<compile_context>
chip_gen: v7x
topology: tpu7x:2x2x1
jax: 0.10.0
libtpu: 0.0.40
codegen_flags: <defaults>
</compile_context>

<pallas_src>
import functools

import jax
import jax.numpy as jnp
from jax.experimental import pallas as pl
from jax.experimental.pallas import tpu as pltpu


# -----------------------------------------------------------------------------
# In-kernel helpers (operate on VMEM refs / values, fully static shapes)
# -----------------------------------------------------------------------------
def _fill_padded(pad_ref, x):
    """Zero-pad x by 1 pixel on H/W into the VMEM scratch ref pad_ref."""
    h, w, _ = x.shape
    pad_ref[...] = jnp.zeros(pad_ref.shape, pad_ref.dtype)
    pad_ref[1:h + 1, 1:w + 1, :] = x


def _conv3x3_im2col(pad_ref, w_ref, b_ref, *, stride, relu):
    """3x3 conv (pad=1 already materialized in pad_ref) as one im2col matmul.

    pad_ref: (H+2, W+2, Cin) f32 VMEM scratch holding the zero-padded input.
    w_ref:   (9*Cin, Cout) bf16.   b_ref: (1, Cout) f32.
    Returns (Ho*Wo, Cout) f32 with Ho = H // stride, Wo = W // stride.
    """
    hp, wp, cin = pad_ref.shape
    h, w = hp - 2, wp - 2
    ho, wo = h // stride, w // stride

    # Three W-shifted (row-padded) copies, loaded once and reused for every kh
    # tap; for stride 2 the even-column subsample is done once per shift.
    xcols = []
    for kw in range(3):
        xc = pad_ref[:, kw:kw + w, :]                        # (H+2, W, Cin)
        if stride == 2:
            xc = xc.reshape(hp, wo, 2, cin)[:, :, 0, :]      # even columns
        xcols.append(xc)

    taps = []
    for kh in range(3):
        for kw in range(3):
            v = xcols[kw][kh:kh + h]                         # (H, Wsel, Cin)
            if stride == 2:
                v = v.reshape(ho, 2, wo, cin)[:, 0, :, :]    # even rows
            taps.append(v.reshape(ho * wo, cin))
    patches = jnp.concatenate(taps, axis=-1).astype(jnp.bfloat16)  # (M, 9*Cin)

    acc = jnp.dot(patches, w_ref[...], preferred_element_type=jnp.float32)
    acc = acc + b_ref[...]                                   # bias broadcast
    if relu:
        acc = jnp.maximum(acc, 0.0)
    return acc                                               # (M, Cout) f32


def _postprocess_feature(head, pri_ref, *, num_anchors, num_classes,
                         center_var, size_var):
    """Softmax over classes + SSD prior decode, kept in the lane-dense
    per-location layout: returns scores (M, A*C) and corner boxes (M, A*4)."""
    a_n, c_n = num_anchors, num_classes
    sc_parts, bx_parts = [], []
    for a in range(a_n):
        logit = head[:, a * c_n:(a + 1) * c_n]               # (M, C)
        m = jnp.max(logit, axis=-1, keepdims=True)
        e = jnp.exp(logit - m)
        sc_parts.append(e / jnp.sum(e, axis=-1, keepdims=True))

        loc = head[:, a_n * c_n + 4 * a: a_n * c_n + 4 * (a + 1)]  # (M, 4)
        pri = pri_ref[a]                                     # (M, 4) cx,cy,w,h
        cxcy = loc[:, 0:2] * center_var * pri[:, 2:4] + pri[:, 0:2]
        wh = jnp.exp(loc[:, 2:4] * size_var) * pri[:, 2:4]
        bx_parts.append(jnp.concatenate([cxcy - 0.5 * wh, cxcy + 0.5 * wh],
                                        axis=-1))            # (M, 4) x1y1x2y2
    return (jnp.concatenate(sc_parts, axis=-1),              # (M, A*C)
            jnp.concatenate(bx_parts, axis=-1))              # (M, A*4)


# -----------------------------------------------------------------------------
# Fused SSD forward kernel: one grid step per image, all activations in VMEM.
# -----------------------------------------------------------------------------
def _ssd_fused_kernel(x_ref, w1_ref, b1_ref, w2_ref, b2_ref, w3_ref, b3_ref,
                      wh0_ref, bh0_ref, wh1_ref, bh1_ref, pri0_ref, pri1_ref,
                      scores_ref, boxes_ref,
                      p1_ref, p2_ref, p3_ref, p4_ref,
                      *, num_anchors, num_classes, center_var, size_var):
    h, w = x_ref.shape[1], x_ref.shape[2]
    h2, w2 = h // 2, w // 2
    h4, w4 = h2 // 2, w2 // 2
    c1 = w1_ref.shape[1]
    c2 = w2_ref.shape[1]
    c3 = w3_ref.shape[1]

    # ---- backbone ("basic": conv1 s1 -> conv2 s2 -> conv3 s2), all in VMEM ---
    _fill_padded(p1_ref, x_ref[0])
    h1 = _conv3x3_im2col(p1_ref, w1_ref, b1_ref, stride=1, relu=True)
    _fill_padded(p2_ref, h1.reshape(h, w, c1))

    f0 = _conv3x3_im2col(p2_ref, w2_ref, b2_ref, stride=2, relu=True)
    _fill_padded(p3_ref, f0.reshape(h2, w2, c2))             # feature 0 (H/2)

    f1 = _conv3x3_im2col(p3_ref, w3_ref, b3_ref, stride=2, relu=True)
    _fill_padded(p4_ref, f1.reshape(h4, w4, c3))             # feature 1 (H/4)

    # ---- box head: fused cls+reg predictor conv per feature map -------------
    head0 = _conv3x3_im2col(p3_ref, wh0_ref, bh0_ref, stride=1, relu=False)
    head1 = _conv3x3_im2col(p4_ref, wh1_ref, bh1_ref, stride=1, relu=False)

    # ---- post-processor: softmax + prior decode, lane-dense layout ----------
    sc0, bx0 = _postprocess_feature(
        head0, pri0_ref, num_anchors=num_anchors, num_classes=num_classes,
        center_var=center_var, size_var=size_var)            # (M0,A*C),(M0,A*4)
    sc1, bx1 = _postprocess_feature(
        head1, pri1_ref, num_anchors=num_anchors, num_classes=num_classes,
        center_var=center_var, size_var=size_var)            # (M1,A*C),(M1,A*4)

    m0 = h2 * w2
    m1 = h4 * w4
    scores_ref[0, 0:m0, :] = sc0
    scores_ref[0, m0:m0 + m1, :] = sc1
    boxes_ref[0, 0:m0, :] = bx0
    boxes_ref[0, m0:m0 + m1, :] = bx1


# -----------------------------------------------------------------------------
# Parameter / prior construction (deterministic, host-side, done once)
# -----------------------------------------------------------------------------
def _init_conv(key, cin, cout, scale=0.1):
    kw_, kb_ = jax.random.split(key)
    w = scale * jax.random.normal(kw_, (3, 3, cin, cout), jnp.float32)
    b = scale * jax.random.normal(kb_, (cout,), jnp.float32)
    return w, b


def _pack_conv(w, b):
    """(3,3,Cin,Cout)->(9*Cin,Cout) bf16 matmul weights; bias -> (1,Cout) f32."""
    kh, kw, cin, cout = w.shape
    return (w.reshape(kh * kw * cin, cout).astype(jnp.bfloat16),
            b.reshape(1, cout).astype(jnp.float32))


def _make_feature_priors(size, scale, num_anchors):
    """Center-form priors laid out (A, size*size, 4) to match the kernel."""
    ratios = [1.0, 2.0, 0.5, 3.0][:num_anchors]
    pri = []
    for r in ratios:
        bw = scale * (r ** 0.5)
        bh = scale / (r ** 0.5)
        rows = []
        for i in range(size):
            for j in range(size):
                rows.append([(j + 0.5) / size, (i + 0.5) / size, bw, bh])
        pri.append(rows)
    return jnp.asarray(pri, dtype=jnp.float32)               # (A, S*S, 4)


class SSDDetectorPallas:
    """Synthetic SSDDetector: 'basic' backbone + SSDBoxHead, eval forward,
    implemented as a single fused Pallas TPU kernel (one grid step / image)."""

    NUM_CLASSES = 5       # including background
    NUM_ANCHORS = 4       # anchors per spatial location
    CENTER_VARIANCE = 0.1
    SIZE_VARIANCE = 0.2

    def __init__(self, key, image_size=16):
        self.image_size = image_size
        keys = jax.random.split(key, 8)
        a, c = self.NUM_ANCHORS, self.NUM_CLASSES

        # backbone: conv1 s1 (3->16) -> conv2 s2 (16->32) -> conv3 s2 (32->32)
        w1, b1 = _init_conv(keys[0], 3, 16)
        w2, b2 = _init_conv(keys[1], 16, 32)                 # -> feature 0
        w3, b3 = _init_conv(keys[2], 32, 32)                 # -> feature 1
        self.w1, self.b1 = _pack_conv(w1, b1)
        self.w2, self.b2 = _pack_conv(w2, b2)
        self.w3, self.b3 = _pack_conv(w3, b3)

        # SSDBoxHead predictor convs: cls (A*C) and reg (A*4) fused along Cout
        heads = []
        for kc, kr in [(keys[3], keys[5]), (keys[4], keys[6])]:
            wc, bc = _init_conv(kc, 32, a * c)
            wr, br = _init_conv(kr, 32, a * 4)
            wh = jnp.concatenate([wc, wr], axis=-1)          # (3,3,32,A*C+A*4)
            bh = jnp.concatenate([bc, br], axis=-1)
            heads.append(_pack_conv(wh, bh))
        (self.wh0, self.bh0), (self.wh1, self.bh1) = heads

        # priors hoisted out of the forward pass (constant per image size)
        s0, s1 = image_size // 2, image_size // 4
        self.pri0 = _make_feature_priors(s0, 0.2, a)         # (A, s0*s0, 4)
        self.pri1 = _make_feature_priors(s1, 0.4, a)         # (A, s1*s1, 4)

    def __call__(self, images, targets=None):
        if targets is not None:
            # TODO(synk): training losses (MultiBoxLoss w/ hard-negative
            # mining) have no clean Pallas equivalent here; eval path only.
            raise NotImplementedError("training path not implemented")

        # images: [N, 3, H, W] (NCHW, like PyTorch) -> NHWC once at the edge
        x = jnp.transpose(images, (0, 2, 3, 1)).astype(jnp.float32)
        n, h, w, cin = x.shape
        assert h == self.image_size and w == self.image_size

        a, c = self.NUM_ANCHORS, self.NUM_CLASSES
        h2, w2, h4, w4 = h // 2, w // 2, h // 4, w // 4
        locs = h2 * w2 + h4 * w4              # spatial locations over all maps
        c1, c2, c3 = self.w1.shape[1], self.w2.shape[1], self.w3.shape[1]

        kernel = functools.partial(
            _ssd_fused_kernel,
            num_anchors=a, num_classes=c,
            center_var=self.CENTER_VARIANCE, size_var=self.SIZE_VARIANCE)

        scores2d, boxes2d = pl.pallas_call(
            kernel,
            out_shape=(jax.ShapeDtypeStruct((n, locs, a * c), jnp.float32),
                       jax.ShapeDtypeStruct((n, locs, a * 4), jnp.float32)),
            grid_spec=pltpu.PrefetchScalarGridSpec(
                num_scalar_prefetch=0,
                # One image per grid step; the batch axis is "parallel" so the
                # two images land on both TensorCores of a v7x megacore.
                # TODO(synk): for real SSD resolutions add a row-band grid axis
                # (2-row halo) and an explicit vmem_limit_bytes.
                grid=(n,),
                in_specs=[
                    pl.BlockSpec((1, h, w, cin), lambda i: (i, 0, 0, 0)),
                    pl.BlockSpec(self.w1.shape, lambda i: (0, 0)),
                    pl.BlockSpec(self.b1.shape, lambda i: (0, 0)),
                    pl.BlockSpec(self.w2.shape, lambda i: (0, 0)),
                    pl.BlockSpec(self.b2.shape, lambda i: (0, 0)),
                    pl.BlockSpec(self.w3.shape, lambda i: (0, 0)),
                    pl.BlockSpec(self.b3.shape, lambda i: (0, 0)),
                    pl.BlockSpec(self.wh0.shape, lambda i: (0, 0)),
                    pl.BlockSpec(self.bh0.shape, lambda i: (0, 0)),
                    pl.BlockSpec(self.wh1.shape, lambda i: (0, 0)),
                    pl.BlockSpec(self.bh1.shape, lambda i: (0, 0)),
                    pl.BlockSpec(self.pri0.shape, lambda i: (0, 0, 0)),
                    pl.BlockSpec(self.pri1.shape, lambda i: (0, 0, 0)),
                ],
                out_specs=[
                    pl.BlockSpec((1, locs, a * c), lambda i: (i, 0, 0)),
                    pl.BlockSpec((1, locs, a * 4), lambda i: (i, 0, 0)),
                ],
                scratch_shapes=[
                    pltpu.VMEM((h + 2, w + 2, cin), jnp.float32),   # padded img
                    pltpu.VMEM((h + 2, w + 2, c1), jnp.float32),    # padded h1
                    pltpu.VMEM((h2 + 2, w2 + 2, c2), jnp.float32),  # padded f0
                    pltpu.VMEM((h4 + 2, w4 + 2, c3), jnp.float32),  # padded f1
                ],
            ),
            compiler_params=pltpu.CompilerParams(
                dimension_semantics=("parallel",)),
        )(x, self.w1, self.b1, self.w2, self.b2, self.w3, self.b3,
          self.wh0, self.bh0, self.wh1, self.bh1, self.pri0, self.pri1)

        # Free row-major reshapes back to [N, total_anchors, .]; preserves the
        # original (location-major, anchor-minor) ordering.
        scores = scores2d.reshape(n, locs * a, c)
        boxes = boxes2d.reshape(n, locs * a, 4)
        # TODO(synk): NMS / score-threshold filtering omitted (dynamic output).
        return {"boxes": boxes, "scores": scores}


# -----------------------------------------------------------------------------
if __name__ == "__main__":
    key = jax.random.PRNGKey(0)
    k_img, k_params = jax.random.split(key)

    images = jax.random.normal(k_img, (2, 3, 16, 16), jnp.float32)   # NCHW
    detector = SSDDetectorPallas(k_params, image_size=16)

    detections = detector(images)
    boxes = jax.block_until_ready(detections["boxes"])
    scores = jax.block_until_ready(detections["scores"])

    # total anchors: 8*8*4 + 4*4*4 = 320
    assert boxes.shape == (2, 320, 4), boxes.shape
    assert scores.shape == (2, 320, 5), scores.shape
    assert bool(jnp.all(jnp.isfinite(boxes))) and bool(jnp.all(jnp.isfinite(scores)))
    assert bool(jnp.allclose(scores.sum(-1), 1.0, atol=1e-4))   # softmax sanity

    print("KERNEL_OK")
</pallas_src>

<mosaic_0001>
module attributes {stable_mosaic.version = 11 : i64} {
  func.func @_ssd_fused_kernel(%arg0: i32, %arg1: memref<1x16x16x3xf32, #tpu.memory_space<vmem>>, %arg2: memref<27x16xbf16, #tpu.memory_space<vmem>>, %arg3: memref<1x16xf32, #tpu.memory_space<vmem>>, %arg4: memref<144x32xbf16, #tpu.memory_space<vmem>>, %arg5: memref<1x32xf32, #tpu.memory_space<vmem>>, %arg6: memref<288x32xbf16, #tpu.memory_space<vmem>>, %arg7: memref<1x32xf32, #tpu.memory_space<vmem>>, %arg8: memref<288x36xbf16, #tpu.memory_space<vmem>>, %arg9: memref<1x36xf32, #tpu.memory_space<vmem>>, %arg10: memref<288x36xbf16, #tpu.memory_space<vmem>>, %arg11: memref<1x36xf32, #tpu.memory_space<vmem>>, %arg12: memref<4x64x4xf32, #tpu.memory_space<vmem>>, %arg13: memref<4x16x4xf32, #tpu.memory_space<vmem>>, %arg14: memref<1x80x20xf32, #tpu.memory_space<vmem>>, %arg15: memref<1x80x16xf32, #tpu.memory_space<vmem>>, %arg16: memref<18x18x3xf32, #tpu.memory_space<vmem>>, %arg17: memref<18x18x16xf32, #tpu.memory_space<vmem>>, %arg18: memref<10x10x32xf32, #tpu.memory_space<vmem>>, %arg19: memref<6x6x32xf32, #tpu.memory_space<vmem>>) attributes {dimension_semantics = [#tpu.dimension_semantics<parallel>], iteration_bounds = array<i64: 2>, scalar_prefetch = 0 : i64, scratch_operands = 4 : i64, tpu.core_type = #tpu.core_type<tc>, window_params = [{transform_indices = @transform_0, window_bounds = array<i64: 1, 16, 16, 3>}, {pipeline_mode = #tpu.pipeline_mode<synchronous>, transform_indices = @transform_1, window_bounds = array<i64: 27, 16>}, {pipeline_mode = #tpu.pipeline_mode<synchronous>, transform_indices = @transform_2, window_bounds = array<i64: 1, 16>}, {pipeline_mode = #tpu.pipeline_mode<synchronous>, transform_indices = @transform_3, window_bounds = array<i64: 144, 32>}, {pipeline_mode = #tpu.pipeline_mode<synchronous>, transform_indices = @transform_4, window_bounds = array<i64: 1, 32>}, {pipeline_mode = #tpu.pipeline_mode<synchronous>, transform_indices = @transform_5, window_bounds = array<i64: 288, 32>}, {pipeline_mode = #tpu.pipeline_mode<synchronous>, transform_indices = @transform_6, window_bounds = array<i64: 1, 32>}, {pipeline_mode = #tpu.pipeline_mode<synchronous>, transform_indices = @transform_7, window_bounds = array<i64: 288, 36>}, {pipeline_mode = #tpu.pipeline_mode<synchronous>, transform_indices = @transform_8, window_bounds = array<i64: 1, 36>}, {pipeline_mode = #tpu.pipeline_mode<synchronous>, transform_indices = @transform_9, window_bounds = array<i64: 288, 36>}, {pipeline_mode = #tpu.pipeline_mode<synchronous>, transform_indices = @transform_10, window_bounds = array<i64: 1, 36>}, {pipeline_mode = #tpu.pipeline_mode<synchronous>, transform_indices = @transform_11, window_bounds = array<i64: 4, 64, 4>}, {pipeline_mode = #tpu.pipeline_mode<synchronous>, transform_indices = @transform_12, window_bounds = array<i64: 4, 16, 4>}, {transform_indices = @transform_13, window_bounds = array<i64: 1, 80, 20>}, {transform_indices = @transform_14, window_bounds = array<i64: 1, 80, 16>}]} {
    %c0 = arith.constant 0 : index
    %c0_0 = arith.constant 0 : index
    %c0_1 = arith.constant 0 : index
    %c0_2 = arith.constant 0 : index
    %0 = vector.load %arg1[%c0, %c0_0, %c0_1, %c0_2] : memref<1x16x16x3xf32, #tpu.memory_space<vmem>>, vector<1x16x16x3xf32>
    %1 = vector.shape_cast %0 : vector<1x16x16x3xf32> to vector<16x16x3xf32>
    %cst = arith.constant 0.000000e+00 : f32
    %2 = vector.broadcast %cst : f32 to vector<18x18x3xf32>
    %c0_3 = arith.constant 0 : index
    %c0_4 = arith.constant 0 : index
    %c0_5 = arith.constant 0 : index
    %3 = vector.load %arg16[%c0_3, %c0_4, %c0_5] : memref<18x18x3xf32, #tpu.memory_space<vmem>>, vector<18x18x3xf32>
    tpu.vector_store %arg16[%c0_3, %c0_4, %c0_5], %2 {strides = array<i32>} : memref<18x18x3xf32, #tpu.memory_space<vmem>>, vector<18x18x3xf32>,
    %c1 = arith.constant 1 : index
    %c1_6 = arith.constant 1 : index
    %c0_7 = arith.constant 0 : index
    %4 = vector.load %arg16[%c1, %c1_6, %c0_7] : memref<18x18x3xf32, #tpu.memory_space<vmem>>, vector<16x16x3xf32>
    tpu.vector_store %arg16[%c1, %c1_6, %c0_7], %1 {strides = array<i32>} : memref<18x18x3xf32, #tpu.memory_space<vmem>>, vector<16x16x3xf32>,
    %c0_8 = arith.constant 0 : index
    %c0_9 = arith.constant 0 : index
    %c0_10 = arith.constant 0 : index
    %5 = vector.load %arg16[%c0_8, %c0_9, %c0_10] : memref<18x18x3xf32, #tpu.memory_space<vmem>>, vector<18x16x3xf32>
    %c0_11 = arith.constant 0 : index
    %c1_12 = arith.constant 1 : index
    %c0_13 = arith.constant 0 : index
    %6 = vector.load %arg16[%c0_11, %c1_12, %c0_13] : memref<18x18x3xf32, #tpu.memory_space<vmem>>, vector<18x16x3xf32>
    %c0_14 = arith.constant 0 : index
    %c2 = arith.constant 2 : index
    %c0_15 = arith.constant 0 : index
    %7 = vector.load %arg16[%c0_14, %c2, %c0_15] : memref<18x18x3xf32, #tpu.memory_space<vmem>>, vector<18x16x3xf32>
    %8 = vector.extract_strided_slice %5 {offsets = [0, 0, 0], sizes = [16, 16, 3], strides = [1, 1, 1]} : vector<18x16x3xf32> to vector<16x16x3xf32>
    %9 = vector.shape_cast %8 : vector<16x16x3xf32> to vector<256x3xf32>
    %10 = vector.extract_strided_slice %6 {offsets = [0, 0, 0], sizes = [16, 16, 3], strides = [1, 1, 1]} : vector<18x16x3xf32> to vector<16x16x3xf32>
    %11 = vector.shape_cast %10 : vector<16x16x3xf32> to vector<256x3xf32>
    %12 = vector.extract_strided_slice %7 {offsets = [0, 0, 0], sizes = [16, 16, 3], strides = [1, 1, 1]} : vector<18x16x3xf32> to vector<16x16x3xf32>
    %13 = vector.shape_cast %12 : vector<16x16x3xf32> to vector<256x3xf32>
    %14 = vector.extract_strided_slice %5 {offsets = [1, 0, 0], sizes = [16, 16, 3], strides = [1, 1, 1]} : vector<18x16x3xf32> to vector<16x16x3xf32>
    %15 = vector.shape_cast %14 : vector<16x16x3xf32> to vector<256x3xf32>
    %16 = vector.extract_strided_slice %6 {offsets = [1, 0, 0], sizes = [16, 16, 3], strides = [1, 1, 1]} : vector<18x16x3xf32> to vector<16x16x3xf32>
    %17 = vector.shape_cast %16 : vector<16x16x3xf32> to vector<256x3xf32>
    %18 = vector.extract_strided_slice %7 {offsets = [1, 0, 0], sizes = [16, 16, 3], strides = [1, 1, 1]} : vector<18x16x3xf32> to vector<16x16x3xf32>
    %19 = vector.shape_cast %18 : vector<16x16x3xf32> to vector<256x3xf32>
    %20 = vector.extract_strided_slice %5 {offsets = [2, 0, 0], sizes = [16, 16, 3], strides = [1, 1, 1]} : vector<18x16x3xf32> to vector<16x16x3xf32>
    %21 = vector.shape_cast %20 : vector<16x16x3xf32> to vector<256x3xf32>
    %22 = vector.extract_strided_slice %6 {offsets = [2, 0, 0], sizes = [16, 16, 3], strides = [1, 1, 1]} : vector<18x16x3xf32> to vector<16x16x3xf32>
    %23 = vector.shape_cast %22 : vector<16x16x3xf32> to vector<256x3xf32>
    %24 = vector.extract_strided_slice %7 {offsets = [2, 0, 0], sizes = [16, 16, 3], strides = [1, 1, 1]} : vector<18x16x3xf32> to vector<16x16x3xf32>
    %25 = vector.shape_cast %24 : vector<16x16x3xf32> to vector<256x3xf32>
    %26 = tpu.concatenate %9, %11, %13, %15, %17, %19, %21, %23, %25 in 1 : vector<256x3xf32>, vector<256x3xf32>, vector<256x3xf32>, vector<256x3xf32>, vector<256x3xf32>, vector<256x3xf32>, vector<256x3xf32>, vector<256x3xf32>, vector<256x3xf32> -> vector<256x27xf32>
    %27 = arith.truncf %26 : vector<256x27xf32> to vector<256x27xbf16>
    %c0_16 = arith.constant 0 : index
    %c0_17 = arith.constant 0 : index
    %28 = vector.load %arg2[%c0_16, %c0_17] : memref<27x16xbf16, #tpu.memory_space<vmem>>, vector<27x16xbf16>
    %cst_18 = arith.constant dense<0.000000e+00> : vector<256x16xf32>
    %29 = tpu.matmul %27, %28, %cst_18 {dimension_numbers = #tpu.dot_dimension_numbers<[1], [0], [0], [1], [0, 0, 1, 1], [], []>} : vector<256x27xbf16>, vector<27x16xbf16>, vector<256x16xf32> -> vector<256x16xf32>
    %c0_19 = arith.constant 0 : index
    %c0_20 = arith.constant 0 : index
    %30 = vector.load %arg3[%c0_19, %c0_20] : memref<1x16xf32, #tpu.memory_space<vmem>>, vector<1x16xf32>
    %31 = vector.broadcast %30 : vector<1x16xf32> to vector<256x16xf32>
    %32 = arith.addf %29, %31 : vector<256x16xf32>
    %cst_21 = arith.constant 0.000000e+00 : f32
    %33 = vector.broadcast %cst_21 : f32 to vector<256x16xf32>
    %34 = arith.maximumf %32, %33 : vector<256x16xf32>
    %35 = vector.shape_cast %34 : vector<256x16xf32> to vector<16x16x16xf32>
    %cst_22 = arith.constant 0.000000e+00 : f32
    %36 = vector.broadcast %cst_22 : f32 to vector<18x18x16xf32>
    %c0_23 = arith.constant 0 : index
    %c0_24 = arith.constant 0 : index
    %c0_25 = arith.constant 0 : index
    %37 = vector.load %arg17[%c0_23, %c0_24, %c0_25] : memref<18x18x16xf32, #tpu.memory_space<vmem>>, vector<18x18x16xf32>
    tpu.vector_store %arg17[%c0_23, %c0_24, %c0_25], %36 {strides = array<i32>} : memref<18x18x16xf32, #tpu.memory_space<vmem>>, vector<18x18x16xf32>,
    %c1_26 = arith.constant 1 : index
    %c1_27 = arith.constant 1 : index
    %c0_28 = arith.constant 0 : index
    %38 = vector.load %arg17[%c1_26, %c1_27, %c0_28] : memref<18x18x16xf32, #tpu.memory_space<vmem>>, vector<16x16x16xf32>
    tpu.vector_store %arg17[%c1_26, %c1_27, %c0_28], %35 {strides = array<i32>} : memref<18x18x16xf32, #tpu.memory_space<vmem>>, vector<16x16x16xf32>,
    %c0_29 = arith.constant 0 : index
    %c0_30 = arith.constant 0 : index
    %c0_31 = arith.constant 0 : index
    %39 = vector.load %arg17[%c0_29, %c0_30, %c0_31] : memref<18x18x16xf32, #tpu.memory_space<vmem>>, vector<18x16x16xf32>
    %40 = vector.shape_cast %39 : vector<18x16x16xf32> to vector<18x8x2x16xf32>
    %41 = vector.extract_strided_slice %40 {offsets = [0, 0, 0, 0], sizes = [18, 8, 1, 16], strides = [1, 1, 1, 1]} : vector<18x8x2x16xf32> to vector<18x8x1x16xf32>
    %42 = vector.shape_cast %41 : vector<18x8x1x16xf32> to vector<18x8x16xf32>
    %c0_32 = arith.constant 0 : index
    %c1_33 = arith.constant 1 : index
    %c0_34 = arith.constant 0 : index
    %43 = vector.load %arg17[%c0_32, %c1_33, %c0_34] : memref<18x18x16xf32, #tpu.memory_space<vmem>>, vector<18x16x16xf32>
    %44 = vector.shape_cast %43 : vector<18x16x16xf32> to vector<18x8x2x16xf32>
    %45 = vector.extract_strided_slice %44 {offsets = [0, 0, 0, 0], sizes = [18, 8, 1, 16], strides = [1, 1, 1, 1]} : vector<18x8x2x16xf32> to vector<18x8x1x16xf32>
    %46 = vector.shape_cast %45 : vector<18x8x1x16xf32> to vector<18x8x16xf32>
    %c0_35 = arith.constant 0 : index
    %c2_36 = arith.constant 2 : index
    %c0_37 = arith.constant 0 : index
    %47 = vector.load %arg17[%c0_35, %c2_36, %c0_37] : memref<18x18x16xf32, #tpu.memory_space<vmem>>, vector<18x16x16xf32>
    %48 = vector.shape_cast %47 : vector<18x16x16xf32> to vector<18x8x2x16xf32>
    %49 = vector.extract_strided_slice %48 {offsets = [0, 0, 0, 0], sizes = [18, 8, 1, 16], strides = [1, 1, 1, 1]} : vector<18x8x2x16xf32> to vector<18x8x1x16xf32>
    %50 = vector.shape_cast %49 : vector<18x8x1x16xf32> to vector<18x8x16xf32>
    %51 = vector.extract_strided_slice %42 {offsets = [0, 0, 0], sizes = [16, 8, 16], strides = [1, 1, 1]} : vector<18x8x16xf32> to vector<16x8x16xf32>
    %52 = vector.shape_cast %51 : vector<16x8x16xf32> to vector<8x2x8x16xf32>
    %53 = vector.extract_strided_slice %52 {offsets = [0, 0, 0, 0], sizes = [8, 1, 8, 16], strides = [1, 1, 1, 1]} : vector<8x2x8x16xf32> to vector<8x1x8x16xf32>
    %54 = vector.shape_cast %53 : vector<8x1x8x16xf32> to vector<8x8x16xf32>
    %55 = vector.shape_cast %54 : vector<8x8x16xf32> to vector<64x16xf32>
    %56 = vector.extract_strided_slice %46 {offsets = [0, 0, 0], sizes = [16, 8, 16], strides = [1, 1, 1]} : vector<18x8x16xf32> to vector<16x8x16xf32>
    %57 = vector.shape_cast %56 : vector<16x8x16xf32> to vector<8x2x8x16xf32>
    %58 = vector.extract_strided_slice %57 {offsets = [0, 0, 0, 0], sizes = [8, 1, 8, 16], strides = [1, 1, 1, 1]} : vector<8x2x8x16xf32> to vector<8x1x8x16xf32>
    %59 = vector.shape_cast %58 : vector<8x1x8x16xf32> to vector<8x8x16xf32>
    %60 = vector.shape_cast %59 : vector<8x8x16xf32> to vector<64x16xf32>
    %61 = vector.extract_strided_slice %50 {offsets = [0, 0, 0], sizes = [16, 8, 16], strides = [1, 1, 1]} : vector<18x8x16xf32> to vector<16x8x16xf32>
    %62 = vector.shape_cast %61 : vector<16x8x16xf32> to vector<8x2x8x16xf32>
    %63 = vector.extract_strided_slice %62 {offsets = [0, 0, 0, 0], sizes = [8, 1, 8, 16], strides = [1, 1, 1, 1]} : vector<8x2x8x16xf32> to vector<8x1x8x16xf32>
    %64 = vector.shape_cast %63 : vector<8x1x8x16xf32> to vector<8x8x16xf32>
    %65 = vector.shape_cast %64 : vector<8x8x16xf32> to vector<64x16xf32>
    %66 = vector.extract_strided_slice %42 {offsets = [1, 0, 0], sizes = [16, 8, 16], strides = [1, 1, 1]} : vector<18x8x16xf32> to vector<16x8x16xf32>
    %67 = vector.shape_cast %66 : vector<16x8x16xf32> to vector<8x2x8x16xf32>
    %68 = vector.extract_strided_slice %67 {offsets = [0, 0, 0, 0], sizes = [8, 1, 8, 16], strides = [1, 1, 1, 1]} : vector<8x2x8x16xf32> to vector<8x1x8x16xf32>
    %69 = vector.shape_cast %68 : vector<8x1x8x16xf32> to vector<8x8x16xf32>
    %70 = vector.shape_cast %69 : vector<8x8x16xf32> to vector<64x16xf32>
    %71 = vector.extract_strided_slice %46 {offsets = [1, 0, 0], sizes = [16, 8, 16], strides = [1, 1, 1]} : vector<18x8x16xf32> to vector<16x8x16xf32>
    %72 = vector.shape_cast %71 : vector<16x8x16xf32> to vector<8x2x8x16xf32>
    %73 = vector.extract_strided_slice %72 {offsets = [0, 0, 0, 0], sizes = [8, 1, 8, 16], strides = [1, 1, 1, 1]} : vector<8x2x8x16xf32> to vector<8x1x8x16xf32>
    %74 = vector.shape_cast %73 : vector<8x1x8x16xf32> to vector<8x8x16xf32>
    %75 = vector.shape_cast %74 : vector<8x8x16xf32> to vector<64x16xf32>
    %76 = vector.extract_strided_slice %50 {offsets = [1, 0, 0], sizes = [16, 8, 16], strides = [1, 1, 1]} : vector<18x8x16xf32> to vector<16x8x16xf32>
    %77 = vector.shape_cast %76 : vector<16x8x16xf32> to vector<8x2x8x16xf32>
    %78 = vector.extract_strided_slice %77 {offsets = [0, 0, 0, 0], sizes = [8, 1, 8, 16], strides = [1, 1, 1, 1]} : vector<8x2x8x16xf32> to vector<8x1x8x16xf32>
    %79 = vector.shape_cast %78 : vector<8x1x8x16xf32> to vector<8x8x16xf32>
    %80 = vector.shape_cast %79 : vector<8x8x16xf32> to vector<64x16xf32>
    %81 = vector.extract_strided_slice %42 {offsets = [2, 0, 0], sizes = [16, 8, 16], strides = [1, 1, 1]} : vector<18x8x16xf32> to vector<16x8x16xf32>
    %82 = vector.shape_cast %81 : vector<16x8x16xf32> to vector<8x2x8x16xf32>
    %83 = vector.extract_strided_slice %82 {offsets = [0, 0, 0, 0], sizes = [8, 1, 8, 16], strides = [1, 1, 1, 1]} : vector<8x2x8x16xf32> to vector<8x1x8x16xf32>
    %84 = vector.shape_cast %83 : vector<8x1x8x16xf32> to vector<8x8x16xf32>
    %85 = vector.shape_cast %84 : vector<8x8x16xf32> to vector<64x16xf32>
    %86 = vector.extract_strided_slice %46 {offsets = [2, 0, 0], sizes = [16, 8, 16], strides = [1, 1, 1]} : vector<18x8x16xf32> to vector<16x8x16xf32>
    %87 = vector.shape_cast %86 : vector<16x8x16xf32> to vector<8x2x8x16xf32>
    %88 = vector.extract_strided_slice %87 {offsets = [0, 0, 0, 0], sizes = [8, 1, 8, 16], strides = [1, 1, 1, 1]} : vector<8x2x8x16xf32> to vector<8x1x8x16xf32>
    %89 = vector.shape_cast %88 : vector<8x1x8x16xf32> to vector<8x8x16xf32>
    %90 = vector.shape_cast %89 : vector<8x8x16xf32> to vector<64x16xf32>
    %91 = vector.extract_strided_slice %50 {offsets = [2, 0, 0], sizes = [16, 8, 16], strides = [1, 1, 1]} : vector<18x8x16xf32> to vector<16x8x16xf32>
    %92 = vector.shape_cast %91 : vector<16x8x16xf32> to vector<8x2x8x16xf32>
    %93 = vector.extract_strided_slice %92 {offsets = [0, 0, 0, 0], sizes = [8, 1, 8, 16], strides = [1, 1, 1, 1]} : vector<8x2x8x16xf32> to vector<8x1x8x16xf32>
    %94 = vector.shape_cast %93 : vector<8x1x8x16xf32> to vector<8x8x16xf32>
    %95 = vector.shape_cast %94 : vector<8x8x16xf32> to vector<64x16xf32>
    %96 = tpu.concatenate %55, %60, %65, %70, %75, %80, %85, %90, %95 in 1 : vector<64x16xf32>, vector<64x16xf32>, vector<64x16xf32>, vector<64x16xf32>, vector<64x16xf32>, vector<64x16xf32>, vector<64x16xf32>, vector<64x16xf32>, vector<64x16xf32> -> vector<64x144xf32>
    %97 = arith.truncf %96 : vector<64x144xf32> to vector<64x144xbf16>
    %c0_38 = arith.constant 0 : index
    %c0_39 = arith.constant 0 : index
    %98 = vector.load %arg4[%c0_38, %c0_39] : memref<144x32xbf16, #tpu.memory_space<vmem>>, vector<144x32xbf16>
    %cst_40 = arith.constant dense<0.000000e+00> : vector<64x32xf32>
    %99 = tpu.matmul %97, %98, %cst_40 {dimension_numbers = #tpu.dot_dimension_numbers<[1], [0], [0], [1], [0, 0, 1, 1], [], []>} : vector<64x144xbf16>, vector<144x32xbf16>, vector<64x32xf32> -> vector<64x32xf32>
    %c0_41 = arith.constant 0 : index
    %c0_42 = arith.constant 0 : index
    %100 = vector.load %arg5[%c0_41, %c0_42] : memref<1x32xf32, #tpu.memory_space<vmem>>, vector<1x32xf32>
    %101 = vector.broadcast %100 : vector<1x32xf32> to vector<64x32xf32>
    %102 = arith.addf %99, %101 : vector<64x32xf32>
    %cst_43 = arith.constant 0.000000e+00 : f32
    %103 = vector.broadcast %cst_43 : f32 to vector<64x32xf32>
    %104 = arith.maximumf %102, %103 : vector<64x32xf32>
    %105 = vector.shape_cast %104 : vector<64x32xf32> to vector<8x8x32xf32>
    %cst_44 = arith.constant 0.000000e+00 : f32
    %106 = vector.broadcast %cst_44 : f32 to vector<10x10x32xf32>
    %c0_45 = arith.constant 0 : index
    %c0_46 = arith.constant 0 : index
    %c0_47 = arith.constant 0 : index
    %107 = vector.load %arg18[%c0_45, %c0_46, %c0_47] : memref<10x10x32xf32, #tpu.memory_space<vmem>>, vector<10x10x32xf32>
    tpu.vector_store %arg18[%c0_45, %c0_46, %c0_47], %106 {strides = array<i32>} : memref<10x10x32xf32, #tpu.memory_space<vmem>>, vector<10x10x32xf32>,
    %c1_48 = arith.constant 1 : index
    %c1_49 = arith.constant 1 : index
    %c0_50 = arith.constant 0 : index
    %108 = vector.load %arg18[%c1_48, %c1_49, %c0_50] : memref<10x10x32xf32, #tpu.memory_space<vmem>>, vector<8x8x32xf32>
    tpu.vector_store %arg18[%c1_48, %c1_49, %c0_50], %105 {strides = array<i32>} : memref<10x10x32xf32, #tpu.memory_space<vmem>>, vector<8x8x32xf32>,
    %c0_51 = arith.constant 0 : index
    %c0_52 = arith.constant 0 : index
    %c0_53 = arith.constant 0 : index
    %109 = vector.load %arg18[%c0_51, %c0_52, %c0_53] : memref<10x10x32xf32, #tpu.memory_space<vmem>>, vector<10x8x32xf32>
    %110 = vector.shape_cast %109 : vector<10x8x32xf32> to vector<10x4x2x32xf32>
    %111 = vector.extract_strided_slice %110 {offsets = [0, 0, 0, 0], sizes = [10, 4, 1, 32], strides = [1, 1, 1, 1]} : vector<10x4x2x32xf32> to vector<10x4x1x32xf32>
    %112 = vector.shape_cast %111 : vector<10x4x1x32xf32> to vector<10x4x32xf32>
    %c0_54 = arith.constant 0 : index
    %c1_55 = arith.constant 1 : index
    %c0_56 = arith.constant 0 : index
    %113 = vector.load %arg18[%c0_54, %c1_55, %c0_56] : memref<10x10x32xf32, #tpu.memory_space<vmem>>, vector<10x8x32xf32>
    %114 = vector.shape_cast %113 : vector<10x8x32xf32> to vector<10x4x2x32xf32>
    %115 = vector.extract_strided_slice %114 {offsets = [0, 0, 0, 0], sizes = [10, 4, 1, 32], strides = [1, 1, 1, 1]} : vector<10x4x2x32xf32> to vector<10x4x1x32xf32>
    %116 = vector.shape_cast %115 : vector<10x4x1x32xf32> to vector<10x4x32xf32>
    %c0_57 = arith.constant 0 : index
    %c2_58 = arith.constant 2 : index
    %c0_59 = arith.constant 0 : index
    %117 = vector.load %arg18[%c0_57, %c2_58, %c0_59] : memref<10x10x32xf32, #tpu.memory_space<vmem>>, vector<10x8x32xf32>
    %118 = vector.shape_cast %117 : vector<10x8x32xf32> to vector<10x4x2x32xf32>
    %119 = vector.extract_strided_slice %118 {offsets = [0, 0, 0, 0], sizes = [10, 4, 1, 32], strides = [1, 1, 1, 1]} : vector<10x4x2x32xf32> to vector<10x4x1x32xf32>
    %120 = vector.shape_cast %119 : vector<10x4x1x32xf32> to vector<10x4x32xf32>
    %121 = vector.extract_strided_slice %112 {offsets = [0, 0, 0], sizes = [8, 4, 32], strides = [1, 1, 1]} : vector<10x4x32xf32> to vector<8x4x32xf32>
    %122 = vector.shape_cast %121 : vector<8x4x32xf32> to vector<4x2x4x32xf32>
    %123 = vector.extract_strided_slice %122 {offsets = [0, 0, 0, 0], sizes = [4, 1, 4, 32], strides = [1, 1, 1, 1]} : vector<4x2x4x32xf32> to vector<4x1x4x32xf32>
    %124 = vector.shape_cast %123 : vector<4x1x4x32xf32> to vector<4x4x32xf32>
    %125 = vector.shape_cast %124 : vector<4x4x32xf32> to vector<16x32xf32>
    %126 = vector.extract_strided_slice %116 {offsets = [0, 0, 0], sizes = [8, 4, 32], strides = [1, 1, 1]} : vector<10x4x32xf32> to vector<8x4x32xf32>
    %127 = vector.shape_cast %126 : vector<8x4x32xf32> to vector<4x2x4x32xf32>
    %128 = vector.extract_strided_slice %127 {offsets = [0, 0, 0, 0], sizes = [4, 1, 4, 32], strides = [1, 1, 1, 1]} : vector<4x2x4x32xf32> to vector<4x1x4x32xf32>
    %129 = vector.shape_cast %128 : vector<4x1x4x32xf32> to vector<4x4x32xf32>
    %130 = vector.shape_cast %129 : vector<4x4x32xf32> to vector<16x32xf32>
    %131 = vector.extract_strided_slice %120 {offsets = [0, 0, 0], sizes = [8, 4, 32], strides = [1, 1, 1]} : vector<10x4x32xf32> to vector<8x4x32xf32>
    %132 = vector.shape_cast %131 : vector<8x4x32xf32> to vector<4x2x4x32xf32>
    %133 = vector.extract_strided_slice %132 {offsets = [0, 0, 0, 0], sizes = [4, 1, 4, 32], strides = [1, 1, 1, 1]} : vector<4x2x4x32xf32> to vector<4x1x4x32xf32>
    %134 = vector.shape_cast %133 : vector<4x1x4x32xf32> to vector<4x4x32xf32>
    %135 = vector.shape_cast %134 : vector<4x4x32xf32> to vector<16x32xf32>
    %136 = vector.extract_strided_slice %112 {offsets = [1, 0, 0], sizes = [8, 4, 32], strides = [1, 1, 1]} : vector<10x4x32xf32> to vector<8x4x32xf32>
    %137 = vector.shape_cast %136 : vector<8x4x32xf32> to vector<4x2x4x32xf32>
    %138 = vector.extract_strided_slice %137 {offsets = [0, 0, 0, 0], sizes = [4, 1, 4, 32], strides = [1, 1, 1, 1]} : vector<4x2x4x32xf32> to vector<4x1x4x32xf32>
    %139 = vector.shape_cast %138 : vector<4x1x4x32xf32> to vector<4x4x32xf32>
    %140 = vector.shape_cast %139 : vector<4x4x32xf32> to vector<16x32xf32>
    %141 = vector.extract_strided_slice %116 {offsets = [1, 0, 0], sizes = [8, 4, 32], strides = [1, 1, 1]} : vector<10x4x32xf32> to vector<8x4x32xf32>
    %142 = vector.shape_cast %141 : vector<8x4x32xf32> to vector<4x2x4x32xf32>
    %143 = vector.extract_strided_slice %142 {offsets = [0, 0, 0, 0], sizes = [4, 1, 4, 32], strides = [1, 1, 1, 1]} : vector<4x2x4x32xf32> to vector<4x1x4x32xf32>
    %144 = vector.shape_cast %143 : vector<4x1x4x32xf32> to vector<4x4x32xf32>
    %145 = vector.shape_cast %144 : vector<4x4x32xf32> to vector<16x32xf32>
    %146 = vector.extract_strided_slice %120 {offsets = [1, 0, 0], sizes = [8, 4, 32], strides = [1, 1, 1]} : vector<10x4x32xf32> to vector<8x4x32xf32>
    %147 = vector.shape_cast %146 : vector<8x4x32xf32> to vector<4x2x4x32xf32>
    %148 = vector.extract_strided_slice %147 {offsets = [0, 0, 0, 0], sizes = [4, 1, 4, 32], strides = [1, 1, 1, 1]} : vector<4x2x4x32xf32> to vector<4x1x4x32xf32>
    %149 = vector.shape_cast %148 : vector<4x1x4x32xf32> to vector<4x4x32xf32>
    %150 = vector.shape_cast %149 : vector<4x4x32xf32> to vector<16x32xf32>
    %151 = vector.extract_strided_slice %112 {offsets = [2, 0, 0], sizes = [8, 4, 32], strides = [1, 1, 1]} : vector<10x4x32xf32> to vector<8x4x32xf32>
    %152 = vector.shape_cast %151 : vector<8x4x32xf32> to vector<4x2x4x32xf32>
    %153 = vector.extract_strided_slice %152 {offsets = [0, 0, 0, 0], sizes = [4, 1, 4, 32], strides = [1, 1, 1, 1]} : vector<4x2x4x32xf32> to vector<4x1x4x32xf32>
    %154 = vector.shape_cast %153 : vector<4x1x4x32xf32> to vector<4x4x32xf32>
    %155 = vector.shape_cast %154 : vector<4x4x32xf32> to vector<16x32xf32>
    %156 = vector.extract_strided_slice %116 {offsets = [2, 0, 0], sizes = [8, 4, 32], strides = [1, 1, 1]} : vector<10x4x32xf32> to vector<8x4x32xf32>
    %157 = vector.shape_cast %156 : vector<8x4x32xf32> to vector<4x2x4x32xf32>
    %158 = vector.extract_strided_slice %157 {offsets = [0, 0, 0, 0], sizes = [4, 1, 4, 32], strides = [1, 1, 1, 1]} : vector<4x2x4x32xf32> to vector<4x1x4x32xf32>
    %159 = vector.shape_cast %158 : vector<4x1x4x32xf32> to vector<4x4x32xf32>
    %160 = vector.shape_cast %159 : vector<4x4x32xf32> to vector<16x32xf32>
    %161 = vector.extract_strided_slice %120 {offsets = [2, 0, 0], sizes = [8, 4, 32], strides = [1, 1, 1]} : vector<10x4x32xf32> to vector<8x4x32xf32>
    %162 = vector.shape_cast %161 : vector<8x4x32xf32> to vector<4x2x4x32xf32>
    %163 = vector.extract_strided_slice %162 {offsets = [0, 0, 0, 0], sizes = [4, 1, 4, 32], strides = [1, 1, 1, 1]} : vector<4x2x4x32xf32> to vector<4x1x4x32xf32>
    %164 = vector.shape_cast %163 : vector<4x1x4x32xf32> to vector<4x4x32xf32>
    %165 = vector.shape_cast %164 : vector<4x4x32xf32> to vector<16x32xf32>
    %166 = tpu.concatenate %125, %130, %135, %140, %145, %150, %155, %160, %165 in 1 : vector<16x32xf32>, vector<16x32xf32>, vector<16x32xf32>, vector<16x32xf32>, vector<16x32xf32>, vector<16x32xf32>, vector<16x32xf32>, vector<16x32xf32>, vector<16x32xf32> -> vector<16x288xf32>
    %167 = arith.truncf %166 : vector<16x288xf32> to vector<16x288xbf16>
    %c0_60 = arith.constant 0 : index
    %c0_61 = arith.constant 0 : index
    %168 = vector.load %arg6[%c0_60, %c0_61] : memref<288x32xbf16, #tpu.memory_space<vmem>>, vector<288x32xbf16>
    %cst_62 = arith.constant dense<0.000000e+00> : vector<16x32xf32>
    %169 = tpu.matmul %167, %168, %cst_62 {dimension_numbers = #tpu.dot_dimension_numbers<[1], [0], [0], [1], [0, 0, 1, 1], [], []>} : vector<16x288xbf16>, vector<288x32xbf16>, vector<16x32xf32> -> vector<16x32xf32>
    %c0_63 = arith.constant 0 : index
    %c0_64 = arith.constant 0 : index
    %170 = vector.load %arg7[%c0_63, %c0_64] : memref<1x32xf32, #tpu.memory_space<vmem>>, vector<1x32xf32>
    %171 = vector.broadcast %170 : vector<1x32xf32> to vector<16x32xf32>
    %172 = arith.addf %169, %171 : vector<16x32xf32>
    %cst_65 = arith.constant 0.000000e+00 : f32
    %173 = vector.broadcast %cst_65 : f32 to vector<16x32xf32>
    %174 = arith.maximumf %172, %173 : vector<16x32xf32>
    %175 = vector.shape_cast %174 : vector<16x32xf32> to vector<4x4x32xf32>
    %cst_66 = arith.constant 0.000000e+00 : f32
    %176 = vector.broadcast %cst_66 : f32 to vector<6x6x32xf32>
    %c0_67 = arith.constant 0 : index
    %c0_68 = arith.constant 0 : index
    %c0_69 = arith.constant 0 : index
    %177 = vector.load %arg19[%c0_67, %c0_68, %c0_69] : memref<6x6x32xf32, #tpu.memory_space<vmem>>, vector<6x6x32xf32>
    tpu.vector_store %arg19[%c0_67, %c0_68, %c0_69], %176 {strides = array<i32>} : memref<6x6x32xf32, #tpu.memory_space<vmem>>, vector<6x6x32xf32>,
    %c1_70 = arith.constant 1 : index
    %c1_71 = arith.constant 1 : index
    %c0_72 = arith.constant 0 : index
    %178 = vector.load %arg19[%c1_70, %c1_71, %c0_72] : memref<6x6x32xf32, #tpu.memory_space<vmem>>, vector<4x4x32xf32>
    tpu.vector_store %arg19[%c1_70, %c1_71, %c0_72], %175 {strides = array<i32>} : memref<6x6x32xf32, #tpu.memory_space<vmem>>, vector<4x4x32xf32>,
    %c0_73 = arith.constant 0 : index
    %c0_74 = arith.constant 0 : index
    %c0_75 = arith.constant 0 : index
    %179 = vector.load %arg18[%c0_73, %c0_74, %c0_75] : memref<10x10x32xf32, #tpu.memory_space<vmem>>, vector<10x8x32xf32>
    %c0_76 = arith.constant 0 : index
    %c1_77 = arith.constant 1 : index
    %c0_78 = arith.constant 0 : index
    %180 = vector.load %arg18[%c0_76, %c1_77, %c0_78] : memref<10x10x32xf32, #tpu.memory_space<vmem>>, vector<10x8x32xf32>
    %c0_79 = arith.constant 0 : index
    %c2_80 = arith.constant 2 : index
    %c0_81 = arith.constant 0 : index
    %181 = vector.load %arg18[%c0_79, %c2_80, %c0_81] : memref<10x10x32xf32, #tpu.memory_space<vmem>>, vector<10x8x32xf32>
    %182 = vector.extract_strided_slice %179 {offsets = [0, 0, 0], sizes = [8, 8, 32], strides = [1, 1, 1]} : vector<10x8x32xf32> to vector<8x8x32xf32>
    %183 = vector.shape_cast %182 : vector<8x8x32xf32> to vector<64x32xf32>
    %184 = vector.extract_strided_slice %180 {offsets = [0, 0, 0], sizes = [8, 8, 32], strides = [1, 1, 1]} : vector<10x8x32xf32> to vector<8x8x32xf32>
    %185 = vector.shape_cast %184 : vector<8x8x32xf32> to vector<64x32xf32>
    %186 = vector.extract_strided_slice %181 {offsets = [0, 0, 0], sizes = [8, 8, 32], strides = [1, 1, 1]} : vector<10x8x32xf32> to vector<8x8x32xf32>
    %187 = vector.shape_cast %186 : vector<8x8x32xf32> to vector<64x32xf32>
    %188 = vector.extract_strided_slice %179 {offsets = [1, 0, 0], sizes = [8, 8, 32], strides = [1, 1, 1]} : vector<10x8x32xf32> to vector<8x8x32xf32>
    %189 = vector.shape_cast %188 : vector<8x8x32xf32> to vector<64x32xf32>
    %190 = vector.extract_strided_slice %180 {offsets = [1, 0, 0], sizes = [8, 8, 32], strides = [1, 1, 1]} : vector<10x8x32xf32> to vector<8x8x32xf32>
    %191 = vector.shape_cast %190 : vector<8x8x32xf32> to vector<64x32xf32>
    %192 = vector.extract_strided_slice %181 {offsets = [1, 0, 0], sizes = [8, 8, 32], strides = [1, 1, 1]} : vector<10x8x32xf32> to vector<8x8x32xf32>
    %193 = vector.shape_cast %192 : vector<8x8x32xf32> to vector<64x32xf32>
    %194 = vector.extract_strided_slice %179 {offsets = [2, 0, 0], sizes = [8, 8, 32], strides = [1, 1, 1]} : vector<10x8x32xf32> to vector<8x8x32xf32>
    %195 = vector.shape_cast %194 : vector<8x8x32xf32> to vector<64x32xf32>
    %196 = vector.extract_strided_slice %180 {offsets = [2, 0, 0], sizes = [8, 8, 32], strides = [1, 1, 1]} : vector<10x8x32xf32> to vector<8x8x32xf32>
    %197 = vector.shape_cast %196 : vector<8x8x32xf32> to vector<64x32xf32>
    %198 = vector.extract_strided_slice %181 {offsets = [2, 0, 0], sizes = [8, 8, 32], strides = [1, 1, 1]} : vector<10x8x32xf32> to vector<8x8x32xf32>
    %199 = vector.shape_cast %198 : vector<8x8x32xf32> to vector<64x32xf32>
    %200 = tpu.concatenate %183, %185, %187, %189, %191, %193, %195, %197, %199 in 1 : vector<64x32xf32>, vector<64x32xf32>, vector<64x32xf32>, vector<64x32xf32>, vector<64x32xf32>, vector<64x32xf32>, vector<64x32xf32>, vector<64x32xf32>, vector<64x32xf32> -> vector<64x288xf32>
    %201 = arith.truncf %200 : vector<64x288xf32> to vector<64x288xbf16>
    %c0_82 = arith.constant 0 : index
    %c0_83 = arith.constant 0 : index
    %202 = vector.load %arg8[%c0_82, %c0_83] : memref<288x36xbf16, #tpu.memory_space<vmem>>, vector<288x36xbf16>
    %cst_84 = arith.constant dense<0.000000e+00> : vector<64x36xf32>
    %203 = tpu.matmul %201, %202, %cst_84 {dimension_numbers = #tpu.dot_dimension_numbers<[1], [0], [0], [1], [0, 0, 1, 1], [], []>} : vector<64x288xbf16>, vector<288x36xbf16>, vector<64x36xf32> -> vector<64x36xf32>
    %c0_85 = arith.constant 0 : index
    %c0_86 = arith.constant 0 : index
    %204 = vector.load %arg9[%c0_85, %c0_86] : memref<1x36xf32, #tpu.memory_space<vmem>>, vector<1x36xf32>
    %205 = vector.broadcast %204 : vector<1x36xf32> to vector<64x36xf32>
    %206 = arith.addf %203, %205 : vector<64x36xf32>
    %c0_87 = arith.constant 0 : index
    %c0_88 = arith.constant 0 : index
    %c0_89 = arith.constant 0 : index
    %207 = vector.load %arg19[%c0_87, %c0_88, %c0_89] : memref<6x6x32xf32, #tpu.memory_space<vmem>>, vector<6x4x32xf32>
    %c0_90 = arith.constant 0 : index
    %c1_91 = arith.constant 1 : index
    %c0_92 = arith.constant 0 : index
    %208 = vector.load %arg19[%c0_90, %c1_91, %c0_92] : memref<6x6x32xf32, #tpu.memory_space<vmem>>, vector<6x4x32xf32>
    %c0_93 = arith.constant 0 : index
    %c2_94 = arith.constant 2 : index
    %c0_95 = arith.constant 0 : index
    %209 = vector.load %arg19[%c0_93, %c2_94, %c0_95] : memref<6x6x32xf32, #tpu.memory_space<vmem>>, vector<6x4x32xf32>
    %210 = vector.extract_strided_slice %207 {offsets = [0, 0, 0], sizes = [4, 4, 32], strides = [1, 1, 1]} : vector<6x4x32xf32> to vector<4x4x32xf32>
    %211 = vector.shape_cast %210 : vector<4x4x32xf32> to vector<16x32xf32>
    %212 = vector.extract_strided_slice %208 {offsets = [0, 0, 0], sizes = [4, 4, 32], strides = [1, 1, 1]} : vector<6x4x32xf32> to vector<4x4x32xf32>
    %213 = vector.shape_cast %212 : vector<4x4x32xf32> to vector<16x32xf32>
    %214 = vector.extract_strided_slice %209 {offsets = [0, 0, 0], sizes = [4, 4, 32], strides = [1, 1, 1]} : vector<6x4x32xf32> to vector<4x4x32xf32>
    %215 = vector.shape_cast %214 : vector<4x4x32xf32> to vector<16x32xf32>
    %216 = vector.extract_strided_slice %207 {offsets = [1, 0, 0], sizes = [4, 4, 32], strides = [1, 1, 1]} : vector<6x4x32xf32> to vector<4x4x32xf32>
    %217 = vector.shape_cast %216 : vector<4x4x32xf32> to vector<16x32xf32>
    %218 = vector.extract_strided_slice %208 {offsets = [1, 0, 0], sizes = [4, 4, 32], strides = [1, 1, 1]} : vector<6x4x32xf32> to vector<4x4x32xf32>
    %219 = vector.shape_cast %218 : vector<4x4x32xf32> to vector<16x32xf32>
    %220 = vector.extract_strided_slice %209 {offsets = [1, 0, 0], sizes = [4, 4, 32], strides = [1, 1, 1]} : vector<6x4x32xf32> to vector<4x4x32xf32>
    %221 = vector.shape_cast %220 : vector<4x4x32xf32> to vector<16x32xf32>
    %222 = vector.extract_strided_slice %207 {offsets = [2, 0, 0], sizes = [4, 4, 32], strides = [1, 1, 1]} : vector<6x4x32xf32> to vector<4x4x32xf32>
    %223 = vector.shape_cast %222 : vector<4x4x32xf32> to vector<16x32xf32>
    %224 = vector.extract_strided_slice %208 {offsets = [2, 0, 0], sizes = [4, 4, 32], strides = [1, 1, 1]} : vector<6x4x32xf32> to vector<4x4x32xf32>
    %225 = vector.shape_cast %224 : vector<4x4x32xf32> to vector<16x32xf32>
    %226 = vector.extract_strided_slice %209 {offsets = [2, 0, 0], sizes = [4, 4, 32], strides = [1, 1, 1]} : vector<6x4x32xf32> to vector<4x4x32xf32>
    %227 = vector.shape_cast %226 : vector<4x4x32xf32> to vector<16x32xf32>
    %228 = tpu.concatenate %211, %213, %215, %217, %219, %221, %223, %225, %227 in 1 : vector<16x32xf32>, vector<16x32xf32>, vector<16x32xf32>, vector<16x32xf32>, vector<16x32xf32>, vector<16x32xf32>, vector<16x32xf32>, vector<16x32xf32>, vector<16x32xf32> -> vector<16x288xf32>
    %229 = arith.truncf %228 : vector<16x288xf32> to vector<16x288xbf16>
    %c0_96 = arith.constant 0 : index
    %c0_97 = arith.constant 0 : index
    %230 = vector.load %arg10[%c0_96, %c0_97] : memref<288x36xbf16, #tpu.memory_space<vmem>>, vector<288x36xbf16>
    %cst_98 = arith.constant dense<0.000000e+00> : vector<16x36xf32>
    %231 = tpu.matmul %229, %230, %cst_98 {dimension_numbers = #tpu.dot_dimension_numbers<[1], [0], [0], [1], [0, 0, 1, 1], [], []>} : vector<16x288xbf16>, vector<288x36xbf16>, vector<16x36xf32> -> vector<16x36xf32>
    %c0_99 = arith.constant 0 : index
    %c0_100 = arith.constant 0 : index
    %232 = vector.load %arg11[%c0_99, %c0_100] : memref<1x36xf32, #tpu.memory_space<vmem>>, vector<1x36xf32>
    %233 = vector.broadcast %232 : vector<1x36xf32> to vector<16x36xf32>
    %234 = arith.addf %231, %233 : vector<16x36xf32>
    %235 = vector.extract_strided_slice %206 {offsets = [0, 0], sizes = [64, 5], strides = [1, 1]} : vector<64x36xf32> to vector<64x5xf32>
    %cst_101 = arith.constant dense<0xFF800000> : vector<64xf32>
    %236 = vector.multi_reduction <maximumf>, %235, %cst_101 [1] : vector<64x5xf32> to vector<64xf32>
    %237 = vector.shape_cast %236 : vector<64xf32> to vector<64x1xf32>
    %238 = vector.broadcast %237 : vector<64x1xf32> to vector<64x5xf32>
    %239 = arith.subf %235, %238 : vector<64x5xf32>
    %240 = math.exp %239 : vector<64x5xf32>
    %cst_102 = arith.constant dense<0.000000e+00> : vector<64xf32>
    %241 = vector.multi_reduction <add>, %240, %cst_102 [1] : vector<64x5xf32> to vector<64xf32>
    %242 = vector.shape_cast %241 : vector<64xf32> to vector<64x1xf32>
    %243 = vector.broadcast %242 : vector<64x1xf32> to vector<64x5xf32>
    %244 = arith.divf %240, %243 : vector<64x5xf32>
    %245 = vector.extract_strided_slice %206 {offsets = [0, 20], sizes = [64, 4], strides = [1, 1]} : vector<64x36xf32> to vector<64x4xf32>
    %c0_103 = arith.constant 0 : index
    %c0_104 = arith.constant 0 : index
    %c0_105 = arith.constant 0 : index
    %246 = vector.load %arg12[%c0_103, %c0_104, %c0_105] : memref<4x64x4xf32, #tpu.memory_space<vmem>>, vector<1x64x4xf32>
    %247 = vector.shape_cast %246 : vector<1x64x4xf32> to vector<64x4xf32>
    %248 = vector.extract_strided_slice %245 {offsets = [0, 0], sizes = [64, 2], strides = [1, 1]} : vector<64x4xf32> to vector<64x2xf32>
    %cst_106 = arith.constant 1.000000e-01 : f32
    %249 = vector.broadcast %cst_106 : f32 to vector<64x2xf32>
    %250 = arith.mulf %248, %249 : vector<64x2xf32>
    %251 = vector.extract_strided_slice %247 {offsets = [0, 2], sizes = [64, 2], strides = [1, 1]} : vector<64x4xf32> to vector<64x2xf32>
    %252 = arith.mulf %250, %251 : vector<64x2xf32>
    %253 = vector.extract_strided_slice %247 {offsets = [0, 0], sizes = [64, 2], strides = [1, 1]} : vector<64x4xf32> to vector<64x2xf32>
    %254 = arith.addf %252, %253 : vector<64x2xf32>
    %255 = vector.extract_strided_slice %245 {offsets = [0, 2], sizes = [64, 2], strides = [1, 1]} : vector<64x4xf32> to vector<64x2xf32>
    %cst_107 = arith.constant 2.000000e-01 : f32
    %256 = vector.broadcast %cst_107 : f32 to vector<64x2xf32>
    %257 = arith.mulf %255, %256 : vector<64x2xf32>
    %258 = math.exp %257 : vector<64x2xf32>
    %259 = vector.extract_strided_slice %247 {offsets = [0, 2], sizes = [64, 2], strides = [1, 1]} : vector<64x4xf32> to vector<64x2xf32>
    %260 = arith.mulf %258, %259 : vector<64x2xf32>
    %cst_108 = arith.constant 5.000000e-01 : f32
    %261 = vector.broadcast %cst_108 : f32 to vector<64x2xf32>
    %262 = arith.mulf %261, %260 : vector<64x2xf32>
    %263 = arith.subf %254, %262 : vector<64x2xf32>
    %cst_109 = arith.constant 5.000000e-01 : f32
    %264 = vector.broadcast %cst_109 : f32 to vector<64x2xf32>
    %265 = arith.mulf %264, %260 : vector<64x2xf32>
    %266 = arith.addf %254, %265 : vector<64x2xf32>
    %267 = tpu.concatenate %263, %266 in 1 : vector<64x2xf32>, vector<64x2xf32> -> vector<64x4xf32>
    %268 = vector.extract_strided_slice %206 {offsets = [0, 5], sizes = [64, 5], strides = [1, 1]} : vector<64x36xf32> to vector<64x5xf32>
    %cst_110 = arith.constant dense<0xFF800000> : vector<64xf32>
    %269 = vector.multi_reduction <maximumf>, %268, %cst_110 [1] : vector<64x5xf32> to vector<64xf32>
    %270 = vector.shape_cast %269 : vector<64xf32> to vector<64x1xf32>
    %271 = vector.broadcast %270 : vector<64x1xf32> to vector<64x5xf32>
    %272 = arith.subf %268, %271 : vector<64x5xf32>
    %273 = math.exp %272 : vector<64x5xf32>
    %cst_111 = arith.constant dense<0.000000e+00> : vector<64xf32>
    %274 = vector.multi_reduction <add>, %273, %cst_111 [1] : vector<64x5xf32> to vector<64xf32>
    %275 = vector.shape_cast %274 : vector<64xf32> to vector<64x1xf32>
    %276 = vector.broadcast %275 : vector<64x1xf32> to vector<64x5xf32>
    %277 = arith.divf %273, %276 : vector<64x5xf32>
    %278 = vector.extract_strided_slice %206 {offsets = [0, 24], sizes = [64, 4], strides = [1, 1]} : vector<64x36xf32> to vector<64x4xf32>
    %c1_112 = arith.constant 1 : index
    %c0_113 = arith.constant 0 : index
    %c0_114 = arith.constant 0 : index
    %279 = vector.load %arg12[%c1_112, %c0_113, %c0_114] : memref<4x64x4xf32, #tpu.memory_space<vmem>>, vector<1x64x4xf32>
    %280 = vector.shape_cast %279 : vector<1x64x4xf32> to vector<64x4xf32>
    %281 = vector.extract_strided_slice %278 {offsets = [0, 0], sizes = [64, 2], strides = [1, 1]} : vector<64x4xf32> to vector<64x2xf32>
    %cst_115 = arith.constant 1.000000e-01 : f32
    %282 = vector.broadcast %cst_115 : f32 to vector<64x2xf32>
    %283 = arith.mulf %281, %282 : vector<64x2xf32>
    %284 = vector.extract_strided_slice %280 {offsets = [0, 2], sizes = [64, 2], strides = [1, 1]} : vector<64x4xf32> to vector<64x2xf32>
    %285 = arith.mulf %283, %284 : vector<64x2xf32>
    %286 = vector.extract_strided_slice %280 {offsets = [0, 0], sizes = [64, 2], strides = [1, 1]} : vector<64x4xf32> to vector<64x2xf32>
    %287 = arith.addf %285, %286 : vector<64x2xf32>
    %288 = vector.extract_strided_slice %278 {offsets = [0, 2], sizes = [64, 2], strides = [1, 1]} : vector<64x4xf32> to vector<64x2xf32>
    %cst_116 = arith.constant 2.000000e-01 : f32
    %289 = vector.broadcast %cst_116 : f32 to vector<64x2xf32>
    %290 = arith.mulf %288, %289 : vector<64x2xf32>
    %291 = math.exp %290 : vector<64x2xf32>
    %292 = vector.extract_strided_slice %280 {offsets = [0, 2], sizes = [64, 2], strides = [1, 1]} : vector<64x4xf32> to vector<64x2xf32>
    %293 = arith.mulf %291, %292 : vector<64x2xf32>
    %cst_117 = arith.constant 5.000000e-01 : f32
    %294 = vector.broadcast %cst_117 : f32 to vector<64x2xf32>
    %295 = arith.mulf %294, %293 : vector<64x2xf32>
    %296 = arith.subf %287, %295 : vector<64x2xf32>
    %cst_118 = arith.constant 5.000000e-01 : f32
    %297 = vector.broadcast %cst_118 : f32 to vector<64x2xf32>
    %298 = arith.mulf %297, %293 : vector<64x2xf32>
    %299 = arith.addf %287, %298 : vector<64x2xf32>
    %300 = tpu.concatenate %296, %299 in 1 : vector<64x2xf32>, vector<64x2xf32> -> vector<64x4xf32>
    %301 = vector.extract_strided_slice %206 {offsets = [0, 10], sizes = [64, 5], strides = [1, 1]} : vector<64x36xf32> to vector<64x5xf32>
    %cst_119 = arith.constant dense<0xFF800000> : vector<64xf32>
    %302 = vector.multi_reduction <maximumf>, %301, %cst_119 [1] : vector<64x5xf32> to vector<64xf32>
    %303 = vector.shape_cast %302 : vector<64xf32> to vector<64x1xf32>
    %304 = vector.broadcast %303 : vector<64x1xf32> to vector<64x5xf32>
    %305 = arith.subf %301, %304 : vector<64x5xf32>
    %306 = math.exp %305 : vector<64x5xf32>
    %cst_120 = arith.constant dense<0.000000e+00> : vector<64xf32>
    %307 = vector.multi_reduction <add>, %306, %cst_120 [1] : vector<64x5xf32> to vector<64xf32>
    %308 = vector.shape_cast %307 : vector<64xf32> to vector<64x1xf32>
    %309 = vector.broadcast %308 : vector<64x1xf32> to vector<64x5xf32>
    %310 = arith.divf %306, %309 : vector<64x5xf32>
    %311 = vector.extract_strided_slice %206 {offsets = [0, 28], sizes = [64, 4], strides = [1, 1]} : vector<64x36xf32> to vector<64x4xf32>
    %c2_121 = arith.constant 2 : index
    %c0_122 = arith.constant 0 : index
    %c0_123 = arith.constant 0 : index
    %312 = vector.load %arg12[%c2_121, %c0_122, %c0_123] : memref<4x64x4xf32, #tpu.memory_space<vmem>>, vector<1x64x4xf32>
    %313 = vector.shape_cast %312 : vector<1x64x4xf32> to vector<64x4xf32>
    %314 = vector.extract_strided_slice %311 {offsets = [0, 0], sizes = [64, 2], strides = [1, 1]} : vector<64x4xf32> to vector<64x2xf32>
    %cst_124 = arith.constant 1.000000e-01 : f32
    %315 = vector.broadcast %cst_124 : f32 to vector<64x2xf32>
    %316 = arith.mulf %314, %315 : vector<64x2xf32>
    %317 = vector.extract_strided_slice %313 {offsets = [0, 2], sizes = [64, 2], strides = [1, 1]} : vector<64x4xf32> to vector<64x2xf32>
    %318 = arith.mulf %316, %317 : vector<64x2xf32>
    %319 = vector.extract_strided_slice %313 {offsets = [0, 0], sizes = [64, 2], strides = [1, 1]} : vector<64x4xf32> to vector<64x2xf32>
    %320 = arith.addf %318, %319 : vector<64x2xf32>
    %321 = vector.extract_strided_slice %311 {offsets = [0, 2], sizes = [64, 2], strides = [1, 1]} : vector<64x4xf32> to vector<64x2xf32>
    %cst_125 = arith.constant 2.000000e-01 : f32
    %322 = vector.broadcast %cst_125 : f32 to vector<64x2xf32>
    %323 = arith.mulf %321, %322 : vector<64x2xf32>
    %324 = math.exp %323 : vector<64x2xf32>
    %325 = vector.extract_strided_slice %313 {offsets = [0, 2], sizes = [64, 2], strides = [1, 1]} : vector<64x4xf32> to vector<64x2xf32>
    %326 = arith.mulf %324, %325 : vector<64x2xf32>
    %cst_126 = arith.constant 5.000000e-01 : f32
    %327 = vector.broadcast %cst_126 : f32 to vector<64x2xf32>
    %328 = arith.mulf %327, %326 : vector<64x2xf32>
    %329 = arith.subf %320, %328 : vector<64x2xf32>
    %cst_127 = arith.constant 5.000000e-01 : f32
    %330 = vector.broadcast %cst_127 : f32 to vector<64x2xf32>
    %331 = arith.mulf %330, %326 : vector<64x2xf32>
    %332 = arith.addf %320, %331 : vector<64x2xf32>
    %333 = tpu.concatenate %329, %332 in 1 : vector<64x2xf32>, vector<64x2xf32> -> vector<64x4xf32>
    %334 = vector.extract_strided_slice %206 {offsets = [0, 15], sizes = [64, 5], strides = [1, 1]} : vector<64x36xf32> to vector<64x5xf32>
    %cst_128 = arith.constant dense<0xFF800000> : vector<64xf32>
    %335 = vector.multi_reduction <maximumf>, %334, %cst_128 [1] : vector<64x5xf32> to vector<64xf32>
    %336 = vector.shape_cast %335 : vector<64xf32> to vector<64x1xf32>
    %337 = vector.broadcast %336 : vector<64x1xf32> to vector<64x5xf32>
    %338 = arith.subf %334, %337 : vector<64x5xf32>
    %339 = math.exp %338 : vector<64x5xf32>
    %cst_129 = arith.constant dense<0.000000e+00> : vector<64xf32>
    %340 = vector.multi_reduction <add>, %339, %cst_129 [1] : vector<64x5xf32> to vector<64xf32>
    %341 = vector.shape_cast %340 : vector<64xf32> to vector<64x1xf32>
    %342 = vector.broadcast %341 : vector<64x1xf32> to vector<64x5xf32>
    %343 = arith.divf %339, %342 : vector<64x5xf32>
    %344 = vector.extract_strided_slice %206 {offsets = [0, 32], sizes = [64, 4], strides = [1, 1]} : vector<64x36xf32> to vector<64x4xf32>
    %c3 = arith.constant 3 : index
    %c0_130 = arith.constant 0 : index
    %c0_131 = arith.constant 0 : index
    %345 = vector.load %arg12[%c3, %c0_130, %c0_131] : memref<4x64x4xf32, #tpu.memory_space<vmem>>, vector<1x64x4xf32>
    %346 = vector.shape_cast %345 : vector<1x64x4xf32> to vector<64x4xf32>
    %347 = vector.extract_strided_slice %344 {offsets = [0, 0], sizes = [64, 2], strides = [1, 1]} : vector<64x4xf32> to vector<64x2xf32>
    %cst_132 = arith.constant 1.000000e-01 : f32
    %348 = vector.broadcast %cst_132 : f32 to vector<64x2xf32>
    %349 = arith.mulf %347, %348 : vector<64x2xf32>
    %350 = vector.extract_strided_slice %346 {offsets = [0, 2], sizes = [64, 2], strides = [1, 1]} : vector<64x4xf32> to vector<64x2xf32>
    %351 = arith.mulf %349, %350 : vector<64x2xf32>
    %352 = vector.extract_strided_slice %346 {offsets = [0, 0], sizes = [64, 2], strides = [1, 1]} : vector<64x4xf32> to vector<64x2xf32>
    %353 = arith.addf %351, %352 : vector<64x2xf32>
    %354 = vector.extract_strided_slice %344 {offsets = [0, 2], sizes = [64, 2], strides = [1, 1]} : vector<64x4xf32> to vector<64x2xf32>
    %cst_133 = arith.constant 2.000000e-01 : f32
    %355 = vector.broadcast %cst_133 : f32 to vector<64x2xf32>
    %356 = arith.mulf %354, %355 : vector<64x2xf32>
    %357 = math.exp %356 : vector<64x2xf32>
    %358 = vector.extract_strided_slice %346 {offsets = [0, 2], sizes = [64, 2], strides = [1, 1]} : vector<64x4xf32> to vector<64x2xf32>
    %359 = arith.mulf %357, %358 : vector<64x2xf32>
    %cst_134 = arith.constant 5.000000e-01 : f32
    %360 = vector.broadcast %cst_134 : f32 to vector<64x2xf32>
    %361 = arith.mulf %360, %359 : vector<64x2xf32>
    %362 = arith.subf %353, %361 : vector<64x2xf32>
    %cst_135 = arith.constant 5.000000e-01 : f32
    %363 = vector.broadcast %cst_135 : f32 to vector<64x2xf32>
    %364 = arith.mulf %363, %359 : vector<64x2xf32>
    %365 = arith.addf %353, %364 : vector<64x2xf32>
    %366 = tpu.concatenate %362, %365 in 1 : vector<64x2xf32>, vector<64x2xf32> -> vector<64x4xf32>
    %367 = tpu.concatenate %244, %277, %310, %343 in 1 : vector<64x5xf32>, vector<64x5xf32>, vector<64x5xf32>, vector<64x5xf32> -> vector<64x20xf32>
    %368 = tpu.concatenate %267, %300, %333, %366 in 1 : vector<64x4xf32>, vector<64x4xf32>, vector<64x4xf32>, vector<64x4xf32> -> vector<64x16xf32>
    %369 = vector.extract_strided_slice %234 {offsets = [0, 0], sizes = [16, 5], strides = [1, 1]} : vector<16x36xf32> to vector<16x5xf32>
    %cst_136 = arith.constant dense<0xFF800000> : vector<16xf32>
    %370 = vector.multi_reduction <maximumf>, %369, %cst_136 [1] : vector<16x5xf32> to vector<16xf32>
    %371 = vector.shape_cast %370 : vector<16xf32> to vector<16x1xf32>
    %372 = vector.broadcast %371 : vector<16x1xf32> to vector<16x5xf32>
    %373 = arith.subf %369, %372 : vector<16x5xf32>
    %374 = math.exp %373 : vector<16x5xf32>
    %cst_137 = arith.constant dense<0.000000e+00> : vector<16xf32>
    %375 = vector.multi_reduction <add>, %374, %cst_137 [1] : vector<16x5xf32> to vector<16xf32>
    %376 = vector.shape_cast %375 : vector<16xf32> to vector<16x1xf32>
    %377 = vector.broadcast %376 : vector<16x1xf32> to vector<16x5xf32>
    %378 = arith.divf %374, %377 : vector<16x5xf32>
    %379 = vector.extract_strided_slice %234 {offsets = [0, 20], sizes = [16, 4], strides = [1, 1]} : vector<16x36xf32> to vector<16x4xf32>
    %c0_138 = arith.constant 0 : index
    %c0_139 = arith.constant 0 : index
    %c0_140 = arith.constant 0 : index
    %380 = vector.load %arg13[%c0_138, %c0_139, %c0_140] : memref<4x16x4xf32, #tpu.memory_space<vmem>>, vector<1x16x4xf32>
    %381 = vector.shape_cast %380 : vector<1x16x4xf32> to vector<16x4xf32>
    %382 = vector.extract_strided_slice %379 {offsets = [0, 0], sizes = [16, 2], strides = [1, 1]} : vector<16x4xf32> to vector<16x2xf32>
    %cst_141 = arith.constant 1.000000e-01 : f32
    %383 = vector.broadcast %cst_141 : f32 to vector<16x2xf32>
    %384 = arith.mulf %382, %383 : vector<16x2xf32>
    %385 = vector.extract_strided_slice %381 {offsets = [0, 2], sizes = [16, 2], strides = [1, 1]} : vector<16x4xf32> to vector<16x2xf32>
    %386 = arith.mulf %384, %385 : vector<16x2xf32>
    %387 = vector.extract_strided_slice %381 {offsets = [0, 0], sizes = [16, 2], strides = [1, 1]} : vector<16x4xf32> to vector<16x2xf32>
    %388 = arith.addf %386, %387 : vector<16x2xf32>
    %389 = vector.extract_strided_slice %379 {offsets = [0, 2], sizes = [16, 2], strides = [1, 1]} : vector<16x4xf32> to vector<16x2xf32>
    %cst_142 = arith.constant 2.000000e-01 : f32
    %390 = vector.broadcast %cst_142 : f32 to vector<16x2xf32>
    %391 = arith.mulf %389, %390 : vector<16x2xf32>
    %392 = math.exp %391 : vector<16x2xf32>
    %393 = vector.extract_strided_slice %381 {offsets = [0, 2], sizes = [16, 2], strides = [1, 1]} : vector<16x4xf32> to vector<16x2xf32>
    %394 = arith.mulf %392, %393 : vector<16x2xf32>
    %cst_143 = arith.constant 5.000000e-01 : f32
    %395 = vector.broadcast %cst_143 : f32 to vector<16x2xf32>
    %396 = arith.mulf %395, %394 : vector<16x2xf32>
    %397 = arith.subf %388, %396 : vector<16x2xf32>
    %cst_144 = arith.constant 5.000000e-01 : f32
    %398 = vector.broadcast %cst_144 : f32 to vector<16x2xf32>
    %399 = arith.mulf %398, %394 : vector<16x2xf32>
    %400 = arith.addf %388, %399 : vector<16x2xf32>
    %401 = tpu.concatenate %397, %400 in 1 : vector<16x2xf32>, vector<16x2xf32> -> vector<16x4xf32>
    %402 = vector.extract_strided_slice %234 {offsets = [0, 5], sizes = [16, 5], strides = [1, 1]} : vector<16x36xf32> to vector<16x5xf32>
    %cst_145 = arith.constant dense<0xFF800000> : vector<16xf32>
    %403 = vector.multi_reduction <maximumf>, %402, %cst_145 [1] : vector<16x5xf32> to vector<16xf32>
    %404 = vector.shape_cast %403 : vector<16xf32> to vector<16x1xf32>
    %405 = vector.broadcast %404 : vector<16x1xf32> to vector<16x5xf32>
    %406 = arith.subf %402, %405 : vector<16x5xf32>
    %407 = math.exp %406 : vector<16x5xf32>
    %cst_146 = arith.constant dense<0.000000e+00> : vector<16xf32>
    %408 = vector.multi_reduction <add>, %407, %cst_146 [1] : vector<16x5xf32> to vector<16xf32>
    %409 = vector.shape_cast %408 : vector<16xf32> to vector<16x1xf32>
    %410 = vector.broadcast %409 : vector<16x1xf32> to vector<16x5xf32>
    %411 = arith.divf %407, %410 : vector<16x5xf32>
    %412 = vector.extract_strided_slice %234 {offsets = [0, 24], sizes = [16, 4], strides = [1, 1]} : vector<16x36xf32> to vector<16x4xf32>
    %c1_147 = arith.constant 1 : index
    %c0_148 = arith.constant 0 : index
    %c0_149 = arith.constant 0 : index
    %413 = vector.load %arg13[%c1_147, %c0_148, %c0_149] : memref<4x16x4xf32, #tpu.memory_space<vmem>>, vector<1x16x4xf32>
    %414 = vector.shape_cast %413 : vector<1x16x4xf32> to vector<16x4xf32>
    %415 = vector.extract_strided_slice %412 {offsets = [0, 0], sizes = [16, 2], strides = [1, 1]} : vector<16x4xf32> to vector<16x2xf32>
    %cst_150 = arith.constant 1.000000e-01 : f32
    %416 = vector.broadcast %cst_150 : f32 to vector<16x2xf32>
    %417 = arith.mulf %415, %416 : vector<16x2xf32>
    %418 = vector.extract_strided_slice %414 {offsets = [0, 2], sizes = [16, 2], strides = [1, 1]} : vector<16x4xf32> to vector<16x2xf32>
    %419 = arith.mulf %417, %418 : vector<16x2xf32>
    %420 = vector.extract_strided_slice %414 {offsets = [0, 0], sizes = [16, 2], strides = [1, 1]} : vector<16x4xf32> to vector<16x2xf32>
    %421 = arith.addf %419, %420 : vector<16x2xf32>
    %422 = vector.extract_strided_slice %412 {offsets = [0, 2], sizes = [16, 2], strides = [1, 1]} : vector<16x4xf32> to vector<16x2xf32>
    %cst_151 = arith.constant 2.000000e-01 : f32
    %423 = vector.broadcast %cst_151 : f32 to vector<16x2xf32>
    %424 = arith.mulf %422, %423 : vector<16x2xf32>
    %425 = math.exp %424 : vector<16x2xf32>
    %426 = vector.extract_strided_slice %414 {offsets = [0, 2], sizes = [16, 2], strides = [1, 1]} : vector<16x4xf32> to vector<16x2xf32>
    %427 = arith.mulf %425, %426 : vector<16x2xf32>
    %cst_152 = arith.constant 5.000000e-01 : f32
    %428 = vector.broadcast %cst_152 : f32 to vector<16x2xf32>
    %429 = arith.mulf %428, %427 : vector<16x2xf32>
    %430 = arith.subf %421, %429 : vector<16x2xf32>
    %cst_153 = arith.constant 5.000000e-01 : f32
    %431 = vector.broadcast %cst_153 : f32 to vector<16x2xf32>
    %432 = arith.mulf %431, %427 : vector<16x2xf32>
    %433 = arith.addf %421, %432 : vector<16x2xf32>
    %434 = tpu.concatenate %430, %433 in 1 : vector<16x2xf32>, vector<16x2xf32> -> vector<16x4xf32>
    %435 = vector.extract_strided_slice %234 {offsets = [0, 10], sizes = [16, 5], strides = [1, 1]} : vector<16x36xf32> to vector<16x5xf32>
    %cst_154 = arith.constant dense<0xFF800000> : vector<16xf32>
    %436 = vector.multi_reduction <maximumf>, %435, %cst_154 [1] : vector<16x5xf32> to vector<16xf32>
    %437 = vector.shape_cast %436 : vector<16xf32> to vector<16x1xf32>
    %438 = vector.broadcast %437 : vector<16x1xf32> to vector<16x5xf32>
    %439 = arith.subf %435, %438 : vector<16x5xf32>
    %440 = math.exp %439 : vector<16x5xf32>
    %cst_155 = arith.constant dense<0.000000e+00> : vector<16xf32>
    %441 = vector.multi_reduction <add>, %440, %cst_155 [1] : vector<16x5xf32> to vector<16xf32>
    %442 = vector.shape_cast %441 : vector<16xf32> to vector<16x1xf32>
    %443 = vector.broadcast %442 : vector<16x1xf32> to vector<16x5xf32>
    %444 = arith.divf %440, %443 : vector<16x5xf32>
    %445 = vector.extract_strided_slice %234 {offsets = [0, 28], sizes = [16, 4], strides = [1, 1]} : vector<16x36xf32> to vector<16x4xf32>
    %c2_156 = arith.constant 2 : index
    %c0_157 = arith.constant 0 : index
    %c0_158 = arith.constant 0 : index
    %446 = vector.load %arg13[%c2_156, %c0_157, %c0_158] : memref<4x16x4xf32, #tpu.memory_space<vmem>>, vector<1x16x4xf32>
    %447 = vector.shape_cast %446 : vector<1x16x4xf32> to vector<16x4xf32>
    %448 = vector.extract_strided_slice %445 {offsets = [0, 0], sizes = [16, 2], strides = [1, 1]} : vector<16x4xf32> to vector<16x2xf32>
    %cst_159 = arith.constant 1.000000e-01 : f32
    %449 = vector.broadcast %cst_159 : f32 to vector<16x2xf32>
    %450 = arith.mulf %448, %449 : vector<16x2xf32>
    %451 = vector.extract_strided_slice %447 {offsets = [0, 2], sizes = [16, 2], strides = [1, 1]} : vector<16x4xf32> to vector<16x2xf32>
    %452 = arith.mulf %450, %451 : vector<16x2xf32>
    %453 = vector.extract_strided_slice %447 {offsets = [0, 0], sizes = [16, 2], strides = [1, 1]} : vector<16x4xf32> to vector<16x2xf32>
    %454 = arith.addf %452, %453 : vector<16x2xf32>
    %455 = vector.extract_strided_slice %445 {offsets = [0, 2], sizes = [16, 2], strides = [1, 1]} : vector<16x4xf32> to vector<16x2xf32>
    %cst_160 = arith.constant 2.000000e-01 : f32
    %456 = vector.broadcast %cst_160 : f32 to vector<16x2xf32>
    %457 = arith.mulf %455, %456 : vector<16x2xf32>
    %458 = math.exp %457 : vector<16x2xf32>
    %459 = vector.extract_strided_slice %447 {offsets = [0, 2], sizes = [16, 2], strides = [1, 1]} : vector<16x4xf32> to vector<16x2xf32>
    %460 = arith.mulf %458, %459 : vector<16x2xf32>
    %cst_161 = arith.constant 5.000000e-01 : f32
    %461 = vector.broadcast %cst_161 : f32 to vector<16x2xf32>
    %462 = arith.mulf %461, %460 : vector<16x2xf32>
    %463 = arith.subf %454, %462 : vector<16x2xf32>
    %cst_162 = arith.constant 5.000000e-01 : f32
    %464 = vector.broadcast %cst_162 : f32 to vector<16x2xf32>
    %465 = arith.mulf %464, %460 : vector<16x2xf32>
    %466 = arith.addf %454, %465 : vector<16x2xf32>
    %467 = tpu.concatenate %463, %466 in 1 : vector<16x2xf32>, vector<16x2xf32> -> vector<16x4xf32>
    %468 = vector.extract_strided_slice %234 {offsets = [0, 15], sizes = [16, 5], strides = [1, 1]} : vector<16x36xf32> to vector<16x5xf32>
    %cst_163 = arith.constant dense<0xFF800000> : vector<16xf32>
    %469 = vector.multi_reduction <maximumf>, %468, %cst_163 [1] : vector<16x5xf32> to vector<16xf32>
    %470 = vector.shape_cast %469 : vector<16xf32> to vector<16x1xf32>
    %471 = vector.broadcast %470 : vector<16x1xf32> to vector<16x5xf32>
    %472 = arith.subf %468, %471 : vector<16x5xf32>
    %473 = math.exp %472 : vector<16x5xf32>
    %cst_164 = arith.constant dense<0.000000e+00> : vector<16xf32>
    %474 = vector.multi_reduction <add>, %473, %cst_164 [1] : vector<16x5xf32> to vector<16xf32>
    %475 = vector.shape_cast %474 : vector<16xf32> to vector<16x1xf32>
    %476 = vector.broadcast %475 : vector<16x1xf32> to vector<16x5xf32>
    %477 = arith.divf %473, %476 : vector<16x5xf32>
    %478 = vector.extract_strided_slice %234 {offsets = [0, 32], sizes = [16, 4], strides = [1, 1]} : vector<16x36xf32> to vector<16x4xf32>
    %c3_165 = arith.constant 3 : index
    %c0_166 = arith.constant 0 : index
    %c0_167 = arith.constant 0 : index
    %479 = vector.load %arg13[%c3_165, %c0_166, %c0_167] : memref<4x16x4xf32, #tpu.memory_space<vmem>>, vector<1x16x4xf32>
    %480 = vector.shape_cast %479 : vector<1x16x4xf32> to vector<16x4xf32>
    %481 = vector.extract_strided_slice %478 {offsets = [0, 0], sizes = [16, 2], strides = [1, 1]} : vector<16x4xf32> to vector<16x2xf32>
    %cst_168 = arith.constant 1.000000e-01 : f32
    %482 = vector.broadcast %cst_168 : f32 to vector<16x2xf32>
    %483 = arith.mulf %481, %482 : vector<16x2xf32>
    %484 = vector.extract_strided_slice %480 {offsets = [0, 2], sizes = [16, 2], strides = [1, 1]} : vector<16x4xf32> to vector<16x2xf32>
    %485 = arith.mulf %483, %484 : vector<16x2xf32>
    %486 = vector.extract_strided_slice %480 {offsets = [0, 0], sizes = [16, 2], strides = [1, 1]} : vector<16x4xf32> to vector<16x2xf32>
    %487 = arith.addf %485, %486 : vector<16x2xf32>
    %488 = vector.extract_strided_slice %478 {offsets = [0, 2], sizes = [16, 2], strides = [1, 1]} : vector<16x4xf32> to vector<16x2xf32>
    %cst_169 = arith.constant 2.000000e-01 : f32
    %489 = vector.broadcast %cst_169 : f32 to vector<16x2xf32>
    %490 = arith.mulf %488, %489 : vector<16x2xf32>
    %491 = math.exp %490 : vector<16x2xf32>
    %492 = vector.extract_strided_slice %480 {offsets = [0, 2], sizes = [16, 2], strides = [1, 1]} : vector<16x4xf32> to vector<16x2xf32>
    %493 = arith.mulf %491, %492 : vector<16x2xf32>
    %cst_170 = arith.constant 5.000000e-01 : f32
    %494 = vector.broadcast %cst_170 : f32 to vector<16x2xf32>
    %495 = arith.mulf %494, %493 : vector<16x2xf32>
    %496 = arith.subf %487, %495 : vector<16x2xf32>
    %cst_171 = arith.constant 5.000000e-01 : f32
    %497 = vector.broadcast %cst_171 : f32 to vector<16x2xf32>
    %498 = arith.mulf %497, %493 : vector<16x2xf32>
    %499 = arith.addf %487, %498 : vector<16x2xf32>
    %500 = tpu.concatenate %496, %499 in 1 : vector<16x2xf32>, vector<16x2xf32> -> vector<16x4xf32>
    %501 = tpu.concatenate %378, %411, %444, %477 in 1 : vector<16x5xf32>, vector<16x5xf32>, vector<16x5xf32>, vector<16x5xf32> -> vector<16x20xf32>
    %502 = tpu.concatenate %401, %434, %467, %500 in 1 : vector<16x4xf32>, vector<16x4xf32>, vector<16x4xf32>, vector<16x4xf32> -> vector<16x16xf32>
    %c0_172 = arith.constant 0 : index
    %c0_173 = arith.constant 0 : index
    %c0_174 = arith.constant 0 : index
    %503 = vector.load %arg14[%c0_172, %c0_173, %c0_174] : memref<1x80x20xf32, #tpu.memory_space<vmem>>, vector<1x64x20xf32>
    %504 = vector.shape_cast %503 : vector<1x64x20xf32> to vector<64x20xf32>
    %505 = vector.shape_cast %367 : vector<64x20xf32> to vector<1x64x20xf32>
    tpu.vector_store %arg14[%c0_172, %c0_173, %c0_174], %505 {strides = array<i32>} : memref<1x80x20xf32, #tpu.memory_space<vmem>>, vector<1x64x20xf32>,
    %c0_175 = arith.constant 0 : index
    %c64 = arith.constant 64 : index
    %c0_176 = arith.constant 0 : index
    %506 = vector.load %arg14[%c0_175, %c64, %c0_176] : memref<1x80x20xf32, #tpu.memory_space<vmem>>, vector<1x16x20xf32>
    %507 = vector.shape_cast %506 : vector<1x16x20xf32> to vector<16x20xf32>
    %508 = vector.shape_cast %501 : vector<16x20xf32> to vector<1x16x20xf32>
    tpu.vector_store %arg14[%c0_175, %c64, %c0_176], %508 {strides = array<i32>} : memref<1x80x20xf32, #tpu.memory_space<vmem>>, vector<1x16x20xf32>,
    %c0_177 = arith.constant 0 : index
    %c0_178 = arith.constant 0 : index
    %c0_179 = arith.constant 0 : index
    %509 = vector.load %arg15[%c0_177, %c0_178, %c0_179] : memref<1x80x16xf32, #tpu.memory_space<vmem>>, vector<1x64x16xf32>
    %510 = vector.shape_cast %509 : vector<1x64x16xf32> to vector<64x16xf32>
    %511 = vector.shape_cast %368 : vector<64x16xf32> to vector<1x64x16xf32>
    tpu.vector_store %arg15[%c0_177, %c0_178, %c0_179], %511 {strides = array<i32>} : memref<1x80x16xf32, #tpu.memory_space<vmem>>, vector<1x64x16xf32>,
    %c0_180 = arith.constant 0 : index
    %c64_181 = arith.constant 64 : index
    %c0_182 = arith.constant 0 : index
    %512 = vector.load %arg15[%c0_180, %c64_181, %c0_182] : memref<1x80x16xf32, #tpu.memory_space<vmem>>, vector<1x16x16xf32>
    %513 = vector.shape_cast %512 : vector<1x16x16xf32> to vector<16x16xf32>
    %514 = vector.shape_cast %502 : vector<16x16xf32> to vector<1x16x16xf32>
    tpu.vector_store %arg15[%c0_180, %c64_181, %c0_182], %514 {strides = array<i32>} : memref<1x80x16xf32, #tpu.memory_space<vmem>>, vector<1x16x16xf32>,
    return
  }
  func.func @transform_0(%arg0: i32) -> (i32, i32, i32, i32) {
    %c0_i32 = arith.constant 0 : i32
    %c0_i32_0 = arith.constant 0 : i32
    %c0_i32_1 = arith.constant 0 : i32
    %c0_i32_2 = arith.constant 0 : i32
    return %arg0, %c0_i32, %c0_i32_0, %c0_i32_1 : i32, i32, i32, i32
  }
  func.func @transform_1(%arg0: i32) -> (i32, i32) {
    %c0_i32 = arith.constant 0 : i32
    %c0_i32_0 = arith.constant 0 : i32
    %c0_i32_1 = arith.constant 0 : i32
    return %c0_i32, %c0_i32_0 : i32, i32
  }
  func.func @transform_2(%arg0: i32) -> (i32, i32) {
    %c0_i32 = arith.constant 0 : i32
    %c0_i32_0 = arith.constant 0 : i32
    %c0_i32_1 = arith.constant 0 : i32
    return %c0_i32, %c0_i32_0 : i32, i32
  }
  func.func @transform_3(%arg0: i32) -> (i32, i32) {
    %c0_i32 = arith.constant 0 : i32
    %c0_i32_0 = arith.constant 0 : i32
    %c0_i32_1 = arith.constant 0 : i32
    return %c0_i32, %c0_i32_0 : i32, i32
  }
  func.func @transform_4(%arg0: i32) -> (i32, i32) {
    %c0_i32 = arith.constant 0 : i32
    %c0_i32_0 = arith.constant 0 : i32
    %c0_i32_1 = arith.constant 0 : i32
    return %c0_i32, %c0_i32_0 : i32, i32
  }
  func.func @transform_5(%arg0: i32) -> (i32, i32) {
    %c0_i32 = arith.constant 0 : i32
    %c0_i32_0 = arith.constant 0 : i32
    %c0_i32_1 = arith.constant 0 : i32
    return %c0_i32, %c0_i32_0 : i32, i32
  }
  func.func @transform_6(%arg0: i32) -> (i32, i32) {
    %c0_i32 = arith.constant 0 : i32
    %c0_i32_0 = arith.constant 0 : i32
    %c0_i32_1 = arith.constant 0 : i32
    return %c0_i32, %c0_i32_0 : i32, i32
  }
  func.func @transform_7(%arg0: i32) -> (i32, i32) {
    %c0_i32 = arith.constant 0 : i32
    %c0_i32_0 = arith.constant 0 : i32
    %c0_i32_1 = arith.constant 0 : i32
    return %c0_i32, %c0_i32_0 : i32, i32
  }
  func.func @transform_8(%arg0: i32) -> (i32, i32) {
    %c0_i32 = arith.constant 0 : i32
    %c0_i32_0 = arith.constant 0 : i32
    %c0_i32_1 = arith.constant 0 : i32
    return %c0_i32, %c0_i32_0 : i32, i32
  }
  func.func @transform_9(%arg0: i32) -> (i32, i32) {
    %c0_i32 = arith.constant 0 : i32
    %c0_i32_0 = arith.constant 0 : i32
    %c0_i32_1 = arith.constant 0 : i32
    return %c0_i32, %c0_i32_0 : i32, i32
  }
  func.func @transform_10(%arg0: i32) -> (i32, i32) {
    %c0_i32 = arith.constant 0 : i32
    %c0_i32_0 = arith.constant 0 : i32
    %c0_i32_1 = arith.constant 0 : i32
    return %c0_i32, %c0_i32_0 : i32, i32
  }
  func.func @transform_11(%arg0: i32) -> (i32, i32, i32) {
    %c0_i32 = arith.constant 0 : i32
    %c0_i32_0 = arith.constant 0 : i32
    %c0_i32_1 = arith.constant 0 : i32
    %c0_i32_2 = arith.constant 0 : i32
    return %c0_i32, %c0_i32_0, %c0_i32_1 : i32, i32, i32
  }
  func.func @transform_12(%arg0: i32) -> (i32, i32, i32) {
    %c0_i32 = arith.constant 0 : i32
    %c0_i32_0 = arith.constant 0 : i32
    %c0_i32_1 = arith.constant 0 : i32
    %c0_i32_2 = arith.constant 0 : i32
    return %c0_i32, %c0_i32_0, %c0_i32_1 : i32, i32, i32
  }
  func.func @transform_13(%arg0: i32) -> (i32, i32, i32) {
    %c0_i32 = arith.constant 0 : i32
    %c0_i32_0 = arith.constant 0 : i32
    %c0_i32_1 = arith.constant 0 : i32
    return %arg0, %c0_i32, %c0_i32_0 : i32, i32, i32
  }
  func.func @transform_14(%arg0: i32) -> (i32, i32, i32) {
    %c0_i32 = arith.constant 0 : i32
    %c0_i32_0 = arith.constant 0 : i32
    %c0_i32_1 = arith.constant 0 : i32
    return %arg0, %c0_i32, %c0_i32_0 : i32, i32, i32
  }
}

</mosaic_0001>

<llo_original>
// kernel: tpu_custom_call.1
$region0: #{tpu_custom_call.1}
  #allocation0 [shape = 'u32[]', space=smem, size = 0x4, offset = 0x4, fixed_abs, tag = 'smem constant byte address 0x4 - core index']
  #allocation1 [shape = 'u32[144,128]{1,0:T(1,128)}', space=vmem, size = 0x12000, scoped, tag = 'internal scratch']
  #allocation2 [shape = 'f32[18,18,3]{2,1,0:T(8,128)}', space=vmem, size = 0x36000, scoped, tag = 'scratch operand']
  #allocation3 [shape = 'f32[18,18,16]{2,1,0:T(8,128)}', space=vmem, size = 0x36000, scoped, tag = 'scratch operand']
  #allocation4 [shape = 'f32[10,10,32]{2,1,0:T(8,128)}', space=vmem, size = 0x14000, scoped, tag = 'scratch operand']
  #allocation5 [shape = 'f32[6,6,32]{2,1,0:T(8,128)}', space=vmem, size = 0x6000, scoped, tag = 'scratch operand']
  %s0 = inlined_call_operand.vmem [shape: f32[2,16,16,3], index: 0, kind: input, shape index: {}]
  %s1 = inlined_call_operand.vmem [shape: bf16[27,16], index: 1, kind: input, shape index: {}]
  %s2 = inlined_call_operand.vmem [shape: f32[1,16], index: 2, kind: input, shape index: {}]
  %s3 = inlined_call_operand.vmem [shape: bf16[144,32], index: 3, kind: input, shape index: {}]
  %s4 = inlined_call_operand.vmem [shape: f32[1,32], index: 4, kind: input, shape index: {}]
  %s5 = inlined_call_operand.vmem [shape: bf16[288,32], index: 5, kind: input, shape index: {}]
  %s6 = inlined_call_operand.vmem [shape: f32[1,32], index: 6, kind: input, shape index: {}]
  %s7 = inlined_call_operand.vmem [shape: bf16[288,36], index: 7, kind: input, shape index: {}]
  %s8 = inlined_call_operand.vmem [shape: f32[1,36], index: 8, kind: input, shape index: {}]
  %s9 = inlined_call_operand.vmem [shape: bf16[288,36], index: 9, kind: input, shape index: {}]
  %s10 = inlined_call_operand.vmem [shape: f32[1,36], index: 10, kind: input, shape index: {}]
  %s11 = inlined_call_operand.vmem [shape: f32[4,64,4], index: 11, kind: input, shape index: {}]
  %s12 = inlined_call_operand.vmem [shape: f32[4,16,4], index: 12, kind: input, shape index: {}]
  %s13 = inlined_call_operand.vmem [shape: f32[2,80,20], index: 13, kind: output, shape index: {0}]
  %s14 = inlined_call_operand.vmem [shape: f32[2,80,16], index: 14, kind: output, shape index: {1}]
  %15 = xla_tuple %s13, %s14
  %s16 = sld [smem:[#allocation0]]
  $region93: #{tpu_custom_call.1} parent=0
    _
  %s18 = ssub.s32 1, %s16
  %s19 = scalar_select 0, %s18, %s16
  loop: start=0, step=1, limit=4
  $region2: #{tpu_custom_call.1} parent=0 // loop_pre_header
    _
  $region3: #{tpu_custom_call.1} parent=0 // loop_header
    %s21 = sphi 0, %s25
    %p22 = scmp.ge.s32.totalorder %s21, 4
    %s31 = sphi 0, %s33
    %s34 = sphi 0, %s31
    %s35 = sphi 0, %s34
    %s51 = sphi 0, %s35
    %s55 = sphi 0, %s55
    %s57 = sphi 0, %s55
    %s58 = sphi 0, %s57
    %s72 = sphi 0, %s58
    %s76 = sphi 0, %s76
    %s78 = sphi 0, %s76
    %s79 = sphi 0, %s78
    %s93 = sphi 0, %s79
    %s97 = sphi 0, %s97
    %s99 = sphi 0, %s97
    %s100 = sphi 0, %s99
    %s114 = sphi 0, %s100
    %s118 = sphi 0, %s118
    %s120 = sphi 0, %s118
    %s121 = sphi 0, %s120
    %s135 = sphi 0, %s121
    %s139 = sphi 0, %s139
    %s141 = sphi 0, %s139
    %s142 = sphi 0, %s141
    %s156 = sphi 0, %s142
    %s160 = sphi 0, %s160
    %s162 = sphi 0, %s160
    %s163 = sphi 0, %s162
    %s177 = sphi 0, %s163
    %s181 = sphi 0, %s181
    %s183 = sphi 0, %s181
    %s184 = sphi 0, %s183
    %s198 = sphi 0, %s184
    %s202 = sphi 0, %s202
    %s204 = sphi 0, %s202
    %s205 = sphi 0, %s204
    %s219 = sphi 0, %s205
    %s223 = sphi 0, %s223
    %s225 = sphi 0, %s223
    %s226 = sphi 0, %s225
    %s240 = sphi 0, %s226
    %s244 = sphi 0, %s244
    %s246 = sphi 0, %s244
    %s247 = sphi 0, %s246
    %s261 = sphi 0, %s247
    %s265 = sphi 0, %s265
    %s267 = sphi 0, %s265
    %s268 = sphi 0, %s267
    %s282 = sphi 0, %s268
    %s286 = sphi 0, %s286
    %s288 = sphi 0, %s286
    %s289 = sphi 0, %s288
    %s303 = sphi 0, %s289
    %s309 = sphi 0, %s311
    %s312 = sphi 0, %s309
    %s313 = sphi 0, %s312
    %s329 = sphi 0, %s313
    %s335 = sphi 0, %s337
    %s338 = sphi 0, %s335
    %s339 = sphi 0, %s338
    %s355 = sphi 0, %s339
  $region4: #{tpu_custom_call.1} parent=0 // loop_header_branch
    %24 = sbr.rel (%p22) target = $region8
  $region5: #{tpu_custom_call.1} parent=0 // loop_body
    %s26 = ssub.s32 %s21, 1
    %s27 = ssub.s32 %s21, 2
    %s28 = sadd.s32 %s21, 1
    %s29 = ssub.s32 %s21, %s28
    %p30 = scmp.eq.s32.totalorder %s29, 0
    %s32 = sadd.s32 %s31, 1
    %s33 = scalar_select %p30, %s31, %s32
    %p36 = pneg %p30
    %p37 = scmp.eq.s32.totalorder %s21, 1
    %p38 = por %p36, %p37
    %p39 = scmp.ne.s32.totalorder %s31, %s34
    %p40 = scmp.eq.s32.totalorder %s21, 0
    %p41 = por %p39, %p40
    %p42 = scmp.ne.s32.totalorder %s31, %s34
    %p43 = scmp.eq.s32.totalorder %s26, 1
    %p44 = por %p42, %p43
    %p45 = scmp.ne.s32.totalorder %s34, %s35
    %p46 = scmp.eq.s32.totalorder %s26, 0
    %p47 = por %p45, %p46
    %p48 = scmp.ne.s32.totalorder %s34, %s35
    %p49 = scmp.eq.s32.totalorder %s27, 1
    %p50 = por %p48, %p49
    %p52 = scmp.ne.s32.totalorder %s35, %s51
    %p53 = scmp.eq.s32.totalorder %s27, 0
    %p54 = por %p52, %p53
    %s56 = sadd.s32 %s55, 1
    %p59 = scmp.eq.s32.totalorder %s21, 1
    %p60 = scmp.ne.s32.totalorder %s55, %s57
    %p61 = scmp.eq.s32.totalorder %s21, 0
    %p62 = por %p60, %p61
    %p63 = scmp.ne.s32.totalorder %s55, %s57
    %p64 = scmp.eq.s32.totalorder %s26, 1
    %p65 = por %p63, %p64
    %p66 = scmp.ne.s32.totalorder %s57, %s58
    %p67 = scmp.eq.s32.totalorder %s26, 0
    %p68 = por %p66, %p67
    %p69 = scmp.ne.s32.totalorder %s57, %s58
    %p70 = scmp.eq.s32.totalorder %s27, 1
    %p71 = por %p69, %p70
    %p73 = scmp.ne.s32.totalorder %s58, %s72
    %p74 = scmp.eq.s32.totalorder %s27, 0
    %p75 = por %p73, %p74
    %s77 = sadd.s32 %s76, 1
    %p80 = scmp.eq.s32.totalorder %s21, 1
    %p81 = scmp.ne.s32.totalorder %s76, %s78
    %p82 = scmp.eq.s32.totalorder %s21, 0
    %p83 = por %p81, %p82
    %p84 = scmp.ne.s32.totalorder %s76, %s78
    %p85 = scmp.eq.s32.totalorder %s26, 1
    %p86 = por %p84, %p85
    %p87 = scmp.ne.s32.totalorder %s78, %s79
    %p88 = scmp.eq.s32.totalorder %s26, 0
    %p89 = por %p87, %p88
    %p90 = scmp.ne.s32.totalorder %s78, %s79
    %p91 = scmp.eq.s32.totalorder %s27, 1
    %p92 = por %p90, %p91
    %p94 = scmp.ne.s32.totalorder %s79, %s93
    %p95 = scmp.eq.s32.totalorder %s27, 0
    %p96 = por %p94, %p95
    %s98 = sadd.s32 %s97, 1
    %p101 = scmp.eq.s32.totalorder %s21, 1
    %p102 = scmp.ne.s32.totalorder %s97, %s99
    %p103 = scmp.eq.s32.totalorder %s21, 0
    %p104 = por %p102, %p103
    %p105 = scmp.ne.s32.totalorder %s97, %s99
    %p106 = scmp.eq.s32.totalorder %s26, 1
    %p107 = por %p105, %p106
    %p108 = scmp.ne.s32.totalorder %s99, %s100
    %p109 = scmp.eq.s32.totalorder %s26, 0
    %p110 = por %p108, %p109
    %p111 = scmp.ne.s32.totalorder %s99, %s100
    %p112 = scmp.eq.s32.totalorder %s27, 1
    %p113 = por %p111, %p112
    %p115 = scmp.ne.s32.totalorder %s100, %s114
    %p116 = scmp.eq.s32.totalorder %s27, 0
    %p117 = por %p115, %p116
    %s119 = sadd.s32 %s118, 1
    %p122 = scmp.eq.s32.totalorder %s21, 1
    %p123 = scmp.ne.s32.totalorder %s118, %s120
    %p124 = scmp.eq.s32.totalorder %s21, 0
    %p125 = por %p123, %p124
    %p126 = scmp.ne.s32.totalorder %s118, %s120
    %p127 = scmp.eq.s32.totalorder %s26, 1
    %p128 = por %p126, %p127
    %p129 = scmp.ne.s32.totalorder %s120, %s121
    %p130 = scmp.eq.s32.totalorder %s26, 0
    %p131 = por %p129, %p130
    %p132 = scmp.ne.s32.totalorder %s120, %s121
    %p133 = scmp.eq.s32.totalorder %s27, 1
    %p134 = por %p132, %p133
    %p136 = scmp.ne.s32.totalorder %s121, %s135
    %p137 = scmp.eq.s32.totalorder %s27, 0
    %p138 = por %p136, %p137
    %s140 = sadd.s32 %s139, 1
    %p143 = scmp.eq.s32.totalorder %s21, 1
    %p144 = scmp.ne.s32.totalorder %s139, %s141
    %p145 = scmp.eq.s32.totalorder %s21, 0
    %p146 = por %p144, %p145
    %p147 = scmp.ne.s32.totalorder %s139, %s141
    %p148 = scmp.eq.s32.totalorder %s26, 1
    %p149 = por %p147, %p148
    %p150 = scmp.ne.s32.totalorder %s141, %s142
    %p151 = scmp.eq.s32.totalorder %s26, 0
    %p152 = por %p150, %p151
    %p153 = scmp.ne.s32.totalorder %s141, %s142
    %p154 = scmp.eq.s32.totalorder %s27, 1
    %p155 = por %p153, %p154
    %p157 = scmp.ne.s32.totalorder %s142, %s156
    %p158 = scmp.eq.s32.totalorder %s27, 0
    %p159 = por %p157, %p158
    %s161 = sadd.s32 %s160, 1
    %p164 = scmp.eq.s32.totalorder %s21, 1
    %p165 = scmp.ne.s32.totalorder %s160, %s162
    %p166 = scmp.eq.s32.totalorder %s21, 0
    %p167 = por %p165, %p166
    %p168 = scmp.ne.s32.totalorder %s160, %s162
    %p169 = scmp.eq.s32.totalorder %s26, 1
    %p170 = por %p168, %p169
    %p171 = scmp.ne.s32.totalorder %s162, %s163
    %p172 = scmp.eq.s32.totalorder %s26, 0
    %p173 = por %p171, %p172
    %p174 = scmp.ne.s32.totalorder %s162, %s163
    %p175 = scmp.eq.s32.totalorder %s27, 1
    %p176 = por %p174, %p175
    %p178 = scmp.ne.s32.totalorder %s163, %s177
    %p179 = scmp.eq.s32.totalorder %s27, 0
    %p180 = por %p178, %p179
    %s182 = sadd.s32 %s181, 1
    %p185 = scmp.eq.s32.totalorder %s21, 1
    %p186 = scmp.ne.s32.totalorder %s181, %s183
    %p187 = scmp.eq.s32.totalorder %s21, 0
    %p188 = por %p186, %p187
    %p189 = scmp.ne.s32.totalorder %s181, %s183
    %p190 = scmp.eq.s32.totalorder %s26, 1
    %p191 = por %p189, %p190
    %p192 = scmp.ne.s32.totalorder %s183, %s184
    %p193 = scmp.eq.s32.totalorder %s26, 0
    %p194 = por %p192, %p193
    %p195 = scmp.ne.s32.totalorder %s183, %s184
    %p196 = scmp.eq.s32.totalorder %s27, 1
    %p197 = por %p195, %p196
    %p199 = scmp.ne.s32.totalorder %s184, %s198
    %p200 = scmp.eq.s32.totalorder %s27, 0
    %p201 = por %p199, %p200
    %s203 = sadd.s32 %s202, 1
    %p206 = scmp.eq.s32.totalorder %s21, 1
    %p207 = scmp.ne.s32.totalorder %s202, %s204
    %p208 = scmp.eq.s32.totalorder %s21, 0
    %p209 = por %p207, %p208
    %p210 = scmp.ne.s32.totalorder %s202, %s204
    %p211 = scmp.eq.s32.totalorder %s26, 1
    %p212 = por %p210, %p211
    %p213 = scmp.ne.s32.totalorder %s204, %s205
    %p214 = scmp.eq.s32.totalorder %s26, 0
    %p215 = por %p213, %p214
    %p216 = scmp.ne.s32.totalorder %s204, %s205
    %p217 = scmp.eq.s32.totalorder %s27, 1
    %p218 = por %p216, %p217
    %p220 = scmp.ne.s32.totalorder %s205, %s219
    %p221 = scmp.eq.s32.totalorder %s27, 0
    %p222 = por %p220, %p221
    %s224 = sadd.s32 %s223, 1
    %p227 = scmp.eq.s32.totalorder %s21, 1
    %p228 = scmp.ne.s32.totalorder %s223, %s225
    %p229 = scmp.eq.s32.totalorder %s21, 0
    %p230 = por %p228, %p229
    %p231 = scmp.ne.s32.totalorder %s223, %s225
    %p232 = scmp.eq.s32.totalorder %s26, 1
    %p233 = por %p231, %p232
    %p234 = scmp.ne.s32.totalorder %s225, %s226
    %p235 = scmp.eq.s32.totalorder %s26, 0
    %p236 = por %p234, %p235
    %p237 = scmp.ne.s32.totalorder %s225, %s226
    %p238 = scmp.eq.s32.totalorder %s27, 1
    %p239 = por %p237, %p238
    %p241 = scmp.ne.s32.totalorder %s226, %s240
    %p242 = scmp.eq.s32.totalorder %s27, 0
    %p243 = por %p241, %p242
    %s245 = sadd.s32 %s244, 1
    %p248 = scmp.eq.s32.totalorder %s21, 1
    %p249 = scmp.ne.s32.totalorder %s244, %s246
    %p250 = scmp.eq.s32.totalorder %s21, 0
    %p251 = por %p249, %p250
    %p252 = scmp.ne.s32.totalorder %s244, %s246
    %p253 = scmp.eq.s32.totalorder %s26, 1
    %p254 = por %p252, %p253
    %p255 = scmp.ne.s32.totalorder %s246, %s247
    %p256 = scmp.eq.s32.totalorder %s26, 0
    %p257 = por %p255, %p256
    %p258 = scmp.ne.s32.totalorder %s246, %s247
    %p259 = scmp.eq.s32.totalorder %s27, 1
    %p260 = por %p258, %p259
    %p262 = scmp.ne.s32.totalorder %s247, %s261
    %p263 = scmp.eq.s32.totalorder %s27, 0
    %p264 = por %p262, %p263
    %s266 = sadd.s32 %s265, 1
    %p269 = scmp.eq.s32.totalorder %s21, 1
    %p270 = scmp.ne.s32.totalorder %s265, %s267
    %p271 = scmp.eq.s32.totalorder %s21, 0
    %p272 = por %p270, %p271
    %p273 = scmp.ne.s32.totalorder %s265, %s267
    %p274 = scmp.eq.s32.totalorder %s26, 1
    %p275 = por %p273, %p274
    %p276 = scmp.ne.s32.totalorder %s267, %s268
    %p277 = scmp.eq.s32.totalorder %s26, 0
    %p278 = por %p276, %p277
    %p279 = scmp.ne.s32.totalorder %s267, %s268
    %p280 = scmp.eq.s32.totalorder %s27, 1
    %p281 = por %p279, %p280
    %p283 = scmp.ne.s32.totalorder %s268, %s282
    %p284 = scmp.eq.s32.totalorder %s27, 0
    %p285 = por %p283, %p284
    %s287 = sadd.s32 %s286, 1
    %p290 = scmp.eq.s32.totalorder %s21, 1
    %p291 = scmp.ne.s32.totalorder %s286, %s288
    %p292 = scmp.eq.s32.totalorder %s21, 0
    %p293 = por %p291, %p292
    %p294 = scmp.ne.s32.totalorder %s286, %s288
    %p295 = scmp.eq.s32.totalorder %s26, 1
    %p296 = por %p294, %p295
    %p297 = scmp.ne.s32.totalorder %s288, %s289
    %p298 = scmp.eq.s32.totalorder %s26, 0
    %p299 = por %p297, %p298
    %p300 = scmp.ne.s32.totalorder %s288, %s289
    %p301 = scmp.eq.s32.totalorder %s27, 1
    %p302 = por %p300, %p301
    %p304 = scmp.ne.s32.totalorder %s289, %s303
    %p305 = scmp.eq.s32.totalorder %s27, 0
    %p306 = por %p304, %p305
    %s307 = ssub.s32 %s21, %s28
    %p308 = scmp.eq.s32.totalorder %s307, 0
    %s310 = sadd.s32 %s309, 1
    %s311 = scalar_select %p308, %s309, %s310
    %p314 = pneg %p308
    %p315 = scmp.eq.s32.totalorder %s21, 1
    %p316 = por %p314, %p315
    %p317 = scmp.ne.s32.totalorder %s309, %s312
    %p318 = scmp.eq.s32.totalorder %s21, 0
    %p319 = por %p317, %p318
    %p320 = scmp.ne.s32.totalorder %s309, %s312
    %p321 = scmp.eq.s32.totalorder %s26, 1
    %p322 = por %p320, %p321
    %p323 = scmp.ne.s32.totalorder %s312, %s313
    %p324 = scmp.eq.s32.totalorder %s26, 0
    %p325 = por %p323, %p324
    %p326 = scmp.ne.s32.totalorder %s312, %s313
    %p327 = scmp.eq.s32.totalorder %s27, 1
    %p328 = por %p326, %p327
    %p330 = scmp.ne.s32.totalorder %s313, %s329
    %p331 = scmp.eq.s32.totalorder %s27, 0
    %p332 = por %p330, %p331
    %s333 = ssub.s32 %s21, %s28
    %p334 = scmp.eq.s32.totalorder %s333, 0
    %s336 = sadd.s32 %s335, 1
    %s337 = scalar_select %p334, %s335, %s336
    %p340 = pneg %p334
    %p341 = scmp.eq.s32.totalorder %s21, 1
    %p342 = por %p340, %p341
    %p343 = scmp.ne.s32.totalorder %s335, %s338
    %p344 = scmp.eq.s32.totalorder %s21, 0
    %p345 = por %p343, %p344
    %p346 = scmp.ne.s32.totalorder %s335, %s338
    %p347 = scmp.eq.s32.totalorder %s26, 1
    %p348 = por %p346, %p347
    %p349 = scmp.ne.s32.totalorder %s338, %s339
    %p350 = scmp.eq.s32.totalorder %s26, 0
    %p351 = por %p349, %p350
    %p352 = scmp.ne.s32.totalorder %s338, %s339
    %p353 = scmp.eq.s32.totalorder %s27, 1
    %p354 = por %p352, %p353
    %p356 = scmp.ne.s32.totalorder %s339, %s355
    %p357 = scmp.eq.s32.totalorder %s27, 0
    %p358 = por %p356, %p357
    %p359 = scmp.le.s32.totalorder 1, %s21
    %p360 = scmp.lt.s32.totalorder %s21, 3
    %p361 = pnand %p359, %p360
    %p362 = pneg %p361
    // Predicated region
    $region9: #{tpu_custom_call.1} parent=5 // pred_check
      _
    $region10: #{tpu_custom_call.1} parent=5 // pred_check_branch
      %364 = sbr.rel (%p361) target = $region12
    $region11: #{tpu_custom_call.1} parent=5 // pred_region
      %s365 = ssub.s32 %s21, 1
      // Predicated region
      $region13: #{tpu_custom_call.1} parent=11 // pred_check
        %p366 = pneg %p68
      $region14: #{tpu_custom_call.1} parent=11 // pred_check_branch
        %368 = sbr.rel (%p366) target = $region16
      $region15: #{tpu_custom_call.1} parent=11 // pred_region
        _
      $region16: #{tpu_custom_call.1} parent=11 // pred_fallthru
        _
      // Predicated region
      $region17: #{tpu_custom_call.1} parent=11 // pred_check
        %p369 = pneg %p89
      $region18: #{tpu_custom_call.1} parent=11 // pred_check_branch
        %371 = sbr.rel (%p369) target = $region20
      $region19: #{tpu_custom_call.1} parent=11 // pred_region
        _
      $region20: #{tpu_custom_call.1} parent=11 // pred_fallthru
        _
      // Predicated region
      $region21: #{tpu_custom_call.1} parent=11 // pred_check
        %p372 = pneg %p110
      $region22: #{tpu_custom_call.1} parent=11 // pred_check_branch
        %374 = sbr.rel (%p372) target = $region24
      $region23: #{tpu_custom_call.1} parent=11 // pred_region
        _
      $region24: #{tpu_custom_call.1} parent=11 // pred_fallthru
        _
      // Predicated region
      $region25: #{tpu_custom_call.1} parent=11 // pred_check
        %p375 = pneg %p131
      $region26: #{tpu_custom_call.1} parent=11 // pred_check_branch
        %377 = sbr.rel (%p375) target = $region28
      $region27: #{tpu_custom_call.1} parent=11 // pred_region
        _
      $region28: #{tpu_custom_call.1} parent=11 // pred_fallthru
        _
      // Predicated region
      $region29: #{tpu_custom_call.1} parent=11 // pred_check
        %p378 = pneg %p152
      $region30: #{tpu_custom_call.1} parent=11 // pred_check_branch
        %380 = sbr.rel (%p378) target = $region32
      $region31: #{tpu_custom_call.1} parent=11 // pred_region
        _
      $region32: #{tpu_custom_call.1} parent=11 // pred_fallthru
        _
      // Predicated region
      $region33: #{tpu_custom_call.1} parent=11 // pred_check
        %p381 = pneg %p173
      $region34: #{tpu_custom_call.1} parent=11 // pred_check_branch
        %383 = sbr.rel (%p381) target = $region36
      $region35: #{tpu_custom_call.1} parent=11 // pred_region
        _
      $region36: #{tpu_custom_call.1} parent=11 // pred_fallthru
        _
      // Predicated region
      $region37: #{tpu_custom_call.1} parent=11 // pred_check
        %p384 = pneg %p194
      $region38: #{tpu_custom_call.1} parent=11 // pred_check_branch
        %386 = sbr.rel (%p384) target = $region40
      $region39: #{tpu_custom_call.1} parent=11 // pred_region
        _
      $region40: #{tpu_custom_call.1} parent=11 // pred_fallthru
        _
      // Predicated region
      $region41: #{tpu_custom_call.1} parent=11 // pred_check
        %p387 = pneg %p215
      $region42: #{tpu_custom_call.1} parent=11 // pred_check_branch
        %389 = sbr.rel (%p387) target = $region44
      $region43: #{tpu_custom_call.1} parent=11 // pred_region
        _
      $region44: #{tpu_custom_call.1} parent=11 // pred_fallthru
        _
      // Predicated region
      $region45: #{tpu_custom_call.1} parent=11 // pred_check
        %p390 = pneg %p236
      $region46: #{tpu_custom_call.1} parent=11 // pred_check_branch
        %392 = sbr.rel (%p390) target = $region48
      $region47: #{tpu_custom_call.1} parent=11 // pred_region
        _
      $region48: #{tpu_custom_call.1} parent=11 // pred_fallthru
        _
      // Predicated region
      $region49: #{tpu_custom_call.1} parent=11 // pred_check
        %p393 = pneg %p257
      $region50: #{tpu_custom_call.1} parent=11 // pred_check_branch
        %395 = sbr.rel (%p393) target = $region52
      $region51: #{tpu_custom_call.1} parent=11 // pred_region
        _
      $region52: #{tpu_custom_call.1} parent=11 // pred_fallthru
        _
      // Predicated region
      $region53: #{tpu_custom_call.1} parent=11 // pred_check
        %p396 = pneg %p278
      $region54: #{tpu_custom_call.1} parent=11 // pred_check_branch
        %398 = sbr.rel (%p396) target = $region56
      $region55: #{tpu_custom_call.1} parent=11 // pred_region
        _
      $region56: #{tpu_custom_call.1} parent=11 // pred_fallthru
        _
      // Predicated region
      $region57: #{tpu_custom_call.1} parent=11 // pred_check
        %p399 = pneg %p299
      $region58: #{tpu_custom_call.1} parent=11 // pred_check_branch
        %401 = sbr.rel (%p399) target = $region60
      $region59: #{tpu_custom_call.1} parent=11 // pred_region
        _
      $region60: #{tpu_custom_call.1} parent=11 // pred_fallthru
        _
    $region12: #{tpu_custom_call.1} parent=5 // pred_fallthru
      _
    %p402 = scmp.lt.s32.totalorder %s21, 2
    // Predicated region
    $region61: #{tpu_custom_call.1} parent=5 // pred_check
      %p403 = pneg %p402
    $region62: #{tpu_custom_call.1} parent=5 // pred_check_branch
      %405 = sbr.rel (%p403) target = $region64
    $region63: #{tpu_custom_call.1} parent=5 // pred_region
      // Predicated region
      $region65: #{tpu_custom_call.1} parent=63 // pred_check
        %p406 = pneg %p41
      $region66: #{tpu_custom_call.1} parent=63 // pred_check_branch
        %408 = sbr.rel (%p406) target = $region68
      $region67: #{tpu_custom_call.1} parent=63 // pred_region
        %p409 = scmp.lt.s32.totalorder %s21, 1
        %s410 = scalar_select %p409, %s21, 1
        %s411 = smul.addr %s410, 32
        %s412 = smul.addr %s411, 8
        %s413 = scalar_lea.vmem %s0, %s412
      $region68: #{tpu_custom_call.1} parent=63 // pred_fallthru
        _
    $region64: #{tpu_custom_call.1} parent=5 // pred_fallthru
      _
    %p414 = scmp.le.s32.totalorder 1, %s21
    %p415 = scmp.lt.s32.totalorder %s21, 3
    %p416 = pnand %p414, %p415
    %p417 = pneg %p416
    // Predicated region
    $region69: #{tpu_custom_call.1} parent=5 // pred_check
      _
    $region70: #{tpu_custom_call.1} parent=5 // pred_check_branch
      %419 = sbr.rel (%p416) target = $region72
    $region71: #{tpu_custom_call.1} parent=5 // pred_region
      %s420 = ssub.s32 %s21, 1
      %p421 = scmp.lt.s32.totalorder %s26, 1
      %s422 = scalar_select %p421, %s26, 1
      %s423 = smul.addr %s422, 32
      %s424 = smul.addr %s423, 8
      %s425 = scalar_lea.vmem %s0, %s424
      %p426 = pneg %p47
      %p427 = pneg %p44
      %p428 = pneg %p68
      %p429 = pneg %p65
      %p430 = pneg %p89
      %p431 = pneg %p86
      %p432 = pneg %p110
      %p433 = pneg %p107
      %p434 = pneg %p131
      %p435 = pneg %p128
      %p436 = pneg %p152
      %p437 = pneg %p149
      %p438 = pneg %p173
      %p439 = pneg %p170
      %p440 = pneg %p194
      %p441 = pneg %p191
      %p442 = pneg %p215
      %p443 = pneg %p212
      %p444 = pneg %p236
      %p445 = pneg %p233
      %p446 = pneg %p257
      %p447 = pneg %p254
      %p448 = pneg %p278
      %p449 = pneg %p275
      %p450 = pneg %p299
      %p451 = pneg %p296
      %p452 = pneg %p325
      %p453 = pneg %p322
      %p454 = scmp.lt.s32.totalorder %s26, 1
      %s455 = scalar_select %p454, %s26, 1
      %s456 = smul.addr %s455, 10
      %s457 = smul.addr %s456, 8
      %s458 = scalar_lea.vmem %s13, %s457
      %p459 = pneg %p351
      %p460 = pneg %p348
      %p461 = scmp.lt.s32.totalorder %s26, 1
      %s462 = scalar_select %p461, %s26, 1
      %s463 = smul.addr %s462, 10
      %s464 = smul.addr %s463, 8
      %s465 = scalar_lea.vmem %s14, %s464
      %p466 = scmp.lt.s32.totalorder %s26, 1
      %s467 = scalar_select %p466, %s26, 1
      %s468 = smul.addr %s467, 32
      %s469 = smul.addr %s468, 8
      %s470 = scalar_lea.vmem %s0, %s469
      %p471 = scmp.lt.s32.totalorder %s26, 1
      %s472 = scalar_select %p471, %s26, 1
      %s473 = smul.addr %s472, 10
      %s474 = smul.addr %s473, 8
      %s475 = scalar_lea.vmem %s13, %s474
      %p476 = scmp.lt.s32.totalorder %s26, 1
      %s477 = scalar_select %p476, %s26, 1
      %s478 = smul.addr %s477, 10
      %s479 = smul.addr %s478, 8
      %s480 = scalar_lea.vmem %s14, %s479
      %v482 = vld [vmem:[%s470] sm:$0xff]
      %v483 = vld [vmem:[%s470 + $0x8] sm:$0xff]
      %v484 = vld [vmem:[%s470 + $0x10] sm:$0xff]
      %v485 = vld [vmem:[%s470 + $0x18] sm:$0xff]
      %v486 = vld [vmem:[%s470 + $0x20] sm:$0xff]
      %v487 = vld [vmem:[%s470 + $0x28] sm:$0xff]
      %v488 = vld [vmem:[%s470 + $0x30] sm:$0xff]
      %v489 = vld [vmem:[%s470 + $0x38] sm:$0xff]
      %v490 = vld [vmem:[%s470 + $0x40] sm:$0xff]
      %v491 = vld [vmem:[%s470 + $0x48] sm:$0xff]
      %v492 = vld [vmem:[%s470 + $0x50] sm:$0xff]
      %v493 = vld [vmem:[%s470 + $0x58] sm:$0xff]
      %v494 = vld [vmem:[%s470 + $0x60] sm:$0xff]
      %v495 = vld [vmem:[%s470 + $0x68] sm:$0xff]
      %v496 = vld [vmem:[%s470 + $0x70] sm:$0xff]
      %v497 = vld [vmem:[%s470 + $0x78] sm:$0xff]
      %v498 = vld [vmem:[%s470 + $0x80] sm:$0xff]
      %v499 = vld [vmem:[%s470 + $0x88] sm:$0xff]
      %v500 = vld [vmem:[%s470 + $0x90] sm:$0xff]
      %v501 = vld [vmem:[%s470 + $0x98] sm:$0xff]
      %v502 = vld [vmem:[%s470 + $0xa0] sm:$0xff]
      %v503 = vld [vmem:[%s470 + $0xa8] sm:$0xff]
      %v504 = vld [vmem:[%s470 + $0xb0] sm:$0xff]
      %v505 = vld [vmem:[%s470 + $0xb8] sm:$0xff]
      %v506 = vld [vmem:[%s470 + $0xc0] sm:$0xff]
      %v507 = vld [vmem:[%s470 + $0xc8] sm:$0xff]
      %v508 = vld [vmem:[%s470 + $0xd0] sm:$0xff]
      %v509 = vld [vmem:[%s470 + $0xd8] sm:$0xff]
      %v510 = vld [vmem:[%s470 + $0xe0] sm:$0xff]
      %v511 = vld [vmem:[%s470 + $0xe8] sm:$0xff]
      %v512 = vld [vmem:[%s470 + $0xf0] sm:$0xff]
      %v513 = vld [vmem:[%s470 + $0xf8] sm:$0xff]
      %vm514 = vcmask 23552
      %515 = vst.msk [vmem:[#allocation2] sm:$0xff] %vm514, 0.0
      %516 = vst.msk [vmem:[#allocation2 + $0x8] sm:$0xff] %vm514, 0.0
      %vm517 = vcmask 17408
      %518 = vst.msk [vmem:[#allocation2 + $0x10] sm:$0x3] %vm517, 0.0
      %519 = vst.msk [vmem:[#allocation2 + $0x18] sm:$0xff] %vm514, 0.0
      %520 = vst.msk [vmem:[#allocation2 + $0x20] sm:$0xff] %vm514, 0.0
      %521 = vst.msk [vmem:[#allocation2 + $0x28] sm:$0x3] %vm517, 0.0
      %522 = vst.msk [vmem:[#allocation2 + $0x30] sm:$0xff] %vm514, 0.0
      %523 = vst.msk [vmem:[#allocation2 + $0x38] sm:$0xff] %vm514, 0.0
      %524 = vst.msk [vmem:[#allocation2 + $0x40] sm:$0x3] %vm517, 0.0
      %525 = vst.msk [vmem:[#allocation2 + $0x48] sm:$0xff] %vm514, 0.0
      %526 = vst.msk [vmem:[#allocation2 + $0x50] sm:$0xff] %vm514, 0.0
      %527 = vst.msk [vmem:[#allocation2 + $0x58] sm:$0x3] %vm517, 0.0
      %528 = vst.msk [vmem:[#allocation2 + $0x60] sm:$0xff] %vm514, 0.0
      %529 = vst.msk [vmem:[#allocation2 + $0x68] sm:$0xff] %vm514, 0.0
      %530 = vst.msk [vmem:[#allocation2 + $0x70] sm:$0x3] %vm517, 0.0
      %531 = vst.msk [vmem:[#allocation2 + $0x78] sm:$0xff] %vm514, 0.0
      %532 = vst.msk [vmem:[#allocation2 + $0x80] sm:$0xff] %vm514, 0.0
      %533 = vst.msk [vmem:[#allocation2 + $0x88] sm:$0x3] %vm517, 0.0
      %534 = vst.msk [vmem:[#allocation2 + $0x90] sm:$0xff] %vm514, 0.0
      %535 = vst.msk [vmem:[#allocation2 + $0x98] sm:$0xff] %vm514, 0.0
      %536 = vst.msk [vmem:[#allocation2 + $0xa0] sm:$0x3] %vm517, 0.0
      %537 = vst.msk [vmem:[#allocation2 + $0xa8] sm:$0xff] %vm514, 0.0
      %538 = vst.msk [vmem:[#allocation2 + $0xb0] sm:$0xff] %vm514, 0.0
      %539 = vst.msk [vmem:[#allocation2 + $0xb8] sm:$0x3] %vm517, 0.0
      %540 = vst.msk [vmem:[#allocation2 + $0xc0] sm:$0xff] %vm514, 0.0
      %541 = vst.msk [vmem:[#allocation2 + $0xc8] sm:$0xff] %vm514, 0.0
      %542 = vst.msk [vmem:[#allocation2 + $0xd0] sm:$0x3] %vm517, 0.0
      %543 = vst.msk [vmem:[#allocation2 + $0xd8] sm:$0xff] %vm514, 0.0
      %544 = vst.msk [vmem:[#allocation2 + $0xe0] sm:$0xff] %vm514, 0.0
      %545 = vst.msk [vmem:[#allocation2 + $0xe8] sm:$0x3] %vm517, 0.0
      %546 = vst.msk [vmem:[#allocation2 + $0xf0] sm:$0xff] %vm514, 0.0
      %547 = vst.msk [vmem:[#allocation2 + $0xf8] sm:$0xff] %vm514, 0.0
      %548 = vst.msk [vmem:[#allocation2 + $0x100] sm:$0x3] %vm517, 0.0
      %549 = vst.msk [vmem:[#allocation2 + $0x108] sm:$0xff] %vm514, 0.0
      %550 = vst.msk [vmem:[#allocation2 + $0x110] sm:$0xff] %vm514, 0.0
      %551 = vst.msk [vmem:[#allocation2 + $0x118] sm:$0x3] %vm517, 0.0
      %552 = vst.msk [vmem:[#allocation2 + $0x120] sm:$0xff] %vm514, 0.0
      %553 = vst.msk [vmem:[#allocation2 + $0x128] sm:$0xff] %vm514, 0.0
      %554 = vst.msk [vmem:[#allocation2 + $0x130] sm:$0x3] %vm517, 0.0
      %555 = vst.msk [vmem:[#allocation2 + $0x138] sm:$0xff] %vm514, 0.0
      %556 = vst.msk [vmem:[#allocation2 + $0x140] sm:$0xff] %vm514, 0.0
      %557 = vst.msk [vmem:[#allocation2 + $0x148] sm:$0x3] %vm517, 0.0
      %558 = vst.msk [vmem:[#allocation2 + $0x150] sm:$0xff] %vm514, 0.0
      %559 = vst.msk [vmem:[#allocation2 + $0x158] sm:$0xff] %vm514, 0.0
      %560 = vst.msk [vmem:[#allocation2 + $0x160] sm:$0x3] %vm517, 0.0
      %561 = vst.msk [vmem:[#allocation2 + $0x168] sm:$0xff] %vm514, 0.0
      %562 = vst.msk [vmem:[#allocation2 + $0x170] sm:$0xff] %vm514, 0.0
      %563 = vst.msk [vmem:[#allocation2 + $0x178] sm:$0x3] %vm517, 0.0
      %564 = vst.msk [vmem:[#allocation2 + $0x180] sm:$0xff] %vm514, 0.0
      %565 = vst.msk [vmem:[#allocation2 + $0x188] sm:$0xff] %vm514, 0.0
      %566 = vst.msk [vmem:[#allocation2 + $0x190] sm:$0x3] %vm517, 0.0
      %567 = vst.msk [vmem:[#allocation2 + $0x198] sm:$0xff] %vm514, 0.0
      %568 = vst.msk [vmem:[#allocation2 + $0x1a0] sm:$0xff] %vm514, 0.0
      %569 = vst.msk [vmem:[#allocation2 + $0x1a8] sm:$0x3] %vm517, 0.0
      %s570 = scalar_lea.vmem [#allocation2], 24
      %571 = vst.msk [vmem:[%s570 + $0x1] sm:$0xff] %vm514, %v482
      %572 = vst.msk [vmem:[%s570 + $0x9] sm:$0xff] %vm514, %v483
      %573 = vst.msk [vmem:[%s570 + $0x19] sm:$0xff] %vm514, %v484
      %574 = vst.msk [vmem:[%s570 + $0x21] sm:$0xff] %vm514, %v485
      %575 = vst.msk [vmem:[%s570 + $0x31] sm:$0xff] %vm514, %v486
      %576 = vst.msk [vmem:[%s570 + $0x39] sm:$0xff] %vm514, %v487
      %577 = vst.msk [vmem:[%s570 + $0x49] sm:$0xff] %vm514, %v488
      %578 = vst.msk [vmem:[%s570 + $0x51] sm:$0xff] %vm514, %v489
      %579 = vst.msk [vmem:[%s570 + $0x61] sm:$0xff] %vm514, %v490
      %580 = vst.msk [vmem:[%s570 + $0x69] sm:$0xff] %vm514, %v491
      %581 = vst.msk [vmem:[%s570 + $0x79] sm:$0xff] %vm514, %v492
      %582 = vst.msk [vmem:[%s570 + $0x81] sm:$0xff] %vm514, %v493
      %583 = vst.msk [vmem:[%s570 + $0x91] sm:$0xff] %vm514, %v494
      %584 = vst.msk [vmem:[%s570 + $0x99] sm:$0xff] %vm514, %v495
      %585 = vst.msk [vmem:[%s570 + $0xa9] sm:$0xff] %vm514, %v496
      %586 = vst.msk [vmem:[%s570 + $0xb1] sm:$0xff] %vm514, %v497
      %587 = vst.msk [vmem:[%s570 + $0xc1] sm:$0xff] %vm514, %v498
      %588 = vst.msk [vmem:[%s570 + $0xc9] sm:$0xff] %vm514, %v499
      %589 = vst.msk [vmem:[%s570 + $0xd9] sm:$0xff] %vm514, %v500
      %590 = vst.msk [vmem:[%s570 + $0xe1] sm:$0xff] %vm514, %v501
      %591 = vst.msk [vmem:[%s570 + $0xf1] sm:$0xff] %vm514, %v502
      %592 = vst.msk [vmem:[%s570 + $0xf9] sm:$0xff] %vm514, %v503
      %593 = vst.msk [vmem:[%s570 + $0x109] sm:$0xff] %vm514, %v504
      %594 = vst.msk [vmem:[%s570 + $0x111] sm:$0xff] %vm514, %v505
      %595 = vst.msk [vmem:[%s570 + $0x121] sm:$0xff] %vm514, %v506
      %596 = vst.msk [vmem:[%s570 + $0x129] sm:$0xff] %vm514, %v507
      %597 = vst.msk [vmem:[%s570 + $0x139] sm:$0xff] %vm514, %v508
      %598 = vst.msk [vmem:[%s570 + $0x141] sm:$0xff] %vm514, %v509
      %599 = vst.msk [vmem:[%s570 + $0x151] sm:$0xff] %vm514, %v510
      %600 = vst.msk [vmem:[%s570 + $0x159] sm:$0xff] %vm514, %v511
      %601 = vst.msk [vmem:[%s570 + $0x169] sm:$0xff] %vm514, %v512
      %602 = vst.msk [vmem:[%s570 + $0x171] sm:$0xff] %vm514, %v513
      %v603 = vld [vmem:[#allocation2] sm:$0xff]
      %v604 = vld [vmem:[#allocation2 + $0x8] sm:$0xff]
      %v605 = vld [vmem:[#allocation2 + $0x18] sm:$0xff]
      %v606 = vld [vmem:[#allocation2 + $0x20] sm:$0xff]
      %v607 = vld [vmem:[#allocation2 + $0x30] sm:$0xff]
      %v608 = vld [vmem:[#allocation2 + $0x38] sm:$0xff]
      %v609 = vld [vmem:[#allocation2 + $0x48] sm:$0xff]
      %v610 = vld [vmem:[#allocation2 + $0x50] sm:$0xff]
      %v611 = vld [vmem:[#allocation2 + $0x60] sm:$0xff]
      %v612 = vld [vmem:[#allocation2 + $0x68] sm:$0xff]
      %v613 = vld [vmem:[#allocation2 + $0x78] sm:$0xff]
      %v614 = vld [vmem:[#allocation2 + $0x80] sm:$0xff]
      %v615 = vld [vmem:[#allocation2 + $0x90] sm:$0xff]
      %v616 = vld [vmem:[#allocation2 + $0x98] sm:$0xff]
      %v617 = vld [vmem:[#allocation2 + $0xa8] sm:$0xff]
      %v618 = vld [vmem:[#allocation2 + $0xb0] sm:$0xff]
      %v619 = vld [vmem:[#allocation2 + $0xc0] sm:$0xff]
      %v620 = vld [vmem:[#allocation2 + $0xc8] sm:$0xff]
      %v621 = vld [vmem:[#allocation2 + $0xd8] sm:$0xff]
      %v622 = vld [vmem:[#allocation2 + $0xe0] sm:$0xff]
      %v623 = vld [vmem:[#allocation2 + $0xf0] sm:$0xff]
      %v624 = vld [vmem:[#allocation2 + $0xf8] sm:$0xff]
      %v625 = vld [vmem:[#allocation2 + $0x108] sm:$0xff]
      %v626 = vld [vmem:[#allocation2 + $0x110] sm:$0xff]
      %v627 = vld [vmem:[#allocation2 + $0x120] sm:$0xff]
      %v628 = vld [vmem:[#allocation2 + $0x128] sm:$0xff]
      %v629 = vld [vmem:[#allocation2 + $0x138] sm:$0xff]
      %v630 = vld [vmem:[#allocation2 + $0x140] sm:$0xff]
      %v631 = vld [vmem:[#allocation2 + $0x150] sm:$0xff]
      %v632 = vld [vmem:[#allocation2 + $0x158] sm:$0xff]
      %v633 = vld [vmem:[#allocation2 + $0x168] sm:$0xff]
      %v634 = vld [vmem:[#allocation2 + $0x170] sm:$0xff]
      %v635 = vld [vmem:[#allocation2 + $0x180] sm:$0xff]
      %v636 = vld [vmem:[#allocation2 + $0x188] sm:$0xff]
      %v637 = vld [vmem:[#allocation2 + $0x198] sm:$0xff]
      %v638 = vld [vmem:[#allocation2 + $0x1a0] sm:$0xff]
      %v639 = vld [vmem:[#allocation2 + $0x1] sm:$0xff]
      %v640 = vld [vmem:[#allocation2 + $0x9] sm:$0xff]
      %v641 = vld [vmem:[#allocation2 + $0x19] sm:$0xff]
      %v642 = vld [vmem:[#allocation2 + $0x21] sm:$0xff]
      %v643 = vld [vmem:[#allocation2 + $0x31] sm:$0xff]
      %v644 = vld [vmem:[#allocation2 + $0x39] sm:$0xff]
      %v645 = vld [vmem:[#allocation2 + $0x49] sm:$0xff]
      %v646 = vld [vmem:[#allocation2 + $0x51] sm:$0xff]
      %v647 = vld [vmem:[#allocation2 + $0x61] sm:$0xff]
      %v648 = vld [vmem:[#allocation2 + $0x69] sm:$0xff]
      %v649 = vld [vmem:[#allocation2 + $0x79] sm:$0xff]
      %v650 = vld [vmem:[#allocation2 + $0x81] sm:$0xff]
      %v651 = vld [vmem:[#allocation2 + $0x91] sm:$0xff]
      %v652 = vld [vmem:[#allocation2 + $0x99] sm:$0xff]
      %v653 = vld [vmem:[#allocation2 + $0xa9] sm:$0xff]
      %v654 = vld [vmem:[#allocation2 + $0xb1] sm:$0xff]
      %v655 = vld [vmem:[#allocation2 + $0xc1] sm:$0xff]
      %v656 = vld [vmem:[#allocation2 + $0xc9] sm:$0xff]
      %v657 = vld [vmem:[#allocation2 + $0xd9] sm:$0xff]
      %v658 = vld [vmem:[#allocation2 + $0xe1] sm:$0xff]
      %v659 = vld [vmem:[#allocation2 + $0xf1] sm:$0xff]
      %v660 = vld [vmem:[#allocation2 + $0xf9] sm:$0xff]
      %v661 = vld [vmem:[#allocation2 + $0x109] sm:$0xff]
      %v662 = vld [vmem:[#allocation2 + $0x111] sm:$0xff]
      %v663 = vld [vmem:[#allocation2 + $0x121] sm:$0xff]
      %v664 = vld [vmem:[#allocation2 + $0x129] sm:$0xff]
      %v665 = vld [vmem:[#allocation2 + $0x139] sm:$0xff]
      %v666 = vld [vmem:[#allocation2 + $0x141] sm:$0xff]
      %v667 = vld [vmem:[#allocation2 + $0x151] sm:$0xff]
      %v668 = vld [vmem:[#allocation2 + $0x159] sm:$0xff]
      %v669 = vld [vmem:[#allocation2 + $0x169] sm:$0xff]
      %v670 = vld [vmem:[#allocation2 + $0x171] sm:$0xff]
      %v671 = vld [vmem:[#allocation2 + $0x181] sm:$0xff]
      %v672 = vld [vmem:[#allocation2 + $0x189] sm:$0xff]
      %v673 = vld [vmem:[#allocation2 + $0x199] sm:$0xff]
      %v674 = vld [vmem:[#allocation2 + $0x1a1] sm:$0xff]
      %v675 = vld [vmem:[#allocation2 + $0x2] sm:$0xff]
      %v676 = vld [vmem:[#allocation2 + $0xa] sm:$0xff]
      %v677 = vld [vmem:[#allocation2 + $0x1a] sm:$0xff]
      %v678 = vld [vmem:[#allocation2 + $0x22] sm:$0xff]
      %v679 = vld [vmem:[#allocation2 + $0x32] sm:$0xff]
      %v680 = vld [vmem:[#allocation2 + $0x3a] sm:$0xff]
      %v681 = vld [vmem:[#allocation2 + $0x4a] sm:$0xff]
      %v682 = vld [vmem:[#allocation2 + $0x52] sm:$0xff]
      %v683 = vld [vmem:[#allocation2 + $0x62] sm:$0xff]
      %v684 = vld [vmem:[#allocation2 + $0x6a] sm:$0xff]
      %v685 = vld [vmem:[#allocation2 + $0x7a] sm:$0xff]
      %v686 = vld [vmem:[#allocation2 + $0x82] sm:$0xff]
      %v687 = vld [vmem:[#allocation2 + $0x92] sm:$0xff]
      %v688 = vld [vmem:[#allocation2 + $0x9a] sm:$0xff]
      %v689 = vld [vmem:[#allocation2 + $0xaa] sm:$0xff]
      %v690 = vld [vmem:[#allocation2 + $0xb2] sm:$0xff]
      %v691 = vld [vmem:[#allocation2 + $0xc2] sm:$0xff]
      %v692 = vld [vmem:[#allocation2 + $0xca] sm:$0xff]
      %v693 = vld [vmem:[#allocation2 + $0xda] sm:$0xff]
      %v694 = vld [vmem:[#allocation2 + $0xe2] sm:$0xff]
      %v695 = vld [vmem:[#allocation2 + $0xf2] sm:$0xff]
      %v696 = vld [vmem:[#allocation2 + $0xfa] sm:$0xff]
      %v697 = vld [vmem:[#allocation2 + $0x10a] sm:$0xff]
      %v698 = vld [vmem:[#allocation2 + $0x112] sm:$0xff]
      %v699 = vld [vmem:[#allocation2 + $0x122] sm:$0xff]
      %v700 = vld [vmem:[#allocation2 + $0x12a] sm:$0xff]
      %v701 = vld [vmem:[#allocation2 + $0x13a] sm:$0xff]
      %v702 = vld [vmem:[#allocation2 + $0x142] sm:$0xff]
      %v703 = vld [vmem:[#allocation2 + $0x152] sm:$0xff]
      %v704 = vld [vmem:[#allocation2 + $0x15a] sm:$0xff]
      %v705 = vld [vmem:[#allocation2 + $0x16a] sm:$0xff]
      %v706 = vld [vmem:[#allocation2 + $0x172] sm:$0xff]
      %v707 = vld [vmem:[#allocation2 + $0x182] sm:$0xff]
      %v708 = vld [vmem:[#allocation2 + $0x18a] sm:$0xff]
      %v709 = vld [vmem:[#allocation2 + $0x19a] sm:$0xff]
      %v710 = vld [vmem:[#allocation2 + $0x1a2] sm:$0xff]
      %743 = vrot.lane.b32.xlu0 %v639, 3
      %v744 = vpop.permute.xlu0 %743
      %745 = vrot.lane.b32.xlu0 %v640, 3
      %v746 = vpop.permute.xlu0 %745
      %747 = vrot.lane.b32.xlu0 %v641, 3
      %v748 = vpop.permute.xlu0 %747
      %749 = vrot.lane.b32.xlu0 %v642, 3
      %v750 = vpop.permute.xlu0 %749
      %751 = vrot.lane.b32.xlu0 %v643, 3
      %v752 = vpop.permute.xlu0 %751
      %753 = vrot.lane.b32.xlu0 %v644, 3
      %v754 = vpop.permute.xlu0 %753
      %755 = vrot.lane.b32.xlu0 %v645, 3
      %v756 = vpop.permute.xlu0 %755
      %757 = vrot.lane.b32.xlu0 %v646, 3
      %v758 = vpop.permute.xlu0 %757
      %759 = vrot.lane.b32.xlu0 %v647, 3
      %v760 = vpop.permute.xlu0 %759
      %761 = vrot.lane.b32.xlu0 %v648, 3
      %v762 = vpop.permute.xlu0 %761
      %763 = vrot.lane.b32.xlu0 %v649, 3
      %v764 = vpop.permute.xlu0 %763
      %765 = vrot.lane.b32.xlu0 %v650, 3
      %v766 = vpop.permute.xlu0 %765
      %767 = vrot.lane.b32.xlu0 %v651, 3
      %v768 = vpop.permute.xlu0 %767
      %769 = vrot.lane.b32.xlu0 %v652, 3
      %v770 = vpop.permute.xlu0 %769
      %771 = vrot.lane.b32.xlu0 %v653, 3
      %v772 = vpop.permute.xlu0 %771
      %773 = vrot.lane.b32.xlu0 %v654, 3
      %v774 = vpop.permute.xlu0 %773
      %775 = vrot.lane.b32.xlu0 %v655, 3
      %v776 = vpop.permute.xlu0 %775
      %777 = vrot.lane.b32.xlu0 %v656, 3
      %v778 = vpop.permute.xlu0 %777
      %779 = vrot.lane.b32.xlu0 %v657, 3
      %v780 = vpop.permute.xlu0 %779
      %781 = vrot.lane.b32.xlu0 %v658, 3
      %v782 = vpop.permute.xlu0 %781
      %783 = vrot.lane.b32.xlu0 %v659, 3
      %v784 = vpop.permute.xlu0 %783
      %785 = vrot.lane.b32.xlu0 %v660, 3
      %v786 = vpop.permute.xlu0 %785
      %787 = vrot.lane.b32.xlu0 %v661, 3
      %v788 = vpop.permute.xlu0 %787
      %789 = vrot.lane.b32.xlu0 %v662, 3
      %v790 = vpop.permute.xlu0 %789
      %791 = vrot.lane.b32.xlu0 %v663, 3
      %v792 = vpop.permute.xlu0 %791
      %793 = vrot.lane.b32.xlu0 %v664, 3
      %v794 = vpop.permute.xlu0 %793
      %795 = vrot.lane.b32.xlu0 %v665, 3
      %v796 = vpop.permute.xlu0 %795
      %797 = vrot.lane.b32.xlu0 %v666, 3
      %v798 = vpop.permute.xlu0 %797
      %799 = vrot.lane.b32.xlu0 %v667, 3
      %v800 = vpop.permute.xlu0 %799
      %801 = vrot.lane.b32.xlu0 %v668, 3
      %v802 = vpop.permute.xlu0 %801
      %803 = vrot.lane.b32.xlu0 %v669, 3
      %v804 = vpop.permute.xlu0 %803
      %805 = vrot.lane.b32.xlu0 %v670, 3
      %v806 = vpop.permute.xlu0 %805
      %871 = vrot.lane.b32.xlu0 %v675, 6
      %v872 = vpop.permute.xlu0 %871
      %873 = vrot.lane.b32.xlu0 %v676, 6
      %v874 = vpop.permute.xlu0 %873
      %875 = vrot.lane.b32.xlu0 %v677, 6
      %v876 = vpop.permute.xlu0 %875
      %877 = vrot.lane.b32.xlu0 %v678, 6
      %v878 = vpop.permute.xlu0 %877
      %879 = vrot.lane.b32.xlu0 %v679, 6
      %v880 = vpop.permute.xlu0 %879
      %881 = vrot.lane.b32.xlu0 %v680, 6
      %v882 = vpop.permute.xlu0 %881
      %883 = vrot.lane.b32.xlu0 %v681, 6
      %v884 = vpop.permute.xlu0 %883
      %885 = vrot.lane.b32.xlu0 %v682, 6
      %v886 = vpop.permute.xlu0 %885
      %887 = vrot.lane.b32.xlu0 %v683, 6
      %v888 = vpop.permute.xlu0 %887
      %889 = vrot.lane.b32.xlu0 %v684, 6
      %v890 = vpop.permute.xlu0 %889
      %891 = vrot.lane.b32.xlu0 %v685, 6
      %v892 = vpop.permute.xlu0 %891
      %893 = vrot.lane.b32.xlu0 %v686, 6
      %v894 = vpop.permute.xlu0 %893
      %895 = vrot.lane.b32.xlu0 %v687, 6
      %v896 = vpop.permute.xlu0 %895
      %897 = vrot.lane.b32.xlu0 %v688, 6
      %v898 = vpop.permute.xlu0 %897
      %899 = vrot.lane.b32.xlu0 %v689, 6
      %v900 = vpop.permute.xlu0 %899
      %901 = vrot.lane.b32.xlu0 %v690, 6
      %v902 = vpop.permute.xlu0 %901
      %903 = vrot.lane.b32.xlu0 %v691, 6
      %v904 = vpop.permute.xlu0 %903
      %905 = vrot.lane.b32.xlu0 %v692, 6
      %v906 = vpop.permute.xlu0 %905
      %907 = vrot.lane.b32.xlu0 %v693, 6
      %v908 = vpop.permute.xlu0 %907
      %909 = vrot.lane.b32.xlu0 %v694, 6
      %v910 = vpop.permute.xlu0 %909
      %911 = vrot.lane.b32.xlu0 %v695, 6
      %v912 = vpop.permute.xlu0 %911
      %913 = vrot.lane.b32.xlu0 %v696, 6
      %v914 = vpop.permute.xlu0 %913
      %915 = vrot.lane.b32.xlu0 %v697, 6
      %v916 = vpop.permute.xlu0 %915
      %917 = vrot.lane.b32.xlu0 %v698, 6
      %v918 = vpop.permute.xlu0 %917
      %919 = vrot.lane.b32.xlu0 %v699, 6
      %v920 = vpop.permute.xlu0 %919
      %921 = vrot.lane.b32.xlu0 %v700, 6
      %v922 = vpop.permute.xlu0 %921
      %923 = vrot.lane.b32.xlu0 %v701, 6
      %v924 = vpop.permute.xlu0 %923
      %925 = vrot.lane.b32.xlu0 %v702, 6
      %v926 = vpop.permute.xlu0 %925
      %927 = vrot.lane.b32.xlu0 %v703, 6
      %v928 = vpop.permute.xlu0 %927
      %929 = vrot.lane.b32.xlu0 %v704, 6
      %v930 = vpop.permute.xlu0 %929
      %931 = vrot.lane.b32.xlu0 %v705, 6
      %v932 = vpop.permute.xlu0 %931
      %933 = vrot.lane.b32.xlu0 %v706, 6
      %v934 = vpop.permute.xlu0 %933
      %999 = vrot.lane.b32.xlu0 %v605, 9
      %v1000 = vpop.permute.xlu0 %999
      %1001 = vrot.lane.b32.xlu0 %v606, 9
      %v1002 = vpop.permute.xlu0 %1001
      %1003 = vrot.lane.b32.xlu0 %v607, 9
      %v1004 = vpop.permute.xlu0 %1003
      %1005 = vrot.lane.b32.xlu0 %v608, 9
      %v1006 = vpop.permute.xlu0 %1005
      %1007 = vrot.lane.b32.xlu0 %v609, 9
      %v1008 = vpop.permute.xlu0 %1007
      %1009 = vrot.lane.b32.xlu0 %v610, 9
      %v1010 = vpop.permute.xlu0 %1009
      %1011 = vrot.lane.b32.xlu0 %v611, 9
      %v1012 = vpop.permute.xlu0 %1011
      %1013 = vrot.lane.b32.xlu0 %v612, 9
      %v1014 = vpop.permute.xlu0 %1013
      %1015 = vrot.lane.b32.xlu0 %v613, 9
      %v1016 = vpop.permute.xlu0 %1015
      %1017 = vrot.lane.b32.xlu0 %v614, 9
      %v1018 = vpop.permute.xlu0 %1017
      %1019 = vrot.lane.b32.xlu0 %v615, 9
      %v1020 = vpop.permute.xlu0 %1019
      %1021 = vrot.lane.b32.xlu0 %v616, 9
      %v1022 = vpop.permute.xlu0 %1021
      %1023 = vrot.lane.b32.xlu0 %v617, 9
      %v1024 = vpop.permute.xlu0 %1023
      %1025 = vrot.lane.b32.xlu0 %v618, 9
      %v1026 = vpop.permute.xlu0 %1025
      %1027 = vrot.lane.b32.xlu0 %v619, 9
      %v1028 = vpop.permute.xlu0 %1027
      %1029 = vrot.lane.b32.xlu0 %v620, 9
      %v1030 = vpop.permute.xlu0 %1029
      %1031 = vrot.lane.b32.xlu0 %v621, 9
      %v1032 = vpop.permute.xlu0 %1031
      %1033 = vrot.lane.b32.xlu0 %v622, 9
      %v1034 = vpop.permute.xlu0 %1033
      %1035 = vrot.lane.b32.xlu0 %v623, 9
      %v1036 = vpop.permute.xlu0 %1035
      %1037 = vrot.lane.b32.xlu0 %v624, 9
      %v1038 = vpop.permute.xlu0 %1037
      %1039 = vrot.lane.b32.xlu0 %v625, 9
      %v1040 = vpop.permute.xlu0 %1039
      %1041 = vrot.lane.b32.xlu0 %v626, 9
      %v1042 = vpop.permute.xlu0 %1041
      %1043 = vrot.lane.b32.xlu0 %v627, 9
      %v1044 = vpop.permute.xlu0 %1043
      %1045 = vrot.lane.b32.xlu0 %v628, 9
      %v1046 = vpop.permute.xlu0 %1045
      %1047 = vrot.lane.b32.xlu0 %v629, 9
      %v1048 = vpop.permute.xlu0 %1047
      %1049 = vrot.lane.b32.xlu0 %v630, 9
      %v1050 = vpop.permute.xlu0 %1049
      %1051 = vrot.lane.b32.xlu0 %v631, 9
      %v1052 = vpop.permute.xlu0 %1051
      %1053 = vrot.lane.b32.xlu0 %v632, 9
      %v1054 = vpop.permute.xlu0 %1053
      %1055 = vrot.lane.b32.xlu0 %v633, 9
      %v1056 = vpop.permute.xlu0 %1055
      %1057 = vrot.lane.b32.xlu0 %v634, 9
      %v1058 = vpop.permute.xlu0 %1057
      %1059 = vrot.lane.b32.xlu0 %v635, 9
      %v1060 = vpop.permute.xlu0 %1059
      %1061 = vrot.lane.b32.xlu0 %v636, 9
      %v1062 = vpop.permute.xlu0 %1061
      %1097 = vrot.lane.b32.xlu0 %v641, 12
      %v1098 = vpop.permute.xlu0 %1097
      %1099 = vrot.lane.b32.xlu0 %v642, 12
      %v1100 = vpop.permute.xlu0 %1099
      %1101 = vrot.lane.b32.xlu0 %v643, 12
      %v1102 = vpop.permute.xlu0 %1101
      %1103 = vrot.lane.b32.xlu0 %v644, 12
      %v1104 = vpop.permute.xlu0 %1103
      %1105 = vrot.lane.b32.xlu0 %v645, 12
      %v1106 = vpop.permute.xlu0 %1105
      %1107 = vrot.lane.b32.xlu0 %v646, 12
      %v1108 = vpop.permute.xlu0 %1107
      %1109 = vrot.lane.b32.xlu0 %v647, 12
      %v1110 = vpop.permute.xlu0 %1109
      %1111 = vrot.lane.b32.xlu0 %v648, 12
      %v1112 = vpop.permute.xlu0 %1111
      %1113 = vrot.lane.b32.xlu0 %v649, 12
      %v1114 = vpop.permute.xlu0 %1113
      %1115 = vrot.lane.b32.xlu0 %v650, 12
      %v1116 = vpop.permute.xlu0 %1115
      %1117 = vrot.lane.b32.xlu0 %v651, 12
      %v1118 = vpop.permute.xlu0 %1117
      %1119 = vrot.lane.b32.xlu0 %v652, 12
      %v1120 = vpop.permute.xlu0 %1119
      %1121 = vrot.lane.b32.xlu0 %v653, 12
      %v1122 = vpop.permute.xlu0 %1121
      %1123 = vrot.lane.b32.xlu0 %v654, 12
      %v1124 = vpop.permute.xlu0 %1123
      %1125 = vrot.lane.b32.xlu0 %v655, 12
      %v1126 = vpop.permute.xlu0 %1125
      %1127 = vrot.lane.b32.xlu0 %v656, 12
      %v1128 = vpop.permute.xlu0 %1127
      %1129 = vrot.lane.b32.xlu0 %v657, 12
      %v1130 = vpop.permute.xlu0 %1129
      %1131 = vrot.lane.b32.xlu0 %v658, 12
      %v1132 = vpop.permute.xlu0 %1131
      %1133 = vrot.lane.b32.xlu0 %v659, 12
      %v1134 = vpop.permute.xlu0 %1133
      %1135 = vrot.lane.b32.xlu0 %v660, 12
      %v1136 = vpop.permute.xlu0 %1135
      %1137 = vrot.lane.b32.xlu0 %v661, 12
      %v1138 = vpop.permute.xlu0 %1137
      %1139 = vrot.lane.b32.xlu0 %v662, 12
      %v1140 = vpop.permute.xlu0 %1139
      %1141 = vrot.lane.b32.xlu0 %v663, 12
      %v1142 = vpop.permute.xlu0 %1141
      %1143 = vrot.lane.b32.xlu0 %v664, 12
      %v1144 = vpop.permute.xlu0 %1143
      %1145 = vrot.lane.b32.xlu0 %v665, 12
      %v1146 = vpop.permute.xlu0 %1145
      %1147 = vrot.lane.b32.xlu0 %v666, 12
      %v1148 = vpop.permute.xlu0 %1147
      %1149 = vrot.lane.b32.xlu0 %v667, 12
      %v1150 = vpop.permute.xlu0 %1149
      %1151 = vrot.lane.b32.xlu0 %v668, 12
      %v1152 = vpop.permute.xlu0 %1151
      %1153 = vrot.lane.b32.xlu0 %v669, 12
      %v1154 = vpop.permute.xlu0 %1153
      %1155 = vrot.lane.b32.xlu0 %v670, 12
      %v1156 = vpop.permute.xlu0 %1155
      %1157 = vrot.lane.b32.xlu0 %v671, 12
      %v1158 = vpop.permute.xlu0 %1157
      %1159 = vrot.lane.b32.xlu0 %v672, 12
      %v1160 = vpop.permute.xlu0 %1159
      %1195 = vrot.lane.b32.xlu0 %v677, 15
      %v1196 = vpop.permute.xlu0 %1195
      %1197 = vrot.lane.b32.xlu0 %v678, 15
      %v1198 = vpop.permute.xlu0 %1197
      %1199 = vrot.lane.b32.xlu0 %v679, 15
      %v1200 = vpop.permute.xlu0 %1199
      %1201 = vrot.lane.b32.xlu0 %v680, 15
      %v1202 = vpop.permute.xlu0 %1201
      %1203 = vrot.lane.b32.xlu0 %v681, 15
      %v1204 = vpop.permute.xlu0 %1203
      %1205 = vrot.lane.b32.xlu0 %v682, 15
      %v1206 = vpop.permute.xlu0 %1205
      %1207 = vrot.lane.b32.xlu0 %v683, 15
      %v1208 = vpop.permute.xlu0 %1207
      %1209 = vrot.lane.b32.xlu0 %v684, 15
      %v1210 = vpop.permute.xlu0 %1209
      %1211 = vrot.lane.b32.xlu0 %v685, 15
      %v1212 = vpop.permute.xlu0 %1211
      %1213 = vrot.lane.b32.xlu0 %v686, 15
      %v1214 = vpop.permute.xlu0 %1213
      %1215 = vrot.lane.b32.xlu0 %v687, 15
      %v1216 = vpop.permute.xlu0 %1215
      %1217 = vrot.lane.b32.xlu0 %v688, 15
      %v1218 = vpop.permute.xlu0 %1217
      %1219 = vrot.lane.b32.xlu0 %v689, 15
      %v1220 = vpop.permute.xlu0 %1219
      %1221 = vrot.lane.b32.xlu0 %v690, 15
      %v1222 = vpop.permute.xlu0 %1221
      %1223 = vrot.lane.b32.xlu0 %v691, 15
      %v1224 = vpop.permute.xlu0 %1223
      %1225 = vrot.lane.b32.xlu0 %v692, 15
      %v1226 = vpop.permute.xlu0 %1225
      %1227 = vrot.lane.b32.xlu0 %v693, 15
      %v1228 = vpop.permute.xlu0 %1227
      %1229 = vrot.lane.b32.xlu0 %v694, 15
      %v1230 = vpop.permute.xlu0 %1229
      %1231 = vrot.lane.b32.xlu0 %v695, 15
      %v1232 = vpop.permute.xlu0 %1231
      %1233 = vrot.lane.b32.xlu0 %v696, 15
      %v1234 = vpop.permute.xlu0 %1233
      %1235 = vrot.lane.b32.xlu0 %v697, 15
      %v1236 = vpop.permute.xlu0 %1235
      %1237 = vrot.lane.b32.xlu0 %v698, 15
      %v1238 = vpop.permute.xlu0 %1237
      %1239 = vrot.lane.b32.xlu0 %v699, 15
      %v1240 = vpop.permute.xlu0 %1239
      %1241 = vrot.lane.b32.xlu0 %v700, 15
      %v1242 = vpop.permute.xlu0 %1241
      %1243 = vrot.lane.b32.xlu0 %v701, 15
      %v1244 = vpop.permute.xlu0 %1243
      %1245 = vrot.lane.b32.xlu0 %v702, 15
      %v1246 = vpop.permute.xlu0 %1245
      %1247 = vrot.lane.b32.xlu0 %v703, 15
      %v1248 = vpop.permute.xlu0 %1247
      %1249 = vrot.lane.b32.xlu0 %v704, 15
      %v1250 = vpop.permute.xlu0 %1249
      %1251 = vrot.lane.b32.xlu0 %v705, 15
      %v1252 = vpop.permute.xlu0 %1251
      %1253 = vrot.lane.b32.xlu0 %v706, 15
      %v1254 = vpop.permute.xlu0 %1253
      %1255 = vrot.lane.b32.xlu0 %v707, 15
      %v1256 = vpop.permute.xlu0 %1255
      %1257 = vrot.lane.b32.xlu0 %v708, 15
      %v1258 = vpop.permute.xlu0 %1257
      %1293 = vrot.lane.b32.xlu0 %v607, 18
      %v1294 = vpop.permute.xlu0 %1293
      %1295 = vrot.lane.b32.xlu0 %v608, 18
      %v1296 = vpop.permute.xlu0 %1295
      %1297 = vrot.lane.b32.xlu0 %v609, 18
      %v1298 = vpop.permute.xlu0 %1297
      %1299 = vrot.lane.b32.xlu0 %v610, 18
      %v1300 = vpop.permute.xlu0 %1299
      %1301 = vrot.lane.b32.xlu0 %v611, 18
      %v1302 = vpop.permute.xlu0 %1301
      %1303 = vrot.lane.b32.xlu0 %v612, 18
      %v1304 = vpop.permute.xlu0 %1303
      %1305 = vrot.lane.b32.xlu0 %v613, 18
      %v1306 = vpop.permute.xlu0 %1305
      %1307 = vrot.lane.b32.xlu0 %v614, 18
      %v1308 = vpop.permute.xlu0 %1307
      %1309 = vrot.lane.b32.xlu0 %v615, 18
      %v1310 = vpop.permute.xlu0 %1309
      %1311 = vrot.lane.b32.xlu0 %v616, 18
      %v1312 = vpop.permute.xlu0 %1311
      %1313 = vrot.lane.b32.xlu0 %v617, 18
      %v1314 = vpop.permute.xlu0 %1313
      %1315 = vrot.lane.b32.xlu0 %v618, 18
      %v1316 = vpop.permute.xlu0 %1315
      %1317 = vrot.lane.b32.xlu0 %v619, 18
      %v1318 = vpop.permute.xlu0 %1317
      %1319 = vrot.lane.b32.xlu0 %v620, 18
      %v1320 = vpop.permute.xlu0 %1319
      %1321 = vrot.lane.b32.xlu0 %v621, 18
      %v1322 = vpop.permute.xlu0 %1321
      %1323 = vrot.lane.b32.xlu0 %v622, 18
      %v1324 = vpop.permute.xlu0 %1323
      %1325 = vrot.lane.b32.xlu0 %v623, 18
      %v1326 = vpop.permute.xlu0 %1325
      %1327 = vrot.lane.b32.xlu0 %v624, 18
      %v1328 = vpop.permute.xlu0 %1327
      %1329 = vrot.lane.b32.xlu0 %v625, 18
      %v1330 = vpop.permute.xlu0 %1329
      %1331 = vrot.lane.b32.xlu0 %v626, 18
      %v1332 = vpop.permute.xlu0 %1331
      %1333 = vrot.lane.b32.xlu0 %v627, 18
      %v1334 = vpop.permute.xlu0 %1333
      %1335 = vrot.lane.b32.xlu0 %v628, 18
      %v1336 = vpop.permute.xlu0 %1335
      %1337 = vrot.lane.b32.xlu0 %v629, 18
      %v1338 = vpop.permute.xlu0 %1337
      %1339 = vrot.lane.b32.xlu0 %v630, 18
      %v1340 = vpop.permute.xlu0 %1339
      %1341 = vrot.lane.b32.xlu0 %v631, 18
      %v1342 = vpop.permute.xlu0 %1341
      %1343 = vrot.lane.b32.xlu0 %v632, 18
      %v1344 = vpop.permute.xlu0 %1343
      %1345 = vrot.lane.b32.xlu0 %v633, 18
      %v1346 = vpop.permute.xlu0 %1345
      %1347 = vrot.lane.b32.xlu0 %v634, 18
      %v1348 = vpop.permute.xlu0 %1347
      %1349 = vrot.lane.b32.xlu0 %v635, 18
      %v1350 = vpop.permute.xlu0 %1349
      %1351 = vrot.lane.b32.xlu0 %v636, 18
      %v1352 = vpop.permute.xlu0 %1351
      %1353 = vrot.lane.b32.xlu0 %v637, 18
      %v1354 = vpop.permute.xlu0 %1353
      %1355 = vrot.lane.b32.xlu0 %v638, 18
      %v1356 = vpop.permute.xlu0 %1355
      %1391 = vrot.lane.b32.xlu0 %v643, 21
      %v1392 = vpop.permute.xlu0 %1391
      %1393 = vrot.lane.b32.xlu0 %v644, 21
      %v1394 = vpop.permute.xlu0 %1393
      %1395 = vrot.lane.b32.xlu0 %v645, 21
      %v1396 = vpop.permute.xlu0 %1395
      %1397 = vrot.lane.b32.xlu0 %v646, 21
      %v1398 = vpop.permute.xlu0 %1397
      %1399 = vrot.lane.b32.xlu0 %v647, 21
      %v1400 = vpop.permute.xlu0 %1399
      %1401 = vrot.lane.b32.xlu0 %v648, 21
      %v1402 = vpop.permute.xlu0 %1401
      %1403 = vrot.lane.b32.xlu0 %v649, 21
      %v1404 = vpop.permute.xlu0 %1403
      %1405 = vrot.lane.b32.xlu0 %v650, 21
      %v1406 = vpop.permute.xlu0 %1405
      %1407 = vrot.lane.b32.xlu0 %v651, 21
      %v1408 = vpop.permute.xlu0 %1407
      %1409 = vrot.lane.b32.xlu0 %v652, 21
      %v1410 = vpop.permute.xlu0 %1409
      %1411 = vrot.lane.b32.xlu0 %v653, 21
      %v1412 = vpop.permute.xlu0 %1411
      %1413 = vrot.lane.b32.xlu0 %v654, 21
      %v1414 = vpop.permute.xlu0 %1413
      %1415 = vrot.lane.b32.xlu0 %v655, 21
      %v1416 = vpop.permute.xlu0 %1415
      %1417 = vrot.lane.b32.xlu0 %v656, 21
      %v1418 = vpop.permute.xlu0 %1417
      %1419 = vrot.lane.b32.xlu0 %v657, 21
      %v1420 = vpop.permute.xlu0 %1419
      %1421 = vrot.lane.b32.xlu0 %v658, 21
      %v1422 = vpop.permute.xlu0 %1421
      %1423 = vrot.lane.b32.xlu0 %v659, 21
      %v1424 = vpop.permute.xlu0 %1423
      %1425 = vrot.lane.b32.xlu0 %v660, 21
      %v1426 = vpop.permute.xlu0 %1425
      %1427 = vrot.lane.b32.xlu0 %v661, 21
      %v1428 = vpop.permute.xlu0 %1427
      %1429 = vrot.lane.b32.xlu0 %v662, 21
      %v1430 = vpop.permute.xlu0 %1429
      %1431 = vrot.lane.b32.xlu0 %v663, 21
      %v1432 = vpop.permute.xlu0 %1431
      %1433 = vrot.lane.b32.xlu0 %v664, 21
      %v1434 = vpop.permute.xlu0 %1433
      %1435 = vrot.lane.b32.xlu0 %v665, 21
      %v1436 = vpop.permute.xlu0 %1435
      %1437 = vrot.lane.b32.xlu0 %v666, 21
      %v1438 = vpop.permute.xlu0 %1437
      %1439 = vrot.lane.b32.xlu0 %v667, 21
      %v1440 = vpop.permute.xlu0 %1439
      %1441 = vrot.lane.b32.xlu0 %v668, 21
      %v1442 = vpop.permute.xlu0 %1441
      %1443 = vrot.lane.b32.xlu0 %v669, 21
      %v1444 = vpop.permute.xlu0 %1443
      %1445 = vrot.lane.b32.xlu0 %v670, 21
      %v1446 = vpop.permute.xlu0 %1445
      %1447 = vrot.lane.b32.xlu0 %v671, 21
      %v1448 = vpop.permute.xlu0 %1447
      %1449 = vrot.lane.b32.xlu0 %v672, 21
      %v1450 = vpop.permute.xlu0 %1449
      %1451 = vrot.lane.b32.xlu0 %v673, 21
      %v1452 = vpop.permute.xlu0 %1451
      %1453 = vrot.lane.b32.xlu0 %v674, 21
      %v1454 = vpop.permute.xlu0 %1453
      %1489 = vrot.lane.b32.xlu0 %v679, 24
      %v1490 = vpop.permute.xlu0 %1489
      %1491 = vrot.lane.b32.xlu0 %v680, 24
      %v1492 = vpop.permute.xlu0 %1491
      %1493 = vrot.lane.b32.xlu0 %v681, 24
      %v1494 = vpop.permute.xlu0 %1493
      %1495 = vrot.lane.b32.xlu0 %v682, 24
      %v1496 = vpop.permute.xlu0 %1495
      %1497 = vrot.lane.b32.xlu0 %v683, 24
      %v1498 = vpop.permute.xlu0 %1497
      %1499 = vrot.lane.b32.xlu0 %v684, 24
      %v1500 = vpop.permute.xlu0 %1499
      %1501 = vrot.lane.b32.xlu0 %v685, 24
      %v1502 = vpop.permute.xlu0 %1501
      %1503 = vrot.lane.b32.xlu0 %v686, 24
      %v1504 = vpop.permute.xlu0 %1503
      %1505 = vrot.lane.b32.xlu0 %v687, 24
      %v1506 = vpop.permute.xlu0 %1505
      %1507 = vrot.lane.b32.xlu0 %v688, 24
      %v1508 = vpop.permute.xlu0 %1507
      %1509 = vrot.lane.b32.xlu0 %v689, 24
      %v1510 = vpop.permute.xlu0 %1509
      %1511 = vrot.lane.b32.xlu0 %v690, 24
      %v1512 = vpop.permute.xlu0 %1511
      %1513 = vrot.lane.b32.xlu0 %v691, 24
      %v1514 = vpop.permute.xlu0 %1513
      %1515 = vrot.lane.b32.xlu0 %v692, 24
      %v1516 = vpop.permute.xlu0 %1515
      %1517 = vrot.lane.b32.xlu0 %v693, 24
      %v1518 = vpop.permute.xlu0 %1517
      %1519 = vrot.lane.b32.xlu0 %v694, 24
      %v1520 = vpop.permute.xlu0 %1519
      %1521 = vrot.lane.b32.xlu0 %v695, 24
      %v1522 = vpop.permute.xlu0 %1521
      %1523 = vrot.lane.b32.xlu0 %v696, 24
      %v1524 = vpop.permute.xlu0 %1523
      %1525 = vrot.lane.b32.xlu0 %v697, 24
      %v1526 = vpop.permute.xlu0 %1525
      %1527 = vrot.lane.b32.xlu0 %v698, 24
      %v1528 = vpop.permute.xlu0 %1527
      %1529 = vrot.lane.b32.xlu0 %v699, 24
      %v1530 = vpop.permute.xlu0 %1529
      %1531 = vrot.lane.b32.xlu0 %v700, 24
      %v1532 = vpop.permute.xlu0 %1531
      %1533 = vrot.lane.b32.xlu0 %v701, 24
      %v1534 = vpop.permute.xlu0 %1533
      %1535 = vrot.lane.b32.xlu0 %v702, 24
      %v1536 = vpop.permute.xlu0 %1535
      %1537 = vrot.lane.b32.xlu0 %v703, 24
      %v1538 = vpop.permute.xlu0 %1537
      %1539 = vrot.lane.b32.xlu0 %v704, 24
      %v1540 = vpop.permute.xlu0 %1539
      %1541 = vrot.lane.b32.xlu0 %v705, 24
      %v1542 = vpop.permute.xlu0 %1541
      %1543 = vrot.lane.b32.xlu0 %v706, 24
      %v1544 = vpop.permute.xlu0 %1543
      %1545 = vrot.lane.b32.xlu0 %v707, 24
      %v1546 = vpop.permute.xlu0 %1545
      %1547 = vrot.lane.b32.xlu0 %v708, 24
      %v1548 = vpop.permute.xlu0 %1547
      %1549 = vrot.lane.b32.xlu0 %v709, 24
      %v1550 = vpop.permute.xlu0 %1549
      %1551 = vrot.lane.b32.xlu0 %v710, 24
      %v1552 = vpop.permute.xlu0 %1551
      %v1585 = vsel %vm514, %v603, %v744
      %v1586 = vsel %vm514, %v604, %v746
      %v1587 = vsel %vm514, %v605, %v748
      %v1588 = vsel %vm514, %v606, %v750
      %v1589 = vsel %vm514, %v607, %v752
      %v1590 = vsel %vm514, %v608, %v754
      %v1591 = vsel %vm514, %v609, %v756
      %v1592 = vsel %vm514, %v610, %v758
      %v1593 = vsel %vm514, %v611, %v760
      %v1594 = vsel %vm514, %v612, %v762
      %v1595 = vsel %vm514, %v613, %v764
      %v1596 = vsel %vm514, %v614, %v766
      %v1597 = vsel %vm514, %v615, %v768
      %v1598 = vsel %vm514, %v616, %v770
      %v1599 = vsel %vm514, %v617, %v772
      %v1600 = vsel %vm514, %v618, %v774
      %v1601 = vsel %vm514, %v619, %v776
      %v1602 = vsel %vm514, %v620, %v778
      %v1603 = vsel %vm514, %v621, %v780
      %v1604 = vsel %vm514, %v622, %v782
      %v1605 = vsel %vm514, %v623, %v784
      %v1606 = vsel %vm514, %v624, %v786
      %v1607 = vsel %vm514, %v625, %v788
      %v1608 = vsel %vm514, %v626, %v790
      %v1609 = vsel %vm514, %v627, %v792
      %v1610 = vsel %vm514, %v628, %v794
      %v1611 = vsel %vm514, %v629, %v796
      %v1612 = vsel %vm514, %v630, %v798
      %v1613 = vsel %vm514, %v631, %v800
      %v1614 = vsel %vm514, %v632, %v802
      %v1615 = vsel %vm514, %v633, %v804
      %v1616 = vsel %vm514, %v634, %v806
      %vm1617 = vcmask 48128
      %v1618 = vsel %vm1617, %v1585, %v872
      %v1619 = vsel %vm1617, %v1586, %v874
      %v1620 = vsel %vm1617, %v1587, %v876
      %v1621 = vsel %vm1617, %v1588, %v878
      %v1622 = vsel %vm1617, %v1589, %v880
      %v1623 = vsel %vm1617, %v1590, %v882
      %v1624 = vsel %vm1617, %v1591, %v884
      %v1625 = vsel %vm1617, %v1592, %v886
      %v1626 = vsel %vm1617, %v1593, %v888
      %v1627 = vsel %vm1617, %v1594, %v890
      %v1628 = vsel %vm1617, %v1595, %v892
      %v1629 = vsel %vm1617, %v1596, %v894
      %v1630 = vsel %vm1617, %v1597, %v896
      %v1631 = vsel %vm1617, %v1598, %v898
      %v1632 = vsel %vm1617, %v1599, %v900
      %v1633 = vsel %vm1617, %v1600, %v902
      %v1634 = vsel %vm1617, %v1601, %v904
      %v1635 = vsel %vm1617, %v1602, %v906
      %v1636 = vsel %vm1617, %v1603, %v908
      %v1637 = vsel %vm1617, %v1604, %v910
      %v1638 = vsel %vm1617, %v1605, %v912
      %v1639 = vsel %vm1617, %v1606, %v914
      %v1640 = vsel %vm1617, %v1607, %v916
      %v1641 = vsel %vm1617, %v1608, %v918
      %v1642 = vsel %vm1617, %v1609, %v920
      %v1643 = vsel %vm1617, %v1610, %v922
      %v1644 = vsel %vm1617, %v1611, %v924
      %v1645 = vsel %vm1617, %v1612, %v926
      %v1646 = vsel %vm1617, %v1613, %v928
      %v1647 = vsel %vm1617, %v1614, %v930
      %v1648 = vsel %vm1617, %v1615, %v932
      %v1649 = vsel %vm1617, %v1616, %v934
      %vm1650 = vcmask 72704
      %v1651 = vsel %vm1650, %v1618, %v1000
      %v1652 = vsel %vm1650, %v1619, %v1002
      %v1653 = vsel %vm1650, %v1620, %v1004
      %v1654 = vsel %vm1650, %v1621, %v1006
      %v1655 = vsel %vm1650, %v1622, %v1008
      %v1656 = vsel %vm1650, %v1623, %v1010
      %v1657 = vsel %vm1650, %v1624, %v1012
      %v1658 = vsel %vm1650, %v1625, %v1014
      %v1659 = vsel %vm1650, %v1626, %v1016
      %v1660 = vsel %vm1650, %v1627, %v1018
      %v1661 = vsel %vm1650, %v1628, %v1020
      %v1662 = vsel %vm1650, %v1629, %v1022
      %v1663 = vsel %vm1650, %v1630, %v1024
      %v1664 = vsel %vm1650, %v1631, %v1026
      %v1665 = vsel %vm1650, %v1632, %v1028
      %v1666 = vsel %vm1650, %v1633, %v1030
      %v1667 = vsel %vm1650, %v1634, %v1032
      %v1668 = vsel %vm1650, %v1635, %v1034
      %v1669 = vsel %vm1650, %v1636, %v1036
      %v1670 = vsel %vm1650, %v1637, %v1038
      %v1671 = vsel %vm1650, %v1638, %v1040
      %v1672 = vsel %vm1650, %v1639, %v1042
      %v1673 = vsel %vm1650, %v1640, %v1044
      %v1674 = vsel %vm1650, %v1641, %v1046
      %v1675 = vsel %vm1650, %v1642, %v1048
      %v1676 = vsel %vm1650, %v1643, %v1050
      %v1677 = vsel %vm1650, %v1644, %v1052
      %v1678 = vsel %vm1650, %v1645, %v1054
      %v1679 = vsel %vm1650, %v1646, %v1056
      %v1680 = vsel %vm1650, %v1647, %v1058
      %v1681 = vsel %vm1650, %v1648, %v1060
      %v1682 = vsel %vm1650, %v1649, %v1062
      %vm1683 = vcmask 97280
      %v1684 = vsel %vm1683, %v1651, %v1098
      %v1685 = vsel %vm1683, %v1652, %v1100
      %v1686 = vsel %vm1683, %v1653, %v1102
      %v1687 = vsel %vm1683, %v1654, %v1104
      %v1688 = vsel %vm1683, %v1655, %v1106
      %v1689 = vsel %vm1683, %v1656, %v1108
      %v1690 = vsel %vm1683, %v1657, %v1110
      %v1691 = vsel %vm1683, %v1658, %v1112
      %v1692 = vsel %vm1683, %v1659, %v1114
      %v1693 = vsel %vm1683, %v1660, %v1116
      %v1694 = vsel %vm1683, %v1661, %v1118
      %v1695 = vsel %vm1683, %v1662, %v1120
      %v1696 = vsel %vm1683, %v1663, %v1122
      %v1697 = vsel %vm1683, %v1664, %v1124
      %v1698 = vsel %vm1683, %v1665, %v1126
      %v1699 = vsel %vm1683, %v1666, %v1128
      %v1700 = vsel %vm1683, %v1667, %v1130
      %v1701 = vsel %vm1683, %v1668, %v1132
      %v1702 = vsel %vm1683, %v1669, %v1134
      %v1703 = vsel %vm1683, %v1670, %v1136
      %v1704 = vsel %vm1683, %v1671, %v1138
      %v1705 = vsel %vm1683, %v1672, %v1140
      %v1706 = vsel %vm1683, %v1673, %v1142
      %v1707 = vsel %vm1683, %v1674, %v1144
      %v1708 = vsel %vm1683, %v1675, %v1146
      %v1709 = vsel %vm1683, %v1676, %v1148
      %v1710 = vsel %vm1683, %v1677, %v1150
      %v1711 = vsel %vm1683, %v1678, %v1152
      %v1712 = vsel %vm1683, %v1679, %v1154
      %v1713 = vsel %vm1683, %v1680, %v1156
      %v1714 = vsel %vm1683, %v1681, %v1158
      %v1715 = vsel %vm1683, %v1682, %v1160
      %vm1716 = vcmask 121856
      %v1717 = vsel %vm1716, %v1684, %v1196
      %v1718 = vsel %vm1716, %v1685, %v1198
      %v1719 = vsel %vm1716, %v1686, %v1200
      %v1720 = vsel %vm1716, %v1687, %v1202
      %v1721 = vsel %vm1716, %v1688, %v1204
      %v1722 = vsel %vm1716, %v1689, %v1206
      %v1723 = vsel %vm1716, %v1690, %v1208
      %v1724 = vsel %vm1716, %v1691, %v1210
      %v1725 = vsel %vm1716, %v1692, %v1212
      %v1726 = vsel %vm1716, %v1693, %v1214
      %v1727 = vsel %vm1716, %v1694, %v1216
      %v1728 = vsel %vm1716, %v1695, %v1218
      %v1729 = vsel %vm1716, %v1696, %v1220
      %v1730 = vsel %vm1716, %v1697, %v1222
      %v1731 = vsel %vm1716, %v1698, %v1224
      %v1732 = vsel %vm1716, %v1699, %v1226
      %v1733 = vsel %vm1716, %v1700, %v1228
      %v1734 = vsel %vm1716, %v1701, %v1230
      %v1735 = vsel %vm1716, %v1702, %v1232
      %v1736 = vsel %vm1716, %v1703, %v1234
      %v1737 = vsel %vm1716, %v1704, %v1236
      %v1738 = vsel %vm1716, %v1705, %v1238
      %v1739 = vsel %vm1716, %v1706, %v1240
      %v1740 = vsel %vm1716, %v1707, %v1242
      %v1741 = vsel %vm1716, %v1708, %v1244
      %v1742 = vsel %vm1716, %v1709, %v1246
      %v1743 = vsel %vm1716, %v1710, %v1248
      %v1744 = vsel %vm1716, %v1711, %v1250
      %v1745 = vsel %vm1716, %v1712, %v1252
      %v1746 = vsel %vm1716, %v1713, %v1254
      %v1747 = vsel %vm1716, %v1714, %v1256
      %v1748 = vsel %vm1716, %v1715, %v1258
      %vm1749 = vcmask 146432
      %v1750 = vsel %vm1749, %v1717, %v1294
      %v1751 = vsel %vm1749, %v1718, %v1296
      %v1752 = vsel %vm1749, %v1719, %v1298
      %v1753 = vsel %vm1749, %v1720, %v1300
      %v1754 = vsel %vm1749, %v1721, %v1302
      %v1755 = vsel %vm1749, %v1722, %v1304
      %v1756 = vsel %vm1749, %v1723, %v1306
      %v1757 = vsel %vm1749, %v1724, %v1308
      %v1758 = vsel %vm1749, %v1725, %v1310
      %v1759 = vsel %vm1749, %v1726, %v1312
      %v1760 = vsel %vm1749, %v1727, %v1314
      %v1761 = vsel %vm1749, %v1728, %v1316
      %v1762 = vsel %vm1749, %v1729, %v1318
      %v1763 = vsel %vm1749, %v1730, %v1320
      %v1764 = vsel %vm1749, %v1731, %v1322
      %v1765 = vsel %vm1749, %v1732, %v1324
      %v1766 = vsel %vm1749, %v1733, %v1326
      %v1767 = vsel %vm1749, %v1734, %v1328
      %v1768 = vsel %vm1749, %v1735, %v1330
      %v1769 = vsel %vm1749, %v1736, %v1332
      %v1770 = vsel %vm1749, %v1737, %v1334
      %v1771 = vsel %vm1749, %v1738, %v1336
      %v1772 = vsel %vm1749, %v1739, %v1338
      %v1773 = vsel %vm1749, %v1740, %v1340
      %v1774 = vsel %vm1749, %v1741, %v1342
      %v1775 = vsel %vm1749, %v1742, %v1344
      %v1776 = vsel %vm1749, %v1743, %v1346
      %v1777 = vsel %vm1749, %v1744, %v1348
      %v1778 = vsel %vm1749, %v1745, %v1350
      %v1779 = vsel %vm1749, %v1746, %v1352
      %v1780 = vsel %vm1749, %v1747, %v1354
      %v1781 = vsel %vm1749, %v1748, %v1356
      %vm1782 = vcmask 171008
      %v1783 = vsel %vm1782, %v1750, %v1392
      %v1784 = vsel %vm1782, %v1751, %v1394
      %v1785 = vsel %vm1782, %v1752, %v1396
      %v1786 = vsel %vm1782, %v1753, %v1398
      %v1787 = vsel %vm1782, %v1754, %v1400
      %v1788 = vsel %vm1782, %v1755, %v1402
      %v1789 = vsel %vm1782, %v1756, %v1404
      %v1790 = vsel %vm1782, %v1757, %v1406
      %v1791 = vsel %vm1782, %v1758, %v1408
      %v1792 = vsel %vm1782, %v1759, %v1410
      %v1793 = vsel %vm1782, %v1760, %v1412
      %v1794 = vsel %vm1782, %v1761, %v1414
      %v1795 = vsel %vm1782, %v1762, %v1416
      %v1796 = vsel %vm1782, %v1763, %v1418
      %v1797 = vsel %vm1782, %v1764, %v1420
      %v1798 = vsel %vm1782, %v1765, %v1422
      %v1799 = vsel %vm1782, %v1766, %v1424
      %v1800 = vsel %vm1782, %v1767, %v1426
      %v1801 = vsel %vm1782, %v1768, %v1428
      %v1802 = vsel %vm1782, %v1769, %v1430
      %v1803 = vsel %vm1782, %v1770, %v1432
      %v1804 = vsel %vm1782, %v1771, %v1434
      %v1805 = vsel %vm1782, %v1772, %v1436
      %v1806 = vsel %vm1782, %v1773, %v1438
      %v1807 = vsel %vm1782, %v1774, %v1440
      %v1808 = vsel %vm1782, %v1775, %v1442
      %v1809 = vsel %vm1782, %v1776, %v1444
      %v1810 = vsel %vm1782, %v1777, %v1446
      %v1811 = vsel %vm1782, %v1778, %v1448
      %v1812 = vsel %vm1782, %v1779, %v1450
      %v1813 = vsel %vm1782, %v1780, %v1452
      %v1814 = vsel %vm1782, %v1781, %v1454
      %vm1815 = vcmask 195584
      %v1816 = vsel %vm1815, %v1783, %v1490
      %v1817 = vsel %vm1815, %v1784, %v1492
      %v1818 = vsel %vm1815, %v1785, %v1494
      %v1819 = vsel %vm1815, %v1786, %v1496
      %v1820 = vsel %vm1815, %v1787, %v1498
      %v1821 = vsel %vm1815, %v1788, %v1500
      %v1822 = vsel %vm1815, %v1789, %v1502
      %v1823 = vsel %vm1815, %v1790, %v1504
      %v1824 = vsel %vm1815, %v1791, %v1506
      %v1825 = vsel %vm1815, %v1792, %v1508
      %v1826 = vsel %vm1815, %v1793, %v1510
      %v1827 = vsel %vm1815, %v1794, %v1512
      %v1828 = vsel %vm1815, %v1795, %v1514
      %v1829 = vsel %vm1815, %v1796, %v1516
      %v1830 = vsel %vm1815, %v1797, %v1518
      %v1831 = vsel %vm1815, %v1798, %v1520
      %v1832 = vsel %vm1815, %v1799, %v1522
      %v1833 = vsel %vm1815, %v1800, %v1524
      %v1834 = vsel %vm1815, %v1801, %v1526
      %v1835 = vsel %vm1815, %v1802, %v1528
      %v1836 = vsel %vm1815, %v1803, %v1530
      %v1837 = vsel %vm1815, %v1804, %v1532
      %v1838 = vsel %vm1815, %v1805, %v1534
      %v1839 = vsel %vm1815, %v1806, %v1536
      %v1840 = vsel %vm1815, %v1807, %v1538
      %v1841 = vsel %vm1815, %v1808, %v1540
      %v1842 = vsel %vm1815, %v1809, %v1542
      %v1843 = vsel %vm1815, %v1810, %v1544
      %v1844 = vsel %vm1815, %v1811, %v1546
      %v1845 = vsel %vm1815, %v1812, %v1548
      %v1846 = vsel %vm1815, %v1813, %v1550
      %v1847 = vsel %vm1815, %v1814, %v1552
      %v1848 = vpack.c.bf16 %v1817, %v1816
      %v1849 = vpack.c.bf16 %v1819, %v1818
      %v1850 = vpack.c.bf16 %v1821, %v1820
      %v1851 = vpack.c.bf16 %v1823, %v1822
      %v1852 = vpack.c.bf16 %v1825, %v1824
      %v1853 = vpack.c.bf16 %v1827, %v1826
      %v1854 = vpack.c.bf16 %v1829, %v1828
      %v1855 = vpack.c.bf16 %v1831, %v1830
      %v1856 = vpack.c.bf16 %v1833, %v1832
      %v1857 = vpack.c.bf16 %v1835, %v1834
      %v1858 = vpack.c.bf16 %v1837, %v1836
      %v1859 = vpack.c.bf16 %v1839, %v1838
      %v1860 = vpack.c.bf16 %v1841, %v1840
      %v1861 = vpack.c.bf16 %v1843, %v1842
      %v1862 = vpack.c.bf16 %v1845, %v1844
      %v1863 = vpack.c.bf16 %v1847, %v1846
      %v1864 = vld [vmem:[%s1] sm:$0xf]
      %v1865 = vld [vmem:[%s1 + $0x4] sm:$0xf]
      %v1866 = vld [vmem:[%s1 + $0x8] sm:$0xf]
      %v1867 = vld [vmem:[%s1 + $0xc] sm:$0x3]
      %v1868 = vld [vmem:[%s2] sm:$0x1]
      %v1870 = vlaneseq
      %v1871 = vshrl.u32 %v1870, 7
      %v1872 = vsub.s32 0, %v1871
      %v1873 = vrot.slane %v1868, %v1872
      %v1879 = vunpack.c.l.b16 %v1864
      %v1880 = vunpack.c.l.b16 %v1865
      %v1881 = vunpack.c.l.b16 %v1866
      %v1882 = vunpack.c.l.b16 %v1867
      %v1883 = vpack.c.b16 %v1880, %v1879
      %v1884 = vpack.c.b16 %v1882, %v1881
      %vm1886 = vcmask 220160
      %v1888 = vsel %vm1886, %v1848, 0
      %v1891 = vsel %vm1886, %v1849, 0
      %v1894 = vsel %vm1886, %v1850, 0
      %v1897 = vsel %vm1886, %v1851, 0
      %v1900 = vsel %vm1886, %v1852, 0
      %v1903 = vsel %vm1886, %v1853, 0
      %v1906 = vsel %vm1886, %v1854, 0
      %v1909 = vsel %vm1886, %v1855, 0
      %v1912 = vsel %vm1886, %v1856, 0
      %v1915 = vsel %vm1886, %v1857, 0
      %v1918 = vsel %vm1886, %v1858, 0
      %v1921 = vsel %vm1886, %v1859, 0
      %v1924 = vsel %vm1886, %v1860, 0
      %v1927 = vsel %vm1886, %v1861, 0
      %v1930 = vsel %vm1886, %v1862, 0
      %v1933 = vsel %vm1886, %v1863, 0
      %vm1935 = vcmask 1044480
      %vm1936 = vcmask 1045504
      %v1937 = vsel %vm1935, 4294967295, 65535
      %v1938 = vsel %vm1936, %v1937, 0
      %v1940 = vand.u32 %v1884, %v1938
      %1942 = vmatprep.subr.bf16.mxu0 0
      %1943 = vmatpush1.bf16.msra.mxu0 %v1883
      %1944 = vmatprep.subr.bf16.mxu0 0
      %1945 = vmatpush1.bf16.msra.mxu0 %v1940
      %1946 = vmatprep.subr.bf16.mxu0 0
      %1947 = vmatpush1.bf16.msra.mxu0 0
      %1948 = vmatprep.subr.bf16.mxu0 0
      %1949 = vmatpush1.bf16.msra.mxu0 0
      %1950 = vmatprep.subr.bf16.mxu0 0
      %1951 = vmatpush1.bf16.msra.mxu0 0
      %1952 = vmatprep.subr.bf16.mxu0 0
      %1953 = vmatpush1.bf16.msra.mxu0 0
      %1954 = vmatprep.subr.bf16.mxu0 0
      %1955 = vmatpush1.bf16.msra.mxu0 0
      %1956 = vmatprep.subr.bf16.mxu0 0
      %1957 = vmatpush1.bf16.msra.mxu0 0
      %1958 = vmatprep.subr.bf16.mxu0 0
      %1959 = vmatpush1.bf16.msra.mxu0 0
      %1960 = vmatprep.subr.bf16.mxu0 0
      %1961 = vmatpush1.bf16.msra.mxu0 0
      %1962 = vmatprep.subr.bf16.mxu0 0
      %1963 = vmatpush1.bf16.msra.mxu0 0
      %1964 = vmatprep.subr.bf16.mxu0 0
      %1965 = vmatpush1.bf16.msra.mxu0 0
      %1966 = vmatprep.subr.bf16.mxu0 0
      %1967 = vmatpush1.bf16.msra.mxu0 0
      %1968 = vmatprep.subr.bf16.mxu0 0
      %1969 = vmatpush1.bf16.msra.mxu0 0
      %1970 = vmatprep.subr.bf16.mxu0 0
      %1971 = vmatpush1.bf16.msra.mxu0 0
      %1972 = vmatprep.subr.bf16.mxu0 0
      %1973 = vmatpush1.bf16.msra.mxu0 0
      %1974 = vmatprep.mubr.bf16.mxu0 0
      %1975 = vmatmul.mubr.bf16.gmra.mrb[0].mxu0 %v1888
      %v1976 = vpop.f32.mrb[0].mxu0
      %v1977 = vadd.f32 %v1873, %v1976
      %v1978 = vpop.f32.mrb[0].mxu0
      %v1979 = vpop.f32.mrb[0].mxu0
      %v1980 = vadd.f32 %v1873, %v1979
      %v1981 = vpop.f32.mrb[0].mxu0
      %1982 = vmatprep.mubr.bf16.mxu0 0
      %1983 = vmatmul.mubr.bf16.gmra.mrb[0].mxu0 %v1891
      %v1984 = vpop.f32.mrb[0].mxu0
      %v1985 = vadd.f32 %v1873, %v1984
      %v1986 = vpop.f32.mrb[0].mxu0
      %v1987 = vpop.f32.mrb[0].mxu0
      %v1988 = vadd.f32 %v1873, %v1987
      %v1989 = vpop.f32.mrb[0].mxu0
      %1990 = vmatprep.mubr.bf16.mxu0 0
      %1991 = vmatmul.mubr.bf16.gmra.mrb[0].mxu0 %v1894
      %v1992 = vpop.f32.mrb[0].mxu0
      %v1993 = vadd.f32 %v1873, %v1992
      %v1994 = vpop.f32.mrb[0].mxu0
      %v1995 = vpop.f32.mrb[0].mxu0
      %v1996 = vadd.f32 %v1873, %v1995
      %v1997 = vpop.f32.mrb[0].mxu0
      %1998 = vmatprep.mubr.bf16.mxu0 0
      %1999 = vmatmul.mubr.bf16.gmra.mrb[0].mxu0 %v1897
      %v2000 = vpop.f32.mrb[0].mxu0
      %v2001 = vadd.f32 %v1873, %v2000
      %v2002 = vpop.f32.mrb[0].mxu0
      %v2003 = vpop.f32.mrb[0].mxu0
      %v2004 = vadd.f32 %v1873, %v2003
      %v2005 = vpop.f32.mrb[0].mxu0
      %2006 = vmatprep.mubr.bf16.mxu0 0
      %2007 = vmatmul.mubr.bf16.gmra.mrb[0].mxu0 %v1900
      %v2008 = vpop.f32.mrb[0].mxu0
      %v2009 = vadd.f32 %v1873, %v2008
      %v2010 = vpop.f32.mrb[0].mxu0
      %v2011 = vpop.f32.mrb[0].mxu0
      %v2012 = vadd.f32 %v1873, %v2011
      %v2013 = vpop.f32.mrb[0].mxu0
      %2014 = vmatprep.mubr.bf16.mxu0 0
      %2015 = vmatmul.mubr.bf16.gmra.mrb[0].mxu0 %v1903
      %v2016 = vpop.f32.mrb[0].mxu0
      %v2017 = vadd.f32 %v1873, %v2016
      %v2018 = vpop.f32.mrb[0].mxu0
      %v2019 = vpop.f32.mrb[0].mxu0
      %v2020 = vadd.f32 %v1873, %v2019
      %v2021 = vpop.f32.mrb[0].mxu0
      %2022 = vmatprep.mubr.bf16.mxu0 0
      %2023 = vmatmul.mubr.bf16.gmra.mrb[0].mxu0 %v1906
      %v2024 = vpop.f32.mrb[0].mxu0
      %v2025 = vadd.f32 %v1873, %v2024
      %v2026 = vpop.f32.mrb[0].mxu0
      %v2027 = vpop.f32.mrb[0].mxu0
      %v2028 = vadd.f32 %v1873, %v2027
      %v2029 = vpop.f32.mrb[0].mxu0
      %2030 = vmatprep.mubr.bf16.mxu0 0
      %2031 = vmatmul.mubr.bf16.gmra.mrb[0].mxu0 %v1909
      %v2032 = vpop.f32.mrb[0].mxu0
      %v2033 = vadd.f32 %v1873, %v2032
      %v2034 = vpop.f32.mrb[0].mxu0
      %v2035 = vpop.f32.mrb[0].mxu0
      %v2036 = vadd.f32 %v1873, %v2035
      %v2037 = vpop.f32.mrb[0].mxu0
      %2038 = vmatprep.mubr.bf16.mxu0 0
      %2039 = vmatmul.mubr.bf16.gmra.mrb[0].mxu0 %v1912
      %v2040 = vpop.f32.mrb[0].mxu0
      %v2041 = vadd.f32 %v1873, %v2040
      %v2042 = vpop.f32.mrb[0].mxu0
      %v2043 = vpop.f32.mrb[0].mxu0
      %v2044 = vadd.f32 %v1873, %v2043
      %v2045 = vpop.f32.mrb[0].mxu0
      %2046 = vmatprep.mubr.bf16.mxu0 0
      %2047 = vmatmul.mubr.bf16.gmra.mrb[0].mxu0 %v1915
      %v2048 = vpop.f32.mrb[0].mxu0
      %v2049 = vadd.f32 %v1873, %v2048
      %v2050 = vpop.f32.mrb[0].mxu0
      %v2051 = vpop.f32.mrb[0].mxu0
      %v2052 = vadd.f32 %v1873, %v2051
      %v2053 = vpop.f32.mrb[0].mxu0
      %2054 = vmatprep.mubr.bf16.mxu0 0
      %2055 = vmatmul.mubr.bf16.gmra.mrb[0].mxu0 %v1918
      %v2056 = vpop.f32.mrb[0].mxu0
      %v2057 = vadd.f32 %v1873, %v2056
      %v2058 = vpop.f32.mrb[0].mxu0
      %v2059 = vpop.f32.mrb[0].mxu0
      %v2060 = vadd.f32 %v1873, %v2059
      %v2061 = vpop.f32.mrb[0].mxu0
      %2062 = vmatprep.mubr.bf16.mxu0 0
      %2063 = vmatmul.mubr.bf16.gmra.mrb[0].mxu0 %v1921
      %v2064 = vpop.f32.mrb[0].mxu0
      %v2065 = vadd.f32 %v1873, %v2064
      %v2066 = vpop.f32.mrb[0].mxu0
      %v2067 = vpop.f32.mrb[0].mxu0
      %v2068 = vadd.f32 %v1873, %v2067
      %v2069 = vpop.f32.mrb[0].mxu0
      %2070 = vmatprep.mubr.bf16.mxu0 0
      %2071 = vmatmul.mubr.bf16.gmra.mrb[0].mxu0 %v1924
      %v2072 = vpop.f32.mrb[0].mxu0
      %v2073 = vadd.f32 %v1873, %v2072
      %v2074 = vpop.f32.mrb[0].mxu0
      %v2075 = vpop.f32.mrb[0].mxu0
      %v2076 = vadd.f32 %v1873, %v2075
      %v2077 = vpop.f32.mrb[0].mxu0
      %2078 = vmatprep.mubr.bf16.mxu0 0
      %2079 = vmatmul.mubr.bf16.gmra.mrb[0].mxu0 %v1927
      %v2080 = vpop.f32.mrb[0].mxu0
      %v2081 = vadd.f32 %v1873, %v2080
      %v2082 = vpop.f32.mrb[0].mxu0
      %v2083 = vpop.f32.mrb[0].mxu0
      %v2084 = vadd.f32 %v1873, %v2083
      %v2085 = vpop.f32.mrb[0].mxu0
      %2086 = vmatprep.mubr.bf16.mxu0 0
      %2087 = vmatmul.mubr.bf16.gmra.mrb[0].mxu0 %v1930
      %v2088 = vpop.f32.mrb[0].mxu0
      %v2089 = vadd.f32 %v1873, %v2088
      %v2090 = vpop.f32.mrb[0].mxu0
      %v2091 = vpop.f32.mrb[0].mxu0
      %v2092 = vadd.f32 %v1873, %v2091
      %v2093 = vpop.f32.mrb[0].mxu0
      %2094 = vmatprep.mubr.bf16.mxu0 0
      %2095 = vmatmul.mubr.bf16.gmra.mrb[0].mxu0 %v1933
      %v2096 = vpop.f32.mrb[0].mxu0
      %v2097 = vadd.f32 %v1873, %v2096
      %v2098 = vpop.f32.mrb[0].mxu0
      %v2099 = vpop.f32.mrb[0].mxu0
      %v2100 = vadd.f32 %v1873, %v2099
      %v2101 = vpop.f32.mrb[0].mxu0
      %2102 = vdwg.mxu0
      %v2103 = vmax.f32 %v1977, 0.0
      %v2104 = vmax.f32 %v1980, 0.0
      %v2105 = vmax.f32 %v1985, 0.0
      %v2106 = vmax.f32 %v1988, 0.0
      %v2107 = vmax.f32 %v1993, 0.0
      %v2108 = vmax.f32 %v1996, 0.0
      %v2109 = vmax.f32 %v2001, 0.0
      %v2110 = vmax.f32 %v2004, 0.0
      %v2111 = vmax.f32 %v2009, 0.0
      %v2112 = vmax.f32 %v2012, 0.0
      %v2113 = vmax.f32 %v2017, 0.0
      %v2114 = vmax.f32 %v2020, 0.0
      %v2115 = vmax.f32 %v2025, 0.0
      %v2116 = vmax.f32 %v2028, 0.0
      %v2117 = vmax.f32 %v2033, 0.0
      %v2118 = vmax.f32 %v2036, 0.0
      %v2119 = vmax.f32 %v2041, 0.0
      %v2120 = vmax.f32 %v2044, 0.0
      %v2121 = vmax.f32 %v2049, 0.0
      %v2122 = vmax.f32 %v2052, 0.0
      %v2123 = vmax.f32 %v2057, 0.0
      %v2124 = vmax.f32 %v2060, 0.0
      %v2125 = vmax.f32 %v2065, 0.0
      %v2126 = vmax.f32 %v2068, 0.0
      %v2127 = vmax.f32 %v2073, 0.0
      %v2128 = vmax.f32 %v2076, 0.0
      %v2129 = vmax.f32 %v2081, 0.0
      %v2130 = vmax.f32 %v2084, 0.0
      %v2131 = vmax.f32 %v2089, 0.0
      %v2132 = vmax.f32 %v2092, 0.0
      %v2133 = vmax.f32 %v2097, 0.0
      %v2134 = vmax.f32 %v2100, 0.0
      %vm2135 = vcmask 130048
      %2136 = vst.msk [vmem:[#allocation3] sm:$0xff] %vm2135, 0.0
      %2137 = vst.msk [vmem:[#allocation3 + $0x8] sm:$0xff] %vm2135, 0.0
      %vm2138 = vcmask 123904
      %2139 = vst.msk [vmem:[#allocation3 + $0x10] sm:$0x3] %vm2138, 0.0
      %2140 = vst.msk [vmem:[#allocation3 + $0x18] sm:$0xff] %vm2135, 0.0
      %2141 = vst.msk [vmem:[#allocation3 + $0x20] sm:$0xff] %vm2135, 0.0
      %2142 = vst.msk [vmem:[#allocation3 + $0x28] sm:$0x3] %vm2138, 0.0
      %2143 = vst.msk [vmem:[#allocation3 + $0x30] sm:$0xff] %vm2135, 0.0
      %2144 = vst.msk [vmem:[#allocation3 + $0x38] sm:$0xff] %vm2135, 0.0
      %2145 = vst.msk [vmem:[#allocation3 + $0x40] sm:$0x3] %vm2138, 0.0
      %2146 = vst.msk [vmem:[#allocation3 + $0x48] sm:$0xff] %vm2135, 0.0
      %2147 = vst.msk [vmem:[#allocation3 + $0x50] sm:$0xff] %vm2135, 0.0
      %2148 = vst.msk [vmem:[#allocation3 + $0x58] sm:$0x3] %vm2138, 0.0
      %2149 = vst.msk [vmem:[#allocation3 + $0x60] sm:$0xff] %vm2135, 0.0
      %2150 = vst.msk [vmem:[#allocation3 + $0x68] sm:$0xff] %vm2135, 0.0
      %2151 = vst.msk [vmem:[#allocation3 + $0x70] sm:$0x3] %vm2138, 0.0
      %2152 = vst.msk [vmem:[#allocation3 + $0x78] sm:$0xff] %vm2135, 0.0
      %2153 = vst.msk [vmem:[#allocation3 + $0x80] sm:$0xff] %vm2135, 0.0
      %2154 = vst.msk [vmem:[#allocation3 + $0x88] sm:$0x3] %vm2138, 0.0
      %2155 = vst.msk [vmem:[#allocation3 + $0x90] sm:$0xff] %vm2135, 0.0
      %2156 = vst.msk [vmem:[#allocation3 + $0x98] sm:$0xff] %vm2135, 0.0
      %2157 = vst.msk [vmem:[#allocation3 + $0xa0] sm:$0x3] %vm2138, 0.0
      %2158 = vst.msk [vmem:[#allocation3 + $0xa8] sm:$0xff] %vm2135, 0.0
      %2159 = vst.msk [vmem:[#allocation3 + $0xb0] sm:$0xff] %vm2135, 0.0
      %2160 = vst.msk [vmem:[#allocation3 + $0xb8] sm:$0x3] %vm2138, 0.0
      %2161 = vst.msk [vmem:[#allocation3 + $0xc0] sm:$0xff] %vm2135, 0.0
      %2162 = vst.msk [vmem:[#allocation3 + $0xc8] sm:$0xff] %vm2135, 0.0
      %2163 = vst.msk [vmem:[#allocation3 + $0xd0] sm:$0x3] %vm2138, 0.0
      %2164 = vst.msk [vmem:[#allocation3 + $0xd8] sm:$0xff] %vm2135, 0.0
      %2165 = vst.msk [vmem:[#allocation3 + $0xe0] sm:$0xff] %vm2135, 0.0
      %2166 = vst.msk [vmem:[#allocation3 + $0xe8] sm:$0x3] %vm2138, 0.0
      %2167 = vst.msk [vmem:[#allocation3 + $0xf0] sm:$0xff] %vm2135, 0.0
      %2168 = vst.msk [vmem:[#allocation3 + $0xf8] sm:$0xff] %vm2135, 0.0
      %2169 = vst.msk [vmem:[#allocation3 + $0x100] sm:$0x3] %vm2138, 0.0
      %2170 = vst.msk [vmem:[#allocation3 + $0x108] sm:$0xff] %vm2135, 0.0
      %2171 = vst.msk [vmem:[#allocation3 + $0x110] sm:$0xff] %vm2135, 0.0
      %2172 = vst.msk [vmem:[#allocation3 + $0x118] sm:$0x3] %vm2138, 0.0
      %2173 = vst.msk [vmem:[#allocation3 + $0x120] sm:$0xff] %vm2135, 0.0
      %2174 = vst.msk [vmem:[#allocation3 + $0x128] sm:$0xff] %vm2135, 0.0
      %2175 = vst.msk [vmem:[#allocation3 + $0x130] sm:$0x3] %vm2138, 0.0
      %2176 = vst.msk [vmem:[#allocation3 + $0x138] sm:$0xff] %vm2135, 0.0
      %2177 = vst.msk [vmem:[#allocation3 + $0x140] sm:$0xff] %vm2135, 0.0
      %2178 = vst.msk [vmem:[#allocation3 + $0x148] sm:$0x3] %vm2138, 0.0
      %2179 = vst.msk [vmem:[#allocation3 + $0x150] sm:$0xff] %vm2135, 0.0
      %2180 = vst.msk [vmem:[#allocation3 + $0x158] sm:$0xff] %vm2135, 0.0
      %2181 = vst.msk [vmem:[#allocation3 + $0x160] sm:$0x3] %vm2138, 0.0
      %2182 = vst.msk [vmem:[#allocation3 + $0x168] sm:$0xff] %vm2135, 0.0
      %2183 = vst.msk [vmem:[#allocation3 + $0x170] sm:$0xff] %vm2135, 0.0
      %2184 = vst.msk [vmem:[#allocation3 + $0x178] sm:$0x3] %vm2138, 0.0
      %2185 = vst.msk [vmem:[#allocation3 + $0x180] sm:$0xff] %vm2135, 0.0
      %2186 = vst.msk [vmem:[#allocation3 + $0x188] sm:$0xff] %vm2135, 0.0
      %2187 = vst.msk [vmem:[#allocation3 + $0x190] sm:$0x3] %vm2138, 0.0
      %2188 = vst.msk [vmem:[#allocation3 + $0x198] sm:$0xff] %vm2135, 0.0
      %2189 = vst.msk [vmem:[#allocation3 + $0x1a0] sm:$0xff] %vm2135, 0.0
      %2190 = vst.msk [vmem:[#allocation3 + $0x1a8] sm:$0x3] %vm2138, 0.0
      %s2191 = scalar_lea.vmem [#allocation3], 24
      %2192 = vst.msk [vmem:[%s2191 + $0x1] sm:$0xff] %vm2135, %v2103
      %2193 = vst.msk [vmem:[%s2191 + $0x9] sm:$0xff] %vm2135, %v2104
      %2194 = vst.msk [vmem:[%s2191 + $0x19] sm:$0xff] %vm2135, %v2105
      %2195 = vst.msk [vmem:[%s2191 + $0x21] sm:$0xff] %vm2135, %v2106
      %2196 = vst.msk [vmem:[%s2191 + $0x31] sm:$0xff] %vm2135, %v2107
      %2197 = vst.msk [vmem:[%s2191 + $0x39] sm:$0xff] %vm2135, %v2108
      %2198 = vst.msk [vmem:[%s2191 + $0x49] sm:$0xff] %vm2135, %v2109
      %2199 = vst.msk [vmem:[%s2191 + $0x51] sm:$0xff] %vm2135, %v2110
      %2200 = vst.msk [vmem:[%s2191 + $0x61] sm:$0xff] %vm2135, %v2111
      %2201 = vst.msk [vmem:[%s2191 + $0x69] sm:$0xff] %vm2135, %v2112
      %2202 = vst.msk [vmem:[%s2191 + $0x79] sm:$0xff] %vm2135, %v2113
      %2203 = vst.msk [vmem:[%s2191 + $0x81] sm:$0xff] %vm2135, %v2114
      %2204 = vst.msk [vmem:[%s2191 + $0x91] sm:$0xff] %vm2135, %v2115
      %2205 = vst.msk [vmem:[%s2191 + $0x99] sm:$0xff] %vm2135, %v2116
      %2206 = vst.msk [vmem:[%s2191 + $0xa9] sm:$0xff] %vm2135, %v2117
      %2207 = vst.msk [vmem:[%s2191 + $0xb1] sm:$0xff] %vm2135, %v2118
      %2208 = vst.msk [vmem:[%s2191 + $0xc1] sm:$0xff] %vm2135, %v2119
      %2209 = vst.msk [vmem:[%s2191 + $0xc9] sm:$0xff] %vm2135, %v2120
      %2210 = vst.msk [vmem:[%s2191 + $0xd9] sm:$0xff] %vm2135, %v2121
      %2211 = vst.msk [vmem:[%s2191 + $0xe1] sm:$0xff] %vm2135, %v2122
      %2212 = vst.msk [vmem:[%s2191 + $0xf1] sm:$0xff] %vm2135, %v2123
      %2213 = vst.msk [vmem:[%s2191 + $0xf9] sm:$0xff] %vm2135, %v2124
      %2214 = vst.msk [vmem:[%s2191 + $0x109] sm:$0xff] %vm2135, %v2125
      %2215 = vst.msk [vmem:[%s2191 + $0x111] sm:$0xff] %vm2135, %v2126
      %2216 = vst.msk [vmem:[%s2191 + $0x121] sm:$0xff] %vm2135, %v2127
      %2217 = vst.msk [vmem:[%s2191 + $0x129] sm:$0xff] %vm2135, %v2128
      %2218 = vst.msk [vmem:[%s2191 + $0x139] sm:$0xff] %vm2135, %v2129
      %2219 = vst.msk [vmem:[%s2191 + $0x141] sm:$0xff] %vm2135, %v2130
      %2220 = vst.msk [vmem:[%s2191 + $0x151] sm:$0xff] %vm2135, %v2131
      %2221 = vst.msk [vmem:[%s2191 + $0x159] sm:$0xff] %vm2135, %v2132
      %2222 = vst.msk [vmem:[%s2191 + $0x169] sm:$0xff] %vm2135, %v2133
      %2223 = vst.msk [vmem:[%s2191 + $0x171] sm:$0xff] %vm2135, %v2134
      %v2224 = vld [vmem:[#allocation3] sm:$0xff]
      %v2225 = vld [vmem:[#allocation3 + $0x8] sm:$0xff]
      %v2226 = vld [vmem:[#allocation3 + $0x18] sm:$0xff]
      %v2227 = vld [vmem:[#allocation3 + $0x20] sm:$0xff]
      %v2228 = vld [vmem:[#allocation3 + $0x30] sm:$0xff]
      %v2229 = vld [vmem:[#allocation3 + $0x38] sm:$0xff]
      %v2230 = vld [vmem:[#allocation3 + $0x48] sm:$0xff]
      %v2231 = vld [vmem:[#allocation3 + $0x50] sm:$0xff]
      %v2232 = vld [vmem:[#allocation3 + $0x60] sm:$0xff]
      %v2233 = vld [vmem:[#allocation3 + $0x68] sm:$0xff]
      %v2234 = vld [vmem:[#allocation3 + $0x78] sm:$0xff]
      %v2235 = vld [vmem:[#allocation3 + $0x80] sm:$0xff]
      %v2236 = vld [vmem:[#allocation3 + $0x90] sm:$0xff]
      %v2237 = vld [vmem:[#allocation3 + $0x98] sm:$0xff]
      %v2238 = vld [vmem:[#allocation3 + $0xa8] sm:$0xff]
      %v2239 = vld [vmem:[#allocation3 + $0xb0] sm:$0xff]
      %v2240 = vld [vmem:[#allocation3 + $0xc0] sm:$0xff]
      %v2241 = vld [vmem:[#allocation3 + $0xc8] sm:$0xff]
      %v2242 = vld [vmem:[#allocation3 + $0xd8] sm:$0xff]
      %v2243 = vld [vmem:[#allocation3 + $0xe0] sm:$0xff]
      %v2244 = vld [vmem:[#allocation3 + $0xf0] sm:$0xff]
      %v2245 = vld [vmem:[#allocation3 + $0xf8] sm:$0xff]
      %v2246 = vld [vmem:[#allocation3 + $0x108] sm:$0xff]
      %v2247 = vld [vmem:[#allocation3 + $0x110] sm:$0xff]
      %v2248 = vld [vmem:[#allocation3 + $0x120] sm:$0xff]
      %v2249 = vld [vmem:[#allocation3 + $0x128] sm:$0xff]
      %v2250 = vld [vmem:[#allocation3 + $0x138] sm:$0xff]
      %v2251 = vld [vmem:[#allocation3 + $0x140] sm:$0xff]
      %v2252 = vld [vmem:[#allocation3 + $0x150] sm:$0xff]
      %v2253 = vld [vmem:[#allocation3 + $0x158] sm:$0xff]
      %v2254 = vld [vmem:[#allocation3 + $0x168] sm:$0xff]
      %v2255 = vld [vmem:[#allocation3 + $0x170] sm:$0xff]
      %v2256 = vld [vmem:[#allocation3 + $0x180] sm:$0xff]
      %v2257 = vld [vmem:[#allocation3 + $0x188] sm:$0xff]
      %v2292 = vcombine.high %v2224, %v2224
      %v2294 = vunpack.c.l.s4 1983009808
      %v2295 = vunpack.c.0.s8 %v2294
      %v2296 = vlaneseq
      %v2297 = vshrl.u32 %v2296, 7
      %v2298 = vsub.s32 %v2295, %v2297
      %v2299 = vrot.slane %v2224, %v2298
      %v2301 = vunpack.c.l.s4 1983009808
      %v2302 = vunpack.c.0.s8 %v2301
      %v2303 = vlaneseq
      %v2304 = vshrl.u32 %v2303, 7
      %v2305 = vsub.s32 %v2302, %v2304
      %v2306 = vrot.slane %v2292, %v2305
      %v2307 = vcombine.high %v2299, %v2299
      %v2308 = vcombine.high %v2306, %v2306
      %v2309 = vcombine.high %v2225, %v2225
      %v2311 = vunpack.c.l.s4 1983009808
      %v2312 = vunpack.c.0.s8 %v2311
      %v2313 = vlaneseq
      %v2314 = vshrl.u32 %v2313, 7
      %v2315 = vsub.s32 %v2312, %v2314
      %v2316 = vrot.slane %v2225, %v2315
      %v2318 = vunpack.c.l.s4 1983009808
      %v2319 = vunpack.c.0.s8 %v2318
      %v2320 = vlaneseq
      %v2321 = vshrl.u32 %v2320, 7
      %v2322 = vsub.s32 %v2319, %v2321
      %v2323 = vrot.slane %v2309, %v2322
      %v2324 = vcombine.high %v2316, %v2316
      %v2325 = vcombine.high %v2323, %v2323
      %v2326 = vcombine.high %v2226, %v2226
      %v2328 = vunpack.c.l.s4 1983009808
      %v2329 = vunpack.c.0.s8 %v2328
      %v2330 = vlaneseq
      %v2331 = vshrl.u32 %v2330, 7
      %v2332 = vsub.s32 %v2329, %v2331
      %v2333 = vrot.slane %v2226, %v2332
      %v2335 = vunpack.c.l.s4 1983009808
      %v2336 = vunpack.c.0.s8 %v2335
      %v2337 = vlaneseq
      %v2338 = vshrl.u32 %v2337, 7
      %v2339 = vsub.s32 %v2336, %v2338
      %v2340 = vrot.slane %v2326, %v2339
      %v2341 = vcombine.high %v2333, %v2333
      %v2342 = vcombine.high %v2340, %v2340
      %v2343 = vcombine.high %v2227, %v2227
      %v2345 = vunpack.c.l.s4 1983009808
      %v2346 = vunpack.c.0.s8 %v2345
      %v2347 = vlaneseq
      %v2348 = vshrl.u32 %v2347, 7
      %v2349 = vsub.s32 %v2346, %v2348
      %v2350 = vrot.slane %v2227, %v2349
      %v2352 = vunpack.c.l.s4 1983009808
      %v2353 = vunpack.c.0.s8 %v2352
      %v2354 = vlaneseq
      %v2355 = vshrl.u32 %v2354, 7
      %v2356 = vsub.s32 %v2353, %v2355
      %v2357 = vrot.slane %v2343, %v2356
      %v2358 = vcombine.high %v2350, %v2350
      %v2359 = vcombine.high %v2357, %v2357
      %v2360 = vcombine.high %v2228, %v2228
      %v2362 = vunpack.c.l.s4 1983009808
      %v2363 = vunpack.c.0.s8 %v2362
      %v2364 = vlaneseq
      %v2365 = vshrl.u32 %v2364, 7
      %v2366 = vsub.s32 %v2363, %v2365
      %v2367 = vrot.slane %v2228, %v2366
      %v2369 = vunpack.c.l.s4 1983009808
      %v2370 = vunpack.c.0.s8 %v2369
      %v2371 = vlaneseq
      %v2372 = vshrl.u32 %v2371, 7
      %v2373 = vsub.s32 %v2370, %v2372
      %v2374 = vrot.slane %v2360, %v2373
      %v2375 = vcombine.high %v2367, %v2367
      %v2376 = vcombine.high %v2374, %v2374
      %v2377 = vcombine.high %v2229, %v2229
      %v2379 = vunpack.c.l.s4 1983009808
      %v2380 = vunpack.c.0.s8 %v2379
      %v2381 = vlaneseq
      %v2382 = vshrl.u32 %v2381, 7
      %v2383 = vsub.s32 %v2380, %v2382
      %v2384 = vrot.slane %v2229, %v2383
      %v2386 = vunpack.c.l.s4 1983009808
      %v2387 = vunpack.c.0.s8 %v2386
      %v2388 = vlaneseq
      %v2389 = vshrl.u32 %v2388, 7
      %v2390 = vsub.s32 %v2387, %v2389
      %v2391 = vrot.slane %v2377, %v2390
      %v2392 = vcombine.high %v2384, %v2384
      %v2393 = vcombine.high %v2391, %v2391
      %v2394 = vcombine.high %v2230, %v2230
      %v2396 = vunpack.c.l.s4 1983009808
      %v2397 = vunpack.c.0.s8 %v2396
      %v2398 = vlaneseq
      %v2399 = vshrl.u32 %v2398, 7
      %v2400 = vsub.s32 %v2397, %v2399
      %v2401 = vrot.slane %v2230, %v2400
      %v2403 = vunpack.c.l.s4 1983009808
      %v2404 = vunpack.c.0.s8 %v2403
      %v2405 = vlaneseq
      %v2406 = vshrl.u32 %v2405, 7
      %v2407 = vsub.s32 %v2404, %v2406
      %v2408 = vrot.slane %v2394, %v2407
      %v2409 = vcombine.high %v2401, %v2401
      %v2410 = vcombine.high %v2408, %v2408
      %v2411 = vcombine.high %v2231, %v2231
      %v2413 = vunpack.c.l.s4 1983009808
      %v2414 = vunpack.c.0.s8 %v2413
      %v2415 = vlaneseq
      %v2416 = vshrl.u32 %v2415, 7
      %v2417 = vsub.s32 %v2414, %v2416
      %v2418 = vrot.slane %v2231, %v2417
      %v2420 = vunpack.c.l.s4 1983009808
      %v2421 = vunpack.c.0.s8 %v2420
      %v2422 = vlaneseq
      %v2423 = vshrl.u32 %v2422, 7
      %v2424 = vsub.s32 %v2421, %v2423
      %v2425 = vrot.slane %v2411, %v2424
      %v2426 = vcombine.high %v2418, %v2418
      %v2427 = vcombine.high %v2425, %v2425
      %v2428 = vcombine.high %v2232, %v2232
      %v2430 = vunpack.c.l.s4 1983009808
      %v2431 = vunpack.c.0.s8 %v2430
      %v2432 = vlaneseq
      %v2433 = vshrl.u32 %v2432, 7
      %v2434 = vsub.s32 %v2431, %v2433
      %v2435 = vrot.slane %v2232, %v2434
      %v2437 = vunpack.c.l.s4 1983009808
      %v2438 = vunpack.c.0.s8 %v2437
      %v2439 = vlaneseq
      %v2440 = vshrl.u32 %v2439, 7
      %v2441 = vsub.s32 %v2438, %v2440
      %v2442 = vrot.slane %v2428, %v2441
      %v2443 = vcombine.high %v2435, %v2435
      %v2444 = vcombine.high %v2442, %v2442
      %v2445 = vcombine.high %v2233, %v2233
      %v2447 = vunpack.c.l.s4 1983009808
      %v2448 = vunpack.c.0.s8 %v2447
      %v2449 = vlaneseq
      %v2450 = vshrl.u32 %v2449, 7
      %v2451 = vsub.s32 %v2448, %v2450
      %v2452 = vrot.slane %v2233, %v2451
      %v2454 = vunpack.c.l.s4 1983009808
      %v2455 = vunpack.c.0.s8 %v2454
      %v2456 = vlaneseq
      %v2457 = vshrl.u32 %v2456, 7
      %v2458 = vsub.s32 %v2455, %v2457
      %v2459 = vrot.slane %v2445, %v2458
      %v2460 = vcombine.high %v2452, %v2452
      %v2461 = vcombine.high %v2459, %v2459
      %v2462 = vcombine.high %v2234, %v2234
      %v2464 = vunpack.c.l.s4 1983009808
      %v2465 = vunpack.c.0.s8 %v2464
      %v2466 = vlaneseq
      %v2467 = vshrl.u32 %v2466, 7
      %v2468 = vsub.s32 %v2465, %v2467
      %v2469 = vrot.slane %v2234, %v2468
      %v2471 = vunpack.c.l.s4 1983009808
      %v2472 = vunpack.c.0.s8 %v2471
      %v2473 = vlaneseq
      %v2474 = vshrl.u32 %v2473, 7
      %v2475 = vsub.s32 %v2472, %v2474
      %v2476 = vrot.slane %v2462, %v2475
      %v2477 = vcombine.high %v2469, %v2469
      %v2478 = vcombine.high %v2476, %v2476
      %v2479 = vcombine.high %v2235, %v2235
      %v2481 = vunpack.c.l.s4 1983009808
      %v2482 = vunpack.c.0.s8 %v2481
      %v2483 = vlaneseq
      %v2484 = vshrl.u32 %v2483, 7
      %v2485 = vsub.s32 %v2482, %v2484
      %v2486 = vrot.slane %v2235, %v2485
      %v2488 = vunpack.c.l.s4 1983009808
      %v2489 = vunpack.c.0.s8 %v2488
      %v2490 = vlaneseq
      %v2491 = vshrl.u32 %v2490, 7
      %v2492 = vsub.s32 %v2489, %v2491
      %v2493 = vrot.slane %v2479, %v2492
      %v2494 = vcombine.high %v2486, %v2486
      %v2495 = vcombine.high %v2493, %v2493
      %v2496 = vcombine.high %v2236, %v2236
      %v2498 = vunpack.c.l.s4 1983009808
      %v2499 = vunpack.c.0.s8 %v2498
      %v2500 = vlaneseq
      %v2501 = vshrl.u32 %v2500, 7
      %v2502 = vsub.s32 %v2499, %v2501
      %v2503 = vrot.slane %v2236, %v2502
      %v2505 = vunpack.c.l.s4 1983009808
      %v2506 = vunpack.c.0.s8 %v2505
      %v2507 = vlaneseq
      %v2508 = vshrl.u32 %v2507, 7
      %v2509 = vsub.s32 %v2506, %v2508
      %v2510 = vrot.slane %v2496, %v2509
      %v2511 = vcombine.high %v2503, %v2503
      %v2512 = vcombine.high %v2510, %v2510
      %v2513 = vcombine.high %v2237, %v2237
      %v2515 = vunpack.c.l.s4 1983009808
      %v2516 = vunpack.c.0.s8 %v2515
      %v2517 = vlaneseq
      %v2518 = vshrl.u32 %v2517, 7
      %v2519 = vsub.s32 %v2516, %v2518
      %v2520 = vrot.slane %v2237, %v2519
      %v2522 = vunpack.c.l.s4 1983009808
      %v2523 = vunpack.c.0.s8 %v2522
      %v2524 = vlaneseq
      %v2525 = vshrl.u32 %v2524, 7
      %v2526 = vsub.s32 %v2523, %v2525
      %v2527 = vrot.slane %v2513, %v2526
      %v2528 = vcombine.high %v2520, %v2520
      %v2529 = vcombine.high %v2527, %v2527
      %v2530 = vcombine.high %v2238, %v2238
      %v2532 = vunpack.c.l.s4 1983009808
      %v2533 = vunpack.c.0.s8 %v2532
      %v2534 = vlaneseq
      %v2535 = vshrl.u32 %v2534, 7
      %v2536 = vsub.s32 %v2533, %v2535
      %v2537 = vrot.slane %v2238, %v2536
      %v2539 = vunpack.c.l.s4 1983009808
      %v2540 = vunpack.c.0.s8 %v2539
      %v2541 = vlaneseq
      %v2542 = vshrl.u32 %v2541, 7
      %v2543 = vsub.s32 %v2540, %v2542
      %v2544 = vrot.slane %v2530, %v2543
      %v2545 = vcombine.high %v2537, %v2537
      %v2546 = vcombine.high %v2544, %v2544
      %v2547 = vcombine.high %v2239, %v2239
      %v2549 = vunpack.c.l.s4 1983009808
      %v2550 = vunpack.c.0.s8 %v2549
      %v2551 = vlaneseq
      %v2552 = vshrl.u32 %v2551, 7
      %v2553 = vsub.s32 %v2550, %v2552
      %v2554 = vrot.slane %v2239, %v2553
      %v2556 = vunpack.c.l.s4 1983009808
      %v2557 = vunpack.c.0.s8 %v2556
      %v2558 = vlaneseq
      %v2559 = vshrl.u32 %v2558, 7
      %v2560 = vsub.s32 %v2557, %v2559
      %v2561 = vrot.slane %v2547, %v2560
      %v2562 = vcombine.high %v2554, %v2554
      %v2563 = vcombine.high %v2561, %v2561
      %v2564 = vcombine.high %v2240, %v2240
      %v2566 = vunpack.c.l.s4 1983009808
      %v2567 = vunpack.c.0.s8 %v2566
      %v2568 = vlaneseq
      %v2569 = vshrl.u32 %v2568, 7
      %v2570 = vsub.s32 %v2567, %v2569
      %v2571 = vrot.slane %v2240, %v2570
      %v2573 = vunpack.c.l.s4 1983009808
      %v2574 = vunpack.c.0.s8 %v2573
      %v2575 = vlaneseq
      %v2576 = vshrl.u32 %v2575, 7
      %v2577 = vsub.s32 %v2574, %v2576
      %v2578 = vrot.slane %v2564, %v2577
      %v2579 = vcombine.high %v2571, %v2571
      %v2580 = vcombine.high %v2578, %v2578
      %v2581 = vcombine.high %v2241, %v2241
      %v2583 = vunpack.c.l.s4 1983009808
      %v2584 = vunpack.c.0.s8 %v2583
      %v2585 = vlaneseq
      %v2586 = vshrl.u32 %v2585, 7
      %v2587 = vsub.s32 %v2584, %v2586
      %v2588 = vrot.slane %v2241, %v2587
      %v2590 = vunpack.c.l.s4 1983009808
      %v2591 = vunpack.c.0.s8 %v2590
      %v2592 = vlaneseq
      %v2593 = vshrl.u32 %v2592, 7
      %v2594 = vsub.s32 %v2591, %v2593
      %v2595 = vrot.slane %v2581, %v2594
      %v2596 = vcombine.high %v2588, %v2588
      %v2597 = vcombine.high %v2595, %v2595
      %v2598 = vcombine.high %v2242, %v2242
      %v2600 = vunpack.c.l.s4 1983009808
      %v2601 = vunpack.c.0.s8 %v2600
      %v2602 = vlaneseq
      %v2603 = vshrl.u32 %v2602, 7
      %v2604 = vsub.s32 %v2601, %v2603
      %v2605 = vrot.slane %v2242, %v2604
      %v2607 = vunpack.c.l.s4 1983009808
      %v2608 = vunpack.c.0.s8 %v2607
      %v2609 = vlaneseq
      %v2610 = vshrl.u32 %v2609, 7
      %v2611 = vsub.s32 %v2608, %v2610
      %v2612 = vrot.slane %v2598, %v2611
      %v2613 = vcombine.high %v2605, %v2605
      %v2614 = vcombine.high %v2612, %v2612
      %v2615 = vcombine.high %v2243, %v2243
      %v2617 = vunpack.c.l.s4 1983009808
      %v2618 = vunpack.c.0.s8 %v2617
      %v2619 = vlaneseq
      %v2620 = vshrl.u32 %v2619, 7
      %v2621 = vsub.s32 %v2618, %v2620
      %v2622 = vrot.slane %v2243, %v2621
      %v2624 = vunpack.c.l.s4 1983009808
      %v2625 = vunpack.c.0.s8 %v2624
      %v2626 = vlaneseq
      %v2627 = vshrl.u32 %v2626, 7
      %v2628 = vsub.s32 %v2625, %v2627
      %v2629 = vrot.slane %v2615, %v2628
      %v2630 = vcombine.high %v2622, %v2622
      %v2631 = vcombine.high %v2629, %v2629
      %v2632 = vcombine.high %v2244, %v2244
      %v2634 = vunpack.c.l.s4 1983009808
      %v2635 = vunpack.c.0.s8 %v2634
      %v2636 = vlaneseq
      %v2637 = vshrl.u32 %v2636, 7
      %v2638 = vsub.s32 %v2635, %v2637
      %v2639 = vrot.slane %v2244, %v2638
      %v2641 = vunpack.c.l.s4 1983009808
      %v2642 = vunpack.c.0.s8 %v2641
      %v2643 = vlaneseq
      %v2644 = vshrl.u32 %v2643, 7
      %v2645 = vsub.s32 %v2642, %v2644
      %v2646 = vrot.slane %v2632, %v2645
      %v2647 = vcombine.high %v2639, %v2639
      %v2648 = vcombine.high %v2646, %v2646
      %v2649 = vcombine.high %v2245, %v2245
      %v2651 = vunpack.c.l.s4 1983009808
      %v2652 = vunpack.c.0.s8 %v2651
      %v2653 = vlaneseq
      %v2654 = vshrl.u32 %v2653, 7
      %v2655 = vsub.s32 %v2652, %v2654
      %v2656 = vrot.slane %v2245, %v2655
      %v2658 = vunpack.c.l.s4 1983009808
      %v2659 = vunpack.c.0.s8 %v2658
      %v2660 = vlaneseq
      %v2661 = vshrl.u32 %v2660, 7
      %v2662 = vsub.s32 %v2659, %v2661
      %v2663 = vrot.slane %v2649, %v2662
      %v2664 = vcombine.high %v2656, %v2656
      %v2665 = vcombine.high %v2663, %v2663
      %v2666 = vcombine.high %v2246, %v2246
      %v2668 = vunpack.c.l.s4 1983009808
      %v2669 = vunpack.c.0.s8 %v2668
      %v2670 = vlaneseq
      %v2671 = vshrl.u32 %v2670, 7
      %v2672 = vsub.s32 %v2669, %v2671
      %v2673 = vrot.slane %v2246, %v2672
      %v2675 = vunpack.c.l.s4 1983009808
      %v2676 = vunpack.c.0.s8 %v2675
      %v2677 = vlaneseq
      %v2678 = vshrl.u32 %v2677, 7
      %v2679 = vsub.s32 %v2676, %v2678
      %v2680 = vrot.slane %v2666, %v2679
      %v2681 = vcombine.high %v2673, %v2673
      %v2682 = vcombine.high %v2680, %v2680
      %v2683 = vcombine.high %v2247, %v2247
      %v2685 = vunpack.c.l.s4 1983009808
      %v2686 = vunpack.c.0.s8 %v2685
      %v2687 = vlaneseq
      %v2688 = vshrl.u32 %v2687, 7
      %v2689 = vsub.s32 %v2686, %v2688
      %v2690 = vrot.slane %v2247, %v2689
      %v2692 = vunpack.c.l.s4 1983009808
      %v2693 = vunpack.c.0.s8 %v2692
      %v2694 = vlaneseq
      %v2695 = vshrl.u32 %v2694, 7
      %v2696 = vsub.s32 %v2693, %v2695
      %v2697 = vrot.slane %v2683, %v2696
      %v2698 = vcombine.high %v2690, %v2690
      %v2699 = vcombine.high %v2697, %v2697
      %v2700 = vcombine.high %v2248, %v2248
      %v2702 = vunpack.c.l.s4 1983009808
      %v2703 = vunpack.c.0.s8 %v2702
      %v2704 = vlaneseq
      %v2705 = vshrl.u32 %v2704, 7
      %v2706 = vsub.s32 %v2703, %v2705
      %v2707 = vrot.slane %v2248, %v2706
      %v2709 = vunpack.c.l.s4 1983009808
      %v2710 = vunpack.c.0.s8 %v2709
      %v2711 = vlaneseq
      %v2712 = vshrl.u32 %v2711, 7
      %v2713 = vsub.s32 %v2710, %v2712
      %v2714 = vrot.slane %v2700, %v2713
      %v2715 = vcombine.high %v2707, %v2707
      %v2716 = vcombine.high %v2714, %v2714
      %v2717 = vcombine.high %v2249, %v2249
      %v2719 = vunpack.c.l.s4 1983009808
      %v2720 = vunpack.c.0.s8 %v2719
      %v2721 = vlaneseq
      %v2722 = vshrl.u32 %v2721, 7
      %v2723 = vsub.s32 %v2720, %v2722
      %v2724 = vrot.slane %v2249, %v2723
      %v2726 = vunpack.c.l.s4 1983009808
      %v2727 = vunpack.c.0.s8 %v2726
      %v2728 = vlaneseq
      %v2729 = vshrl.u32 %v2728, 7
      %v2730 = vsub.s32 %v2727, %v2729
      %v2731 = vrot.slane %v2717, %v2730
      %v2732 = vcombine.high %v2724, %v2724
      %v2733 = vcombine.high %v2731, %v2731
      %v2734 = vcombine.high %v2250, %v2250
      %v2736 = vunpack.c.l.s4 1983009808
      %v2737 = vunpack.c.0.s8 %v2736
      %v2738 = vlaneseq
      %v2739 = vshrl.u32 %v2738, 7
      %v2740 = vsub.s32 %v2737, %v2739
      %v2741 = vrot.slane %v2250, %v2740
      %v2743 = vunpack.c.l.s4 1983009808
      %v2744 = vunpack.c.0.s8 %v2743
      %v2745 = vlaneseq
      %v2746 = vshrl.u32 %v2745, 7
      %v2747 = vsub.s32 %v2744, %v2746
      %v2748 = vrot.slane %v2734, %v2747
      %v2749 = vcombine.high %v2741, %v2741
      %v2750 = vcombine.high %v2748, %v2748
      %v2751 = vcombine.high %v2251, %v2251
      %v2753 = vunpack.c.l.s4 1983009808
      %v2754 = vunpack.c.0.s8 %v2753
      %v2755 = vlaneseq
      %v2756 = vshrl.u32 %v2755, 7
      %v2757 = vsub.s32 %v2754, %v2756
      %v2758 = vrot.slane %v2251, %v2757
      %v2760 = vunpack.c.l.s4 1983009808
      %v2761 = vunpack.c.0.s8 %v2760
      %v2762 = vlaneseq
      %v2763 = vshrl.u32 %v2762, 7
      %v2764 = vsub.s32 %v2761, %v2763
      %v2765 = vrot.slane %v2751, %v2764
      %v2766 = vcombine.high %v2758, %v2758
      %v2767 = vcombine.high %v2765, %v2765
      %v2768 = vcombine.high %v2252, %v2252
      %v2770 = vunpack.c.l.s4 1983009808
      %v2771 = vunpack.c.0.s8 %v2770
      %v2772 = vlaneseq
      %v2773 = vshrl.u32 %v2772, 7
      %v2774 = vsub.s32 %v2771, %v2773
      %v2775 = vrot.slane %v2252, %v2774
      %v2777 = vunpack.c.l.s4 1983009808
      %v2778 = vunpack.c.0.s8 %v2777
      %v2779 = vlaneseq
      %v2780 = vshrl.u32 %v2779, 7
      %v2781 = vsub.s32 %v2778, %v2780
      %v2782 = vrot.slane %v2768, %v2781
      %v2783 = vcombine.high %v2775, %v2775
      %v2784 = vcombine.high %v2782, %v2782
      %v2785 = vcombine.high %v2253, %v2253
      %v2787 = vunpack.c.l.s4 1983009808
      %v2788 = vunpack.c.0.s8 %v2787
      %v2789 = vlaneseq
      %v2790 = vshrl.u32 %v2789, 7
      %v2791 = vsub.s32 %v2788, %v2790
      %v2792 = vrot.slane %v2253, %v2791
      %v2794 = vunpack.c.l.s4 1983009808
      %v2795 = vunpack.c.0.s8 %v2794
      %v2796 = vlaneseq
      %v2797 = vshrl.u32 %v2796, 7
      %v2798 = vsub.s32 %v2795, %v2797
      %v2799 = vrot.slane %v2785, %v2798
      %v2800 = vcombine.high %v2792, %v2792
      %v2801 = vcombine.high %v2799, %v2799
      %v2802 = vcombine.high %v2254, %v2254
      %v2804 = vunpack.c.l.s4 1983009808
      %v2805 = vunpack.c.0.s8 %v2804
      %v2806 = vlaneseq
      %v2807 = vshrl.u32 %v2806, 7
      %v2808 = vsub.s32 %v2805, %v2807
      %v2809 = vrot.slane %v2254, %v2808
      %v2811 = vunpack.c.l.s4 1983009808
      %v2812 = vunpack.c.0.s8 %v2811
      %v2813 = vlaneseq
      %v2814 = vshrl.u32 %v2813, 7
      %v2815 = vsub.s32 %v2812, %v2814
      %v2816 = vrot.slane %v2802, %v2815
      %v2817 = vcombine.high %v2809, %v2809
      %v2818 = vcombine.high %v2816, %v2816
      %v2819 = vcombine.high %v2255, %v2255
      %v2821 = vunpack.c.l.s4 1983009808
      %v2822 = vunpack.c.0.s8 %v2821
      %v2823 = vlaneseq
      %v2824 = vshrl.u32 %v2823, 7
      %v2825 = vsub.s32 %v2822, %v2824
      %v2826 = vrot.slane %v2255, %v2825
      %v2828 = vunpack.c.l.s4 1983009808
      %v2829 = vunpack.c.0.s8 %v2828
      %v2830 = vlaneseq
      %v2831 = vshrl.u32 %v2830, 7
      %v2832 = vsub.s32 %v2829, %v2831
      %v2833 = vrot.slane %v2819, %v2832
      %v2834 = vcombine.high %v2826, %v2826
      %v2835 = vcombine.high %v2833, %v2833
      %v2836 = vcombine.high %v2256, %v2256
      %v2838 = vunpack.c.l.s4 1983009808
      %v2839 = vunpack.c.0.s8 %v2838
      %v2840 = vlaneseq
      %v2841 = vshrl.u32 %v2840, 7
      %v2842 = vsub.s32 %v2839, %v2841
      %v2843 = vrot.slane %v2256, %v2842
      %v2845 = vunpack.c.l.s4 1983009808
      %v2846 = vunpack.c.0.s8 %v2845
      %v2847 = vlaneseq
      %v2848 = vshrl.u32 %v2847, 7
      %v2849 = vsub.s32 %v2846, %v2848
      %v2850 = vrot.slane %v2836, %v2849
      %v2851 = vcombine.high %v2843, %v2843
      %v2852 = vcombine.high %v2850, %v2850
      %v2853 = vcombine.high %v2257, %v2257
      %v2855 = vunpack.c.l.s4 1983009808
      %v2856 = vunpack.c.0.s8 %v2855
      %v2857 = vlaneseq
      %v2858 = vshrl.u32 %v2857, 7
      %v2859 = vsub.s32 %v2856, %v2858
      %v2860 = vrot.slane %v2257, %v2859
      %v2862 = vunpack.c.l.s4 1983009808
      %v2863 = vunpack.c.0.s8 %v2862
      %v2864 = vlaneseq
      %v2865 = vshrl.u32 %v2864, 7
      %v2866 = vsub.s32 %v2863, %v2865
      %v2867 = vrot.slane %v2853, %v2866
      %v2868 = vcombine.high %v2860, %v2860
      %v2869 = vcombine.high %v2867, %v2867
      %v2870 = vld [vmem:[#allocation3 + $0x1] sm:$0xff]
      %v2871 = vld [vmem:[#allocation3 + $0x9] sm:$0xff]
      %v2872 = vld [vmem:[#allocation3 + $0x19] sm:$0xff]
      %v2873 = vld [vmem:[#allocation3 + $0x21] sm:$0xff]
      %v2874 = vld [vmem:[#allocation3 + $0x31] sm:$0xff]
      %v2875 = vld [vmem:[#allocation3 + $0x39] sm:$0xff]
      %v2876 = vld [vmem:[#allocation3 + $0x49] sm:$0xff]
      %v2877 = vld [vmem:[#allocation3 + $0x51] sm:$0xff]
      %v2878 = vld [vmem:[#allocation3 + $0x61] sm:$0xff]
      %v2879 = vld [vmem:[#allocation3 + $0x69] sm:$0xff]
      %v2880 = vld [vmem:[#allocation3 + $0x79] sm:$0xff]
      %v2881 = vld [vmem:[#allocation3 + $0x81] sm:$0xff]
      %v2882 = vld [vmem:[#allocation3 + $0x91] sm:$0xff]
      %v2883 = vld [vmem:[#allocation3 + $0x99] sm:$0xff]
      %v2884 = vld [vmem:[#allocation3 + $0xa9] sm:$0xff]
      %v2885 = vld [vmem:[#allocation3 + $0xb1] sm:$0xff]
      %v2886 = vld [vmem:[#allocation3 + $0xc1] sm:$0xff]
      %v2887 = vld [vmem:[#allocation3 + $0xc9] sm:$0xff]
      %v2888 = vld [vmem:[#allocation3 + $0xd9] sm:$0xff]
      %v2889 = vld [vmem:[#allocation3 + $0xe1] sm:$0xff]
      %v2890 = vld [vmem:[#allocation3 + $0xf1] sm:$0xff]
      %v2891 = vld [vmem:[#allocation3 + $0xf9] sm:$0xff]
      %v2892 = vld [vmem:[#allocation3 + $0x109] sm:$0xff]
      %v2893 = vld [vmem:[#allocation3 + $0x111] sm:$0xff]
      %v2894 = vld [vmem:[#allocation3 + $0x121] sm:$0xff]
      %v2895 = vld [vmem:[#allocation3 + $0x129] sm:$0xff]
      %v2896 = vld [vmem:[#allocation3 + $0x139] sm:$0xff]
      %v2897 = vld [vmem:[#allocation3 + $0x141] sm:$0xff]
      %v2898 = vld [vmem:[#allocation3 + $0x151] sm:$0xff]
      %v2899 = vld [vmem:[#allocation3 + $0x159] sm:$0xff]
      %v2900 = vld [vmem:[#allocation3 + $0x169] sm:$0xff]
      %v2901 = vld [vmem:[#allocation3 + $0x171] sm:$0xff]
      %v2902 = vld [vmem:[#allocation3 + $0x181] sm:$0xff]
      %v2903 = vld [vmem:[#allocation3 + $0x189] sm:$0xff]
      %v2938 = vcombine.high %v2870, %v2870
      %v2940 = vunpack.c.l.s4 1983009808
      %v2941 = vunpack.c.0.s8 %v2940
      %v2942 = vlaneseq
      %v2943 = vshrl.u32 %v2942, 7
      %v2944 = vsub.s32 %v2941, %v2943
      %v2945 = vrot.slane %v2870, %v2944
      %v2947 = vunpack.c.l.s4 1983009808
      %v2948 = vunpack.c.0.s8 %v2947
      %v2949 = vlaneseq
      %v2950 = vshrl.u32 %v2949, 7
      %v2951 = vsub.s32 %v2948, %v2950
      %v2952 = vrot.slane %v2938, %v2951
      %v2953 = vcombine.high %v2945, %v2945
      %v2954 = vcombine.high %v2952, %v2952
      %v2955 = vcombine.high %v2871, %v2871
      %v2957 = vunpack.c.l.s4 1983009808
      %v2958 = vunpack.c.0.s8 %v2957
      %v2959 = vlaneseq
      %v2960 = vshrl.u32 %v2959, 7
      %v2961 = vsub.s32 %v2958, %v2960
      %v2962 = vrot.slane %v2871, %v2961
      %v2964 = vunpack.c.l.s4 1983009808
      %v2965 = vunpack.c.0.s8 %v2964
      %v2966 = vlaneseq
      %v2967 = vshrl.u32 %v2966, 7
      %v2968 = vsub.s32 %v2965, %v2967
      %v2969 = vrot.slane %v2955, %v2968
      %v2970 = vcombine.high %v2962, %v2962
      %v2971 = vcombine.high %v2969, %v2969
      %v2972 = vcombine.high %v2872, %v2872
      %v2974 = vunpack.c.l.s4 1983009808
      %v2975 = vunpack.c.0.s8 %v2974
      %v2976 = vlaneseq
      %v2977 = vshrl.u32 %v2976, 7
      %v2978 = vsub.s32 %v2975, %v2977
      %v2979 = vrot.slane %v2872, %v2978
      %v2981 = vunpack.c.l.s4 1983009808
      %v2982 = vunpack.c.0.s8 %v2981
      %v2983 = vlaneseq
      %v2984 = vshrl.u32 %v2983, 7
      %v2985 = vsub.s32 %v2982, %v2984
      %v2986 = vrot.slane %v2972, %v2985
      %v2987 = vcombine.high %v2979, %v2979
      %v2988 = vcombine.high %v2986, %v2986
      %v2989 = vcombine.high %v2873, %v2873
      %v2991 = vunpack.c.l.s4 1983009808
      %v2992 = vunpack.c.0.s8 %v2991
      %v2993 = vlaneseq
      %v2994 = vshrl.u32 %v2993, 7
      %v2995 = vsub.s32 %v2992, %v2994
      %v2996 = vrot.slane %v2873, %v2995
      %v2998 = vunpack.c.l.s4 1983009808
      %v2999 = vunpack.c.0.s8 %v2998
      %v3000 = vlaneseq
      %v3001 = vshrl.u32 %v3000, 7
      %v3002 = vsub.s32 %v2999, %v3001
      %v3003 = vrot.slane %v2989, %v3002
      %v3004 = vcombine.high %v2996, %v2996
      %v3005 = vcombine.high %v3003, %v3003
      %v3006 = vcombine.high %v2874, %v2874
      %v3008 = vunpack.c.l.s4 1983009808
      %v3009 = vunpack.c.0.s8 %v3008
      %v3010 = vlaneseq
      %v3011 = vshrl.u32 %v3010, 7
      %v3012 = vsub.s32 %v3009, %v3011
      %v3013 = vrot.slane %v2874, %v3012
      %v3015 = vunpack.c.l.s4 1983009808
      %v3016 = vunpack.c.0.s8 %v3015
      %v3017 = vlaneseq
      %v3018 = vshrl.u32 %v3017, 7
      %v3019 = vsub.s32 %v3016, %v3018
      %v3020 = vrot.slane %v3006, %v3019
      %v3021 = vcombine.high %v3013, %v3013
      %v3022 = vcombine.high %v3020, %v3020
      %v3023 = vcombine.high %v2875, %v2875
      %v3025 = vunpack.c.l.s4 1983009808
      %v3026 = vunpack.c.0.s8 %v3025
      %v3027 = vlaneseq
      %v3028 = vshrl.u32 %v3027, 7
      %v3029 = vsub.s32 %v3026, %v3028
      %v3030 = vrot.slane %v2875, %v3029
      %v3032 = vunpack.c.l.s4 1983009808
      %v3033 = vunpack.c.0.s8 %v3032
      %v3034 = vlaneseq
      %v3035 = vshrl.u32 %v3034, 7
      %v3036 = vsub.s32 %v3033, %v3035
      %v3037 = vrot.slane %v3023, %v3036
      %v3038 = vcombine.high %v3030, %v3030
      %v3039 = vcombine.high %v3037, %v3037
      %v3040 = vcombine.high %v2876, %v2876
      %v3042 = vunpack.c.l.s4 1983009808
      %v3043 = vunpack.c.0.s8 %v3042
      %v3044 = vlaneseq
      %v3045 = vshrl.u32 %v3044, 7
      %v3046 = vsub.s32 %v3043, %v3045
      %v3047 = vrot.slane %v2876, %v3046
      %v3049 = vunpack.c.l.s4 1983009808
      %v3050 = vunpack.c.0.s8 %v3049
      %v3051 = vlaneseq
      %v3052 = vshrl.u32 %v3051, 7
      %v3053 = vsub.s32 %v3050, %v3052
      %v3054 = vrot.slane %v3040, %v3053
      %v3055 = vcombine.high %v3047, %v3047
      %v3056 = vcombine.high %v3054, %v3054
      %v3057 = vcombine.high %v2877, %v2877
      %v3059 = vunpack.c.l.s4 1983009808
      %v3060 = vunpack.c.0.s8 %v3059
      %v3061 = vlaneseq
      %v3062 = vshrl.u32 %v3061, 7
      %v3063 = vsub.s32 %v3060, %v3062
      %v3064 = vrot.slane %v2877, %v3063
      %v3066 = vunpack.c.l.s4 1983009808
      %v3067 = vunpack.c.0.s8 %v3066
      %v3068 = vlaneseq
      %v3069 = vshrl.u32 %v3068, 7
      %v3070 = vsub.s32 %v3067, %v3069
      %v3071 = vrot.slane %v3057, %v3070
      %v3072 = vcombine.high %v3064, %v3064
      %v3073 = vcombine.high %v3071, %v3071
      %v3074 = vcombine.high %v2878, %v2878
      %v3076 = vunpack.c.l.s4 1983009808
      %v3077 = vunpack.c.0.s8 %v3076
      %v3078 = vlaneseq
      %v3079 = vshrl.u32 %v3078, 7
      %v3080 = vsub.s32 %v3077, %v3079
      %v3081 = vrot.slane %v2878, %v3080
      %v3083 = vunpack.c.l.s4 1983009808
      %v3084 = vunpack.c.0.s8 %v3083
      %v3085 = vlaneseq
      %v3086 = vshrl.u32 %v3085, 7
      %v3087 = vsub.s32 %v3084, %v3086
      %v3088 = vrot.slane %v3074, %v3087
      %v3089 = vcombine.high %v3081, %v3081
      %v3090 = vcombine.high %v3088, %v3088
      %v3091 = vcombine.high %v2879, %v2879
      %v3093 = vunpack.c.l.s4 1983009808
      %v3094 = vunpack.c.0.s8 %v3093
      %v3095 = vlaneseq
      %v3096 = vshrl.u32 %v3095, 7
      %v3097 = vsub.s32 %v3094, %v3096
      %v3098 = vrot.slane %v2879, %v3097
      %v3100 = vunpack.c.l.s4 1983009808
      %v3101 = vunpack.c.0.s8 %v3100
      %v3102 = vlaneseq
      %v3103 = vshrl.u32 %v3102, 7
      %v3104 = vsub.s32 %v3101, %v3103
      %v3105 = vrot.slane %v3091, %v3104
      %v3106 = vcombine.high %v3098, %v3098
      %v3107 = vcombine.high %v3105, %v3105
      %v3108 = vcombine.high %v2880, %v2880
      %v3110 = vunpack.c.l.s4 1983009808
      %v3111 = vunpack.c.0.s8 %v3110
      %v3112 = vlaneseq
      %v3113 = vshrl.u32 %v3112, 7
      %v3114 = vsub.s32 %v3111, %v3113
      %v3115 = vrot.slane %v2880, %v3114
      %v3117 = vunpack.c.l.s4 1983009808
      %v3118 = vunpack.c.0.s8 %v3117
      %v3119 = vlaneseq
      %v3120 = vshrl.u32 %v3119, 7
      %v3121 = vsub.s32 %v3118, %v3120
      %v3122 = vrot.slane %v3108, %v3121
      %v3123 = vcombine.high %v3115, %v3115
      %v3124 = vcombine.high %v3122, %v3122
      %v3125 = vcombine.high %v2881, %v2881
      %v3127 = vunpack.c.l.s4 1983009808
      %v3128 = vunpack.c.0.s8 %v3127
      %v3129 = vlaneseq
      %v3130 = vshrl.u32 %v3129, 7
      %v3131 = vsub.s32 %v3128, %v3130
      %v3132 = vrot.slane %v2881, %v3131
      %v3134 = vunpack.c.l.s4 1983009808
      %v3135 = vunpack.c.0.s8 %v3134
      %v3136 = vlaneseq
      %v3137 = vshrl.u32 %v3136, 7
      %v3138 = vsub.s32 %v3135, %v3137
      %v3139 = vrot.slane %v3125, %v3138
      %v3140 = vcombine.high %v3132, %v3132
      %v3141 = vcombine.high %v3139, %v3139
      %v3142 = vcombine.high %v2882, %v2882
      %v3144 = vunpack.c.l.s4 1983009808
      %v3145 = vunpack.c.0.s8 %v3144
      %v3146 = vlaneseq
      %v3147 = vshrl.u32 %v3146, 7
      %v3148 = vsub.s32 %v3145, %v3147
      %v3149 = vrot.slane %v2882, %v3148
      %v3151 = vunpack.c.l.s4 1983009808
      %v3152 = vunpack.c.0.s8 %v3151
      %v3153 = vlaneseq
      %v3154 = vshrl.u32 %v3153, 7
      %v3155 = vsub.s32 %v3152, %v3154
      %v3156 = vrot.slane %v3142, %v3155
      %v3157 = vcombine.high %v3149, %v3149
      %v3158 = vcombine.high %v3156, %v3156
      %v3159 = vcombine.high %v2883, %v2883
      %v3161 = vunpack.c.l.s4 1983009808
      %v3162 = vunpack.c.0.s8 %v3161
      %v3163 = vlaneseq
      %v3164 = vshrl.u32 %v3163, 7
      %v3165 = vsub.s32 %v3162, %v3164
      %v3166 = vrot.slane %v2883, %v3165
      %v3168 = vunpack.c.l.s4 1983009808
      %v3169 = vunpack.c.0.s8 %v3168
      %v3170 = vlaneseq
      %v3171 = vshrl.u32 %v3170, 7
      %v3172 = vsub.s32 %v3169, %v3171
      %v3173 = vrot.slane %v3159, %v3172
      %v3174 = vcombine.high %v3166, %v3166
      %v3175 = vcombine.high %v3173, %v3173
      %v3176 = vcombine.high %v2884, %v2884
      %v3178 = vunpack.c.l.s4 1983009808
      %v3179 = vunpack.c.0.s8 %v3178
      %v3180 = vlaneseq
      %v3181 = vshrl.u32 %v3180, 7
      %v3182 = vsub.s32 %v3179, %v3181
      %v3183 = vrot.slane %v2884, %v3182
      %v3185 = vunpack.c.l.s4 1983009808
      %v3186 = vunpack.c.0.s8 %v3185
      %v3187 = vlaneseq
      %v3188 = vshrl.u32 %v3187, 7
      %v3189 = vsub.s32 %v3186, %v3188
      %v3190 = vrot.slane %v3176, %v3189
      %v3191 = vcombine.high %v3183, %v3183
      %v3192 = vcombine.high %v3190, %v3190
      %v3193 = vcombine.high %v2885, %v2885
      %v3195 = vunpack.c.l.s4 1983009808
      %v3196 = vunpack.c.0.s8 %v3195
      %v3197 = vlaneseq
      %v3198 = vshrl.u32 %v3197, 7
      %v3199 = vsub.s32 %v3196, %v3198
      %v3200 = vrot.slane %v2885, %v3199
      %v3202 = vunpack.c.l.s4 1983009808
      %v3203 = vunpack.c.0.s8 %v3202
      %v3204 = vlaneseq
      %v3205 = vshrl.u32 %v3204, 7
      %v3206 = vsub.s32 %v3203, %v3205
      %v3207 = vrot.slane %v3193, %v3206
      %v3208 = vcombine.high %v3200, %v3200
      %v3209 = vcombine.high %v3207, %v3207
      %v3210 = vcombine.high %v2886, %v2886
      %v3212 = vunpack.c.l.s4 1983009808
      %v3213 = vunpack.c.0.s8 %v3212
      %v3214 = vlaneseq
      %v3215 = vshrl.u32 %v3214, 7
      %v3216 = vsub.s32 %v3213, %v3215
      %v3217 = vrot.slane %v2886, %v3216
      %v3219 = vunpack.c.l.s4 1983009808
      %v3220 = vunpack.c.0.s8 %v3219
      %v3221 = vlaneseq
      %v3222 = vshrl.u32 %v3221, 7
      %v3223 = vsub.s32 %v3220, %v3222
      %v3224 = vrot.slane %v3210, %v3223
      %v3225 = vcombine.high %v3217, %v3217
      %v3226 = vcombine.high %v3224, %v3224
      %v3227 = vcombine.high %v2887, %v2887
      %v3229 = vunpack.c.l.s4 1983009808
      %v3230 = vunpack.c.0.s8 %v3229
      %v3231 = vlaneseq
      %v3232 = vshrl.u32 %v3231, 7
      %v3233 = vsub.s32 %v3230, %v3232
      %v3234 = vrot.slane %v2887, %v3233
      %v3236 = vunpack.c.l.s4 1983009808
      %v3237 = vunpack.c.0.s8 %v3236
      %v3238 = vlaneseq
      %v3239 = vshrl.u32 %v3238, 7
      %v3240 = vsub.s32 %v3237, %v3239
      %v3241 = vrot.slane %v3227, %v3240
      %v3242 = vcombine.high %v3234, %v3234
      %v3243 = vcombine.high %v3241, %v3241
      %v3244 = vcombine.high %v2888, %v2888
      %v3246 = vunpack.c.l.s4 1983009808
      %v3247 = vunpack.c.0.s8 %v3246
      %v3248 = vlaneseq
      %v3249 = vshrl.u32 %v3248, 7
      %v3250 = vsub.s32 %v3247, %v3249
      %v3251 = vrot.slane %v2888, %v3250
      %v3253 = vunpack.c.l.s4 1983009808
      %v3254 = vunpack.c.0.s8 %v3253
      %v3255 = vlaneseq
      %v3256 = vshrl.u32 %v3255, 7
      %v3257 = vsub.s32 %v3254, %v3256
      %v3258 = vrot.slane %v3244, %v3257
      %v3259 = vcombine.high %v3251, %v3251
      %v3260 = vcombine.high %v3258, %v3258
      %v3261 = vcombine.high %v2889, %v2889
      %v3263 = vunpack.c.l.s4 1983009808
      %v3264 = vunpack.c.0.s8 %v3263
      %v3265 = vlaneseq
      %v3266 = vshrl.u32 %v3265, 7
      %v3267 = vsub.s32 %v3264, %v3266
      %v3268 = vrot.slane %v2889, %v3267
      %v3270 = vunpack.c.l.s4 1983009808
      %v3271 = vunpack.c.0.s8 %v3270
      %v3272 = vlaneseq
      %v3273 = vshrl.u32 %v3272, 7
      %v3274 = vsub.s32 %v3271, %v3273
      %v3275 = vrot.slane %v3261, %v3274
      %v3276 = vcombine.high %v3268, %v3268
      %v3277 = vcombine.high %v3275, %v3275
      %v3278 = vcombine.high %v2890, %v2890
      %v3280 = vunpack.c.l.s4 1983009808
      %v3281 = vunpack.c.0.s8 %v3280
      %v3282 = vlaneseq
      %v3283 = vshrl.u32 %v3282, 7
      %v3284 = vsub.s32 %v3281, %v3283
      %v3285 = vrot.slane %v2890, %v3284
      %v3287 = vunpack.c.l.s4 1983009808
      %v3288 = vunpack.c.0.s8 %v3287
      %v3289 = vlaneseq
      %v3290 = vshrl.u32 %v3289, 7
      %v3291 = vsub.s32 %v3288, %v3290
      %v3292 = vrot.slane %v3278, %v3291
      %v3293 = vcombine.high %v3285, %v3285
      %v3294 = vcombine.high %v3292, %v3292
      %v3295 = vcombine.high %v2891, %v2891
      %v3297 = vunpack.c.l.s4 1983009808
      %v3298 = vunpack.c.0.s8 %v3297
      %v3299 = vlaneseq
      %v3300 = vshrl.u32 %v3299, 7
      %v3301 = vsub.s32 %v3298, %v3300
      %v3302 = vrot.slane %v2891, %v3301
      %v3304 = vunpack.c.l.s4 1983009808
      %v3305 = vunpack.c.0.s8 %v3304
      %v3306 = vlaneseq
      %v3307 = vshrl.u32 %v3306, 7
      %v3308 = vsub.s32 %v3305, %v3307
      %v3309 = vrot.slane %v3295, %v3308
      %v3310 = vcombine.high %v3302, %v3302
      %v3311 = vcombine.high %v3309, %v3309
      %v3312 = vcombine.high %v2892, %v2892
      %v3314 = vunpack.c.l.s4 1983009808
      %v3315 = vunpack.c.0.s8 %v3314
      %v3316 = vlaneseq
      %v3317 = vshrl.u32 %v3316, 7
      %v3318 = vsub.s32 %v3315, %v3317
      %v3319 = vrot.slane %v2892, %v3318
      %v3321 = vunpack.c.l.s4 1983009808
      %v3322 = vunpack.c.0.s8 %v3321
      %v3323 = vlaneseq
      %v3324 = vshrl.u32 %v3323, 7
      %v3325 = vsub.s32 %v3322, %v3324
      %v3326 = vrot.slane %v3312, %v3325
      %v3327 = vcombine.high %v3319, %v3319
      %v3328 = vcombine.high %v3326, %v3326
      %v3329 = vcombine.high %v2893, %v2893
      %v3331 = vunpack.c.l.s4 1983009808
      %v3332 = vunpack.c.0.s8 %v3331
      %v3333 = vlaneseq
      %v3334 = vshrl.u32 %v3333, 7
      %v3335 = vsub.s32 %v3332, %v3334
      %v3336 = vrot.slane %v2893, %v3335
      %v3338 = vunpack.c.l.s4 1983009808
      %v3339 = vunpack.c.0.s8 %v3338
      %v3340 = vlaneseq
      %v3341 = vshrl.u32 %v3340, 7
      %v3342 = vsub.s32 %v3339, %v3341
      %v3343 = vrot.slane %v3329, %v3342
      %v3344 = vcombine.high %v3336, %v3336
      %v3345 = vcombine.high %v3343, %v3343
      %v3346 = vcombine.high %v2894, %v2894
      %v3348 = vunpack.c.l.s4 1983009808
      %v3349 = vunpack.c.0.s8 %v3348
      %v3350 = vlaneseq
      %v3351 = vshrl.u32 %v3350, 7
      %v3352 = vsub.s32 %v3349, %v3351
      %v3353 = vrot.slane %v2894, %v3352
      %v3355 = vunpack.c.l.s4 1983009808
      %v3356 = vunpack.c.0.s8 %v3355
      %v3357 = vlaneseq
      %v3358 = vshrl.u32 %v3357, 7
      %v3359 = vsub.s32 %v3356, %v3358
      %v3360 = vrot.slane %v3346, %v3359
      %v3361 = vcombine.high %v3353, %v3353
      %v3362 = vcombine.high %v3360, %v3360
      %v3363 = vcombine.high %v2895, %v2895
      %v3365 = vunpack.c.l.s4 1983009808
      %v3366 = vunpack.c.0.s8 %v3365
      %v3367 = vlaneseq
      %v3368 = vshrl.u32 %v3367, 7
      %v3369 = vsub.s32 %v3366, %v3368
      %v3370 = vrot.slane %v2895, %v3369
      %v3372 = vunpack.c.l.s4 1983009808
      %v3373 = vunpack.c.0.s8 %v3372
      %v3374 = vlaneseq
      %v3375 = vshrl.u32 %v3374, 7
      %v3376 = vsub.s32 %v3373, %v3375
      %v3377 = vrot.slane %v3363, %v3376
      %v3378 = vcombine.high %v3370, %v3370
      %v3379 = vcombine.high %v3377, %v3377
      %v3380 = vcombine.high %v2896, %v2896
      %v3382 = vunpack.c.l.s4 1983009808
      %v3383 = vunpack.c.0.s8 %v3382
      %v3384 = vlaneseq
      %v3385 = vshrl.u32 %v3384, 7
      %v3386 = vsub.s32 %v3383, %v3385
      %v3387 = vrot.slane %v2896, %v3386
      %v3389 = vunpack.c.l.s4 1983009808
      %v3390 = vunpack.c.0.s8 %v3389
      %v3391 = vlaneseq
      %v3392 = vshrl.u32 %v3391, 7
      %v3393 = vsub.s32 %v3390, %v3392
      %v3394 = vrot.slane %v3380, %v3393
      %v3395 = vcombine.high %v3387, %v3387
      %v3396 = vcombine.high %v3394, %v3394
      %v3397 = vcombine.high %v2897, %v2897
      %v3399 = vunpack.c.l.s4 1983009808
      %v3400 = vunpack.c.0.s8 %v3399
      %v3401 = vlaneseq
      %v3402 = vshrl.u32 %v3401, 7
      %v3403 = vsub.s32 %v3400, %v3402
      %v3404 = vrot.slane %v2897, %v3403
      %v3406 = vunpack.c.l.s4 1983009808
      %v3407 = vunpack.c.0.s8 %v3406
      %v3408 = vlaneseq
      %v3409 = vshrl.u32 %v3408, 7
      %v3410 = vsub.s32 %v3407, %v3409
      %v3411 = vrot.slane %v3397, %v3410
      %v3412 = vcombine.high %v3404, %v3404
      %v3413 = vcombine.high %v3411, %v3411
      %v3414 = vcombine.high %v2898, %v2898
      %v3416 = vunpack.c.l.s4 1983009808
      %v3417 = vunpack.c.0.s8 %v3416
      %v3418 = vlaneseq
      %v3419 = vshrl.u32 %v3418, 7
      %v3420 = vsub.s32 %v3417, %v3419
      %v3421 = vrot.slane %v2898, %v3420
      %v3423 = vunpack.c.l.s4 1983009808
      %v3424 = vunpack.c.0.s8 %v3423
      %v3425 = vlaneseq
      %v3426 = vshrl.u32 %v3425, 7
      %v3427 = vsub.s32 %v3424, %v3426
      %v3428 = vrot.slane %v3414, %v3427
      %v3429 = vcombine.high %v3421, %v3421
      %v3430 = vcombine.high %v3428, %v3428
      %v3431 = vcombine.high %v2899, %v2899
      %v3433 = vunpack.c.l.s4 1983009808
      %v3434 = vunpack.c.0.s8 %v3433
      %v3435 = vlaneseq
      %v3436 = vshrl.u32 %v3435, 7
      %v3437 = vsub.s32 %v3434, %v3436
      %v3438 = vrot.slane %v2899, %v3437
      %v3440 = vunpack.c.l.s4 1983009808
      %v3441 = vunpack.c.0.s8 %v3440
      %v3442 = vlaneseq
      %v3443 = vshrl.u32 %v3442, 7
      %v3444 = vsub.s32 %v3441, %v3443
      %v3445 = vrot.slane %v3431, %v3444
      %v3446 = vcombine.high %v3438, %v3438
      %v3447 = vcombine.high %v3445, %v3445
      %v3448 = vcombine.high %v2900, %v2900
      %v3450 = vunpack.c.l.s4 1983009808
      %v3451 = vunpack.c.0.s8 %v3450
      %v3452 = vlaneseq
      %v3453 = vshrl.u32 %v3452, 7
      %v3454 = vsub.s32 %v3451, %v3453
      %v3455 = vrot.slane %v2900, %v3454
      %v3457 = vunpack.c.l.s4 1983009808
      %v3458 = vunpack.c.0.s8 %v3457
      %v3459 = vlaneseq
      %v3460 = vshrl.u32 %v3459, 7
      %v3461 = vsub.s32 %v3458, %v3460
      %v3462 = vrot.slane %v3448, %v3461
      %v3463 = vcombine.high %v3455, %v3455
      %v3464 = vcombine.high %v3462, %v3462
      %v3465 = vcombine.high %v2901, %v2901
      %v3467 = vunpack.c.l.s4 1983009808
      %v3468 = vunpack.c.0.s8 %v3467
      %v3469 = vlaneseq
      %v3470 = vshrl.u32 %v3469, 7
      %v3471 = vsub.s32 %v3468, %v3470
      %v3472 = vrot.slane %v2901, %v3471
      %v3474 = vunpack.c.l.s4 1983009808
      %v3475 = vunpack.c.0.s8 %v3474
      %v3476 = vlaneseq
      %v3477 = vshrl.u32 %v3476, 7
      %v3478 = vsub.s32 %v3475, %v3477
      %v3479 = vrot.slane %v3465, %v3478
      %v3480 = vcombine.high %v3472, %v3472
      %v3481 = vcombine.high %v3479, %v3479
      %v3482 = vcombine.high %v2902, %v2902
      %v3484 = vunpack.c.l.s4 1983009808
      %v3485 = vunpack.c.0.s8 %v3484
      %v3486 = vlaneseq
      %v3487 = vshrl.u32 %v3486, 7
      %v3488 = vsub.s32 %v3485, %v3487
      %v3489 = vrot.slane %v2902, %v3488
      %v3491 = vunpack.c.l.s4 1983009808
      %v3492 = vunpack.c.0.s8 %v3491
      %v3493 = vlaneseq
      %v3494 = vshrl.u32 %v3493, 7
      %v3495 = vsub.s32 %v3492, %v3494
      %v3496 = vrot.slane %v3482, %v3495
      %v3497 = vcombine.high %v3489, %v3489
      %v3498 = vcombine.high %v3496, %v3496
      %v3499 = vcombine.high %v2903, %v2903
      %v3501 = vunpack.c.l.s4 1983009808
      %v3502 = vunpack.c.0.s8 %v3501
      %v3503 = vlaneseq
      %v3504 = vshrl.u32 %v3503, 7
      %v3505 = vsub.s32 %v3502, %v3504
      %v3506 = vrot.slane %v2903, %v3505
      %v3508 = vunpack.c.l.s4 1983009808
      %v3509 = vunpack.c.0.s8 %v3508
      %v3510 = vlaneseq
      %v3511 = vshrl.u32 %v3510, 7
      %v3512 = vsub.s32 %v3509, %v3511
      %v3513 = vrot.slane %v3499, %v3512
      %v3514 = vcombine.high %v3506, %v3506
      %v3515 = vcombine.high %v3513, %v3513
      %v3516 = vld [vmem:[#allocation3 + $0x2] sm:$0xff]
      %v3517 = vld [vmem:[#allocation3 + $0xa] sm:$0xff]
      %v3518 = vld [vmem:[#allocation3 + $0x1a] sm:$0xff]
      %v3519 = vld [vmem:[#allocation3 + $0x22] sm:$0xff]
      %v3520 = vld [vmem:[#allocation3 + $0x32] sm:$0xff]
      %v3521 = vld [vmem:[#allocation3 + $0x3a] sm:$0xff]
      %v3522 = vld [vmem:[#allocation3 + $0x4a] sm:$0xff]
      %v3523 = vld [vmem:[#allocation3 + $0x52] sm:$0xff]
      %v3524 = vld [vmem:[#allocation3 + $0x62] sm:$0xff]
      %v3525 = vld [vmem:[#allocation3 + $0x6a] sm:$0xff]
      %v3526 = vld [vmem:[#allocation3 + $0x7a] sm:$0xff]
      %v3527 = vld [vmem:[#allocation3 + $0x82] sm:$0xff]
      %v3528 = vld [vmem:[#allocation3 + $0x92] sm:$0xff]
      %v3529 = vld [vmem:[#allocation3 + $0x9a] sm:$0xff]
      %v3530 = vld [vmem:[#allocation3 + $0xaa] sm:$0xff]
      %v3531 = vld [vmem:[#allocation3 + $0xb2] sm:$0xff]
      %v3532 = vld [vmem:[#allocation3 + $0xc2] sm:$0xff]
      %v3533 = vld [vmem:[#allocation3 + $0xca] sm:$0xff]
      %v3534 = vld [vmem:[#allocation3 + $0xda] sm:$0xff]
      %v3535 = vld [vmem:[#allocation3 + $0xe2] sm:$0xff]
      %v3536 = vld [vmem:[#allocation3 + $0xf2] sm:$0xff]
      %v3537 = vld [vmem:[#allocation3 + $0xfa] sm:$0xff]
      %v3538 = vld [vmem:[#allocation3 + $0x10a] sm:$0xff]
      %v3539 = vld [vmem:[#allocation3 + $0x112] sm:$0xff]
      %v3540 = vld [vmem:[#allocation3 + $0x122] sm:$0xff]
      %v3541 = vld [vmem:[#allocation3 + $0x12a] sm:$0xff]
      %v3542 = vld [vmem:[#allocation3 + $0x13a] sm:$0xff]
      %v3543 = vld [vmem:[#allocation3 + $0x142] sm:$0xff]
      %v3544 = vld [vmem:[#allocation3 + $0x152] sm:$0xff]
      %v3545 = vld [vmem:[#allocation3 + $0x15a] sm:$0xff]
      %v3546 = vld [vmem:[#allocation3 + $0x16a] sm:$0xff]
      %v3547 = vld [vmem:[#allocation3 + $0x172] sm:$0xff]
      %v3548 = vld [vmem:[#allocation3 + $0x182] sm:$0xff]
      %v3549 = vld [vmem:[#allocation3 + $0x18a] sm:$0xff]
      %v3584 = vcombine.high %v3516, %v3516
      %v3586 = vunpack.c.l.s4 1983009808
      %v3587 = vunpack.c.0.s8 %v3586
      %v3588 = vlaneseq
      %v3589 = vshrl.u32 %v3588, 7
      %v3590 = vsub.s32 %v3587, %v3589
      %v3591 = vrot.slane %v3516, %v3590
      %v3593 = vunpack.c.l.s4 1983009808
      %v3594 = vunpack.c.0.s8 %v3593
      %v3595 = vlaneseq
      %v3596 = vshrl.u32 %v3595, 7
      %v3597 = vsub.s32 %v3594, %v3596
      %v3598 = vrot.slane %v3584, %v3597
      %v3599 = vcombine.high %v3591, %v3591
      %v3600 = vcombine.high %v3598, %v3598
      %v3601 = vcombine.high %v3517, %v3517
      %v3603 = vunpack.c.l.s4 1983009808
      %v3604 = vunpack.c.0.s8 %v3603
      %v3605 = vlaneseq
      %v3606 = vshrl.u32 %v3605, 7
      %v3607 = vsub.s32 %v3604, %v3606
      %v3608 = vrot.slane %v3517, %v3607
      %v3610 = vunpack.c.l.s4 1983009808
      %v3611 = vunpack.c.0.s8 %v3610
      %v3612 = vlaneseq
      %v3613 = vshrl.u32 %v3612, 7
      %v3614 = vsub.s32 %v3611, %v3613
      %v3615 = vrot.slane %v3601, %v3614
      %v3616 = vcombine.high %v3608, %v3608
      %v3617 = vcombine.high %v3615, %v3615
      %v3618 = vcombine.high %v3518, %v3518
      %v3620 = vunpack.c.l.s4 1983009808
      %v3621 = vunpack.c.0.s8 %v3620
      %v3622 = vlaneseq
      %v3623 = vshrl.u32 %v3622, 7
      %v3624 = vsub.s32 %v3621, %v3623
      %v3625 = vrot.slane %v3518, %v3624
      %v3627 = vunpack.c.l.s4 1983009808
      %v3628 = vunpack.c.0.s8 %v3627
      %v3629 = vlaneseq
      %v3630 = vshrl.u32 %v3629, 7
      %v3631 = vsub.s32 %v3628, %v3630
      %v3632 = vrot.slane %v3618, %v3631
      %v3633 = vcombine.high %v3625, %v3625
      %v3634 = vcombine.high %v3632, %v3632
      %v3635 = vcombine.high %v3519, %v3519
      %v3637 = vunpack.c.l.s4 1983009808
      %v3638 = vunpack.c.0.s8 %v3637
      %v3639 = vlaneseq
      %v3640 = vshrl.u32 %v3639, 7
      %v3641 = vsub.s32 %v3638, %v3640
      %v3642 = vrot.slane %v3519, %v3641
      %v3644 = vunpack.c.l.s4 1983009808
      %v3645 = vunpack.c.0.s8 %v3644
      %v3646 = vlaneseq
      %v3647 = vshrl.u32 %v3646, 7
      %v3648 = vsub.s32 %v3645, %v3647
      %v3649 = vrot.slane %v3635, %v3648
      %v3650 = vcombine.high %v3642, %v3642
      %v3651 = vcombine.high %v3649, %v3649
      %v3652 = vcombine.high %v3520, %v3520
      %v3654 = vunpack.c.l.s4 1983009808
      %v3655 = vunpack.c.0.s8 %v3654
      %v3656 = vlaneseq
      %v3657 = vshrl.u32 %v3656, 7
      %v3658 = vsub.s32 %v3655, %v3657
      %v3659 = vrot.slane %v3520, %v3658
      %v3661 = vunpack.c.l.s4 1983009808
      %v3662 = vunpack.c.0.s8 %v3661
      %v3663 = vlaneseq
      %v3664 = vshrl.u32 %v3663, 7
      %v3665 = vsub.s32 %v3662, %v3664
      %v3666 = vrot.slane %v3652, %v3665
      %v3667 = vcombine.high %v3659, %v3659
      %v3668 = vcombine.high %v3666, %v3666
      %v3669 = vcombine.high %v3521, %v3521
      %v3671 = vunpack.c.l.s4 1983009808
      %v3672 = vunpack.c.0.s8 %v3671
      %v3673 = vlaneseq
      %v3674 = vshrl.u32 %v3673, 7
      %v3675 = vsub.s32 %v3672, %v3674
      %v3676 = vrot.slane %v3521, %v3675
      %v3678 = vunpack.c.l.s4 1983009808
      %v3679 = vunpack.c.0.s8 %v3678
      %v3680 = vlaneseq
      %v3681 = vshrl.u32 %v3680, 7
      %v3682 = vsub.s32 %v3679, %v3681
      %v3683 = vrot.slane %v3669, %v3682
      %v3684 = vcombine.high %v3676, %v3676
      %v3685 = vcombine.high %v3683, %v3683
      %v3686 = vcombine.high %v3522, %v3522
      %v3688 = vunpack.c.l.s4 1983009808
      %v3689 = vunpack.c.0.s8 %v3688
      %v3690 = vlaneseq
      %v3691 = vshrl.u32 %v3690, 7
      %v3692 = vsub.s32 %v3689, %v3691
      %v3693 = vrot.slane %v3522, %v3692
      %v3695 = vunpack.c.l.s4 1983009808
      %v3696 = vunpack.c.0.s8 %v3695
      %v3697 = vlaneseq
      %v3698 = vshrl.u32 %v3697, 7
      %v3699 = vsub.s32 %v3696, %v3698
      %v3700 = vrot.slane %v3686, %v3699
      %v3701 = vcombine.high %v3693, %v3693
      %v3702 = vcombine.high %v3700, %v3700
      %v3703 = vcombine.high %v3523, %v3523
      %v3705 = vunpack.c.l.s4 1983009808
      %v3706 = vunpack.c.0.s8 %v3705
      %v3707 = vlaneseq
      %v3708 = vshrl.u32 %v3707, 7
      %v3709 = vsub.s32 %v3706, %v3708
      %v3710 = vrot.slane %v3523, %v3709
      %v3712 = vunpack.c.l.s4 1983009808
      %v3713 = vunpack.c.0.s8 %v3712
      %v3714 = vlaneseq
      %v3715 = vshrl.u32 %v3714, 7
      %v3716 = vsub.s32 %v3713, %v3715
      %v3717 = vrot.slane %v3703, %v3716
      %v3718 = vcombine.high %v3710, %v3710
      %v3719 = vcombine.high %v3717, %v3717
      %v3720 = vcombine.high %v3524, %v3524
      %v3722 = vunpack.c.l.s4 1983009808
      %v3723 = vunpack.c.0.s8 %v3722
      %v3724 = vlaneseq
      %v3725 = vshrl.u32 %v3724, 7
      %v3726 = vsub.s32 %v3723, %v3725
      %v3727 = vrot.slane %v3524, %v3726
      %v3729 = vunpack.c.l.s4 1983009808
      %v3730 = vunpack.c.0.s8 %v3729
      %v3731 = vlaneseq
      %v3732 = vshrl.u32 %v3731, 7
      %v3733 = vsub.s32 %v3730, %v3732
      %v3734 = vrot.slane %v3720, %v3733
      %v3735 = vcombine.high %v3727, %v3727
      %v3736 = vcombine.high %v3734, %v3734
      %v3737 = vcombine.high %v3525, %v3525
      %v3739 = vunpack.c.l.s4 1983009808
      %v3740 = vunpack.c.0.s8 %v3739
      %v3741 = vlaneseq
      %v3742 = vshrl.u32 %v3741, 7
      %v3743 = vsub.s32 %v3740, %v3742
      %v3744 = vrot.slane %v3525, %v3743
      %v3746 = vunpack.c.l.s4 1983009808
      %v3747 = vunpack.c.0.s8 %v3746
      %v3748 = vlaneseq
      %v3749 = vshrl.u32 %v3748, 7
      %v3750 = vsub.s32 %v3747, %v3749
      %v3751 = vrot.slane %v3737, %v3750
      %v3752 = vcombine.high %v3744, %v3744
      %v3753 = vcombine.high %v3751, %v3751
      %v3754 = vcombine.high %v3526, %v3526
      %v3756 = vunpack.c.l.s4 1983009808
      %v3757 = vunpack.c.0.s8 %v3756
      %v3758 = vlaneseq
      %v3759 = vshrl.u32 %v3758, 7
      %v3760 = vsub.s32 %v3757, %v3759
      %v3761 = vrot.slane %v3526, %v3760
      %v3763 = vunpack.c.l.s4 1983009808
      %v3764 = vunpack.c.0.s8 %v3763
      %v3765 = vlaneseq
      %v3766 = vshrl.u32 %v3765, 7
      %v3767 = vsub.s32 %v3764, %v3766
      %v3768 = vrot.slane %v3754, %v3767
      %v3769 = vcombine.high %v3761, %v3761
      %v3770 = vcombine.high %v3768, %v3768
      %v3771 = vcombine.high %v3527, %v3527
      %v3773 = vunpack.c.l.s4 1983009808
      %v3774 = vunpack.c.0.s8 %v3773
      %v3775 = vlaneseq
      %v3776 = vshrl.u32 %v3775, 7
      %v3777 = vsub.s32 %v3774, %v3776
      %v3778 = vrot.slane %v3527, %v3777
      %v3780 = vunpack.c.l.s4 1983009808
      %v3781 = vunpack.c.0.s8 %v3780
      %v3782 = vlaneseq
      %v3783 = vshrl.u32 %v3782, 7
      %v3784 = vsub.s32 %v3781, %v3783
      %v3785 = vrot.slane %v3771, %v3784
      %v3786 = vcombine.high %v3778, %v3778
      %v3787 = vcombine.high %v3785, %v3785
      %v3788 = vcombine.high %v3528, %v3528
      %v3790 = vunpack.c.l.s4 1983009808
      %v3791 = vunpack.c.0.s8 %v3790
      %v3792 = vlaneseq
      %v3793 = vshrl.u32 %v3792, 7
      %v3794 = vsub.s32 %v3791, %v3793
      %v3795 = vrot.slane %v3528, %v3794
      %v3797 = vunpack.c.l.s4 1983009808
      %v3798 = vunpack.c.0.s8 %v3797
      %v3799 = vlaneseq
      %v3800 = vshrl.u32 %v3799, 7
      %v3801 = vsub.s32 %v3798, %v3800
      %v3802 = vrot.slane %v3788, %v3801
      %v3803 = vcombine.high %v3795, %v3795
      %v3804 = vcombine.high %v3802, %v3802
      %v3805 = vcombine.high %v3529, %v3529
      %v3807 = vunpack.c.l.s4 1983009808
      %v3808 = vunpack.c.0.s8 %v3807
      %v3809 = vlaneseq
      %v3810 = vshrl.u32 %v3809, 7
      %v3811 = vsub.s32 %v3808, %v3810
      %v3812 = vrot.slane %v3529, %v3811
      %v3814 = vunpack.c.l.s4 1983009808
      %v3815 = vunpack.c.0.s8 %v3814
      %v3816 = vlaneseq
      %v3817 = vshrl.u32 %v3816, 7
      %v3818 = vsub.s32 %v3815, %v3817
      %v3819 = vrot.slane %v3805, %v3818
      %v3820 = vcombine.high %v3812, %v3812
      %v3821 = vcombine.high %v3819, %v3819
      %v3822 = vcombine.high %v3530, %v3530
      %v3824 = vunpack.c.l.s4 1983009808
      %v3825 = vunpack.c.0.s8 %v3824
      %v3826 = vlaneseq
      %v3827 = vshrl.u32 %v3826, 7
      %v3828 = vsub.s32 %v3825, %v3827
      %v3829 = vrot.slane %v3530, %v3828
      %v3831 = vunpack.c.l.s4 1983009808
      %v3832 = vunpack.c.0.s8 %v3831
      %v3833 = vlaneseq
      %v3834 = vshrl.u32 %v3833, 7
      %v3835 = vsub.s32 %v3832, %v3834
      %v3836 = vrot.slane %v3822, %v3835
      %v3837 = vcombine.high %v3829, %v3829
      %v3838 = vcombine.high %v3836, %v3836
      %v3839 = vcombine.high %v3531, %v3531
      %v3841 = vunpack.c.l.s4 1983009808
      %v3842 = vunpack.c.0.s8 %v3841
      %v3843 = vlaneseq
      %v3844 = vshrl.u32 %v3843, 7
      %v3845 = vsub.s32 %v3842, %v3844
      %v3846 = vrot.slane %v3531, %v3845
      %v3848 = vunpack.c.l.s4 1983009808
      %v3849 = vunpack.c.0.s8 %v3848
      %v3850 = vlaneseq
      %v3851 = vshrl.u32 %v3850, 7
      %v3852 = vsub.s32 %v3849, %v3851
      %v3853 = vrot.slane %v3839, %v3852
      %v3854 = vcombine.high %v3846, %v3846
      %v3855 = vcombine.high %v3853, %v3853
      %v3856 = vcombine.high %v3532, %v3532
      %v3858 = vunpack.c.l.s4 1983009808
      %v3859 = vunpack.c.0.s8 %v3858
      %v3860 = vlaneseq
      %v3861 = vshrl.u32 %v3860, 7
      %v3862 = vsub.s32 %v3859, %v3861
      %v3863 = vrot.slane %v3532, %v3862
      %v3865 = vunpack.c.l.s4 1983009808
      %v3866 = vunpack.c.0.s8 %v3865
      %v3867 = vlaneseq
      %v3868 = vshrl.u32 %v3867, 7
      %v3869 = vsub.s32 %v3866, %v3868
      %v3870 = vrot.slane %v3856, %v3869
      %v3871 = vcombine.high %v3863, %v3863
      %v3872 = vcombine.high %v3870, %v3870
      %v3873 = vcombine.high %v3533, %v3533
      %v3875 = vunpack.c.l.s4 1983009808
      %v3876 = vunpack.c.0.s8 %v3875
      %v3877 = vlaneseq
      %v3878 = vshrl.u32 %v3877, 7
      %v3879 = vsub.s32 %v3876, %v3878
      %v3880 = vrot.slane %v3533, %v3879
      %v3882 = vunpack.c.l.s4 1983009808
      %v3883 = vunpack.c.0.s8 %v3882
      %v3884 = vlaneseq
      %v3885 = vshrl.u32 %v3884, 7
      %v3886 = vsub.s32 %v3883, %v3885
      %v3887 = vrot.slane %v3873, %v3886
      %v3888 = vcombine.high %v3880, %v3880
      %v3889 = vcombine.high %v3887, %v3887
      %v3890 = vcombine.high %v3534, %v3534
      %v3892 = vunpack.c.l.s4 1983009808
      %v3893 = vunpack.c.0.s8 %v3892
      %v3894 = vlaneseq
      %v3895 = vshrl.u32 %v3894, 7
      %v3896 = vsub.s32 %v3893, %v3895
      %v3897 = vrot.slane %v3534, %v3896
      %v3899 = vunpack.c.l.s4 1983009808
      %v3900 = vunpack.c.0.s8 %v3899
      %v3901 = vlaneseq
      %v3902 = vshrl.u32 %v3901, 7
      %v3903 = vsub.s32 %v3900, %v3902
      %v3904 = vrot.slane %v3890, %v3903
      %v3905 = vcombine.high %v3897, %v3897
      %v3906 = vcombine.high %v3904, %v3904
      %v3907 = vcombine.high %v3535, %v3535
      %v3909 = vunpack.c.l.s4 1983009808
      %v3910 = vunpack.c.0.s8 %v3909
      %v3911 = vlaneseq
      %v3912 = vshrl.u32 %v3911, 7
      %v3913 = vsub.s32 %v3910, %v3912
      %v3914 = vrot.slane %v3535, %v3913
      %v3916 = vunpack.c.l.s4 1983009808
      %v3917 = vunpack.c.0.s8 %v3916
      %v3918 = vlaneseq
      %v3919 = vshrl.u32 %v3918, 7
      %v3920 = vsub.s32 %v3917, %v3919
      %v3921 = vrot.slane %v3907, %v3920
      %v3922 = vcombine.high %v3914, %v3914
      %v3923 = vcombine.high %v3921, %v3921
      %v3924 = vcombine.high %v3536, %v3536
      %v3926 = vunpack.c.l.s4 1983009808
      %v3927 = vunpack.c.0.s8 %v3926
      %v3928 = vlaneseq
      %v3929 = vshrl.u32 %v3928, 7
      %v3930 = vsub.s32 %v3927, %v3929
      %v3931 = vrot.slane %v3536, %v3930
      %v3933 = vunpack.c.l.s4 1983009808
      %v3934 = vunpack.c.0.s8 %v3933
      %v3935 = vlaneseq
      %v3936 = vshrl.u32 %v3935, 7
      %v3937 = vsub.s32 %v3934, %v3936
      %v3938 = vrot.slane %v3924, %v3937
      %v3939 = vcombine.high %v3931, %v3931
      %v3940 = vcombine.high %v3938, %v3938
      %v3941 = vcombine.high %v3537, %v3537
      %v3943 = vunpack.c.l.s4 1983009808
      %v3944 = vunpack.c.0.s8 %v3943
      %v3945 = vlaneseq
      %v3946 = vshrl.u32 %v3945, 7
      %v3947 = vsub.s32 %v3944, %v3946
      %v3948 = vrot.slane %v3537, %v3947
      %v3950 = vunpack.c.l.s4 1983009808
      %v3951 = vunpack.c.0.s8 %v3950
      %v3952 = vlaneseq
      %v3953 = vshrl.u32 %v3952, 7
      %v3954 = vsub.s32 %v3951, %v3953
      %v3955 = vrot.slane %v3941, %v3954
      %v3956 = vcombine.high %v3948, %v3948
      %v3957 = vcombine.high %v3955, %v3955
      %v3958 = vcombine.high %v3538, %v3538
      %v3960 = vunpack.c.l.s4 1983009808
      %v3961 = vunpack.c.0.s8 %v3960
      %v3962 = vlaneseq
      %v3963 = vshrl.u32 %v3962, 7
      %v3964 = vsub.s32 %v3961, %v3963
      %v3965 = vrot.slane %v3538, %v3964
      %v3967 = vunpack.c.l.s4 1983009808
      %v3968 = vunpack.c.0.s8 %v3967
      %v3969 = vlaneseq
      %v3970 = vshrl.u32 %v3969, 7
      %v3971 = vsub.s32 %v3968, %v3970
      %v3972 = vrot.slane %v3958, %v3971
      %v3973 = vcombine.high %v3965, %v3965
      %v3974 = vcombine.high %v3972, %v3972
      %v3975 = vcombine.high %v3539, %v3539
      %v3977 = vunpack.c.l.s4 1983009808
      %v3978 = vunpack.c.0.s8 %v3977
      %v3979 = vlaneseq
      %v3980 = vshrl.u32 %v3979, 7
      %v3981 = vsub.s32 %v3978, %v3980
      %v3982 = vrot.slane %v3539, %v3981
      %v3984 = vunpack.c.l.s4 1983009808
      %v3985 = vunpack.c.0.s8 %v3984
      %v3986 = vlaneseq
      %v3987 = vshrl.u32 %v3986, 7
      %v3988 = vsub.s32 %v3985, %v3987
      %v3989 = vrot.slane %v3975, %v3988
      %v3990 = vcombine.high %v3982, %v3982
      %v3991 = vcombine.high %v3989, %v3989
      %v3992 = vcombine.high %v3540, %v3540
      %v3994 = vunpack.c.l.s4 1983009808
      %v3995 = vunpack.c.0.s8 %v3994
      %v3996 = vlaneseq
      %v3997 = vshrl.u32 %v3996, 7
      %v3998 = vsub.s32 %v3995, %v3997
      %v3999 = vrot.slane %v3540, %v3998
      %v4001 = vunpack.c.l.s4 1983009808
      %v4002 = vunpack.c.0.s8 %v4001
      %v4003 = vlaneseq
      %v4004 = vshrl.u32 %v4003, 7
      %v4005 = vsub.s32 %v4002, %v4004
      %v4006 = vrot.slane %v3992, %v4005
      %v4007 = vcombine.high %v3999, %v3999
      %v4008 = vcombine.high %v4006, %v4006
      %v4009 = vcombine.high %v3541, %v3541
      %v4011 = vunpack.c.l.s4 1983009808
      %v4012 = vunpack.c.0.s8 %v4011
      %v4013 = vlaneseq
      %v4014 = vshrl.u32 %v4013, 7
      %v4015 = vsub.s32 %v4012, %v4014
      %v4016 = vrot.slane %v3541, %v4015
      %v4018 = vunpack.c.l.s4 1983009808
      %v4019 = vunpack.c.0.s8 %v4018
      %v4020 = vlaneseq
      %v4021 = vshrl.u32 %v4020, 7
      %v4022 = vsub.s32 %v4019, %v4021
      %v4023 = vrot.slane %v4009, %v4022
      %v4024 = vcombine.high %v4016, %v4016
      %v4025 = vcombine.high %v4023, %v4023
      %v4026 = vcombine.high %v3542, %v3542
      %v4028 = vunpack.c.l.s4 1983009808
      %v4029 = vunpack.c.0.s8 %v4028
      %v4030 = vlaneseq
      %v4031 = vshrl.u32 %v4030, 7
      %v4032 = vsub.s32 %v4029, %v4031
      %v4033 = vrot.slane %v3542, %v4032
      %v4035 = vunpack.c.l.s4 1983009808
      %v4036 = vunpack.c.0.s8 %v4035
      %v4037 = vlaneseq
      %v4038 = vshrl.u32 %v4037, 7
      %v4039 = vsub.s32 %v4036, %v4038
      %v4040 = vrot.slane %v4026, %v4039
      %v4041 = vcombine.high %v4033, %v4033
      %v4042 = vcombine.high %v4040, %v4040
      %v4043 = vcombine.high %v3543, %v3543
      %v4045 = vunpack.c.l.s4 1983009808
      %v4046 = vunpack.c.0.s8 %v4045
      %v4047 = vlaneseq
      %v4048 = vshrl.u32 %v4047, 7
      %v4049 = vsub.s32 %v4046, %v4048
      %v4050 = vrot.slane %v3543, %v4049
      %v4052 = vunpack.c.l.s4 1983009808
      %v4053 = vunpack.c.0.s8 %v4052
      %v4054 = vlaneseq
      %v4055 = vshrl.u32 %v4054, 7
      %v4056 = vsub.s32 %v4053, %v4055
      %v4057 = vrot.slane %v4043, %v4056
      %v4058 = vcombine.high %v4050, %v4050
      %v4059 = vcombine.high %v4057, %v4057
      %v4060 = vcombine.high %v3544, %v3544
      %v4062 = vunpack.c.l.s4 1983009808
      %v4063 = vunpack.c.0.s8 %v4062
      %v4064 = vlaneseq
      %v4065 = vshrl.u32 %v4064, 7
      %v4066 = vsub.s32 %v4063, %v4065
      %v4067 = vrot.slane %v3544, %v4066
      %v4069 = vunpack.c.l.s4 1983009808
      %v4070 = vunpack.c.0.s8 %v4069
      %v4071 = vlaneseq
      %v4072 = vshrl.u32 %v4071, 7
      %v4073 = vsub.s32 %v4070, %v4072
      %v4074 = vrot.slane %v4060, %v4073
      %v4075 = vcombine.high %v4067, %v4067
      %v4076 = vcombine.high %v4074, %v4074
      %v4077 = vcombine.high %v3545, %v3545
      %v4079 = vunpack.c.l.s4 1983009808
      %v4080 = vunpack.c.0.s8 %v4079
      %v4081 = vlaneseq
      %v4082 = vshrl.u32 %v4081, 7
      %v4083 = vsub.s32 %v4080, %v4082
      %v4084 = vrot.slane %v3545, %v4083
      %v4086 = vunpack.c.l.s4 1983009808
      %v4087 = vunpack.c.0.s8 %v4086
      %v4088 = vlaneseq
      %v4089 = vshrl.u32 %v4088, 7
      %v4090 = vsub.s32 %v4087, %v4089
      %v4091 = vrot.slane %v4077, %v4090
      %v4092 = vcombine.high %v4084, %v4084
      %v4093 = vcombine.high %v4091, %v4091
      %v4094 = vcombine.high %v3546, %v3546
      %v4096 = vunpack.c.l.s4 1983009808
      %v4097 = vunpack.c.0.s8 %v4096
      %v4098 = vlaneseq
      %v4099 = vshrl.u32 %v4098, 7
      %v4100 = vsub.s32 %v4097, %v4099
      %v4101 = vrot.slane %v3546, %v4100
      %v4103 = vunpack.c.l.s4 1983009808
      %v4104 = vunpack.c.0.s8 %v4103
      %v4105 = vlaneseq
      %v4106 = vshrl.u32 %v4105, 7
      %v4107 = vsub.s32 %v4104, %v4106
      %v4108 = vrot.slane %v4094, %v4107
      %v4109 = vcombine.high %v4101, %v4101
      %v4110 = vcombine.high %v4108, %v4108
      %v4111 = vcombine.high %v3547, %v3547
      %v4113 = vunpack.c.l.s4 1983009808
      %v4114 = vunpack.c.0.s8 %v4113
      %v4115 = vlaneseq
      %v4116 = vshrl.u32 %v4115, 7
      %v4117 = vsub.s32 %v4114, %v4116
      %v4118 = vrot.slane %v3547, %v4117
      %v4120 = vunpack.c.l.s4 1983009808
      %v4121 = vunpack.c.0.s8 %v4120
      %v4122 = vlaneseq
      %v4123 = vshrl.u32 %v4122, 7
      %v4124 = vsub.s32 %v4121, %v4123
      %v4125 = vrot.slane %v4111, %v4124
      %v4126 = vcombine.high %v4118, %v4118
      %v4127 = vcombine.high %v4125, %v4125
      %v4128 = vcombine.high %v3548, %v3548
      %v4130 = vunpack.c.l.s4 1983009808
      %v4131 = vunpack.c.0.s8 %v4130
      %v4132 = vlaneseq
      %v4133 = vshrl.u32 %v4132, 7
      %v4134 = vsub.s32 %v4131, %v4133
      %v4135 = vrot.slane %v3548, %v4134
      %v4137 = vunpack.c.l.s4 1983009808
      %v4138 = vunpack.c.0.s8 %v4137
      %v4139 = vlaneseq
      %v4140 = vshrl.u32 %v4139, 7
      %v4141 = vsub.s32 %v4138, %v4140
      %v4142 = vrot.slane %v4128, %v4141
      %v4143 = vcombine.high %v4135, %v4135
      %v4144 = vcombine.high %v4142, %v4142
      %v4145 = vcombine.high %v3549, %v3549
      %v4147 = vunpack.c.l.s4 1983009808
      %v4148 = vunpack.c.0.s8 %v4147
      %v4149 = vlaneseq
      %v4150 = vshrl.u32 %v4149, 7
      %v4151 = vsub.s32 %v4148, %v4150
      %v4152 = vrot.slane %v3549, %v4151
      %v4154 = vunpack.c.l.s4 1983009808
      %v4155 = vunpack.c.0.s8 %v4154
      %v4156 = vlaneseq
      %v4157 = vshrl.u32 %v4156, 7
      %v4158 = vsub.s32 %v4155, %v4157
      %v4159 = vrot.slane %v4145, %v4158
      %v4160 = vcombine.high %v4152, %v4152
      %v4161 = vcombine.high %v4159, %v4159
      %v4162 = vlaneseq
      %v4163 = vshrl.u32 %v4162, 7
      %v4164 = vsub.s32 0, %v4163
      %v4165 = vrot.slane %v2299, %v4164
      %v4166 = vlaneseq
      %v4167 = vshrl.u32 %v4166, 7
      %v4168 = vsub.s32 0, %v4167
      %v4169 = vrot.slane %v2307, %v4168
      %v4170 = vlaneseq
      %v4171 = vshrl.u32 %v4170, 7
      %v4172 = vsub.s32 0, %v4171
      %v4173 = vrot.slane %v2306, %v4172
      %v4174 = vlaneseq
      %v4175 = vshrl.u32 %v4174, 7
      %v4176 = vsub.s32 0, %v4175
      %v4177 = vrot.slane %v2308, %v4176
      %v4178 = vlaneseq
      %v4179 = vshrl.u32 %v4178, 7
      %v4180 = vsub.s32 0, %v4179
      %v4181 = vrot.slane %v2316, %v4180
      %v4182 = vlaneseq
      %v4183 = vshrl.u32 %v4182, 7
      %v4184 = vsub.s32 0, %v4183
      %v4185 = vrot.slane %v2324, %v4184
      %v4186 = vlaneseq
      %v4187 = vshrl.u32 %v4186, 7
      %v4188 = vsub.s32 0, %v4187
      %v4189 = vrot.slane %v2323, %v4188
      %v4190 = vlaneseq
      %v4191 = vshrl.u32 %v4190, 7
      %v4192 = vsub.s32 0, %v4191
      %v4193 = vrot.slane %v2325, %v4192
      %v4194 = vlaneseq
      %v4195 = vshrl.u32 %v4194, 7
      %v4196 = vsub.s32 0, %v4195
      %v4197 = vrot.slane %v2367, %v4196
      %v4198 = vlaneseq
      %v4199 = vshrl.u32 %v4198, 7
      %v4200 = vsub.s32 0, %v4199
      %v4201 = vrot.slane %v2375, %v4200
      %v4202 = vlaneseq
      %v4203 = vshrl.u32 %v4202, 7
      %v4204 = vsub.s32 0, %v4203
      %v4205 = vrot.slane %v2374, %v4204
      %v4206 = vlaneseq
      %v4207 = vshrl.u32 %v4206, 7
      %v4208 = vsub.s32 0, %v4207
      %v4209 = vrot.slane %v2376, %v4208
      %v4210 = vlaneseq
      %v4211 = vshrl.u32 %v4210, 7
      %v4212 = vsub.s32 0, %v4211
      %v4213 = vrot.slane %v2384, %v4212
      %v4214 = vlaneseq
      %v4215 = vshrl.u32 %v4214, 7
      %v4216 = vsub.s32 0, %v4215
      %v4217 = vrot.slane %v2392, %v4216
      %v4218 = vlaneseq
      %v4219 = vshrl.u32 %v4218, 7
      %v4220 = vsub.s32 0, %v4219
      %v4221 = vrot.slane %v2391, %v4220
      %v4222 = vlaneseq
      %v4223 = vshrl.u32 %v4222, 7
      %v4224 = vsub.s32 0, %v4223
      %v4225 = vrot.slane %v2393, %v4224
      %v4226 = vlaneseq
      %v4227 = vshrl.u32 %v4226, 7
      %v4228 = vsub.s32 0, %v4227
      %v4229 = vrot.slane %v2435, %v4228
      %v4230 = vlaneseq
      %v4231 = vshrl.u32 %v4230, 7
      %v4232 = vsub.s32 0, %v4231
      %v4233 = vrot.slane %v2443, %v4232
      %v4234 = vlaneseq
      %v4235 = vshrl.u32 %v4234, 7
      %v4236 = vsub.s32 0, %v4235
      %v4237 = vrot.slane %v2442, %v4236
      %v4238 = vlaneseq
      %v4239 = vshrl.u32 %v4238, 7
      %v4240 = vsub.s32 0, %v4239
      %v4241 = vrot.slane %v2444, %v4240
      %v4242 = vlaneseq
      %v4243 = vshrl.u32 %v4242, 7
      %v4244 = vsub.s32 0, %v4243
      %v4245 = vrot.slane %v2452, %v4244
      %v4246 = vlaneseq
      %v4247 = vshrl.u32 %v4246, 7
      %v4248 = vsub.s32 0, %v4247
      %v4249 = vrot.slane %v2460, %v4248
      %v4250 = vlaneseq
      %v4251 = vshrl.u32 %v4250, 7
      %v4252 = vsub.s32 0, %v4251
      %v4253 = vrot.slane %v2459, %v4252
      %v4254 = vlaneseq
      %v4255 = vshrl.u32 %v4254, 7
      %v4256 = vsub.s32 0, %v4255
      %v4257 = vrot.slane %v2461, %v4256
      %v4258 = vlaneseq
      %v4259 = vshrl.u32 %v4258, 7
      %v4260 = vsub.s32 0, %v4259
      %v4261 = vrot.slane %v2503, %v4260
      %v4262 = vlaneseq
      %v4263 = vshrl.u32 %v4262, 7
      %v4264 = vsub.s32 0, %v4263
      %v4265 = vrot.slane %v2511, %v4264
      %v4266 = vlaneseq
      %v4267 = vshrl.u32 %v4266, 7
      %v4268 = vsub.s32 0, %v4267
      %v4269 = vrot.slane %v2510, %v4268
      %v4270 = vlaneseq
      %v4271 = vshrl.u32 %v4270, 7
      %v4272 = vsub.s32 0, %v4271
      %v4273 = vrot.slane %v2512, %v4272
      %v4274 = vlaneseq
      %v4275 = vshrl.u32 %v4274, 7
      %v4276 = vsub.s32 0, %v4275
      %v4277 = vrot.slane %v2520, %v4276
      %v4278 = vlaneseq
      %v4279 = vshrl.u32 %v4278, 7
      %v4280 = vsub.s32 0, %v4279
      %v4281 = vrot.slane %v2528, %v4280
      %v4282 = vlaneseq
      %v4283 = vshrl.u32 %v4282, 7
      %v4284 = vsub.s32 0, %v4283
      %v4285 = vrot.slane %v2527, %v4284
      %v4286 = vlaneseq
      %v4287 = vshrl.u32 %v4286, 7
      %v4288 = vsub.s32 0, %v4287
      %v4289 = vrot.slane %v2529, %v4288
      %v4290 = vlaneseq
      %v4291 = vshrl.u32 %v4290, 7
      %v4292 = vsub.s32 0, %v4291
      %v4293 = vrot.slane %v2571, %v4292
      %v4294 = vlaneseq
      %v4295 = vshrl.u32 %v4294, 7
      %v4296 = vsub.s32 0, %v4295
      %v4297 = vrot.slane %v2579, %v4296
      %v4298 = vlaneseq
      %v4299 = vshrl.u32 %v4298, 7
      %v4300 = vsub.s32 0, %v4299
      %v4301 = vrot.slane %v2578, %v4300
      %v4302 = vlaneseq
      %v4303 = vshrl.u32 %v4302, 7
      %v4304 = vsub.s32 0, %v4303
      %v4305 = vrot.slane %v2580, %v4304
      %v4306 = vlaneseq
      %v4307 = vshrl.u32 %v4306, 7
      %v4308 = vsub.s32 0, %v4307
      %v4309 = vrot.slane %v2588, %v4308
      %v4310 = vlaneseq
      %v4311 = vshrl.u32 %v4310, 7
      %v4312 = vsub.s32 0, %v4311
      %v4313 = vrot.slane %v2596, %v4312
      %v4314 = vlaneseq
      %v4315 = vshrl.u32 %v4314, 7
      %v4316 = vsub.s32 0, %v4315
      %v4317 = vrot.slane %v2595, %v4316
      %v4318 = vlaneseq
      %v4319 = vshrl.u32 %v4318, 7
      %v4320 = vsub.s32 0, %v4319
      %v4321 = vrot.slane %v2597, %v4320
      %v4322 = vlaneseq
      %v4323 = vshrl.u32 %v4322, 7
      %v4324 = vsub.s32 0, %v4323
      %v4325 = vrot.slane %v2639, %v4324
      %v4326 = vlaneseq
      %v4327 = vshrl.u32 %v4326, 7
      %v4328 = vsub.s32 0, %v4327
      %v4329 = vrot.slane %v2647, %v4328
      %v4330 = vlaneseq
      %v4331 = vshrl.u32 %v4330, 7
      %v4332 = vsub.s32 0, %v4331
      %v4333 = vrot.slane %v2646, %v4332
      %v4334 = vlaneseq
      %v4335 = vshrl.u32 %v4334, 7
      %v4336 = vsub.s32 0, %v4335
      %v4337 = vrot.slane %v2648, %v4336
      %v4338 = vlaneseq
      %v4339 = vshrl.u32 %v4338, 7
      %v4340 = vsub.s32 0, %v4339
      %v4341 = vrot.slane %v2656, %v4340
      %v4342 = vlaneseq
      %v4343 = vshrl.u32 %v4342, 7
      %v4344 = vsub.s32 0, %v4343
      %v4345 = vrot.slane %v2664, %v4344
      %v4346 = vlaneseq
      %v4347 = vshrl.u32 %v4346, 7
      %v4348 = vsub.s32 0, %v4347
      %v4349 = vrot.slane %v2663, %v4348
      %v4350 = vlaneseq
      %v4351 = vshrl.u32 %v4350, 7
      %v4352 = vsub.s32 0, %v4351
      %v4353 = vrot.slane %v2665, %v4352
      %v4354 = vlaneseq
      %v4355 = vshrl.u32 %v4354, 7
      %v4356 = vsub.s32 0, %v4355
      %v4357 = vrot.slane %v2707, %v4356
      %v4358 = vlaneseq
      %v4359 = vshrl.u32 %v4358, 7
      %v4360 = vsub.s32 0, %v4359
      %v4361 = vrot.slane %v2715, %v4360
      %v4362 = vlaneseq
      %v4363 = vshrl.u32 %v4362, 7
      %v4364 = vsub.s32 0, %v4363
      %v4365 = vrot.slane %v2714, %v4364
      %v4366 = vlaneseq
      %v4367 = vshrl.u32 %v4366, 7
      %v4368 = vsub.s32 0, %v4367
      %v4369 = vrot.slane %v2716, %v4368
      %v4370 = vlaneseq
      %v4371 = vshrl.u32 %v4370, 7
      %v4372 = vsub.s32 0, %v4371
      %v4373 = vrot.slane %v2724, %v4372
      %v4374 = vlaneseq
      %v4375 = vshrl.u32 %v4374, 7
      %v4376 = vsub.s32 0, %v4375
      %v4377 = vrot.slane %v2732, %v4376
      %v4378 = vlaneseq
      %v4379 = vshrl.u32 %v4378, 7
      %v4380 = vsub.s32 0, %v4379
      %v4381 = vrot.slane %v2731, %v4380
      %v4382 = vlaneseq
      %v4383 = vshrl.u32 %v4382, 7
      %v4384 = vsub.s32 0, %v4383
      %v4385 = vrot.slane %v2733, %v4384
      %v4386 = vlaneseq
      %v4387 = vshrl.u32 %v4386, 7
      %v4388 = vsub.s32 0, %v4387
      %v4389 = vrot.slane %v2775, %v4388
      %v4390 = vlaneseq
      %v4391 = vshrl.u32 %v4390, 7
      %v4392 = vsub.s32 0, %v4391
      %v4393 = vrot.slane %v2783, %v4392
      %v4394 = vlaneseq
      %v4395 = vshrl.u32 %v4394, 7
      %v4396 = vsub.s32 0, %v4395
      %v4397 = vrot.slane %v2782, %v4396
      %v4398 = vlaneseq
      %v4399 = vshrl.u32 %v4398, 7
      %v4400 = vsub.s32 0, %v4399
      %v4401 = vrot.slane %v2784, %v4400
      %v4402 = vlaneseq
      %v4403 = vshrl.u32 %v4402, 7
      %v4404 = vsub.s32 0, %v4403
      %v4405 = vrot.slane %v2792, %v4404
      %v4406 = vlaneseq
      %v4407 = vshrl.u32 %v4406, 7
      %v4408 = vsub.s32 0, %v4407
      %v4409 = vrot.slane %v2800, %v4408
      %v4410 = vlaneseq
      %v4411 = vshrl.u32 %v4410, 7
      %v4412 = vsub.s32 0, %v4411
      %v4413 = vrot.slane %v2799, %v4412
      %v4414 = vlaneseq
      %v4415 = vshrl.u32 %v4414, 7
      %v4416 = vsub.s32 0, %v4415
      %v4417 = vrot.slane %v2801, %v4416
      %vm4418 = vcmask 1041409
      %v4419 = vsel %vm4418, %v4169, %v4165
      %vm4420 = vcmask 1042434
      %v4421 = vsel %vm4420, %v4173, %v4419
      %vm4422 = vcmask 1043459
      %v4423 = vsel %vm4422, %v4177, %v4421
      %vm4424 = vcmask 1044484
      %v4425 = vsel %vm4424, %v4181, %v4423
      %vm4426 = vcmask 1045509
      %v4427 = vsel %vm4426, %v4185, %v4425
      %vm4428 = vcmask 1046534
      %v4429 = vsel %vm4428, %v4189, %v4427
      %vm4430 = vcmask 1047559
      %v4431 = vsel %vm4430, %v4193, %v4429
      %v4432 = vsel %vm4418, %v4201, %v4197
      %v4433 = vsel %vm4420, %v4205, %v4432
      %v4434 = vsel %vm4422, %v4209, %v4433
      %v4435 = vsel %vm4424, %v4213, %v4434
      %v4436 = vsel %vm4426, %v4217, %v4435
      %v4437 = vsel %vm4428, %v4221, %v4436
      %v4438 = vsel %vm4430, %v4225, %v4437
      %v4439 = vsel %vm4418, %v4233, %v4229
      %v4440 = vsel %vm4420, %v4237, %v4439
      %v4441 = vsel %vm4422, %v4241, %v4440
      %v4442 = vsel %vm4424, %v4245, %v4441
      %v4443 = vsel %vm4426, %v4249, %v4442
      %v4444 = vsel %vm4428, %v4253, %v4443
      %v4445 = vsel %vm4430, %v4257, %v4444
      %v4446 = vsel %vm4418, %v4265, %v4261
      %v4447 = vsel %vm4420, %v4269, %v4446
      %v4448 = vsel %vm4422, %v4273, %v4447
      %v4449 = vsel %vm4424, %v4277, %v4448
      %v4450 = vsel %vm4426, %v4281, %v4449
      %v4451 = vsel %vm4428, %v4285, %v4450
      %v4452 = vsel %vm4430, %v4289, %v4451
      %v4453 = vsel %vm4418, %v4297, %v4293
      %v4454 = vsel %vm4420, %v4301, %v4453
      %v4455 = vsel %vm4422, %v4305, %v4454
      %v4456 = vsel %vm4424, %v4309, %v4455
      %v4457 = vsel %vm4426, %v4313, %v4456
      %v4458 = vsel %vm4428, %v4317, %v4457
      %v4459 = vsel %vm4430, %v4321, %v4458
      %v4460 = vsel %vm4418, %v4329, %v4325
      %v4461 = vsel %vm4420, %v4333, %v4460
      %v4462 = vsel %vm4422, %v4337, %v4461
      %v4463 = vsel %vm4424, %v4341, %v4462
      %v4464 = vsel %vm4426, %v4345, %v4463
      %v4465 = vsel %vm4428, %v4349, %v4464
      %v4466 = vsel %vm4430, %v4353, %v4465
      %v4467 = vsel %vm4418, %v4361, %v4357
      %v4468 = vsel %vm4420, %v4365, %v4467
      %v4469 = vsel %vm4422, %v4369, %v4468
      %v4470 = vsel %vm4424, %v4373, %v4469
      %v4471 = vsel %vm4426, %v4377, %v4470
      %v4472 = vsel %vm4428, %v4381, %v4471
      %v4473 = vsel %vm4430, %v4385, %v4472
      %v4474 = vsel %vm4418, %v4393, %v4389
      %v4475 = vsel %vm4420, %v4397, %v4474
      %v4476 = vsel %vm4422, %v4401, %v4475
      %v4477 = vsel %vm4424, %v4405, %v4476
      %v4478 = vsel %vm4426, %v4409, %v4477
      %v4479 = vsel %vm4428, %v4413, %v4478
      %v4480 = vsel %vm4430, %v4417, %v4479
      %v4489 = vlaneseq
      %v4490 = vshrl.u32 %v4489, 7
      %v4491 = vsub.s32 0, %v4490
      %v4492 = vrot.slane %v2945, %v4491
      %v4493 = vlaneseq
      %v4494 = vshrl.u32 %v4493, 7
      %v4495 = vsub.s32 0, %v4494
      %v4496 = vrot.slane %v2953, %v4495
      %v4497 = vlaneseq
      %v4498 = vshrl.u32 %v4497, 7
      %v4499 = vsub.s32 0, %v4498
      %v4500 = vrot.slane %v2952, %v4499
      %v4501 = vlaneseq
      %v4502 = vshrl.u32 %v4501, 7
      %v4503 = vsub.s32 0, %v4502
      %v4504 = vrot.slane %v2954, %v4503
      %v4505 = vlaneseq
      %v4506 = vshrl.u32 %v4505, 7
      %v4507 = vsub.s32 0, %v4506
      %v4508 = vrot.slane %v2962, %v4507
      %v4509 = vlaneseq
      %v4510 = vshrl.u32 %v4509, 7
      %v4511 = vsub.s32 0, %v4510
      %v4512 = vrot.slane %v2970, %v4511
      %v4513 = vlaneseq
      %v4514 = vshrl.u32 %v4513, 7
      %v4515 = vsub.s32 0, %v4514
      %v4516 = vrot.slane %v2969, %v4515
      %v4517 = vlaneseq
      %v4518 = vshrl.u32 %v4517, 7
      %v4519 = vsub.s32 0, %v4518
      %v4520 = vrot.slane %v2971, %v4519
      %v4521 = vlaneseq
      %v4522 = vshrl.u32 %v4521, 7
      %v4523 = vsub.s32 0, %v4522
      %v4524 = vrot.slane %v3013, %v4523
      %v4525 = vlaneseq
      %v4526 = vshrl.u32 %v4525, 7
      %v4527 = vsub.s32 0, %v4526
      %v4528 = vrot.slane %v3021, %v4527
      %v4529 = vlaneseq
      %v4530 = vshrl.u32 %v4529, 7
      %v4531 = vsub.s32 0, %v4530
      %v4532 = vrot.slane %v3020, %v4531
      %v4533 = vlaneseq
      %v4534 = vshrl.u32 %v4533, 7
      %v4535 = vsub.s32 0, %v4534
      %v4536 = vrot.slane %v3022, %v4535
      %v4537 = vlaneseq
      %v4538 = vshrl.u32 %v4537, 7
      %v4539 = vsub.s32 0, %v4538
      %v4540 = vrot.slane %v3030, %v4539
      %v4541 = vlaneseq
      %v4542 = vshrl.u32 %v4541, 7
      %v4543 = vsub.s32 0, %v4542
      %v4544 = vrot.slane %v3038, %v4543
      %v4545 = vlaneseq
      %v4546 = vshrl.u32 %v4545, 7
      %v4547 = vsub.s32 0, %v4546
      %v4548 = vrot.slane %v3037, %v4547
      %v4549 = vlaneseq
      %v4550 = vshrl.u32 %v4549, 7
      %v4551 = vsub.s32 0, %v4550
      %v4552 = vrot.slane %v3039, %v4551
      %v4553 = vlaneseq
      %v4554 = vshrl.u32 %v4553, 7
      %v4555 = vsub.s32 0, %v4554
      %v4556 = vrot.slane %v3081, %v4555
      %v4557 = vlaneseq
      %v4558 = vshrl.u32 %v4557, 7
      %v4559 = vsub.s32 0, %v4558
      %v4560 = vrot.slane %v3089, %v4559
      %v4561 = vlaneseq
      %v4562 = vshrl.u32 %v4561, 7
      %v4563 = vsub.s32 0, %v4562
      %v4564 = vrot.slane %v3088, %v4563
      %v4565 = vlaneseq
      %v4566 = vshrl.u32 %v4565, 7
      %v4567 = vsub.s32 0, %v4566
      %v4568 = vrot.slane %v3090, %v4567
      %v4569 = vlaneseq
      %v4570 = vshrl.u32 %v4569, 7
      %v4571 = vsub.s32 0, %v4570
      %v4572 = vrot.slane %v3098, %v4571
      %v4573 = vlaneseq
      %v4574 = vshrl.u32 %v4573, 7
      %v4575 = vsub.s32 0, %v4574
      %v4576 = vrot.slane %v3106, %v4575
      %v4577 = vlaneseq
      %v4578 = vshrl.u32 %v4577, 7
      %v4579 = vsub.s32 0, %v4578
      %v4580 = vrot.slane %v3105, %v4579
      %v4581 = vlaneseq
      %v4582 = vshrl.u32 %v4581, 7
      %v4583 = vsub.s32 0, %v4582
      %v4584 = vrot.slane %v3107, %v4583
      %v4585 = vlaneseq
      %v4586 = vshrl.u32 %v4585, 7
      %v4587 = vsub.s32 0, %v4586
      %v4588 = vrot.slane %v3149, %v4587
      %v4589 = vlaneseq
      %v4590 = vshrl.u32 %v4589, 7
      %v4591 = vsub.s32 0, %v4590
      %v4592 = vrot.slane %v3157, %v4591
      %v4593 = vlaneseq
      %v4594 = vshrl.u32 %v4593, 7
      %v4595 = vsub.s32 0, %v4594
      %v4596 = vrot.slane %v3156, %v4595
      %v4597 = vlaneseq
      %v4598 = vshrl.u32 %v4597, 7
      %v4599 = vsub.s32 0, %v4598
      %v4600 = vrot.slane %v3158, %v4599
      %v4601 = vlaneseq
      %v4602 = vshrl.u32 %v4601, 7
      %v4603 = vsub.s32 0, %v4602
      %v4604 = vrot.slane %v3166, %v4603
      %v4605 = vlaneseq
      %v4606 = vshrl.u32 %v4605, 7
      %v4607 = vsub.s32 0, %v4606
      %v4608 = vrot.slane %v3174, %v4607
      %v4609 = vlaneseq
      %v4610 = vshrl.u32 %v4609, 7
      %v4611 = vsub.s32 0, %v4610
      %v4612 = vrot.slane %v3173, %v4611
      %v4613 = vlaneseq
      %v4614 = vshrl.u32 %v4613, 7
      %v4615 = vsub.s32 0, %v4614
      %v4616 = vrot.slane %v3175, %v4615
      %v4617 = vlaneseq
      %v4618 = vshrl.u32 %v4617, 7
      %v4619 = vsub.s32 0, %v4618
      %v4620 = vrot.slane %v3217, %v4619
      %v4621 = vlaneseq
      %v4622 = vshrl.u32 %v4621, 7
      %v4623 = vsub.s32 0, %v4622
      %v4624 = vrot.slane %v3225, %v4623
      %v4625 = vlaneseq
      %v4626 = vshrl.u32 %v4625, 7
      %v4627 = vsub.s32 0, %v4626
      %v4628 = vrot.slane %v3224, %v4627
      %v4629 = vlaneseq
      %v4630 = vshrl.u32 %v4629, 7
      %v4631 = vsub.s32 0, %v4630
      %v4632 = vrot.slane %v3226, %v4631
      %v4633 = vlaneseq
      %v4634 = vshrl.u32 %v4633, 7
      %v4635 = vsub.s32 0, %v4634
      %v4636 = vrot.slane %v3234, %v4635
      %v4637 = vlaneseq
      %v4638 = vshrl.u32 %v4637, 7
      %v4639 = vsub.s32 0, %v4638
      %v4640 = vrot.slane %v3242, %v4639
      %v4641 = vlaneseq
      %v4642 = vshrl.u32 %v4641, 7
      %v4643 = vsub.s32 0, %v4642
      %v4644 = vrot.slane %v3241, %v4643
      %v4645 = vlaneseq
      %v4646 = vshrl.u32 %v4645, 7
      %v4647 = vsub.s32 0, %v4646
      %v4648 = vrot.slane %v3243, %v4647
      %v4649 = vlaneseq
      %v4650 = vshrl.u32 %v4649, 7
      %v4651 = vsub.s32 0, %v4650
      %v4652 = vrot.slane %v3285, %v4651
      %v4653 = vlaneseq
      %v4654 = vshrl.u32 %v4653, 7
      %v4655 = vsub.s32 0, %v4654
      %v4656 = vrot.slane %v3293, %v4655
      %v4657 = vlaneseq
      %v4658 = vshrl.u32 %v4657, 7
      %v4659 = vsub.s32 0, %v4658
      %v4660 = vrot.slane %v3292, %v4659
      %v4661 = vlaneseq
      %v4662 = vshrl.u32 %v4661, 7
      %v4663 = vsub.s32 0, %v4662
      %v4664 = vrot.slane %v3294, %v4663
      %v4665 = vlaneseq
      %v4666 = vshrl.u32 %v4665, 7
      %v4667 = vsub.s32 0, %v4666
      %v4668 = vrot.slane %v3302, %v4667
      %v4669 = vlaneseq
      %v4670 = vshrl.u32 %v4669, 7
      %v4671 = vsub.s32 0, %v4670
      %v4672 = vrot.slane %v3310, %v4671
      %v4673 = vlaneseq
      %v4674 = vshrl.u32 %v4673, 7
      %v4675 = vsub.s32 0, %v4674
      %v4676 = vrot.slane %v3309, %v4675
      %v4677 = vlaneseq
      %v4678 = vshrl.u32 %v4677, 7
      %v4679 = vsub.s32 0, %v4678
      %v4680 = vrot.slane %v3311, %v4679
      %v4681 = vlaneseq
      %v4682 = vshrl.u32 %v4681, 7
      %v4683 = vsub.s32 0, %v4682
      %v4684 = vrot.slane %v3353, %v4683
      %v4685 = vlaneseq
      %v4686 = vshrl.u32 %v4685, 7
      %v4687 = vsub.s32 0, %v4686
      %v4688 = vrot.slane %v3361, %v4687
      %v4689 = vlaneseq
      %v4690 = vshrl.u32 %v4689, 7
      %v4691 = vsub.s32 0, %v4690
      %v4692 = vrot.slane %v3360, %v4691
      %v4693 = vlaneseq
      %v4694 = vshrl.u32 %v4693, 7
      %v4695 = vsub.s32 0, %v4694
      %v4696 = vrot.slane %v3362, %v4695
      %v4697 = vlaneseq
      %v4698 = vshrl.u32 %v4697, 7
      %v4699 = vsub.s32 0, %v4698
      %v4700 = vrot.slane %v3370, %v4699
      %v4701 = vlaneseq
      %v4702 = vshrl.u32 %v4701, 7
      %v4703 = vsub.s32 0, %v4702
      %v4704 = vrot.slane %v3378, %v4703
      %v4705 = vlaneseq
      %v4706 = vshrl.u32 %v4705, 7
      %v4707 = vsub.s32 0, %v4706
      %v4708 = vrot.slane %v3377, %v4707
      %v4709 = vlaneseq
      %v4710 = vshrl.u32 %v4709, 7
      %v4711 = vsub.s32 0, %v4710
      %v4712 = vrot.slane %v3379, %v4711
      %v4713 = vlaneseq
      %v4714 = vshrl.u32 %v4713, 7
      %v4715 = vsub.s32 0, %v4714
      %v4716 = vrot.slane %v3421, %v4715
      %v4717 = vlaneseq
      %v4718 = vshrl.u32 %v4717, 7
      %v4719 = vsub.s32 0, %v4718
      %v4720 = vrot.slane %v3429, %v4719
      %v4721 = vlaneseq
      %v4722 = vshrl.u32 %v4721, 7
      %v4723 = vsub.s32 0, %v4722
      %v4724 = vrot.slane %v3428, %v4723
      %v4725 = vlaneseq
      %v4726 = vshrl.u32 %v4725, 7
      %v4727 = vsub.s32 0, %v4726
      %v4728 = vrot.slane %v3430, %v4727
      %v4729 = vlaneseq
      %v4730 = vshrl.u32 %v4729, 7
      %v4731 = vsub.s32 0, %v4730
      %v4732 = vrot.slane %v3438, %v4731
      %v4733 = vlaneseq
      %v4734 = vshrl.u32 %v4733, 7
      %v4735 = vsub.s32 0, %v4734
      %v4736 = vrot.slane %v3446, %v4735
      %v4737 = vlaneseq
      %v4738 = vshrl.u32 %v4737, 7
      %v4739 = vsub.s32 0, %v4738
      %v4740 = vrot.slane %v3445, %v4739
      %v4741 = vlaneseq
      %v4742 = vshrl.u32 %v4741, 7
      %v4743 = vsub.s32 0, %v4742
      %v4744 = vrot.slane %v3447, %v4743
      %v4745 = vsel %vm4418, %v4496, %v4492
      %v4746 = vsel %vm4420, %v4500, %v4745
      %v4747 = vsel %vm4422, %v4504, %v4746
      %v4748 = vsel %vm4424, %v4508, %v4747
      %v4749 = vsel %vm4426, %v4512, %v4748
      %v4750 = vsel %vm4428, %v4516, %v4749
      %v4751 = vsel %vm4430, %v4520, %v4750
      %v4752 = vsel %vm4418, %v4528, %v4524
      %v4753 = vsel %vm4420, %v4532, %v4752
      %v4754 = vsel %vm4422, %v4536, %v4753
      %v4755 = vsel %vm4424, %v4540, %v4754
      %v4756 = vsel %vm4426, %v4544, %v4755
      %v4757 = vsel %vm4428, %v4548, %v4756
      %v4758 = vsel %vm4430, %v4552, %v4757
      %v4759 = vsel %vm4418, %v4560, %v4556
      %v4760 = vsel %vm4420, %v4564, %v4759
      %v4761 = vsel %vm4422, %v4568, %v4760
      %v4762 = vsel %vm4424, %v4572, %v4761
      %v4763 = vsel %vm4426, %v4576, %v4762
      %v4764 = vsel %vm4428, %v4580, %v4763
      %v4765 = vsel %vm4430, %v4584, %v4764
      %v4766 = vsel %vm4418, %v4592, %v4588
      %v4767 = vsel %vm4420, %v4596, %v4766
      %v4768 = vsel %vm4422, %v4600, %v4767
      %v4769 = vsel %vm4424, %v4604, %v4768
      %v4770 = vsel %vm4426, %v4608, %v4769
      %v4771 = vsel %vm4428, %v4612, %v4770
      %v4772 = vsel %vm4430, %v4616, %v4771
      %v4773 = vsel %vm4418, %v4624, %v4620
      %v4774 = vsel %vm4420, %v4628, %v4773
      %v4775 = vsel %vm4422, %v4632, %v4774
      %v4776 = vsel %vm4424, %v4636, %v4775
      %v4777 = vsel %vm4426, %v4640, %v4776
      %v4778 = vsel %vm4428, %v4644, %v4777
      %v4779 = vsel %vm4430, %v4648, %v4778
      %v4780 = vsel %vm4418, %v4656, %v4652
      %v4781 = vsel %vm4420, %v4660, %v4780
      %v4782 = vsel %vm4422, %v4664, %v4781
      %v4783 = vsel %vm4424, %v4668, %v4782
      %v4784 = vsel %vm4426, %v4672, %v4783
      %v4785 = vsel %vm4428, %v4676, %v4784
      %v4786 = vsel %vm4430, %v4680, %v4785
      %v4787 = vsel %vm4418, %v4688, %v4684
      %v4788 = vsel %vm4420, %v4692, %v4787
      %v4789 = vsel %vm4422, %v4696, %v4788
      %v4790 = vsel %vm4424, %v4700, %v4789
      %v4791 = vsel %vm4426, %v4704, %v4790
      %v4792 = vsel %vm4428, %v4708, %v4791
      %v4793 = vsel %vm4430, %v4712, %v4792
      %v4794 = vsel %vm4418, %v4720, %v4716
      %v4795 = vsel %vm4420, %v4724, %v4794
      %v4796 = vsel %vm4422, %v4728, %v4795
      %v4797 = vsel %vm4424, %v4732, %v4796
      %v4798 = vsel %vm4426, %v4736, %v4797
      %v4799 = vsel %vm4428, %v4740, %v4798
      %v4800 = vsel %vm4430, %v4744, %v4799
      %4801 = vrot.lane.b32.xlu0 %v4751, 16
      %v4802 = vpop.permute.xlu0 %4801
      %4803 = vrot.lane.b32.xlu0 %v4758, 16
      %v4804 = vpop.permute.xlu0 %4803
      %4805 = vrot.lane.b32.xlu0 %v4765, 16
      %v4806 = vpop.permute.xlu0 %4805
      %4807 = vrot.lane.b32.xlu0 %v4772, 16
      %v4808 = vpop.permute.xlu0 %4807
      %4809 = vrot.lane.b32.xlu0 %v4779, 16
      %v4810 = vpop.permute.xlu0 %4809
      %4811 = vrot.lane.b32.xlu0 %v4786, 16
      %v4812 = vpop.permute.xlu0 %4811
      %4813 = vrot.lane.b32.xlu0 %v4793, 16
      %v4814 = vpop.permute.xlu0 %4813
      %4815 = vrot.lane.b32.xlu0 %v4800, 16
      %v4816 = vpop.permute.xlu0 %4815
      %v4825 = vlaneseq
      %v4826 = vshrl.u32 %v4825, 7
      %v4827 = vsub.s32 0, %v4826
      %v4828 = vrot.slane %v3591, %v4827
      %v4829 = vlaneseq
      %v4830 = vshrl.u32 %v4829, 7
      %v4831 = vsub.s32 0, %v4830
      %v4832 = vrot.slane %v3599, %v4831
      %v4833 = vlaneseq
      %v4834 = vshrl.u32 %v4833, 7
      %v4835 = vsub.s32 0, %v4834
      %v4836 = vrot.slane %v3598, %v4835
      %v4837 = vlaneseq
      %v4838 = vshrl.u32 %v4837, 7
      %v4839 = vsub.s32 0, %v4838
      %v4840 = vrot.slane %v3600, %v4839
      %v4841 = vlaneseq
      %v4842 = vshrl.u32 %v4841, 7
      %v4843 = vsub.s32 0, %v4842
      %v4844 = vrot.slane %v3608, %v4843
      %v4845 = vlaneseq
      %v4846 = vshrl.u32 %v4845, 7
      %v4847 = vsub.s32 0, %v4846
      %v4848 = vrot.slane %v3616, %v4847
      %v4849 = vlaneseq
      %v4850 = vshrl.u32 %v4849, 7
      %v4851 = vsub.s32 0, %v4850
      %v4852 = vrot.slane %v3615, %v4851
      %v4853 = vlaneseq
      %v4854 = vshrl.u32 %v4853, 7
      %v4855 = vsub.s32 0, %v4854
      %v4856 = vrot.slane %v3617, %v4855
      %v4857 = vlaneseq
      %v4858 = vshrl.u32 %v4857, 7
      %v4859 = vsub.s32 0, %v4858
      %v4860 = vrot.slane %v3659, %v4859
      %v4861 = vlaneseq
      %v4862 = vshrl.u32 %v4861, 7
      %v4863 = vsub.s32 0, %v4862
      %v4864 = vrot.slane %v3667, %v4863
      %v4865 = vlaneseq
      %v4866 = vshrl.u32 %v4865, 7
      %v4867 = vsub.s32 0, %v4866
      %v4868 = vrot.slane %v3666, %v4867
      %v4869 = vlaneseq
      %v4870 = vshrl.u32 %v4869, 7
      %v4871 = vsub.s32 0, %v4870
      %v4872 = vrot.slane %v3668, %v4871
      %v4873 = vlaneseq
      %v4874 = vshrl.u32 %v4873, 7
      %v4875 = vsub.s32 0, %v4874
      %v4876 = vrot.slane %v3676, %v4875
      %v4877 = vlaneseq
      %v4878 = vshrl.u32 %v4877, 7
      %v4879 = vsub.s32 0, %v4878
      %v4880 = vrot.slane %v3684, %v4879
      %v4881 = vlaneseq
      %v4882 = vshrl.u32 %v4881, 7
      %v4883 = vsub.s32 0, %v4882
      %v4884 = vrot.slane %v3683, %v4883
      %v4885 = vlaneseq
      %v4886 = vshrl.u32 %v4885, 7
      %v4887 = vsub.s32 0, %v4886
      %v4888 = vrot.slane %v3685, %v4887
      %v4889 = vlaneseq
      %v4890 = vshrl.u32 %v4889, 7
      %v4891 = vsub.s32 0, %v4890
      %v4892 = vrot.slane %v3727, %v4891
      %v4893 = vlaneseq
      %v4894 = vshrl.u32 %v4893, 7
      %v4895 = vsub.s32 0, %v4894
      %v4896 = vrot.slane %v3735, %v4895
      %v4897 = vlaneseq
      %v4898 = vshrl.u32 %v4897, 7
      %v4899 = vsub.s32 0, %v4898
      %v4900 = vrot.slane %v3734, %v4899
      %v4901 = vlaneseq
      %v4902 = vshrl.u32 %v4901, 7
      %v4903 = vsub.s32 0, %v4902
      %v4904 = vrot.slane %v3736, %v4903
      %v4905 = vlaneseq
      %v4906 = vshrl.u32 %v4905, 7
      %v4907 = vsub.s32 0, %v4906
      %v4908 = vrot.slane %v3744, %v4907
      %v4909 = vlaneseq
      %v4910 = vshrl.u32 %v4909, 7
      %v4911 = vsub.s32 0, %v4910
      %v4912 = vrot.slane %v3752, %v4911
      %v4913 = vlaneseq
      %v4914 = vshrl.u32 %v4913, 7
      %v4915 = vsub.s32 0, %v4914
      %v4916 = vrot.slane %v3751, %v4915
      %v4917 = vlaneseq
      %v4918 = vshrl.u32 %v4917, 7
      %v4919 = vsub.s32 0, %v4918
      %v4920 = vrot.slane %v3753, %v4919
      %v4921 = vlaneseq
      %v4922 = vshrl.u32 %v4921, 7
      %v4923 = vsub.s32 0, %v4922
      %v4924 = vrot.slane %v3795, %v4923
      %v4925 = vlaneseq
      %v4926 = vshrl.u32 %v4925, 7
      %v4927 = vsub.s32 0, %v4926
      %v4928 = vrot.slane %v3803, %v4927
      %v4929 = vlaneseq
      %v4930 = vshrl.u32 %v4929, 7
      %v4931 = vsub.s32 0, %v4930
      %v4932 = vrot.slane %v3802, %v4931
      %v4933 = vlaneseq
      %v4934 = vshrl.u32 %v4933, 7
      %v4935 = vsub.s32 0, %v4934
      %v4936 = vrot.slane %v3804, %v4935
      %v4937 = vlaneseq
      %v4938 = vshrl.u32 %v4937, 7
      %v4939 = vsub.s32 0, %v4938
      %v4940 = vrot.slane %v3812, %v4939
      %v4941 = vlaneseq
      %v4942 = vshrl.u32 %v4941, 7
      %v4943 = vsub.s32 0, %v4942
      %v4944 = vrot.slane %v3820, %v4943
      %v4945 = vlaneseq
      %v4946 = vshrl.u32 %v4945, 7
      %v4947 = vsub.s32 0, %v4946
      %v4948 = vrot.slane %v3819, %v4947
      %v4949 = vlaneseq
      %v4950 = vshrl.u32 %v4949, 7
      %v4951 = vsub.s32 0, %v4950
      %v4952 = vrot.slane %v3821, %v4951
      %v4953 = vlaneseq
      %v4954 = vshrl.u32 %v4953, 7
      %v4955 = vsub.s32 0, %v4954
      %v4956 = vrot.slane %v3863, %v4955
      %v4957 = vlaneseq
      %v4958 = vshrl.u32 %v4957, 7
      %v4959 = vsub.s32 0, %v4958
      %v4960 = vrot.slane %v3871, %v4959
      %v4961 = vlaneseq
      %v4962 = vshrl.u32 %v4961, 7
      %v4963 = vsub.s32 0, %v4962
      %v4964 = vrot.slane %v3870, %v4963
      %v4965 = vlaneseq
      %v4966 = vshrl.u32 %v4965, 7
      %v4967 = vsub.s32 0, %v4966
      %v4968 = vrot.slane %v3872, %v4967
      %v4969 = vlaneseq
      %v4970 = vshrl.u32 %v4969, 7
      %v4971 = vsub.s32 0, %v4970
      %v4972 = vrot.slane %v3880, %v4971
      %v4973 = vlaneseq
      %v4974 = vshrl.u32 %v4973, 7
      %v4975 = vsub.s32 0, %v4974
      %v4976 = vrot.slane %v3888, %v4975
      %v4977 = vlaneseq
      %v4978 = vshrl.u32 %v4977, 7
      %v4979 = vsub.s32 0, %v4978
      %v4980 = vrot.slane %v3887, %v4979
      %v4981 = vlaneseq
      %v4982 = vshrl.u32 %v4981, 7
      %v4983 = vsub.s32 0, %v4982
      %v4984 = vrot.slane %v3889, %v4983
      %v4985 = vlaneseq
      %v4986 = vshrl.u32 %v4985, 7
      %v4987 = vsub.s32 0, %v4986
      %v4988 = vrot.slane %v3931, %v4987
      %v4989 = vlaneseq
      %v4990 = vshrl.u32 %v4989, 7
      %v4991 = vsub.s32 0, %v4990
      %v4992 = vrot.slane %v3939, %v4991
      %v4993 = vlaneseq
      %v4994 = vshrl.u32 %v4993, 7
      %v4995 = vsub.s32 0, %v4994
      %v4996 = vrot.slane %v3938, %v4995
      %v4997 = vlaneseq
      %v4998 = vshrl.u32 %v4997, 7
      %v4999 = vsub.s32 0, %v4998
      %v5000 = vrot.slane %v3940, %v4999
      %v5001 = vlaneseq
      %v5002 = vshrl.u32 %v5001, 7
      %v5003 = vsub.s32 0, %v5002
      %v5004 = vrot.slane %v3948, %v5003
      %v5005 = vlaneseq
      %v5006 = vshrl.u32 %v5005, 7
      %v5007 = vsub.s32 0, %v5006
      %v5008 = vrot.slane %v3956, %v5007
      %v5009 = vlaneseq
      %v5010 = vshrl.u32 %v5009, 7
      %v5011 = vsub.s32 0, %v5010
      %v5012 = vrot.slane %v3955, %v5011
      %v5013 = vlaneseq
      %v5014 = vshrl.u32 %v5013, 7
      %v5015 = vsub.s32 0, %v5014
      %v5016 = vrot.slane %v3957, %v5015
      %v5017 = vlaneseq
      %v5018 = vshrl.u32 %v5017, 7
      %v5019 = vsub.s32 0, %v5018
      %v5020 = vrot.slane %v3999, %v5019
      %v5021 = vlaneseq
      %v5022 = vshrl.u32 %v5021, 7
      %v5023 = vsub.s32 0, %v5022
      %v5024 = vrot.slane %v4007, %v5023
      %v5025 = vlaneseq
      %v5026 = vshrl.u32 %v5025, 7
      %v5027 = vsub.s32 0, %v5026
      %v5028 = vrot.slane %v4006, %v5027
      %v5029 = vlaneseq
      %v5030 = vshrl.u32 %v5029, 7
      %v5031 = vsub.s32 0, %v5030
      %v5032 = vrot.slane %v4008, %v5031
      %v5033 = vlaneseq
      %v5034 = vshrl.u32 %v5033, 7
      %v5035 = vsub.s32 0, %v5034
      %v5036 = vrot.slane %v4016, %v5035
      %v5037 = vlaneseq
      %v5038 = vshrl.u32 %v5037, 7
      %v5039 = vsub.s32 0, %v5038
      %v5040 = vrot.slane %v4024, %v5039
      %v5041 = vlaneseq
      %v5042 = vshrl.u32 %v5041, 7
      %v5043 = vsub.s32 0, %v5042
      %v5044 = vrot.slane %v4023, %v5043
      %v5045 = vlaneseq
      %v5046 = vshrl.u32 %v5045, 7
      %v5047 = vsub.s32 0, %v5046
      %v5048 = vrot.slane %v4025, %v5047
      %v5049 = vlaneseq
      %v5050 = vshrl.u32 %v5049, 7
      %v5051 = vsub.s32 0, %v5050
      %v5052 = vrot.slane %v4067, %v5051
      %v5053 = vlaneseq
      %v5054 = vshrl.u32 %v5053, 7
      %v5055 = vsub.s32 0, %v5054
      %v5056 = vrot.slane %v4075, %v5055
      %v5057 = vlaneseq
      %v5058 = vshrl.u32 %v5057, 7
      %v5059 = vsub.s32 0, %v5058
      %v5060 = vrot.slane %v4074, %v5059
      %v5061 = vlaneseq
      %v5062 = vshrl.u32 %v5061, 7
      %v5063 = vsub.s32 0, %v5062
      %v5064 = vrot.slane %v4076, %v5063
      %v5065 = vlaneseq
      %v5066 = vshrl.u32 %v5065, 7
      %v5067 = vsub.s32 0, %v5066
      %v5068 = vrot.slane %v4084, %v5067
      %v5069 = vlaneseq
      %v5070 = vshrl.u32 %v5069, 7
      %v5071 = vsub.s32 0, %v5070
      %v5072 = vrot.slane %v4092, %v5071
      %v5073 = vlaneseq
      %v5074 = vshrl.u32 %v5073, 7
      %v5075 = vsub.s32 0, %v5074
      %v5076 = vrot.slane %v4091, %v5075
      %v5077 = vlaneseq
      %v5078 = vshrl.u32 %v5077, 7
      %v5079 = vsub.s32 0, %v5078
      %v5080 = vrot.slane %v4093, %v5079
      %v5081 = vsel %vm4418, %v4832, %v4828
      %v5082 = vsel %vm4420, %v4836, %v5081
      %v5083 = vsel %vm4422, %v4840, %v5082
      %v5084 = vsel %vm4424, %v4844, %v5083
      %v5085 = vsel %vm4426, %v4848, %v5084
      %v5086 = vsel %vm4428, %v4852, %v5085
      %v5087 = vsel %vm4430, %v4856, %v5086
      %v5088 = vsel %vm4418, %v4864, %v4860
      %v5089 = vsel %vm4420, %v4868, %v5088
      %v5090 = vsel %vm4422, %v4872, %v5089
      %v5091 = vsel %vm4424, %v4876, %v5090
      %v5092 = vsel %vm4426, %v4880, %v5091
      %v5093 = vsel %vm4428, %v4884, %v5092
      %v5094 = vsel %vm4430, %v4888, %v5093
      %v5095 = vsel %vm4418, %v4896, %v4892
      %v5096 = vsel %vm4420, %v4900, %v5095
      %v5097 = vsel %vm4422, %v4904, %v5096
      %v5098 = vsel %vm4424, %v4908, %v5097
      %v5099 = vsel %vm4426, %v4912, %v5098
      %v5100 = vsel %vm4428, %v4916, %v5099
      %v5101 = vsel %vm4430, %v4920, %v5100
      %v5102 = vsel %vm4418, %v4928, %v4924
      %v5103 = vsel %vm4420, %v4932, %v5102
      %v5104 = vsel %vm4422, %v4936, %v5103
      %v5105 = vsel %vm4424, %v4940, %v5104
      %v5106 = vsel %vm4426, %v4944, %v5105
      %v5107 = vsel %vm4428, %v4948, %v5106
      %v5108 = vsel %vm4430, %v4952, %v5107
      %v5109 = vsel %vm4418, %v4960, %v4956
      %v5110 = vsel %vm4420, %v4964, %v5109
      %v5111 = vsel %vm4422, %v4968, %v5110
      %v5112 = vsel %vm4424, %v4972, %v5111
      %v5113 = vsel %vm4426, %v4976, %v5112
      %v5114 = vsel %vm4428, %v4980, %v5113
      %v5115 = vsel %vm4430, %v4984, %v5114
      %v5116 = vsel %vm4418, %v4992, %v4988
      %v5117 = vsel %vm4420, %v4996, %v5116
      %v5118 = vsel %vm4422, %v5000, %v5117
      %v5119 = vsel %vm4424, %v5004, %v5118
      %v5120 = vsel %vm4426, %v5008, %v5119
      %v5121 = vsel %vm4428, %v5012, %v5120
      %v5122 = vsel %vm4430, %v5016, %v5121
      %v5123 = vsel %vm4418, %v5024, %v5020
      %v5124 = vsel %vm4420, %v5028, %v5123
      %v5125 = vsel %vm4422, %v5032, %v5124
      %v5126 = vsel %vm4424, %v5036, %v5125
      %v5127 = vsel %vm4426, %v5040, %v5126
      %v5128 = vsel %vm4428, %v5044, %v5127
      %v5129 = vsel %vm4430, %v5048, %v5128
      %v5130 = vsel %vm4418, %v5056, %v5052
      %v5131 = vsel %vm4420, %v5060, %v5130
      %v5132 = vsel %vm4422, %v5064, %v5131
      %v5133 = vsel %vm4424, %v5068, %v5132
      %v5134 = vsel %vm4426, %v5072, %v5133
      %v5135 = vsel %vm4428, %v5076, %v5134
      %v5136 = vsel %vm4430, %v5080, %v5135
      %5137 = vrot.lane.b32.xlu0 %v5087, 32
      %v5138 = vpop.permute.xlu0 %5137
      %5139 = vrot.lane.b32.xlu0 %v5094, 32
      %v5140 = vpop.permute.xlu0 %5139
      %5141 = vrot.lane.b32.xlu0 %v5101, 32
      %v5142 = vpop.permute.xlu0 %5141
      %5143 = vrot.lane.b32.xlu0 %v5108, 32
      %v5144 = vpop.permute.xlu0 %5143
      %5145 = vrot.lane.b32.xlu0 %v5115, 32
      %v5146 = vpop.permute.xlu0 %5145
      %5147 = vrot.lane.b32.xlu0 %v5122, 32
      %v5148 = vpop.permute.xlu0 %5147
      %5149 = vrot.lane.b32.xlu0 %v5129, 32
      %v5150 = vpop.permute.xlu0 %5149
      %5151 = vrot.lane.b32.xlu0 %v5136, 32
      %v5152 = vpop.permute.xlu0 %5151
      %v5161 = vlaneseq
      %v5162 = vshrl.u32 %v5161, 7
      %v5163 = vsub.s32 0, %v5162
      %v5164 = vrot.slane %v2333, %v5163
      %v5165 = vlaneseq
      %v5166 = vshrl.u32 %v5165, 7
      %v5167 = vsub.s32 0, %v5166
      %v5168 = vrot.slane %v2341, %v5167
      %v5169 = vlaneseq
      %v5170 = vshrl.u32 %v5169, 7
      %v5171 = vsub.s32 0, %v5170
      %v5172 = vrot.slane %v2340, %v5171
      %v5173 = vlaneseq
      %v5174 = vshrl.u32 %v5173, 7
      %v5175 = vsub.s32 0, %v5174
      %v5176 = vrot.slane %v2342, %v5175
      %v5177 = vlaneseq
      %v5178 = vshrl.u32 %v5177, 7
      %v5179 = vsub.s32 0, %v5178
      %v5180 = vrot.slane %v2350, %v5179
      %v5181 = vlaneseq
      %v5182 = vshrl.u32 %v5181, 7
      %v5183 = vsub.s32 0, %v5182
      %v5184 = vrot.slane %v2358, %v5183
      %v5185 = vlaneseq
      %v5186 = vshrl.u32 %v5185, 7
      %v5187 = vsub.s32 0, %v5186
      %v5188 = vrot.slane %v2357, %v5187
      %v5189 = vlaneseq
      %v5190 = vshrl.u32 %v5189, 7
      %v5191 = vsub.s32 0, %v5190
      %v5192 = vrot.slane %v2359, %v5191
      %v5193 = vlaneseq
      %v5194 = vshrl.u32 %v5193, 7
      %v5195 = vsub.s32 0, %v5194
      %v5196 = vrot.slane %v2401, %v5195
      %v5197 = vlaneseq
      %v5198 = vshrl.u32 %v5197, 7
      %v5199 = vsub.s32 0, %v5198
      %v5200 = vrot.slane %v2409, %v5199
      %v5201 = vlaneseq
      %v5202 = vshrl.u32 %v5201, 7
      %v5203 = vsub.s32 0, %v5202
      %v5204 = vrot.slane %v2408, %v5203
      %v5205 = vlaneseq
      %v5206 = vshrl.u32 %v5205, 7
      %v5207 = vsub.s32 0, %v5206
      %v5208 = vrot.slane %v2410, %v5207
      %v5209 = vlaneseq
      %v5210 = vshrl.u32 %v5209, 7
      %v5211 = vsub.s32 0, %v5210
      %v5212 = vrot.slane %v2418, %v5211
      %v5213 = vlaneseq
      %v5214 = vshrl.u32 %v5213, 7
      %v5215 = vsub.s32 0, %v5214
      %v5216 = vrot.slane %v2426, %v5215
      %v5217 = vlaneseq
      %v5218 = vshrl.u32 %v5217, 7
      %v5219 = vsub.s32 0, %v5218
      %v5220 = vrot.slane %v2425, %v5219
      %v5221 = vlaneseq
      %v5222 = vshrl.u32 %v5221, 7
      %v5223 = vsub.s32 0, %v5222
      %v5224 = vrot.slane %v2427, %v5223
      %v5225 = vlaneseq
      %v5226 = vshrl.u32 %v5225, 7
      %v5227 = vsub.s32 0, %v5226
      %v5228 = vrot.slane %v2469, %v5227
      %v5229 = vlaneseq
      %v5230 = vshrl.u32 %v5229, 7
      %v5231 = vsub.s32 0, %v5230
      %v5232 = vrot.slane %v2477, %v5231
      %v5233 = vlaneseq
      %v5234 = vshrl.u32 %v5233, 7
      %v5235 = vsub.s32 0, %v5234
      %v5236 = vrot.slane %v2476, %v5235
      %v5237 = vlaneseq
      %v5238 = vshrl.u32 %v5237, 7
      %v5239 = vsub.s32 0, %v5238
      %v5240 = vrot.slane %v2478, %v5239
      %v5241 = vlaneseq
      %v5242 = vshrl.u32 %v5241, 7
      %v5243 = vsub.s32 0, %v5242
      %v5244 = vrot.slane %v2486, %v5243
      %v5245 = vlaneseq
      %v5246 = vshrl.u32 %v5245, 7
      %v5247 = vsub.s32 0, %v5246
      %v5248 = vrot.slane %v2494, %v5247
      %v5249 = vlaneseq
      %v5250 = vshrl.u32 %v5249, 7
      %v5251 = vsub.s32 0, %v5250
      %v5252 = vrot.slane %v2493, %v5251
      %v5253 = vlaneseq
      %v5254 = vshrl.u32 %v5253, 7
      %v5255 = vsub.s32 0, %v5254
      %v5256 = vrot.slane %v2495, %v5255
      %v5257 = vlaneseq
      %v5258 = vshrl.u32 %v5257, 7
      %v5259 = vsub.s32 0, %v5258
      %v5260 = vrot.slane %v2537, %v5259
      %v5261 = vlaneseq
      %v5262 = vshrl.u32 %v5261, 7
      %v5263 = vsub.s32 0, %v5262
      %v5264 = vrot.slane %v2545, %v5263
      %v5265 = vlaneseq
      %v5266 = vshrl.u32 %v5265, 7
      %v5267 = vsub.s32 0, %v5266
      %v5268 = vrot.slane %v2544, %v5267
      %v5269 = vlaneseq
      %v5270 = vshrl.u32 %v5269, 7
      %v5271 = vsub.s32 0, %v5270
      %v5272 = vrot.slane %v2546, %v5271
      %v5273 = vlaneseq
      %v5274 = vshrl.u32 %v5273, 7
      %v5275 = vsub.s32 0, %v5274
      %v5276 = vrot.slane %v2554, %v5275
      %v5277 = vlaneseq
      %v5278 = vshrl.u32 %v5277, 7
      %v5279 = vsub.s32 0, %v5278
      %v5280 = vrot.slane %v2562, %v5279
      %v5281 = vlaneseq
      %v5282 = vshrl.u32 %v5281, 7
      %v5283 = vsub.s32 0, %v5282
      %v5284 = vrot.slane %v2561, %v5283
      %v5285 = vlaneseq
      %v5286 = vshrl.u32 %v5285, 7
      %v5287 = vsub.s32 0, %v5286
      %v5288 = vrot.slane %v2563, %v5287
      %v5289 = vlaneseq
      %v5290 = vshrl.u32 %v5289, 7
      %v5291 = vsub.s32 0, %v5290
      %v5292 = vrot.slane %v2605, %v5291
      %v5293 = vlaneseq
      %v5294 = vshrl.u32 %v5293, 7
      %v5295 = vsub.s32 0, %v5294
      %v5296 = vrot.slane %v2613, %v5295
      %v5297 = vlaneseq
      %v5298 = vshrl.u32 %v5297, 7
      %v5299 = vsub.s32 0, %v5298
      %v5300 = vrot.slane %v2612, %v5299
      %v5301 = vlaneseq
      %v5302 = vshrl.u32 %v5301, 7
      %v5303 = vsub.s32 0, %v5302
      %v5304 = vrot.slane %v2614, %v5303
      %v5305 = vlaneseq
      %v5306 = vshrl.u32 %v5305, 7
      %v5307 = vsub.s32 0, %v5306
      %v5308 = vrot.slane %v2622, %v5307
      %v5309 = vlaneseq
      %v5310 = vshrl.u32 %v5309, 7
      %v5311 = vsub.s32 0, %v5310
      %v5312 = vrot.slane %v2630, %v5311
      %v5313 = vlaneseq
      %v5314 = vshrl.u32 %v5313, 7
      %v5315 = vsub.s32 0, %v5314
      %v5316 = vrot.slane %v2629, %v5315
      %v5317 = vlaneseq
      %v5318 = vshrl.u32 %v5317, 7
      %v5319 = vsub.s32 0, %v5318
      %v5320 = vrot.slane %v2631, %v5319
      %v5321 = vlaneseq
      %v5322 = vshrl.u32 %v5321, 7
      %v5323 = vsub.s32 0, %v5322
      %v5324 = vrot.slane %v2673, %v5323
      %v5325 = vlaneseq
      %v5326 = vshrl.u32 %v5325, 7
      %v5327 = vsub.s32 0, %v5326
      %v5328 = vrot.slane %v2681, %v5327
      %v5329 = vlaneseq
      %v5330 = vshrl.u32 %v5329, 7
      %v5331 = vsub.s32 0, %v5330
      %v5332 = vrot.slane %v2680, %v5331
      %v5333 = vlaneseq
      %v5334 = vshrl.u32 %v5333, 7
      %v5335 = vsub.s32 0, %v5334
      %v5336 = vrot.slane %v2682, %v5335
      %v5337 = vlaneseq
      %v5338 = vshrl.u32 %v5337, 7
      %v5339 = vsub.s32 0, %v5338
      %v5340 = vrot.slane %v2690, %v5339
      %v5341 = vlaneseq
      %v5342 = vshrl.u32 %v5341, 7
      %v5343 = vsub.s32 0, %v5342
      %v5344 = vrot.slane %v2698, %v5343
      %v5345 = vlaneseq
      %v5346 = vshrl.u32 %v5345, 7
      %v5347 = vsub.s32 0, %v5346
      %v5348 = vrot.slane %v2697, %v5347
      %v5349 = vlaneseq
      %v5350 = vshrl.u32 %v5349, 7
      %v5351 = vsub.s32 0, %v5350
      %v5352 = vrot.slane %v2699, %v5351
      %v5353 = vlaneseq
      %v5354 = vshrl.u32 %v5353, 7
      %v5355 = vsub.s32 0, %v5354
      %v5356 = vrot.slane %v2741, %v5355
      %v5357 = vlaneseq
      %v5358 = vshrl.u32 %v5357, 7
      %v5359 = vsub.s32 0, %v5358
      %v5360 = vrot.slane %v2749, %v5359
      %v5361 = vlaneseq
      %v5362 = vshrl.u32 %v5361, 7
      %v5363 = vsub.s32 0, %v5362
      %v5364 = vrot.slane %v2748, %v5363
      %v5365 = vlaneseq
      %v5366 = vshrl.u32 %v5365, 7
      %v5367 = vsub.s32 0, %v5366
      %v5368 = vrot.slane %v2750, %v5367
      %v5369 = vlaneseq
      %v5370 = vshrl.u32 %v5369, 7
      %v5371 = vsub.s32 0, %v5370
      %v5372 = vrot.slane %v2758, %v5371
      %v5373 = vlaneseq
      %v5374 = vshrl.u32 %v5373, 7
      %v5375 = vsub.s32 0, %v5374
      %v5376 = vrot.slane %v2766, %v5375
      %v5377 = vlaneseq
      %v5378 = vshrl.u32 %v5377, 7
      %v5379 = vsub.s32 0, %v5378
      %v5380 = vrot.slane %v2765, %v5379
      %v5381 = vlaneseq
      %v5382 = vshrl.u32 %v5381, 7
      %v5383 = vsub.s32 0, %v5382
      %v5384 = vrot.slane %v2767, %v5383
      %v5385 = vlaneseq
      %v5386 = vshrl.u32 %v5385, 7
      %v5387 = vsub.s32 0, %v5386
      %v5388 = vrot.slane %v2809, %v5387
      %v5389 = vlaneseq
      %v5390 = vshrl.u32 %v5389, 7
      %v5391 = vsub.s32 0, %v5390
      %v5392 = vrot.slane %v2817, %v5391
      %v5393 = vlaneseq
      %v5394 = vshrl.u32 %v5393, 7
      %v5395 = vsub.s32 0, %v5394
      %v5396 = vrot.slane %v2816, %v5395
      %v5397 = vlaneseq
      %v5398 = vshrl.u32 %v5397, 7
      %v5399 = vsub.s32 0, %v5398
      %v5400 = vrot.slane %v2818, %v5399
      %v5401 = vlaneseq
      %v5402 = vshrl.u32 %v5401, 7
      %v5403 = vsub.s32 0, %v5402
      %v5404 = vrot.slane %v2826, %v5403
      %v5405 = vlaneseq
      %v5406 = vshrl.u32 %v5405, 7
      %v5407 = vsub.s32 0, %v5406
      %v5408 = vrot.slane %v2834, %v5407
      %v5409 = vlaneseq
      %v5410 = vshrl.u32 %v5409, 7
      %v5411 = vsub.s32 0, %v5410
      %v5412 = vrot.slane %v2833, %v5411
      %v5413 = vlaneseq
      %v5414 = vshrl.u32 %v5413, 7
      %v5415 = vsub.s32 0, %v5414
      %v5416 = vrot.slane %v2835, %v5415
      %v5417 = vsel %vm4418, %v5168, %v5164
      %v5418 = vsel %vm4420, %v5172, %v5417
      %v5419 = vsel %vm4422, %v5176, %v5418
      %v5420 = vsel %vm4424, %v5180, %v5419
      %v5421 = vsel %vm4426, %v5184, %v5420
      %v5422 = vsel %vm4428, %v5188, %v5421
      %v5423 = vsel %vm4430, %v5192, %v5422
      %v5424 = vsel %vm4418, %v5200, %v5196
      %v5425 = vsel %vm4420, %v5204, %v5424
      %v5426 = vsel %vm4422, %v5208, %v5425
      %v5427 = vsel %vm4424, %v5212, %v5426
      %v5428 = vsel %vm4426, %v5216, %v5427
      %v5429 = vsel %vm4428, %v5220, %v5428
      %v5430 = vsel %vm4430, %v5224, %v5429
      %v5431 = vsel %vm4418, %v5232, %v5228
      %v5432 = vsel %vm4420, %v5236, %v5431
      %v5433 = vsel %vm4422, %v5240, %v5432
      %v5434 = vsel %vm4424, %v5244, %v5433
      %v5435 = vsel %vm4426, %v5248, %v5434
      %v5436 = vsel %vm4428, %v5252, %v5435
      %v5437 = vsel %vm4430, %v5256, %v5436
      %v5438 = vsel %vm4418, %v5264, %v5260
      %v5439 = vsel %vm4420, %v5268, %v5438
      %v5440 = vsel %vm4422, %v5272, %v5439
      %v5441 = vsel %vm4424, %v5276, %v5440
      %v5442 = vsel %vm4426, %v5280, %v5441
      %v5443 = vsel %vm4428, %v5284, %v5442
      %v5444 = vsel %vm4430, %v5288, %v5443
      %v5445 = vsel %vm4418, %v5296, %v5292
      %v5446 = vsel %vm4420, %v5300, %v5445
      %v5447 = vsel %vm4422, %v5304, %v5446
      %v5448 = vsel %vm4424, %v5308, %v5447
      %v5449 = vsel %vm4426, %v5312, %v5448
      %v5450 = vsel %vm4428, %v5316, %v5449
      %v5451 = vsel %vm4430, %v5320, %v5450
      %v5452 = vsel %vm4418, %v5328, %v5324
      %v5453 = vsel %vm4420, %v5332, %v5452
      %v5454 = vsel %vm4422, %v5336, %v5453
      %v5455 = vsel %vm4424, %v5340, %v5454
      %v5456 = vsel %vm4426, %v5344, %v5455
      %v5457 = vsel %vm4428, %v5348, %v5456
      %v5458 = vsel %vm4430, %v5352, %v5457
      %v5459 = vsel %vm4418, %v5360, %v5356
      %v5460 = vsel %vm4420, %v5364, %v5459
      %v5461 = vsel %vm4422, %v5368, %v5460
      %v5462 = vsel %vm4424, %v5372, %v5461
      %v5463 = vsel %vm4426, %v5376, %v5462
      %v5464 = vsel %vm4428, %v5380, %v5463
      %v5465 = vsel %vm4430, %v5384, %v5464
      %v5466 = vsel %vm4418, %v5392, %v5388
      %v5467 = vsel %vm4420, %v5396, %v5466
      %v5468 = vsel %vm4422, %v5400, %v5467
      %v5469 = vsel %vm4424, %v5404, %v5468
      %v5470 = vsel %vm4426, %v5408, %v5469
      %v5471 = vsel %vm4428, %v5412, %v5470
      %v5472 = vsel %vm4430, %v5416, %v5471
      %5473 = vrot.lane.b32.xlu0 %v5423, 48
      %v5474 = vpop.permute.xlu0 %5473
      %5475 = vrot.lane.b32.xlu0 %v5430, 48
      %v5476 = vpop.permute.xlu0 %5475
      %5477 = vrot.lane.b32.xlu0 %v5437, 48
      %v5478 = vpop.permute.xlu0 %5477
      %5479 = vrot.lane.b32.xlu0 %v5444, 48
      %v5480 = vpop.permute.xlu0 %5479
      %5481 = vrot.lane.b32.xlu0 %v5451, 48
      %v5482 = vpop.permute.xlu0 %5481
      %5483 = vrot.lane.b32.xlu0 %v5458, 48
      %v5484 = vpop.permute.xlu0 %5483
      %5485 = vrot.lane.b32.xlu0 %v5465, 48
      %v5486 = vpop.permute.xlu0 %5485
      %5487 = vrot.lane.b32.xlu0 %v5472, 48
      %v5488 = vpop.permute.xlu0 %5487
      %v5497 = vlaneseq
      %v5498 = vshrl.u32 %v5497, 7
      %v5499 = vsub.s32 0, %v5498
      %v5500 = vrot.slane %v2979, %v5499
      %v5501 = vlaneseq
      %v5502 = vshrl.u32 %v5501, 7
      %v5503 = vsub.s32 0, %v5502
      %v5504 = vrot.slane %v2987, %v5503
      %v5505 = vlaneseq
      %v5506 = vshrl.u32 %v5505, 7
      %v5507 = vsub.s32 0, %v5506
      %v5508 = vrot.slane %v2986, %v5507
      %v5509 = vlaneseq
      %v5510 = vshrl.u32 %v5509, 7
      %v5511 = vsub.s32 0, %v5510
      %v5512 = vrot.slane %v2988, %v5511
      %v5513 = vlaneseq
      %v5514 = vshrl.u32 %v5513, 7
      %v5515 = vsub.s32 0, %v5514
      %v5516 = vrot.slane %v2996, %v5515
      %v5517 = vlaneseq
      %v5518 = vshrl.u32 %v5517, 7
      %v5519 = vsub.s32 0, %v5518
      %v5520 = vrot.slane %v3004, %v5519
      %v5521 = vlaneseq
      %v5522 = vshrl.u32 %v5521, 7
      %v5523 = vsub.s32 0, %v5522
      %v5524 = vrot.slane %v3003, %v5523
      %v5525 = vlaneseq
      %v5526 = vshrl.u32 %v5525, 7
      %v5527 = vsub.s32 0, %v5526
      %v5528 = vrot.slane %v3005, %v5527
      %v5529 = vlaneseq
      %v5530 = vshrl.u32 %v5529, 7
      %v5531 = vsub.s32 0, %v5530
      %v5532 = vrot.slane %v3047, %v5531
      %v5533 = vlaneseq
      %v5534 = vshrl.u32 %v5533, 7
      %v5535 = vsub.s32 0, %v5534
      %v5536 = vrot.slane %v3055, %v5535
      %v5537 = vlaneseq
      %v5538 = vshrl.u32 %v5537, 7
      %v5539 = vsub.s32 0, %v5538
      %v5540 = vrot.slane %v3054, %v5539
      %v5541 = vlaneseq
      %v5542 = vshrl.u32 %v5541, 7
      %v5543 = vsub.s32 0, %v5542
      %v5544 = vrot.slane %v3056, %v5543
      %v5545 = vlaneseq
      %v5546 = vshrl.u32 %v5545, 7
      %v5547 = vsub.s32 0, %v5546
      %v5548 = vrot.slane %v3064, %v5547
      %v5549 = vlaneseq
      %v5550 = vshrl.u32 %v5549, 7
      %v5551 = vsub.s32 0, %v5550
      %v5552 = vrot.slane %v3072, %v5551
      %v5553 = vlaneseq
      %v5554 = vshrl.u32 %v5553, 7
      %v5555 = vsub.s32 0, %v5554
      %v5556 = vrot.slane %v3071, %v5555
      %v5557 = vlaneseq
      %v5558 = vshrl.u32 %v5557, 7
      %v5559 = vsub.s32 0, %v5558
      %v5560 = vrot.slane %v3073, %v5559
      %v5561 = vlaneseq
      %v5562 = vshrl.u32 %v5561, 7
      %v5563 = vsub.s32 0, %v5562
      %v5564 = vrot.slane %v3115, %v5563
      %v5565 = vlaneseq
      %v5566 = vshrl.u32 %v5565, 7
      %v5567 = vsub.s32 0, %v5566
      %v5568 = vrot.slane %v3123, %v5567
      %v5569 = vlaneseq
      %v5570 = vshrl.u32 %v5569, 7
      %v5571 = vsub.s32 0, %v5570
      %v5572 = vrot.slane %v3122, %v5571
      %v5573 = vlaneseq
      %v5574 = vshrl.u32 %v5573, 7
      %v5575 = vsub.s32 0, %v5574
      %v5576 = vrot.slane %v3124, %v5575
      %v5577 = vlaneseq
      %v5578 = vshrl.u32 %v5577, 7
      %v5579 = vsub.s32 0, %v5578
      %v5580 = vrot.slane %v3132, %v5579
      %v5581 = vlaneseq
      %v5582 = vshrl.u32 %v5581, 7
      %v5583 = vsub.s32 0, %v5582
      %v5584 = vrot.slane %v3140, %v5583
      %v5585 = vlaneseq
      %v5586 = vshrl.u32 %v5585, 7
      %v5587 = vsub.s32 0, %v5586
      %v5588 = vrot.slane %v3139, %v5587
      %v5589 = vlaneseq
      %v5590 = vshrl.u32 %v5589, 7
      %v5591 = vsub.s32 0, %v5590
      %v5592 = vrot.slane %v3141, %v5591
      %v5593 = vlaneseq
      %v5594 = vshrl.u32 %v5593, 7
      %v5595 = vsub.s32 0, %v5594
      %v5596 = vrot.slane %v3183, %v5595
      %v5597 = vlaneseq
      %v5598 = vshrl.u32 %v5597, 7
      %v5599 = vsub.s32 0, %v5598
      %v5600 = vrot.slane %v3191, %v5599
      %v5601 = vlaneseq
      %v5602 = vshrl.u32 %v5601, 7
      %v5603 = vsub.s32 0, %v5602
      %v5604 = vrot.slane %v3190, %v5603
      %v5605 = vlaneseq
      %v5606 = vshrl.u32 %v5605, 7
      %v5607 = vsub.s32 0, %v5606
      %v5608 = vrot.slane %v3192, %v5607
      %v5609 = vlaneseq
      %v5610 = vshrl.u32 %v5609, 7
      %v5611 = vsub.s32 0, %v5610
      %v5612 = vrot.slane %v3200, %v5611
      %v5613 = vlaneseq
      %v5614 = vshrl.u32 %v5613, 7
      %v5615 = vsub.s32 0, %v5614
      %v5616 = vrot.slane %v3208, %v5615
      %v5617 = vlaneseq
      %v5618 = vshrl.u32 %v5617, 7
      %v5619 = vsub.s32 0, %v5618
      %v5620 = vrot.slane %v3207, %v5619
      %v5621 = vlaneseq
      %v5622 = vshrl.u32 %v5621, 7
      %v5623 = vsub.s32 0, %v5622
      %v5624 = vrot.slane %v3209, %v5623
      %v5625 = vlaneseq
      %v5626 = vshrl.u32 %v5625, 7
      %v5627 = vsub.s32 0, %v5626
      %v5628 = vrot.slane %v3251, %v5627
      %v5629 = vlaneseq
      %v5630 = vshrl.u32 %v5629, 7
      %v5631 = vsub.s32 0, %v5630
      %v5632 = vrot.slane %v3259, %v5631
      %v5633 = vlaneseq
      %v5634 = vshrl.u32 %v5633, 7
      %v5635 = vsub.s32 0, %v5634
      %v5636 = vrot.slane %v3258, %v5635
      %v5637 = vlaneseq
      %v5638 = vshrl.u32 %v5637, 7
      %v5639 = vsub.s32 0, %v5638
      %v5640 = vrot.slane %v3260, %v5639
      %v5641 = vlaneseq
      %v5642 = vshrl.u32 %v5641, 7
      %v5643 = vsub.s32 0, %v5642
      %v5644 = vrot.slane %v3268, %v5643
      %v5645 = vlaneseq
      %v5646 = vshrl.u32 %v5645, 7
      %v5647 = vsub.s32 0, %v5646
      %v5648 = vrot.slane %v3276, %v5647
      %v5649 = vlaneseq
      %v5650 = vshrl.u32 %v5649, 7
      %v5651 = vsub.s32 0, %v5650
      %v5652 = vrot.slane %v3275, %v5651
      %v5653 = vlaneseq
      %v5654 = vshrl.u32 %v5653, 7
      %v5655 = vsub.s32 0, %v5654
      %v5656 = vrot.slane %v3277, %v5655
      %v5657 = vlaneseq
      %v5658 = vshrl.u32 %v5657, 7
      %v5659 = vsub.s32 0, %v5658
      %v5660 = vrot.slane %v3319, %v5659
      %v5661 = vlaneseq
      %v5662 = vshrl.u32 %v5661, 7
      %v5663 = vsub.s32 0, %v5662
      %v5664 = vrot.slane %v3327, %v5663
      %v5665 = vlaneseq
      %v5666 = vshrl.u32 %v5665, 7
      %v5667 = vsub.s32 0, %v5666
      %v5668 = vrot.slane %v3326, %v5667
      %v5669 = vlaneseq
      %v5670 = vshrl.u32 %v5669, 7
      %v5671 = vsub.s32 0, %v5670
      %v5672 = vrot.slane %v3328, %v5671
      %v5673 = vlaneseq
      %v5674 = vshrl.u32 %v5673, 7
      %v5675 = vsub.s32 0, %v5674
      %v5676 = vrot.slane %v3336, %v5675
      %v5677 = vlaneseq
      %v5678 = vshrl.u32 %v5677, 7
      %v5679 = vsub.s32 0, %v5678
      %v5680 = vrot.slane %v3344, %v5679
      %v5681 = vlaneseq
      %v5682 = vshrl.u32 %v5681, 7
      %v5683 = vsub.s32 0, %v5682
      %v5684 = vrot.slane %v3343, %v5683
      %v5685 = vlaneseq
      %v5686 = vshrl.u32 %v5685, 7
      %v5687 = vsub.s32 0, %v5686
      %v5688 = vrot.slane %v3345, %v5687
      %v5689 = vlaneseq
      %v5690 = vshrl.u32 %v5689, 7
      %v5691 = vsub.s32 0, %v5690
      %v5692 = vrot.slane %v3387, %v5691
      %v5693 = vlaneseq
      %v5694 = vshrl.u32 %v5693, 7
      %v5695 = vsub.s32 0, %v5694
      %v5696 = vrot.slane %v3395, %v5695
      %v5697 = vlaneseq
      %v5698 = vshrl.u32 %v5697, 7
      %v5699 = vsub.s32 0, %v5698
      %v5700 = vrot.slane %v3394, %v5699
      %v5701 = vlaneseq
      %v5702 = vshrl.u32 %v5701, 7
      %v5703 = vsub.s32 0, %v5702
      %v5704 = vrot.slane %v3396, %v5703
      %v5705 = vlaneseq
      %v5706 = vshrl.u32 %v5705, 7
      %v5707 = vsub.s32 0, %v5706
      %v5708 = vrot.slane %v3404, %v5707
      %v5709 = vlaneseq
      %v5710 = vshrl.u32 %v5709, 7
      %v5711 = vsub.s32 0, %v5710
      %v5712 = vrot.slane %v3412, %v5711
      %v5713 = vlaneseq
      %v5714 = vshrl.u32 %v5713, 7
      %v5715 = vsub.s32 0, %v5714
      %v5716 = vrot.slane %v3411, %v5715
      %v5717 = vlaneseq
      %v5718 = vshrl.u32 %v5717, 7
      %v5719 = vsub.s32 0, %v5718
      %v5720 = vrot.slane %v3413, %v5719
      %v5721 = vlaneseq
      %v5722 = vshrl.u32 %v5721, 7
      %v5723 = vsub.s32 0, %v5722
      %v5724 = vrot.slane %v3455, %v5723
      %v5725 = vlaneseq
      %v5726 = vshrl.u32 %v5725, 7
      %v5727 = vsub.s32 0, %v5726
      %v5728 = vrot.slane %v3463, %v5727
      %v5729 = vlaneseq
      %v5730 = vshrl.u32 %v5729, 7
      %v5731 = vsub.s32 0, %v5730
      %v5732 = vrot.slane %v3462, %v5731
      %v5733 = vlaneseq
      %v5734 = vshrl.u32 %v5733, 7
      %v5735 = vsub.s32 0, %v5734
      %v5736 = vrot.slane %v3464, %v5735
      %v5737 = vlaneseq
      %v5738 = vshrl.u32 %v5737, 7
      %v5739 = vsub.s32 0, %v5738
      %v5740 = vrot.slane %v3472, %v5739
      %v5741 = vlaneseq
      %v5742 = vshrl.u32 %v5741, 7
      %v5743 = vsub.s32 0, %v5742
      %v5744 = vrot.slane %v3480, %v5743
      %v5745 = vlaneseq
      %v5746 = vshrl.u32 %v5745, 7
      %v5747 = vsub.s32 0, %v5746
      %v5748 = vrot.slane %v3479, %v5747
      %v5749 = vlaneseq
      %v5750 = vshrl.u32 %v5749, 7
      %v5751 = vsub.s32 0, %v5750
      %v5752 = vrot.slane %v3481, %v5751
      %v5753 = vsel %vm4418, %v5504, %v5500
      %v5754 = vsel %vm4420, %v5508, %v5753
      %v5755 = vsel %vm4422, %v5512, %v5754
      %v5756 = vsel %vm4424, %v5516, %v5755
      %v5757 = vsel %vm4426, %v5520, %v5756
      %v5758 = vsel %vm4428, %v5524, %v5757
      %v5759 = vsel %vm4430, %v5528, %v5758
      %v5760 = vsel %vm4418, %v5536, %v5532
      %v5761 = vsel %vm4420, %v5540, %v5760
      %v5762 = vsel %vm4422, %v5544, %v5761
      %v5763 = vsel %vm4424, %v5548, %v5762
      %v5764 = vsel %vm4426, %v5552, %v5763
      %v5765 = vsel %vm4428, %v5556, %v5764
      %v5766 = vsel %vm4430, %v5560, %v5765
      %v5767 = vsel %vm4418, %v5568, %v5564
      %v5768 = vsel %vm4420, %v5572, %v5767
      %v5769 = vsel %vm4422, %v5576, %v5768
      %v5770 = vsel %vm4424, %v5580, %v5769
      %v5771 = vsel %vm4426, %v5584, %v5770
      %v5772 = vsel %vm4428, %v5588, %v5771
      %v5773 = vsel %vm4430, %v5592, %v5772
      %v5774 = vsel %vm4418, %v5600, %v5596
      %v5775 = vsel %vm4420, %v5604, %v5774
      %v5776 = vsel %vm4422, %v5608, %v5775
      %v5777 = vsel %vm4424, %v5612, %v5776
      %v5778 = vsel %vm4426, %v5616, %v5777
      %v5779 = vsel %vm4428, %v5620, %v5778
      %v5780 = vsel %vm4430, %v5624, %v5779
      %v5781 = vsel %vm4418, %v5632, %v5628
      %v5782 = vsel %vm4420, %v5636, %v5781
      %v5783 = vsel %vm4422, %v5640, %v5782
      %v5784 = vsel %vm4424, %v5644, %v5783
      %v5785 = vsel %vm4426, %v5648, %v5784
      %v5786 = vsel %vm4428, %v5652, %v5785
      %v5787 = vsel %vm4430, %v5656, %v5786
      %v5788 = vsel %vm4418, %v5664, %v5660
      %v5789 = vsel %vm4420, %v5668, %v5788
      %v5790 = vsel %vm4422, %v5672, %v5789
      %v5791 = vsel %vm4424, %v5676, %v5790
      %v5792 = vsel %vm4426, %v5680, %v5791
      %v5793 = vsel %vm4428, %v5684, %v5792
      %v5794 = vsel %vm4430, %v5688, %v5793
      %v5795 = vsel %vm4418, %v5696, %v5692
      %v5796 = vsel %vm4420, %v5700, %v5795
      %v5797 = vsel %vm4422, %v5704, %v5796
      %v5798 = vsel %vm4424, %v5708, %v5797
      %v5799 = vsel %vm4426, %v5712, %v5798
      %v5800 = vsel %vm4428, %v5716, %v5799
      %v5801 = vsel %vm4430, %v5720, %v5800
      %v5802 = vsel %vm4418, %v5728, %v5724
      %v5803 = vsel %vm4420, %v5732, %v5802
      %v5804 = vsel %vm4422, %v5736, %v5803
      %v5805 = vsel %vm4424, %v5740, %v5804
      %v5806 = vsel %vm4426, %v5744, %v5805
      %v5807 = vsel %vm4428, %v5748, %v5806
      %v5808 = vsel %vm4430, %v5752, %v5807
      %5809 = vrot.lane.b32.xlu0 %v5759, 64
      %v5810 = vpop.permute.xlu0 %5809
      %5811 = vrot.lane.b32.xlu0 %v5766, 64
      %v5812 = vpop.permute.xlu0 %5811
      %5813 = vrot.lane.b32.xlu0 %v5773, 64
      %v5814 = vpop.permute.xlu0 %5813
      %5815 = vrot.lane.b32.xlu0 %v5780, 64
      %v5816 = vpop.permute.xlu0 %5815
      %5817 = vrot.lane.b32.xlu0 %v5787, 64
      %v5818 = vpop.permute.xlu0 %5817
      %5819 = vrot.lane.b32.xlu0 %v5794, 64
      %v5820 = vpop.permute.xlu0 %5819
      %5821 = vrot.lane.b32.xlu0 %v5801, 64
      %v5822 = vpop.permute.xlu0 %5821
      %5823 = vrot.lane.b32.xlu0 %v5808, 64
      %v5824 = vpop.permute.xlu0 %5823
      %v5833 = vlaneseq
      %v5834 = vshrl.u32 %v5833, 7
      %v5835 = vsub.s32 0, %v5834
      %v5836 = vrot.slane %v3625, %v5835
      %v5837 = vlaneseq
      %v5838 = vshrl.u32 %v5837, 7
      %v5839 = vsub.s32 0, %v5838
      %v5840 = vrot.slane %v3633, %v5839
      %v5841 = vlaneseq
      %v5842 = vshrl.u32 %v5841, 7
      %v5843 = vsub.s32 0, %v5842
      %v5844 = vrot.slane %v3632, %v5843
      %v5845 = vlaneseq
      %v5846 = vshrl.u32 %v5845, 7
      %v5847 = vsub.s32 0, %v5846
      %v5848 = vrot.slane %v3634, %v5847
      %v5849 = vlaneseq
      %v5850 = vshrl.u32 %v5849, 7
      %v5851 = vsub.s32 0, %v5850
      %v5852 = vrot.slane %v3642, %v5851
      %v5853 = vlaneseq
      %v5854 = vshrl.u32 %v5853, 7
      %v5855 = vsub.s32 0, %v5854
      %v5856 = vrot.slane %v3650, %v5855
      %v5857 = vlaneseq
      %v5858 = vshrl.u32 %v5857, 7
      %v5859 = vsub.s32 0, %v5858
      %v5860 = vrot.slane %v3649, %v5859
      %v5861 = vlaneseq
      %v5862 = vshrl.u32 %v5861, 7
      %v5863 = vsub.s32 0, %v5862
      %v5864 = vrot.slane %v3651, %v5863
      %v5865 = vlaneseq
      %v5866 = vshrl.u32 %v5865, 7
      %v5867 = vsub.s32 0, %v5866
      %v5868 = vrot.slane %v3693, %v5867
      %v5869 = vlaneseq
      %v5870 = vshrl.u32 %v5869, 7
      %v5871 = vsub.s32 0, %v5870
      %v5872 = vrot.slane %v3701, %v5871
      %v5873 = vlaneseq
      %v5874 = vshrl.u32 %v5873, 7
      %v5875 = vsub.s32 0, %v5874
      %v5876 = vrot.slane %v3700, %v5875
      %v5877 = vlaneseq
      %v5878 = vshrl.u32 %v5877, 7
      %v5879 = vsub.s32 0, %v5878
      %v5880 = vrot.slane %v3702, %v5879
      %v5881 = vlaneseq
      %v5882 = vshrl.u32 %v5881, 7
      %v5883 = vsub.s32 0, %v5882
      %v5884 = vrot.slane %v3710, %v5883
      %v5885 = vlaneseq
      %v5886 = vshrl.u32 %v5885, 7
      %v5887 = vsub.s32 0, %v5886
      %v5888 = vrot.slane %v3718, %v5887
      %v5889 = vlaneseq
      %v5890 = vshrl.u32 %v5889, 7
      %v5891 = vsub.s32 0, %v5890
      %v5892 = vrot.slane %v3717, %v5891
      %v5893 = vlaneseq
      %v5894 = vshrl.u32 %v5893, 7
      %v5895 = vsub.s32 0, %v5894
      %v5896 = vrot.slane %v3719, %v5895
      %v5897 = vlaneseq
      %v5898 = vshrl.u32 %v5897, 7
      %v5899 = vsub.s32 0, %v5898
      %v5900 = vrot.slane %v3761, %v5899
      %v5901 = vlaneseq
      %v5902 = vshrl.u32 %v5901, 7
      %v5903 = vsub.s32 0, %v5902
      %v5904 = vrot.slane %v3769, %v5903
      %v5905 = vlaneseq
      %v5906 = vshrl.u32 %v5905, 7
      %v5907 = vsub.s32 0, %v5906
      %v5908 = vrot.slane %v3768, %v5907
      %v5909 = vlaneseq
      %v5910 = vshrl.u32 %v5909, 7
      %v5911 = vsub.s32 0, %v5910
      %v5912 = vrot.slane %v3770, %v5911
      %v5913 = vlaneseq
      %v5914 = vshrl.u32 %v5913, 7
      %v5915 = vsub.s32 0, %v5914
      %v5916 = vrot.slane %v3778, %v5915
      %v5917 = vlaneseq
      %v5918 = vshrl.u32 %v5917, 7
      %v5919 = vsub.s32 0, %v5918
      %v5920 = vrot.slane %v3786, %v5919
      %v5921 = vlaneseq
      %v5922 = vshrl.u32 %v5921, 7
      %v5923 = vsub.s32 0, %v5922
      %v5924 = vrot.slane %v3785, %v5923
      %v5925 = vlaneseq
      %v5926 = vshrl.u32 %v5925, 7
      %v5927 = vsub.s32 0, %v5926
      %v5928 = vrot.slane %v3787, %v5927
      %v5929 = vlaneseq
      %v5930 = vshrl.u32 %v5929, 7
      %v5931 = vsub.s32 0, %v5930
      %v5932 = vrot.slane %v3829, %v5931
      %v5933 = vlaneseq
      %v5934 = vshrl.u32 %v5933, 7
      %v5935 = vsub.s32 0, %v5934
      %v5936 = vrot.slane %v3837, %v5935
      %v5937 = vlaneseq
      %v5938 = vshrl.u32 %v5937, 7
      %v5939 = vsub.s32 0, %v5938
      %v5940 = vrot.slane %v3836, %v5939
      %v5941 = vlaneseq
      %v5942 = vshrl.u32 %v5941, 7
      %v5943 = vsub.s32 0, %v5942
      %v5944 = vrot.slane %v3838, %v5943
      %v5945 = vlaneseq
      %v5946 = vshrl.u32 %v5945, 7
      %v5947 = vsub.s32 0, %v5946
      %v5948 = vrot.slane %v3846, %v5947
      %v5949 = vlaneseq
      %v5950 = vshrl.u32 %v5949, 7
      %v5951 = vsub.s32 0, %v5950
      %v5952 = vrot.slane %v3854, %v5951
      %v5953 = vlaneseq
      %v5954 = vshrl.u32 %v5953, 7
      %v5955 = vsub.s32 0, %v5954
      %v5956 = vrot.slane %v3853, %v5955
      %v5957 = vlaneseq
      %v5958 = vshrl.u32 %v5957, 7
      %v5959 = vsub.s32 0, %v5958
      %v5960 = vrot.slane %v3855, %v5959
      %v5961 = vlaneseq
      %v5962 = vshrl.u32 %v5961, 7
      %v5963 = vsub.s32 0, %v5962
      %v5964 = vrot.slane %v3897, %v5963
      %v5965 = vlaneseq
      %v5966 = vshrl.u32 %v5965, 7
      %v5967 = vsub.s32 0, %v5966
      %v5968 = vrot.slane %v3905, %v5967
      %v5969 = vlaneseq
      %v5970 = vshrl.u32 %v5969, 7
      %v5971 = vsub.s32 0, %v5970
      %v5972 = vrot.slane %v3904, %v5971
      %v5973 = vlaneseq
      %v5974 = vshrl.u32 %v5973, 7
      %v5975 = vsub.s32 0, %v5974
      %v5976 = vrot.slane %v3906, %v5975
      %v5977 = vlaneseq
      %v5978 = vshrl.u32 %v5977, 7
      %v5979 = vsub.s32 0, %v5978
      %v5980 = vrot.slane %v3914, %v5979
      %v5981 = vlaneseq
      %v5982 = vshrl.u32 %v5981, 7
      %v5983 = vsub.s32 0, %v5982
      %v5984 = vrot.slane %v3922, %v5983
      %v5985 = vlaneseq
      %v5986 = vshrl.u32 %v5985, 7
      %v5987 = vsub.s32 0, %v5986
      %v5988 = vrot.slane %v3921, %v5987
      %v5989 = vlaneseq
      %v5990 = vshrl.u32 %v5989, 7
      %v5991 = vsub.s32 0, %v5990
      %v5992 = vrot.slane %v3923, %v5991
      %v5993 = vlaneseq
      %v5994 = vshrl.u32 %v5993, 7
      %v5995 = vsub.s32 0, %v5994
      %v5996 = vrot.slane %v3965, %v5995
      %v5997 = vlaneseq
      %v5998 = vshrl.u32 %v5997, 7
      %v5999 = vsub.s32 0, %v5998
      %v6000 = vrot.slane %v3973, %v5999
      %v6001 = vlaneseq
      %v6002 = vshrl.u32 %v6001, 7
      %v6003 = vsub.s32 0, %v6002
      %v6004 = vrot.slane %v3972, %v6003
      %v6005 = vlaneseq
      %v6006 = vshrl.u32 %v6005, 7
      %v6007 = vsub.s32 0, %v6006
      %v6008 = vrot.slane %v3974, %v6007
      %v6009 = vlaneseq
      %v6010 = vshrl.u32 %v6009, 7
      %v6011 = vsub.s32 0, %v6010
      %v6012 = vrot.slane %v3982, %v6011
      %v6013 = vlaneseq
      %v6014 = vshrl.u32 %v6013, 7
      %v6015 = vsub.s32 0, %v6014
      %v6016 = vrot.slane %v3990, %v6015
      %v6017 = vlaneseq
      %v6018 = vshrl.u32 %v6017, 7
      %v6019 = vsub.s32 0, %v6018
      %v6020 = vrot.slane %v3989, %v6019
      %v6021 = vlaneseq
      %v6022 = vshrl.u32 %v6021, 7
      %v6023 = vsub.s32 0, %v6022
      %v6024 = vrot.slane %v3991, %v6023
      %v6025 = vlaneseq
      %v6026 = vshrl.u32 %v6025, 7
      %v6027 = vsub.s32 0, %v6026
      %v6028 = vrot.slane %v4033, %v6027
      %v6029 = vlaneseq
      %v6030 = vshrl.u32 %v6029, 7
      %v6031 = vsub.s32 0, %v6030
      %v6032 = vrot.slane %v4041, %v6031
      %v6033 = vlaneseq
      %v6034 = vshrl.u32 %v6033, 7
      %v6035 = vsub.s32 0, %v6034
      %v6036 = vrot.slane %v4040, %v6035
      %v6037 = vlaneseq
      %v6038 = vshrl.u32 %v6037, 7
      %v6039 = vsub.s32 0, %v6038
      %v6040 = vrot.slane %v4042, %v6039
      %v6041 = vlaneseq
      %v6042 = vshrl.u32 %v6041, 7
      %v6043 = vsub.s32 0, %v6042
      %v6044 = vrot.slane %v4050, %v6043
      %v6045 = vlaneseq
      %v6046 = vshrl.u32 %v6045, 7
      %v6047 = vsub.s32 0, %v6046
      %v6048 = vrot.slane %v4058, %v6047
      %v6049 = vlaneseq
      %v6050 = vshrl.u32 %v6049, 7
      %v6051 = vsub.s32 0, %v6050
      %v6052 = vrot.slane %v4057, %v6051
      %v6053 = vlaneseq
      %v6054 = vshrl.u32 %v6053, 7
      %v6055 = vsub.s32 0, %v6054
      %v6056 = vrot.slane %v4059, %v6055
      %v6057 = vlaneseq
      %v6058 = vshrl.u32 %v6057, 7
      %v6059 = vsub.s32 0, %v6058
      %v6060 = vrot.slane %v4101, %v6059
      %v6061 = vlaneseq
      %v6062 = vshrl.u32 %v6061, 7
      %v6063 = vsub.s32 0, %v6062
      %v6064 = vrot.slane %v4109, %v6063
      %v6065 = vlaneseq
      %v6066 = vshrl.u32 %v6065, 7
      %v6067 = vsub.s32 0, %v6066
      %v6068 = vrot.slane %v4108, %v6067
      %v6069 = vlaneseq
      %v6070 = vshrl.u32 %v6069, 7
      %v6071 = vsub.s32 0, %v6070
      %v6072 = vrot.slane %v4110, %v6071
      %v6073 = vlaneseq
      %v6074 = vshrl.u32 %v6073, 7
      %v6075 = vsub.s32 0, %v6074
      %v6076 = vrot.slane %v4118, %v6075
      %v6077 = vlaneseq
      %v6078 = vshrl.u32 %v6077, 7
      %v6079 = vsub.s32 0, %v6078
      %v6080 = vrot.slane %v4126, %v6079
      %v6081 = vlaneseq
      %v6082 = vshrl.u32 %v6081, 7
      %v6083 = vsub.s32 0, %v6082
      %v6084 = vrot.slane %v4125, %v6083
      %v6085 = vlaneseq
      %v6086 = vshrl.u32 %v6085, 7
      %v6087 = vsub.s32 0, %v6086
      %v6088 = vrot.slane %v4127, %v6087
      %v6089 = vsel %vm4418, %v5840, %v5836
      %v6090 = vsel %vm4420, %v5844, %v6089
      %v6091 = vsel %vm4422, %v5848, %v6090
      %v6092 = vsel %vm4424, %v5852, %v6091
      %v6093 = vsel %vm4426, %v5856, %v6092
      %v6094 = vsel %vm4428, %v5860, %v6093
      %v6095 = vsel %vm4430, %v5864, %v6094
      %v6096 = vsel %vm4418, %v5872, %v5868
      %v6097 = vsel %vm4420, %v5876, %v6096
      %v6098 = vsel %vm4422, %v5880, %v6097
      %v6099 = vsel %vm4424, %v5884, %v6098
      %v6100 = vsel %vm4426, %v5888, %v6099
      %v6101 = vsel %vm4428, %v5892, %v6100
      %v6102 = vsel %vm4430, %v5896, %v6101
      %v6103 = vsel %vm4418, %v5904, %v5900
      %v6104 = vsel %vm4420, %v5908, %v6103
      %v6105 = vsel %vm4422, %v5912, %v6104
      %v6106 = vsel %vm4424, %v5916, %v6105
      %v6107 = vsel %vm4426, %v5920, %v6106
      %v6108 = vsel %vm4428, %v5924, %v6107
      %v6109 = vsel %vm4430, %v5928, %v6108
      %v6110 = vsel %vm4418, %v5936, %v5932
      %v6111 = vsel %vm4420, %v5940, %v6110
      %v6112 = vsel %vm4422, %v5944, %v6111
      %v6113 = vsel %vm4424, %v5948, %v6112
      %v6114 = vsel %vm4426, %v5952, %v6113
      %v6115 = vsel %vm4428, %v5956, %v6114
      %v6116 = vsel %vm4430, %v5960, %v6115
      %v6117 = vsel %vm4418, %v5968, %v5964
      %v6118 = vsel %vm4420, %v5972, %v6117
      %v6119 = vsel %vm4422, %v5976, %v6118
      %v6120 = vsel %vm4424, %v5980, %v6119
      %v6121 = vsel %vm4426, %v5984, %v6120
      %v6122 = vsel %vm4428, %v5988, %v6121
      %v6123 = vsel %vm4430, %v5992, %v6122
      %v6124 = vsel %vm4418, %v6000, %v5996
      %v6125 = vsel %vm4420, %v6004, %v6124
      %v6126 = vsel %vm4422, %v6008, %v6125
      %v6127 = vsel %vm4424, %v6012, %v6126
      %v6128 = vsel %vm4426, %v6016, %v6127
      %v6129 = vsel %vm4428, %v6020, %v6128
      %v6130 = vsel %vm4430, %v6024, %v6129
      %v6131 = vsel %vm4418, %v6032, %v6028
      %v6132 = vsel %vm4420, %v6036, %v6131
      %v6133 = vsel %vm4422, %v6040, %v6132
      %v6134 = vsel %vm4424, %v6044, %v6133
      %v6135 = vsel %vm4426, %v6048, %v6134
      %v6136 = vsel %vm4428, %v6052, %v6135
      %v6137 = vsel %vm4430, %v6056, %v6136
      %v6138 = vsel %vm4418, %v6064, %v6060
      %v6139 = vsel %vm4420, %v6068, %v6138
      %v6140 = vsel %vm4422, %v6072, %v6139
      %v6141 = vsel %vm4424, %v6076, %v6140
      %v6142 = vsel %vm4426, %v6080, %v6141
      %v6143 = vsel %vm4428, %v6084, %v6142
      %v6144 = vsel %vm4430, %v6088, %v6143
      %6145 = vrot.lane.b32.xlu0 %v6095, 80
      %v6146 = vpop.permute.xlu0 %6145
      %6147 = vrot.lane.b32.xlu0 %v6102, 80
      %v6148 = vpop.permute.xlu0 %6147
      %6149 = vrot.lane.b32.xlu0 %v6109, 80
      %v6150 = vpop.permute.xlu0 %6149
      %6151 = vrot.lane.b32.xlu0 %v6116, 80
      %v6152 = vpop.permute.xlu0 %6151
      %6153 = vrot.lane.b32.xlu0 %v6123, 80
      %v6154 = vpop.permute.xlu0 %6153
      %6155 = vrot.lane.b32.xlu0 %v6130, 80
      %v6156 = vpop.permute.xlu0 %6155
      %6157 = vrot.lane.b32.xlu0 %v6137, 80
      %v6158 = vpop.permute.xlu0 %6157
      %6159 = vrot.lane.b32.xlu0 %v6144, 80
      %v6160 = vpop.permute.xlu0 %6159
      %v6169 = vlaneseq
      %v6170 = vshrl.u32 %v6169, 7
      %v6171 = vsub.s32 0, %v6170
      %v6172 = vrot.slane %v2843, %v6171
      %v6173 = vlaneseq
      %v6174 = vshrl.u32 %v6173, 7
      %v6175 = vsub.s32 0, %v6174
      %v6176 = vrot.slane %v2851, %v6175
      %v6177 = vlaneseq
      %v6178 = vshrl.u32 %v6177, 7
      %v6179 = vsub.s32 0, %v6178
      %v6180 = vrot.slane %v2850, %v6179
      %v6181 = vlaneseq
      %v6182 = vshrl.u32 %v6181, 7
      %v6183 = vsub.s32 0, %v6182
      %v6184 = vrot.slane %v2852, %v6183
      %v6185 = vlaneseq
      %v6186 = vshrl.u32 %v6185, 7
      %v6187 = vsub.s32 0, %v6186
      %v6188 = vrot.slane %v2860, %v6187
      %v6189 = vlaneseq
      %v6190 = vshrl.u32 %v6189, 7
      %v6191 = vsub.s32 0, %v6190
      %v6192 = vrot.slane %v2868, %v6191
      %v6193 = vlaneseq
      %v6194 = vshrl.u32 %v6193, 7
      %v6195 = vsub.s32 0, %v6194
      %v6196 = vrot.slane %v2867, %v6195
      %v6197 = vlaneseq
      %v6198 = vshrl.u32 %v6197, 7
      %v6199 = vsub.s32 0, %v6198
      %v6200 = vrot.slane %v2869, %v6199
      %v6201 = vsel %vm4418, %v6176, %v6172
      %v6202 = vsel %vm4420, %v6180, %v6201
      %v6203 = vsel %vm4422, %v6184, %v6202
      %v6204 = vsel %vm4424, %v6188, %v6203
      %v6205 = vsel %vm4426, %v6192, %v6204
      %v6206 = vsel %vm4428, %v6196, %v6205
      %v6207 = vsel %vm4430, %v6200, %v6206
      %6208 = vrot.lane.b32.xlu0 %v4438, 96
      %v6209 = vpop.permute.xlu0 %6208
      %6210 = vrot.lane.b32.xlu0 %v4445, 96
      %v6211 = vpop.permute.xlu0 %6210
      %6212 = vrot.lane.b32.xlu0 %v4452, 96
      %v6213 = vpop.permute.xlu0 %6212
      %6214 = vrot.lane.b32.xlu0 %v4459, 96
      %v6215 = vpop.permute.xlu0 %6214
      %6216 = vrot.lane.b32.xlu0 %v4466, 96
      %v6217 = vpop.permute.xlu0 %6216
      %6218 = vrot.lane.b32.xlu0 %v4473, 96
      %v6219 = vpop.permute.xlu0 %6218
      %6220 = vrot.lane.b32.xlu0 %v4480, 96
      %v6221 = vpop.permute.xlu0 %6220
      %6222 = vrot.lane.b32.xlu0 %v6207, 96
      %v6223 = vpop.permute.xlu0 %6222
      %v6232 = vlaneseq
      %v6233 = vshrl.u32 %v6232, 7
      %v6234 = vsub.s32 0, %v6233
      %v6235 = vrot.slane %v3489, %v6234
      %v6236 = vlaneseq
      %v6237 = vshrl.u32 %v6236, 7
      %v6238 = vsub.s32 0, %v6237
      %v6239 = vrot.slane %v3497, %v6238
      %v6240 = vlaneseq
      %v6241 = vshrl.u32 %v6240, 7
      %v6242 = vsub.s32 0, %v6241
      %v6243 = vrot.slane %v3496, %v6242
      %v6244 = vlaneseq
      %v6245 = vshrl.u32 %v6244, 7
      %v6246 = vsub.s32 0, %v6245
      %v6247 = vrot.slane %v3498, %v6246
      %v6248 = vlaneseq
      %v6249 = vshrl.u32 %v6248, 7
      %v6250 = vsub.s32 0, %v6249
      %v6251 = vrot.slane %v3506, %v6250
      %v6252 = vlaneseq
      %v6253 = vshrl.u32 %v6252, 7
      %v6254 = vsub.s32 0, %v6253
      %v6255 = vrot.slane %v3514, %v6254
      %v6256 = vlaneseq
      %v6257 = vshrl.u32 %v6256, 7
      %v6258 = vsub.s32 0, %v6257
      %v6259 = vrot.slane %v3513, %v6258
      %v6260 = vlaneseq
      %v6261 = vshrl.u32 %v6260, 7
      %v6262 = vsub.s32 0, %v6261
      %v6263 = vrot.slane %v3515, %v6262
      %v6264 = vsel %vm4418, %v6239, %v6235
      %v6265 = vsel %vm4420, %v6243, %v6264
      %v6266 = vsel %vm4422, %v6247, %v6265
      %v6267 = vsel %vm4424, %v6251, %v6266
      %v6268 = vsel %vm4426, %v6255, %v6267
      %v6269 = vsel %vm4428, %v6259, %v6268
      %v6270 = vsel %vm4430, %v6263, %v6269
      %6271 = vrot.lane.b32.xlu0 %v4758, 112
      %v6272 = vpop.permute.xlu0 %6271
      %6273 = vrot.lane.b32.xlu0 %v4765, 112
      %v6274 = vpop.permute.xlu0 %6273
      %6275 = vrot.lane.b32.xlu0 %v4772, 112
      %v6276 = vpop.permute.xlu0 %6275
      %6277 = vrot.lane.b32.xlu0 %v4779, 112
      %v6278 = vpop.permute.xlu0 %6277
      %6279 = vrot.lane.b32.xlu0 %v4786, 112
      %v6280 = vpop.permute.xlu0 %6279
      %6281 = vrot.lane.b32.xlu0 %v4793, 112
      %v6282 = vpop.permute.xlu0 %6281
      %6283 = vrot.lane.b32.xlu0 %v4800, 112
      %v6284 = vpop.permute.xlu0 %6283
      %6285 = vrot.lane.b32.xlu0 %v6270, 112
      %v6286 = vpop.permute.xlu0 %6285
      %v6295 = vlaneseq
      %v6296 = vshrl.u32 %v6295, 7
      %v6297 = vsub.s32 0, %v6296
      %v6298 = vrot.slane %v4135, %v6297
      %v6299 = vlaneseq
      %v6300 = vshrl.u32 %v6299, 7
      %v6301 = vsub.s32 0, %v6300
      %v6302 = vrot.slane %v4143, %v6301
      %v6303 = vlaneseq
      %v6304 = vshrl.u32 %v6303, 7
      %v6305 = vsub.s32 0, %v6304
      %v6306 = vrot.slane %v4142, %v6305
      %v6307 = vlaneseq
      %v6308 = vshrl.u32 %v6307, 7
      %v6309 = vsub.s32 0, %v6308
      %v6310 = vrot.slane %v4144, %v6309
      %v6311 = vlaneseq
      %v6312 = vshrl.u32 %v6311, 7
      %v6313 = vsub.s32 0, %v6312
      %v6314 = vrot.slane %v4152, %v6313
      %v6315 = vlaneseq
      %v6316 = vshrl.u32 %v6315, 7
      %v6317 = vsub.s32 0, %v6316
      %v6318 = vrot.slane %v4160, %v6317
      %v6319 = vlaneseq
      %v6320 = vshrl.u32 %v6319, 7
      %v6321 = vsub.s32 0, %v6320
      %v6322 = vrot.slane %v4159, %v6321
      %v6323 = vlaneseq
      %v6324 = vshrl.u32 %v6323, 7
      %v6325 = vsub.s32 0, %v6324
      %v6326 = vrot.slane %v4161, %v6325
      %v6327 = vsel %vm4418, %v6302, %v6298
      %v6328 = vsel %vm4420, %v6306, %v6327
      %v6329 = vsel %vm4422, %v6310, %v6328
      %v6330 = vsel %vm4424, %v6314, %v6329
      %v6331 = vsel %vm4426, %v6318, %v6330
      %v6332 = vsel %vm4428, %v6322, %v6331
      %v6333 = vsel %vm4430, %v6326, %v6332
      %v6342 = vsel %vm2135, %v4431, %v4802
      %v6343 = vsel %vm2135, %v4438, %v4804
      %v6344 = vsel %vm2135, %v4445, %v4806
      %v6345 = vsel %vm2135, %v4452, %v4808
      %v6346 = vsel %vm2135, %v4459, %v4810
      %v6347 = vsel %vm2135, %v4466, %v4812
      %v6348 = vsel %vm2135, %v4473, %v4814
      %v6349 = vsel %vm2135, %v4480, %v4816
      %vm6350 = vcmask 261120
      %v6351 = vsel %vm6350, %v6342, %v5138
      %v6352 = vsel %vm6350, %v6343, %v5140
      %v6353 = vsel %vm6350, %v6344, %v5142
      %v6354 = vsel %vm6350, %v6345, %v5144
      %v6355 = vsel %vm6350, %v6346, %v5146
      %v6356 = vsel %vm6350, %v6347, %v5148
      %v6357 = vsel %vm6350, %v6348, %v5150
      %v6358 = vsel %vm6350, %v6349, %v5152
      %vm6359 = vcmask 392192
      %v6360 = vsel %vm6359, %v6351, %v5474
      %v6361 = vsel %vm6359, %v6352, %v5476
      %v6362 = vsel %vm6359, %v6353, %v5478
      %v6363 = vsel %vm6359, %v6354, %v5480
      %v6364 = vsel %vm6359, %v6355, %v5482
      %v6365 = vsel %vm6359, %v6356, %v5484
      %v6366 = vsel %vm6359, %v6357, %v5486
      %v6367 = vsel %vm6359, %v6358, %v5488
      %vm6368 = vcmask 523264
      %v6369 = vsel %vm6368, %v6360, %v5810
      %v6370 = vsel %vm6368, %v6361, %v5812
      %v6371 = vsel %vm6368, %v6362, %v5814
      %v6372 = vsel %vm6368, %v6363, %v5816
      %v6373 = vsel %vm6368, %v6364, %v5818
      %v6374 = vsel %vm6368, %v6365, %v5820
      %v6375 = vsel %vm6368, %v6366, %v5822
      %v6376 = vsel %vm6368, %v6367, %v5824
      %vm6377 = vcmask 654336
      %v6378 = vsel %vm6377, %v6369, %v6146
      %v6379 = vsel %vm6377, %v6370, %v6148
      %v6380 = vsel %vm6377, %v6371, %v6150
      %v6381 = vsel %vm6377, %v6372, %v6152
      %v6382 = vsel %vm6377, %v6373, %v6154
      %v6383 = vsel %vm6377, %v6374, %v6156
      %v6384 = vsel %vm6377, %v6375, %v6158
      %v6385 = vsel %vm6377, %v6376, %v6160
      %vm6386 = vcmask 785408
      %v6387 = vsel %vm6386, %v6378, %v6209
      %v6388 = vsel %vm6386, %v6379, %v6211
      %v6389 = vsel %vm6386, %v6380, %v6213
      %v6390 = vsel %vm6386, %v6381, %v6215
      %v6391 = vsel %vm6386, %v6382, %v6217
      %v6392 = vsel %vm6386, %v6383, %v6219
      %v6393 = vsel %vm6386, %v6384, %v6221
      %v6394 = vsel %vm6386, %v6385, %v6223
      %vm6395 = vcmask 916480
      %v6396 = vsel %vm6395, %v6387, %v6272
      %v6397 = vsel %vm6395, %v6388, %v6274
      %v6398 = vsel %vm6395, %v6389, %v6276
      %v6399 = vsel %vm6395, %v6390, %v6278
      %v6400 = vsel %vm6395, %v6391, %v6280
      %v6401 = vsel %vm6395, %v6392, %v6282
      %v6402 = vsel %vm6395, %v6393, %v6284
      %v6403 = vsel %vm6395, %v6394, %v6286
      %v6404 = vpack.c.bf16 %v6397, %v6396
      %v6405 = vpack.c.bf16 %v5101, %v5094
      %v6406 = vpack.c.bf16 %v6399, %v6398
      %v6407 = vpack.c.bf16 %v5115, %v5108
      %v6408 = vpack.c.bf16 %v6401, %v6400
      %v6409 = vpack.c.bf16 %v5129, %v5122
      %v6410 = vpack.c.bf16 %v6403, %v6402
      %v6411 = vpack.c.bf16 %v6333, %v5136
      %v6412 = vld [vmem:[%s3] sm:$0xf]
      %v6413 = vld [vmem:[%s3 + $0x4] sm:$0xf]
      %v6414 = vld [vmem:[%s3 + $0x8] sm:$0xf]
      %v6415 = vld [vmem:[%s3 + $0xc] sm:$0xf]
      %v6416 = vld [vmem:[%s3 + $0x10] sm:$0xf]
      %v6417 = vld [vmem:[%s3 + $0x14] sm:$0xf]
      %v6418 = vld [vmem:[%s3 + $0x18] sm:$0xf]
      %v6419 = vld [vmem:[%s3 + $0x1c] sm:$0xf]
      %v6420 = vld [vmem:[%s3 + $0x20] sm:$0xf]
      %v6421 = vld [vmem:[%s3 + $0x24] sm:$0xf]
      %v6422 = vld [vmem:[%s3 + $0x28] sm:$0xf]
      %v6423 = vld [vmem:[%s3 + $0x2c] sm:$0xf]
      %v6424 = vld [vmem:[%s3 + $0x30] sm:$0xf]
      %v6425 = vld [vmem:[%s3 + $0x34] sm:$0xf]
      %v6426 = vld [vmem:[%s3 + $0x38] sm:$0xf]
      %v6427 = vld [vmem:[%s3 + $0x3c] sm:$0xf]
      %v6428 = vld [vmem:[%s3 + $0x40] sm:$0xf]
      %v6429 = vld [vmem:[%s3 + $0x44] sm:$0xf]
      %v6430 = vld [vmem:[%s4] sm:$0x1]
      %v6432 = vlaneseq
      %v6433 = vshrl.u32 %v6432, 7
      %v6434 = vsub.s32 0, %v6433
      %v6435 = vrot.slane %v6430, %v6434
      %v6455 = vunpack.c.l.b16 %v6412
      %v6456 = vunpack.c.l.b16 %v6413
      %v6457 = vunpack.c.l.b16 %v6414
      %v6458 = vunpack.c.l.b16 %v6415
      %v6459 = vunpack.c.l.b16 %v6416
      %v6460 = vunpack.c.l.b16 %v6417
      %v6461 = vunpack.c.l.b16 %v6418
      %v6462 = vunpack.c.l.b16 %v6419
      %v6463 = vunpack.c.l.b16 %v6420
      %v6464 = vunpack.c.l.b16 %v6421
      %v6465 = vunpack.c.l.b16 %v6422
      %v6466 = vunpack.c.l.b16 %v6423
      %v6467 = vunpack.c.l.b16 %v6424
      %v6468 = vunpack.c.l.b16 %v6425
      %v6469 = vunpack.c.l.b16 %v6426
      %v6470 = vunpack.c.l.b16 %v6427
      %v6471 = vunpack.c.l.b16 %v6428
      %v6472 = vunpack.c.l.b16 %v6429
      %v6473 = vpack.c.b16 %v6456, %v6455
      %v6474 = vpack.c.b16 %v6458, %v6457
      %v6475 = vpack.c.b16 %v6460, %v6459
      %v6476 = vpack.c.b16 %v6462, %v6461
      %v6477 = vpack.c.b16 %v6464, %v6463
      %v6478 = vpack.c.b16 %v6466, %v6465
      %v6479 = vpack.c.b16 %v6468, %v6467
      %v6480 = vpack.c.b16 %v6470, %v6469
      %v6481 = vpack.c.b16 %v6472, %v6471
      %v6492 = vsel %vm2135, %v6405, 0
      %v6495 = vsel %vm2135, %v6407, 0
      %v6498 = vsel %vm2135, %v6409, 0
      %v6501 = vsel %vm2135, %v6411, 0
      %6503 = vmatprep.subr.bf16.mxu0 0
      %6504 = vmatpush1.bf16.msra.mxu0 %v6473
      %6505 = vmatprep.subr.bf16.mxu0 0
      %6506 = vmatpush1.bf16.msra.mxu0 %v6474
      %6507 = vmatprep.subr.bf16.mxu0 0
      %6508 = vmatpush1.bf16.msra.mxu0 %v6475
      %6509 = vmatprep.subr.bf16.mxu0 0
      %6510 = vmatpush1.bf16.msra.mxu0 %v6476
      %6511 = vmatprep.subr.bf16.mxu0 0
      %6512 = vmatpush1.bf16.msra.mxu0 %v6477
      %6513 = vmatprep.subr.bf16.mxu0 0
      %6514 = vmatpush1.bf16.msra.mxu0 %v6478
      %6515 = vmatprep.subr.bf16.mxu0 0
      %6516 = vmatpush1.bf16.msra.mxu0 %v6479
      %6517 = vmatprep.subr.bf16.mxu0 0
      %6518 = vmatpush1.bf16.msra.mxu0 %v6480
      %6519 = vmatprep.subr.bf16.mxu0 0
      %6520 = vmatpush1.bf16.msra.mxu0 %v6481
      %6521 = vmatprep.subr.bf16.mxu0 0
      %6522 = vmatpush1.bf16.msra.mxu0 0
      %6523 = vmatprep.subr.bf16.mxu0 0
      %6524 = vmatpush1.bf16.msra.mxu0 0
      %6525 = vmatprep.subr.bf16.mxu0 0
      %6526 = vmatpush1.bf16.msra.mxu0 0
      %6527 = vmatprep.subr.bf16.mxu0 0
      %6528 = vmatpush1.bf16.msra.mxu0 0
      %6529 = vmatprep.subr.bf16.mxu0 0
      %6530 = vmatpush1.bf16.msra.mxu0 0
      %6531 = vmatprep.subr.bf16.mxu0 0
      %6532 = vmatpush1.bf16.msra.mxu0 0
      %6533 = vmatprep.subr.bf16.mxu0 0
      %6534 = vmatpush1.bf16.msra.mxu0 0
      %6535 = vmatprep.mubr.bf16.mxu0 %v6492
      %6536 = vmatmul.mubr.bf16.gmra.mrb[0].mxu0 %v6404
      %v6537 = vpop.f32.mrb[0].mxu0
      %v6538 = vadd.f32 %v6435, %v6537
      %v6539 = vpop.f32.mrb[0].mxu0
      %v6540 = vpop.f32.mrb[0].mxu0
      %v6541 = vadd.f32 %v6435, %v6540
      %v6542 = vpop.f32.mrb[0].mxu0
      %6543 = vmatprep.mubr.bf16.mxu0 %v6495
      %6544 = vmatmul.mubr.bf16.gmra.mrb[0].mxu0 %v6406
      %v6545 = vpop.f32.mrb[0].mxu0
      %v6546 = vadd.f32 %v6435, %v6545
      %v6547 = vpop.f32.mrb[0].mxu0
      %v6548 = vpop.f32.mrb[0].mxu0
      %v6549 = vadd.f32 %v6435, %v6548
      %v6550 = vpop.f32.mrb[0].mxu0
      %6551 = vmatprep.mubr.bf16.mxu0 %v6498
      %6552 = vmatmul.mubr.bf16.gmra.mrb[0].mxu0 %v6408
      %v6553 = vpop.f32.mrb[0].mxu0
      %v6554 = vadd.f32 %v6435, %v6553
      %v6555 = vpop.f32.mrb[0].mxu0
      %v6556 = vpop.f32.mrb[0].mxu0
      %v6557 = vadd.f32 %v6435, %v6556
      %v6558 = vpop.f32.mrb[0].mxu0
      %6559 = vmatprep.mubr.bf16.mxu0 %v6501
      %6560 = vmatmul.mubr.bf16.gmra.mrb[0].mxu0 %v6410
      %v6561 = vpop.f32.mrb[0].mxu0
      %v6562 = vadd.f32 %v6435, %v6561
      %v6563 = vpop.f32.mrb[0].mxu0
      %v6564 = vpop.f32.mrb[0].mxu0
      %v6565 = vadd.f32 %v6435, %v6564
      %v6566 = vpop.f32.mrb[0].mxu0
      %6567 = vdwg.mxu0
      %v6568 = vmax.f32 %v6538, 0.0
      %v6569 = vmax.f32 %v6541, 0.0
      %v6570 = vmax.f32 %v6546, 0.0
      %v6571 = vmax.f32 %v6549, 0.0
      %v6572 = vmax.f32 %v6554, 0.0
      %v6573 = vmax.f32 %v6557, 0.0
      %v6574 = vmax.f32 %v6562, 0.0
      %v6575 = vmax.f32 %v6565, 0.0
      %6576 = vst.msk [vmem:[#allocation4] sm:$0xff] %vm6350, 0.0
      %vm6577 = vcmask 254976
      %6578 = vst.msk [vmem:[#allocation4 + $0x8] sm:$0x3] %vm6577, 0.0
      %6579 = vst.msk [vmem:[#allocation4 + $0x10] sm:$0xff] %vm6350, 0.0
      %6580 = vst.msk [vmem:[#allocation4 + $0x18] sm:$0x3] %vm6577, 0.0
      %6581 = vst.msk [vmem:[#allocation4 + $0x20] sm:$0xff] %vm6350, 0.0
      %6582 = vst.msk [vmem:[#allocation4 + $0x28] sm:$0x3] %vm6577, 0.0
      %6583 = vst.msk [vmem:[#allocation4 + $0x30] sm:$0xff] %vm6350, 0.0
      %6584 = vst.msk [vmem:[#allocation4 + $0x38] sm:$0x3] %vm6577, 0.0
      %6585 = vst.msk [vmem:[#allocation4 + $0x40] sm:$0xff] %vm6350, 0.0
      %6586 = vst.msk [vmem:[#allocation4 + $0x48] sm:$0x3] %vm6577, 0.0
      %6587 = vst.msk [vmem:[#allocation4 + $0x50] sm:$0xff] %vm6350, 0.0
      %6588 = vst.msk [vmem:[#allocation4 + $0x58] sm:$0x3] %vm6577, 0.0
      %6589 = vst.msk [vmem:[#allocation4 + $0x60] sm:$0xff] %vm6350, 0.0
      %6590 = vst.msk [vmem:[#allocation4 + $0x68] sm:$0x3] %vm6577, 0.0
      %6591 = vst.msk [vmem:[#allocation4 + $0x70] sm:$0xff] %vm6350, 0.0
      %6592 = vst.msk [vmem:[#allocation4 + $0x78] sm:$0x3] %vm6577, 0.0
      %6593 = vst.msk [vmem:[#allocation4 + $0x80] sm:$0xff] %vm6350, 0.0
      %6594 = vst.msk [vmem:[#allocation4 + $0x88] sm:$0x3] %vm6577, 0.0
      %6595 = vst.msk [vmem:[#allocation4 + $0x90] sm:$0xff] %vm6350, 0.0
      %6596 = vst.msk [vmem:[#allocation4 + $0x98] sm:$0x3] %vm6577, 0.0
      %s6597 = scalar_lea.vmem [#allocation4], 16
      %6598 = vst.msk [vmem:[%s6597 + $0x1] sm:$0xff] %vm6350, %v6568
      %6599 = vst.msk [vmem:[%s6597 + $0x11] sm:$0xff] %vm6350, %v6569
      %6600 = vst.msk [vmem:[%s6597 + $0x21] sm:$0xff] %vm6350, %v6570
      %6601 = vst.msk [vmem:[%s6597 + $0x31] sm:$0xff] %vm6350, %v6571
      %6602 = vst.msk [vmem:[%s6597 + $0x41] sm:$0xff] %vm6350, %v6572
      %6603 = vst.msk [vmem:[%s6597 + $0x51] sm:$0xff] %vm6350, %v6573
      %6604 = vst.msk [vmem:[%s6597 + $0x61] sm:$0xff] %vm6350, %v6574
      %6605 = vst.msk [vmem:[%s6597 + $0x71] sm:$0xff] %vm6350, %v6575
      %v6606 = vld [vmem:[#allocation4] sm:$0xff]
      %v6607 = vld [vmem:[#allocation4 + $0x10] sm:$0xff]
      %v6608 = vld [vmem:[#allocation4 + $0x20] sm:$0xff]
      %v6609 = vld [vmem:[#allocation4 + $0x30] sm:$0xff]
      %v6610 = vld [vmem:[#allocation4 + $0x40] sm:$0xff]
      %v6611 = vld [vmem:[#allocation4 + $0x50] sm:$0xff]
      %v6612 = vld [vmem:[#allocation4 + $0x60] sm:$0xff]
      %v6613 = vld [vmem:[#allocation4 + $0x70] sm:$0xff]
      %v6614 = vld [vmem:[#allocation4 + $0x80] sm:$0xff]
      %v6624 = vcombine.high %v6606, %v6606
      %v6626 = vunpack.c.l.s4 1983009808
      %v6627 = vunpack.c.0.s8 %v6626
      %v6628 = vlaneseq
      %v6629 = vshrl.u32 %v6628, 7
      %v6630 = vsub.s32 %v6627, %v6629
      %v6631 = vrot.slane %v6606, %v6630
      %v6633 = vunpack.c.l.s4 1983009808
      %v6634 = vunpack.c.0.s8 %v6633
      %v6635 = vlaneseq
      %v6636 = vshrl.u32 %v6635, 7
      %v6637 = vsub.s32 %v6634, %v6636
      %v6638 = vrot.slane %v6624, %v6637
      %v6639 = vcombine.high %v6631, %v6631
      %v6640 = vcombine.high %v6638, %v6638
      %v6641 = vcombine.high %v6607, %v6607
      %v6643 = vunpack.c.l.s4 1983009808
      %v6644 = vunpack.c.0.s8 %v6643
      %v6645 = vlaneseq
      %v6646 = vshrl.u32 %v6645, 7
      %v6647 = vsub.s32 %v6644, %v6646
      %v6648 = vrot.slane %v6607, %v6647
      %v6650 = vunpack.c.l.s4 1983009808
      %v6651 = vunpack.c.0.s8 %v6650
      %v6652 = vlaneseq
      %v6653 = vshrl.u32 %v6652, 7
      %v6654 = vsub.s32 %v6651, %v6653
      %v6655 = vrot.slane %v6641, %v6654
      %v6656 = vcombine.high %v6648, %v6648
      %v6657 = vcombine.high %v6655, %v6655
      %v6658 = vcombine.high %v6608, %v6608
      %v6660 = vunpack.c.l.s4 1983009808
      %v6661 = vunpack.c.0.s8 %v6660
      %v6662 = vlaneseq
      %v6663 = vshrl.u32 %v6662, 7
      %v6664 = vsub.s32 %v6661, %v6663
      %v6665 = vrot.slane %v6608, %v6664
      %v6667 = vunpack.c.l.s4 1983009808
      %v6668 = vunpack.c.0.s8 %v6667
      %v6669 = vlaneseq
      %v6670 = vshrl.u32 %v6669, 7
      %v6671 = vsub.s32 %v6668, %v6670
      %v6672 = vrot.slane %v6658, %v6671
      %v6673 = vcombine.high %v6665, %v6665
      %v6674 = vcombine.high %v6672, %v6672
      %v6675 = vcombine.high %v6609, %v6609
      %v6677 = vunpack.c.l.s4 1983009808
      %v6678 = vunpack.c.0.s8 %v6677
      %v6679 = vlaneseq
      %v6680 = vshrl.u32 %v6679, 7
      %v6681 = vsub.s32 %v6678, %v6680
      %v6682 = vrot.slane %v6609, %v6681
      %v6684 = vunpack.c.l.s4 1983009808
      %v6685 = vunpack.c.0.s8 %v6684
      %v6686 = vlaneseq
      %v6687 = vshrl.u32 %v6686, 7
      %v6688 = vsub.s32 %v6685, %v6687
      %v6689 = vrot.slane %v6675, %v6688
      %v6690 = vcombine.high %v6682, %v6682
      %v6691 = vcombine.high %v6689, %v6689
      %v6692 = vcombine.high %v6610, %v6610
      %v6694 = vunpack.c.l.s4 1983009808
      %v6695 = vunpack.c.0.s8 %v6694
      %v6696 = vlaneseq
      %v6697 = vshrl.u32 %v6696, 7
      %v6698 = vsub.s32 %v6695, %v6697
      %v6699 = vrot.slane %v6610, %v6698
      %v6701 = vunpack.c.l.s4 1983009808
      %v6702 = vunpack.c.0.s8 %v6701
      %v6703 = vlaneseq
      %v6704 = vshrl.u32 %v6703, 7
      %v6705 = vsub.s32 %v6702, %v6704
      %v6706 = vrot.slane %v6692, %v6705
      %v6707 = vcombine.high %v6699, %v6699
      %v6708 = vcombine.high %v6706, %v6706
      %v6709 = vcombine.high %v6611, %v6611
      %v6711 = vunpack.c.l.s4 1983009808
      %v6712 = vunpack.c.0.s8 %v6711
      %v6713 = vlaneseq
      %v6714 = vshrl.u32 %v6713, 7
      %v6715 = vsub.s32 %v6712, %v6714
      %v6716 = vrot.slane %v6611, %v6715
      %v6718 = vunpack.c.l.s4 1983009808
      %v6719 = vunpack.c.0.s8 %v6718
      %v6720 = vlaneseq
      %v6721 = vshrl.u32 %v6720, 7
      %v6722 = vsub.s32 %v6719, %v6721
      %v6723 = vrot.slane %v6709, %v6722
      %v6724 = vcombine.high %v6716, %v6716
      %v6725 = vcombine.high %v6723, %v6723
      %v6726 = vcombine.high %v6612, %v6612
      %v6728 = vunpack.c.l.s4 1983009808
      %v6729 = vunpack.c.0.s8 %v6728
      %v6730 = vlaneseq
      %v6731 = vshrl.u32 %v6730, 7
      %v6732 = vsub.s32 %v6729, %v6731
      %v6733 = vrot.slane %v6612, %v6732
      %v6735 = vunpack.c.l.s4 1983009808
      %v6736 = vunpack.c.0.s8 %v6735
      %v6737 = vlaneseq
      %v6738 = vshrl.u32 %v6737, 7
      %v6739 = vsub.s32 %v6736, %v6738
      %v6740 = vrot.slane %v6726, %v6739
      %v6741 = vcombine.high %v6733, %v6733
      %v6742 = vcombine.high %v6740, %v6740
      %v6743 = vcombine.high %v6613, %v6613
      %v6745 = vunpack.c.l.s4 1983009808
      %v6746 = vunpack.c.0.s8 %v6745
      %v6747 = vlaneseq
      %v6748 = vshrl.u32 %v6747, 7
      %v6749 = vsub.s32 %v6746, %v6748
      %v6750 = vrot.slane %v6613, %v6749
      %v6752 = vunpack.c.l.s4 1983009808
      %v6753 = vunpack.c.0.s8 %v6752
      %v6754 = vlaneseq
      %v6755 = vshrl.u32 %v6754, 7
      %v6756 = vsub.s32 %v6753, %v6755
      %v6757 = vrot.slane %v6743, %v6756
      %v6758 = vcombine.high %v6750, %v6750
      %v6759 = vcombine.high %v6757, %v6757
      %v6760 = vcombine.high %v6614, %v6614
      %v6762 = vunpack.c.l.s4 1983009808
      %v6763 = vunpack.c.0.s8 %v6762
      %v6764 = vlaneseq
      %v6765 = vshrl.u32 %v6764, 7
      %v6766 = vsub.s32 %v6763, %v6765
      %v6767 = vrot.slane %v6614, %v6766
      %v6769 = vunpack.c.l.s4 1983009808
      %v6770 = vunpack.c.0.s8 %v6769
      %v6771 = vlaneseq
      %v6772 = vshrl.u32 %v6771, 7
      %v6773 = vsub.s32 %v6770, %v6772
      %v6774 = vrot.slane %v6760, %v6773
      %v6775 = vcombine.high %v6767, %v6767
      %v6776 = vcombine.high %v6774, %v6774
      %v6777 = vld [vmem:[#allocation4 + $0x1] sm:$0xff]
      %v6778 = vld [vmem:[#allocation4 + $0x11] sm:$0xff]
      %v6779 = vld [vmem:[#allocation4 + $0x21] sm:$0xff]
      %v6780 = vld [vmem:[#allocation4 + $0x31] sm:$0xff]
      %v6781 = vld [vmem:[#allocation4 + $0x41] sm:$0xff]
      %v6782 = vld [vmem:[#allocation4 + $0x51] sm:$0xff]
      %v6783 = vld [vmem:[#allocation4 + $0x61] sm:$0xff]
      %v6784 = vld [vmem:[#allocation4 + $0x71] sm:$0xff]
      %v6785 = vld [vmem:[#allocation4 + $0x81] sm:$0xff]
      %v6795 = vcombine.high %v6777, %v6777
      %v6797 = vunpack.c.l.s4 1983009808
      %v6798 = vunpack.c.0.s8 %v6797
      %v6799 = vlaneseq
      %v6800 = vshrl.u32 %v6799, 7
      %v6801 = vsub.s32 %v6798, %v6800
      %v6802 = vrot.slane %v6777, %v6801
      %v6804 = vunpack.c.l.s4 1983009808
      %v6805 = vunpack.c.0.s8 %v6804
      %v6806 = vlaneseq
      %v6807 = vshrl.u32 %v6806, 7
      %v6808 = vsub.s32 %v6805, %v6807
      %v6809 = vrot.slane %v6795, %v6808
      %v6810 = vcombine.high %v6802, %v6802
      %v6811 = vcombine.high %v6809, %v6809
      %v6812 = vcombine.high %v6778, %v6778
      %v6814 = vunpack.c.l.s4 1983009808
      %v6815 = vunpack.c.0.s8 %v6814
      %v6816 = vlaneseq
      %v6817 = vshrl.u32 %v6816, 7
      %v6818 = vsub.s32 %v6815, %v6817
      %v6819 = vrot.slane %v6778, %v6818
      %v6821 = vunpack.c.l.s4 1983009808
      %v6822 = vunpack.c.0.s8 %v6821
      %v6823 = vlaneseq
      %v6824 = vshrl.u32 %v6823, 7
      %v6825 = vsub.s32 %v6822, %v6824
      %v6826 = vrot.slane %v6812, %v6825
      %v6827 = vcombine.high %v6819, %v6819
      %v6828 = vcombine.high %v6826, %v6826
      %v6829 = vcombine.high %v6779, %v6779
      %v6831 = vunpack.c.l.s4 1983009808
      %v6832 = vunpack.c.0.s8 %v6831
      %v6833 = vlaneseq
      %v6834 = vshrl.u32 %v6833, 7
      %v6835 = vsub.s32 %v6832, %v6834
      %v6836 = vrot.slane %v6779, %v6835
      %v6838 = vunpack.c.l.s4 1983009808
      %v6839 = vunpack.c.0.s8 %v6838
      %v6840 = vlaneseq
      %v6841 = vshrl.u32 %v6840, 7
      %v6842 = vsub.s32 %v6839, %v6841
      %v6843 = vrot.slane %v6829, %v6842
      %v6844 = vcombine.high %v6836, %v6836
      %v6845 = vcombine.high %v6843, %v6843
      %v6846 = vcombine.high %v6780, %v6780
      %v6848 = vunpack.c.l.s4 1983009808
      %v6849 = vunpack.c.0.s8 %v6848
      %v6850 = vlaneseq
      %v6851 = vshrl.u32 %v6850, 7
      %v6852 = vsub.s32 %v6849, %v6851
      %v6853 = vrot.slane %v6780, %v6852
      %v6855 = vunpack.c.l.s4 1983009808
      %v6856 = vunpack.c.0.s8 %v6855
      %v6857 = vlaneseq
      %v6858 = vshrl.u32 %v6857, 7
      %v6859 = vsub.s32 %v6856, %v6858
      %v6860 = vrot.slane %v6846, %v6859
      %v6861 = vcombine.high %v6853, %v6853
      %v6862 = vcombine.high %v6860, %v6860
      %v6863 = vcombine.high %v6781, %v6781
      %v6865 = vunpack.c.l.s4 1983009808
      %v6866 = vunpack.c.0.s8 %v6865
      %v6867 = vlaneseq
      %v6868 = vshrl.u32 %v6867, 7
      %v6869 = vsub.s32 %v6866, %v6868
      %v6870 = vrot.slane %v6781, %v6869
      %v6872 = vunpack.c.l.s4 1983009808
      %v6873 = vunpack.c.0.s8 %v6872
      %v6874 = vlaneseq
      %v6875 = vshrl.u32 %v6874, 7
      %v6876 = vsub.s32 %v6873, %v6875
      %v6877 = vrot.slane %v6863, %v6876
      %v6878 = vcombine.high %v6870, %v6870
      %v6879 = vcombine.high %v6877, %v6877
      %v6880 = vcombine.high %v6782, %v6782
      %v6882 = vunpack.c.l.s4 1983009808
      %v6883 = vunpack.c.0.s8 %v6882
      %v6884 = vlaneseq
      %v6885 = vshrl.u32 %v6884, 7
      %v6886 = vsub.s32 %v6883, %v6885
      %v6887 = vrot.slane %v6782, %v6886
      %v6889 = vunpack.c.l.s4 1983009808
      %v6890 = vunpack.c.0.s8 %v6889
      %v6891 = vlaneseq
      %v6892 = vshrl.u32 %v6891, 7
      %v6893 = vsub.s32 %v6890, %v6892
      %v6894 = vrot.slane %v6880, %v6893
      %v6895 = vcombine.high %v6887, %v6887
      %v6896 = vcombine.high %v6894, %v6894
      %v6897 = vcombine.high %v6783, %v6783
      %v6899 = vunpack.c.l.s4 1983009808
      %v6900 = vunpack.c.0.s8 %v6899
      %v6901 = vlaneseq
      %v6902 = vshrl.u32 %v6901, 7
      %v6903 = vsub.s32 %v6900, %v6902
      %v6904 = vrot.slane %v6783, %v6903
      %v6906 = vunpack.c.l.s4 1983009808
      %v6907 = vunpack.c.0.s8 %v6906
      %v6908 = vlaneseq
      %v6909 = vshrl.u32 %v6908, 7
      %v6910 = vsub.s32 %v6907, %v6909
      %v6911 = vrot.slane %v6897, %v6910
      %v6912 = vcombine.high %v6904, %v6904
      %v6913 = vcombine.high %v6911, %v6911
      %v6914 = vcombine.high %v6784, %v6784
      %v6916 = vunpack.c.l.s4 1983009808
      %v6917 = vunpack.c.0.s8 %v6916
      %v6918 = vlaneseq
      %v6919 = vshrl.u32 %v6918, 7
      %v6920 = vsub.s32 %v6917, %v6919
      %v6921 = vrot.slane %v6784, %v6920
      %v6923 = vunpack.c.l.s4 1983009808
      %v6924 = vunpack.c.0.s8 %v6923
      %v6925 = vlaneseq
      %v6926 = vshrl.u32 %v6925, 7
      %v6927 = vsub.s32 %v6924, %v6926
      %v6928 = vrot.slane %v6914, %v6927
      %v6929 = vcombine.high %v6921, %v6921
      %v6930 = vcombine.high %v6928, %v6928
      %v6931 = vcombine.high %v6785, %v6785
      %v6933 = vunpack.c.l.s4 1983009808
      %v6934 = vunpack.c.0.s8 %v6933
      %v6935 = vlaneseq
      %v6936 = vshrl.u32 %v6935, 7
      %v6937 = vsub.s32 %v6934, %v6936
      %v6938 = vrot.slane %v6785, %v6937
      %v6940 = vunpack.c.l.s4 1983009808
      %v6941 = vunpack.c.0.s8 %v6940
      %v6942 = vlaneseq
      %v6943 = vshrl.u32 %v6942, 7
      %v6944 = vsub.s32 %v6941, %v6943
      %v6945 = vrot.slane %v6931, %v6944
      %v6946 = vcombine.high %v6938, %v6938
      %v6947 = vcombine.high %v6945, %v6945
      %v6948 = vld [vmem:[#allocation4 + $0x2] sm:$0xff]
      %v6949 = vld [vmem:[#allocation4 + $0x12] sm:$0xff]
      %v6950 = vld [vmem:[#allocation4 + $0x22] sm:$0xff]
      %v6951 = vld [vmem:[#allocation4 + $0x32] sm:$0xff]
      %v6952 = vld [vmem:[#allocation4 + $0x42] sm:$0xff]
      %v6953 = vld [vmem:[#allocation4 + $0x52] sm:$0xff]
      %v6954 = vld [vmem:[#allocation4 + $0x62] sm:$0xff]
      %v6955 = vld [vmem:[#allocation4 + $0x72] sm:$0xff]
      %v6956 = vld [vmem:[#allocation4 + $0x82] sm:$0xff]
      %v6966 = vcombine.high %v6948, %v6948
      %v6968 = vunpack.c.l.s4 1983009808
      %v6969 = vunpack.c.0.s8 %v6968
      %v6970 = vlaneseq
      %v6971 = vshrl.u32 %v6970, 7
      %v6972 = vsub.s32 %v6969, %v6971
      %v6973 = vrot.slane %v6948, %v6972
      %v6975 = vunpack.c.l.s4 1983009808
      %v6976 = vunpack.c.0.s8 %v6975
      %v6977 = vlaneseq
      %v6978 = vshrl.u32 %v6977, 7
      %v6979 = vsub.s32 %v6976, %v6978
      %v6980 = vrot.slane %v6966, %v6979
      %v6981 = vcombine.high %v6973, %v6973
      %v6982 = vcombine.high %v6980, %v6980
      %v6983 = vcombine.high %v6949, %v6949
      %v6985 = vunpack.c.l.s4 1983009808
      %v6986 = vunpack.c.0.s8 %v6985
      %v6987 = vlaneseq
      %v6988 = vshrl.u32 %v6987, 7
      %v6989 = vsub.s32 %v6986, %v6988
      %v6990 = vrot.slane %v6949, %v6989
      %v6992 = vunpack.c.l.s4 1983009808
      %v6993 = vunpack.c.0.s8 %v6992
      %v6994 = vlaneseq
      %v6995 = vshrl.u32 %v6994, 7
      %v6996 = vsub.s32 %v6993, %v6995
      %v6997 = vrot.slane %v6983, %v6996
      %v6998 = vcombine.high %v6990, %v6990
      %v6999 = vcombine.high %v6997, %v6997
      %v7000 = vcombine.high %v6950, %v6950
      %v7002 = vunpack.c.l.s4 1983009808
      %v7003 = vunpack.c.0.s8 %v7002
      %v7004 = vlaneseq
      %v7005 = vshrl.u32 %v7004, 7
      %v7006 = vsub.s32 %v7003, %v7005
      %v7007 = vrot.slane %v6950, %v7006
      %v7009 = vunpack.c.l.s4 1983009808
      %v7010 = vunpack.c.0.s8 %v7009
      %v7011 = vlaneseq
      %v7012 = vshrl.u32 %v7011, 7
      %v7013 = vsub.s32 %v7010, %v7012
      %v7014 = vrot.slane %v7000, %v7013
      %v7015 = vcombine.high %v7007, %v7007
      %v7016 = vcombine.high %v7014, %v7014
      %v7017 = vcombine.high %v6951, %v6951
      %v7019 = vunpack.c.l.s4 1983009808
      %v7020 = vunpack.c.0.s8 %v7019
      %v7021 = vlaneseq
      %v7022 = vshrl.u32 %v7021, 7
      %v7023 = vsub.s32 %v7020, %v7022
      %v7024 = vrot.slane %v6951, %v7023
      %v7026 = vunpack.c.l.s4 1983009808
      %v7027 = vunpack.c.0.s8 %v7026
      %v7028 = vlaneseq
      %v7029 = vshrl.u32 %v7028, 7
      %v7030 = vsub.s32 %v7027, %v7029
      %v7031 = vrot.slane %v7017, %v7030
      %v7032 = vcombine.high %v7024, %v7024
      %v7033 = vcombine.high %v7031, %v7031
      %v7034 = vcombine.high %v6952, %v6952
      %v7036 = vunpack.c.l.s4 1983009808
      %v7037 = vunpack.c.0.s8 %v7036
      %v7038 = vlaneseq
      %v7039 = vshrl.u32 %v7038, 7
      %v7040 = vsub.s32 %v7037, %v7039
      %v7041 = vrot.slane %v6952, %v7040
      %v7043 = vunpack.c.l.s4 1983009808
      %v7044 = vunpack.c.0.s8 %v7043
      %v7045 = vlaneseq
      %v7046 = vshrl.u32 %v7045, 7
      %v7047 = vsub.s32 %v7044, %v7046
      %v7048 = vrot.slane %v7034, %v7047
      %v7049 = vcombine.high %v7041, %v7041
      %v7050 = vcombine.high %v7048, %v7048
      %v7051 = vcombine.high %v6953, %v6953
      %v7053 = vunpack.c.l.s4 1983009808
      %v7054 = vunpack.c.0.s8 %v7053
      %v7055 = vlaneseq
      %v7056 = vshrl.u32 %v7055, 7
      %v7057 = vsub.s32 %v7054, %v7056
      %v7058 = vrot.slane %v6953, %v7057
      %v7060 = vunpack.c.l.s4 1983009808
      %v7061 = vunpack.c.0.s8 %v7060
      %v7062 = vlaneseq
      %v7063 = vshrl.u32 %v7062, 7
      %v7064 = vsub.s32 %v7061, %v7063
      %v7065 = vrot.slane %v7051, %v7064
      %v7066 = vcombine.high %v7058, %v7058
      %v7067 = vcombine.high %v7065, %v7065
      %v7068 = vcombine.high %v6954, %v6954
      %v7070 = vunpack.c.l.s4 1983009808
      %v7071 = vunpack.c.0.s8 %v7070
      %v7072 = vlaneseq
      %v7073 = vshrl.u32 %v7072, 7
      %v7074 = vsub.s32 %v7071, %v7073
      %v7075 = vrot.slane %v6954, %v7074
      %v7077 = vunpack.c.l.s4 1983009808
      %v7078 = vunpack.c.0.s8 %v7077
      %v7079 = vlaneseq
      %v7080 = vshrl.u32 %v7079, 7
      %v7081 = vsub.s32 %v7078, %v7080
      %v7082 = vrot.slane %v7068, %v7081
      %v7083 = vcombine.high %v7075, %v7075
      %v7084 = vcombine.high %v7082, %v7082
      %v7085 = vcombine.high %v6955, %v6955
      %v7087 = vunpack.c.l.s4 1983009808
      %v7088 = vunpack.c.0.s8 %v7087
      %v7089 = vlaneseq
      %v7090 = vshrl.u32 %v7089, 7
      %v7091 = vsub.s32 %v7088, %v7090
      %v7092 = vrot.slane %v6955, %v7091
      %v7094 = vunpack.c.l.s4 1983009808
      %v7095 = vunpack.c.0.s8 %v7094
      %v7096 = vlaneseq
      %v7097 = vshrl.u32 %v7096, 7
      %v7098 = vsub.s32 %v7095, %v7097
      %v7099 = vrot.slane %v7085, %v7098
      %v7100 = vcombine.high %v7092, %v7092
      %v7101 = vcombine.high %v7099, %v7099
      %v7102 = vcombine.high %v6956, %v6956
      %v7104 = vunpack.c.l.s4 1983009808
      %v7105 = vunpack.c.0.s8 %v7104
      %v7106 = vlaneseq
      %v7107 = vshrl.u32 %v7106, 7
      %v7108 = vsub.s32 %v7105, %v7107
      %v7109 = vrot.slane %v6956, %v7108
      %v7111 = vunpack.c.l.s4 1983009808
      %v7112 = vunpack.c.0.s8 %v7111
      %v7113 = vlaneseq
      %v7114 = vshrl.u32 %v7113, 7
      %v7115 = vsub.s32 %v7112, %v7114
      %v7116 = vrot.slane %v7102, %v7115
      %v7117 = vcombine.high %v7109, %v7109
      %v7118 = vcombine.high %v7116, %v7116
      %v7119 = vlaneseq
      %v7120 = vshrl.u32 %v7119, 7
      %v7121 = vsub.s32 0, %v7120
      %v7122 = vrot.slane %v6631, %v7121
      %v7123 = vlaneseq
      %v7124 = vshrl.u32 %v7123, 7
      %v7125 = vsub.s32 0, %v7124
      %v7126 = vrot.slane %v6639, %v7125
      %v7127 = vlaneseq
      %v7128 = vshrl.u32 %v7127, 7
      %v7129 = vsub.s32 0, %v7128
      %v7130 = vrot.slane %v6638, %v7129
      %v7131 = vlaneseq
      %v7132 = vshrl.u32 %v7131, 7
      %v7133 = vsub.s32 0, %v7132
      %v7134 = vrot.slane %v6640, %v7133
      %v7135 = vlaneseq
      %v7136 = vshrl.u32 %v7135, 7
      %v7137 = vsub.s32 0, %v7136
      %v7138 = vrot.slane %v6665, %v7137
      %v7139 = vlaneseq
      %v7140 = vshrl.u32 %v7139, 7
      %v7141 = vsub.s32 0, %v7140
      %v7142 = vrot.slane %v6673, %v7141
      %v7143 = vlaneseq
      %v7144 = vshrl.u32 %v7143, 7
      %v7145 = vsub.s32 0, %v7144
      %v7146 = vrot.slane %v6672, %v7145
      %v7147 = vlaneseq
      %v7148 = vshrl.u32 %v7147, 7
      %v7149 = vsub.s32 0, %v7148
      %v7150 = vrot.slane %v6674, %v7149
      %v7151 = vlaneseq
      %v7152 = vshrl.u32 %v7151, 7
      %v7153 = vsub.s32 0, %v7152
      %v7154 = vrot.slane %v6699, %v7153
      %v7155 = vlaneseq
      %v7156 = vshrl.u32 %v7155, 7
      %v7157 = vsub.s32 0, %v7156
      %v7158 = vrot.slane %v6707, %v7157
      %v7159 = vlaneseq
      %v7160 = vshrl.u32 %v7159, 7
      %v7161 = vsub.s32 0, %v7160
      %v7162 = vrot.slane %v6706, %v7161
      %v7163 = vlaneseq
      %v7164 = vshrl.u32 %v7163, 7
      %v7165 = vsub.s32 0, %v7164
      %v7166 = vrot.slane %v6708, %v7165
      %v7167 = vlaneseq
      %v7168 = vshrl.u32 %v7167, 7
      %v7169 = vsub.s32 0, %v7168
      %v7170 = vrot.slane %v6733, %v7169
      %v7171 = vlaneseq
      %v7172 = vshrl.u32 %v7171, 7
      %v7173 = vsub.s32 0, %v7172
      %v7174 = vrot.slane %v6741, %v7173
      %v7175 = vlaneseq
      %v7176 = vshrl.u32 %v7175, 7
      %v7177 = vsub.s32 0, %v7176
      %v7178 = vrot.slane %v6740, %v7177
      %v7179 = vlaneseq
      %v7180 = vshrl.u32 %v7179, 7
      %v7181 = vsub.s32 0, %v7180
      %v7182 = vrot.slane %v6742, %v7181
      %v7183 = vsel %vm4418, %v7126, %v7122
      %v7184 = vsel %vm4420, %v7130, %v7183
      %v7185 = vsel %vm4422, %v7134, %v7184
      %v7186 = vsel %vm4424, %v7138, %v7185
      %v7187 = vsel %vm4426, %v7142, %v7186
      %v7188 = vsel %vm4428, %v7146, %v7187
      %v7189 = vsel %vm4430, %v7150, %v7188
      %v7190 = vsel %vm4418, %v7158, %v7154
      %v7191 = vsel %vm4420, %v7162, %v7190
      %v7192 = vsel %vm4422, %v7166, %v7191
      %v7193 = vsel %vm4424, %v7170, %v7192
      %v7194 = vsel %vm4426, %v7174, %v7193
      %v7195 = vsel %vm4428, %v7178, %v7194
      %v7196 = vsel %vm4430, %v7182, %v7195
      %v7199 = vlaneseq
      %v7200 = vshrl.u32 %v7199, 7
      %v7201 = vsub.s32 0, %v7200
      %v7202 = vrot.slane %v6802, %v7201
      %v7203 = vlaneseq
      %v7204 = vshrl.u32 %v7203, 7
      %v7205 = vsub.s32 0, %v7204
      %v7206 = vrot.slane %v6810, %v7205
      %v7207 = vlaneseq
      %v7208 = vshrl.u32 %v7207, 7
      %v7209 = vsub.s32 0, %v7208
      %v7210 = vrot.slane %v6809, %v7209
      %v7211 = vlaneseq
      %v7212 = vshrl.u32 %v7211, 7
      %v7213 = vsub.s32 0, %v7212
      %v7214 = vrot.slane %v6811, %v7213
      %v7215 = vlaneseq
      %v7216 = vshrl.u32 %v7215, 7
      %v7217 = vsub.s32 0, %v7216
      %v7218 = vrot.slane %v6836, %v7217
      %v7219 = vlaneseq
      %v7220 = vshrl.u32 %v7219, 7
      %v7221 = vsub.s32 0, %v7220
      %v7222 = vrot.slane %v6844, %v7221
      %v7223 = vlaneseq
      %v7224 = vshrl.u32 %v7223, 7
      %v7225 = vsub.s32 0, %v7224
      %v7226 = vrot.slane %v6843, %v7225
      %v7227 = vlaneseq
      %v7228 = vshrl.u32 %v7227, 7
      %v7229 = vsub.s32 0, %v7228
      %v7230 = vrot.slane %v6845, %v7229
      %v7231 = vlaneseq
      %v7232 = vshrl.u32 %v7231, 7
      %v7233 = vsub.s32 0, %v7232
      %v7234 = vrot.slane %v6870, %v7233
      %v7235 = vlaneseq
      %v7236 = vshrl.u32 %v7235, 7
      %v7237 = vsub.s32 0, %v7236
      %v7238 = vrot.slane %v6878, %v7237
      %v7239 = vlaneseq
      %v7240 = vshrl.u32 %v7239, 7
      %v7241 = vsub.s32 0, %v7240
      %v7242 = vrot.slane %v6877, %v7241
      %v7243 = vlaneseq
      %v7244 = vshrl.u32 %v7243, 7
      %v7245 = vsub.s32 0, %v7244
      %v7246 = vrot.slane %v6879, %v7245
      %v7247 = vlaneseq
      %v7248 = vshrl.u32 %v7247, 7
      %v7249 = vsub.s32 0, %v7248
      %v7250 = vrot.slane %v6904, %v7249
      %v7251 = vlaneseq
      %v7252 = vshrl.u32 %v7251, 7
      %v7253 = vsub.s32 0, %v7252
      %v7254 = vrot.slane %v6912, %v7253
      %v7255 = vlaneseq
      %v7256 = vshrl.u32 %v7255, 7
      %v7257 = vsub.s32 0, %v7256
      %v7258 = vrot.slane %v6911, %v7257
      %v7259 = vlaneseq
      %v7260 = vshrl.u32 %v7259, 7
      %v7261 = vsub.s32 0, %v7260
      %v7262 = vrot.slane %v6913, %v7261
      %v7263 = vsel %vm4418, %v7206, %v7202
      %v7264 = vsel %vm4420, %v7210, %v7263
      %v7265 = vsel %vm4422, %v7214, %v7264
      %v7266 = vsel %vm4424, %v7218, %v7265
      %v7267 = vsel %vm4426, %v7222, %v7266
      %v7268 = vsel %vm4428, %v7226, %v7267
      %v7269 = vsel %vm4430, %v7230, %v7268
      %v7270 = vsel %vm4418, %v7238, %v7234
      %v7271 = vsel %vm4420, %v7242, %v7270
      %v7272 = vsel %vm4422, %v7246, %v7271
      %v7273 = vsel %vm4424, %v7250, %v7272
      %v7274 = vsel %vm4426, %v7254, %v7273
      %v7275 = vsel %vm4428, %v7258, %v7274
      %v7276 = vsel %vm4430, %v7262, %v7275
      %7277 = vrot.lane.b32.xlu0 %v7269, 32
      %v7278 = vpop.permute.xlu0 %7277
      %7279 = vrot.lane.b32.xlu0 %v7276, 32
      %v7280 = vpop.permute.xlu0 %7279
      %v7283 = vlaneseq
      %v7284 = vshrl.u32 %v7283, 7
      %v7285 = vsub.s32 0, %v7284
      %v7286 = vrot.slane %v6973, %v7285
      %v7287 = vlaneseq
      %v7288 = vshrl.u32 %v7287, 7
      %v7289 = vsub.s32 0, %v7288
      %v7290 = vrot.slane %v6981, %v7289
      %v7291 = vlaneseq
      %v7292 = vshrl.u32 %v7291, 7
      %v7293 = vsub.s32 0, %v7292
      %v7294 = vrot.slane %v6980, %v7293
      %v7295 = vlaneseq
      %v7296 = vshrl.u32 %v7295, 7
      %v7297 = vsub.s32 0, %v7296
      %v7298 = vrot.slane %v6982, %v7297
      %v7299 = vlaneseq
      %v7300 = vshrl.u32 %v7299, 7
      %v7301 = vsub.s32 0, %v7300
      %v7302 = vrot.slane %v7007, %v7301
      %v7303 = vlaneseq
      %v7304 = vshrl.u32 %v7303, 7
      %v7305 = vsub.s32 0, %v7304
      %v7306 = vrot.slane %v7015, %v7305
      %v7307 = vlaneseq
      %v7308 = vshrl.u32 %v7307, 7
      %v7309 = vsub.s32 0, %v7308
      %v7310 = vrot.slane %v7014, %v7309
      %v7311 = vlaneseq
      %v7312 = vshrl.u32 %v7311, 7
      %v7313 = vsub.s32 0, %v7312
      %v7314 = vrot.slane %v7016, %v7313
      %v7315 = vlaneseq
      %v7316 = vshrl.u32 %v7315, 7
      %v7317 = vsub.s32 0, %v7316
      %v7318 = vrot.slane %v7041, %v7317
      %v7319 = vlaneseq
      %v7320 = vshrl.u32 %v7319, 7
      %v7321 = vsub.s32 0, %v7320
      %v7322 = vrot.slane %v7049, %v7321
      %v7323 = vlaneseq
      %v7324 = vshrl.u32 %v7323, 7
      %v7325 = vsub.s32 0, %v7324
      %v7326 = vrot.slane %v7048, %v7325
      %v7327 = vlaneseq
      %v7328 = vshrl.u32 %v7327, 7
      %v7329 = vsub.s32 0, %v7328
      %v7330 = vrot.slane %v7050, %v7329
      %v7331 = vlaneseq
      %v7332 = vshrl.u32 %v7331, 7
      %v7333 = vsub.s32 0, %v7332
      %v7334 = vrot.slane %v7075, %v7333
      %v7335 = vlaneseq
      %v7336 = vshrl.u32 %v7335, 7
      %v7337 = vsub.s32 0, %v7336
      %v7338 = vrot.slane %v7083, %v7337
      %v7339 = vlaneseq
      %v7340 = vshrl.u32 %v7339, 7
      %v7341 = vsub.s32 0, %v7340
      %v7342 = vrot.slane %v7082, %v7341
      %v7343 = vlaneseq
      %v7344 = vshrl.u32 %v7343, 7
      %v7345 = vsub.s32 0, %v7344
      %v7346 = vrot.slane %v7084, %v7345
      %v7347 = vsel %vm4418, %v7290, %v7286
      %v7348 = vsel %vm4420, %v7294, %v7347
      %v7349 = vsel %vm4422, %v7298, %v7348
      %v7350 = vsel %vm4424, %v7302, %v7349
      %v7351 = vsel %vm4426, %v7306, %v7350
      %v7352 = vsel %vm4428, %v7310, %v7351
      %v7353 = vsel %vm4430, %v7314, %v7352
      %v7354 = vsel %vm4418, %v7322, %v7318
      %v7355 = vsel %vm4420, %v7326, %v7354
      %v7356 = vsel %vm4422, %v7330, %v7355
      %v7357 = vsel %vm4424, %v7334, %v7356
      %v7358 = vsel %vm4426, %v7338, %v7357
      %v7359 = vsel %vm4428, %v7342, %v7358
      %v7360 = vsel %vm4430, %v7346, %v7359
      %7361 = vrot.lane.b32.xlu0 %v7353, 64
      %v7362 = vpop.permute.xlu0 %7361
      %7363 = vrot.lane.b32.xlu0 %v7360, 64
      %v7364 = vpop.permute.xlu0 %7363
      %v7367 = vlaneseq
      %v7368 = vshrl.u32 %v7367, 7
      %v7369 = vsub.s32 0, %v7368
      %v7370 = vrot.slane %v6648, %v7369
      %v7371 = vlaneseq
      %v7372 = vshrl.u32 %v7371, 7
      %v7373 = vsub.s32 0, %v7372
      %v7374 = vrot.slane %v6656, %v7373
      %v7375 = vlaneseq
      %v7376 = vshrl.u32 %v7375, 7
      %v7377 = vsub.s32 0, %v7376
      %v7378 = vrot.slane %v6655, %v7377
      %v7379 = vlaneseq
      %v7380 = vshrl.u32 %v7379, 7
      %v7381 = vsub.s32 0, %v7380
      %v7382 = vrot.slane %v6657, %v7381
      %v7383 = vlaneseq
      %v7384 = vshrl.u32 %v7383, 7
      %v7385 = vsub.s32 0, %v7384
      %v7386 = vrot.slane %v6682, %v7385
      %v7387 = vlaneseq
      %v7388 = vshrl.u32 %v7387, 7
      %v7389 = vsub.s32 0, %v7388
      %v7390 = vrot.slane %v6690, %v7389
      %v7391 = vlaneseq
      %v7392 = vshrl.u32 %v7391, 7
      %v7393 = vsub.s32 0, %v7392
      %v7394 = vrot.slane %v6689, %v7393
      %v7395 = vlaneseq
      %v7396 = vshrl.u32 %v7395, 7
      %v7397 = vsub.s32 0, %v7396
      %v7398 = vrot.slane %v6691, %v7397
      %v7399 = vlaneseq
      %v7400 = vshrl.u32 %v7399, 7
      %v7401 = vsub.s32 0, %v7400
      %v7402 = vrot.slane %v6716, %v7401
      %v7403 = vlaneseq
      %v7404 = vshrl.u32 %v7403, 7
      %v7405 = vsub.s32 0, %v7404
      %v7406 = vrot.slane %v6724, %v7405
      %v7407 = vlaneseq
      %v7408 = vshrl.u32 %v7407, 7
      %v7409 = vsub.s32 0, %v7408
      %v7410 = vrot.slane %v6723, %v7409
      %v7411 = vlaneseq
      %v7412 = vshrl.u32 %v7411, 7
      %v7413 = vsub.s32 0, %v7412
      %v7414 = vrot.slane %v6725, %v7413
      %v7415 = vlaneseq
      %v7416 = vshrl.u32 %v7415, 7
      %v7417 = vsub.s32 0, %v7416
      %v7418 = vrot.slane %v6750, %v7417
      %v7419 = vlaneseq
      %v7420 = vshrl.u32 %v7419, 7
      %v7421 = vsub.s32 0, %v7420
      %v7422 = vrot.slane %v6758, %v7421
      %v7423 = vlaneseq
      %v7424 = vshrl.u32 %v7423, 7
      %v7425 = vsub.s32 0, %v7424
      %v7426 = vrot.slane %v6757, %v7425
      %v7427 = vlaneseq
      %v7428 = vshrl.u32 %v7427, 7
      %v7429 = vsub.s32 0, %v7428
      %v7430 = vrot.slane %v6759, %v7429
      %v7431 = vsel %vm4418, %v7374, %v7370
      %v7432 = vsel %vm4420, %v7378, %v7431
      %v7433 = vsel %vm4422, %v7382, %v7432
      %v7434 = vsel %vm4424, %v7386, %v7433
      %v7435 = vsel %vm4426, %v7390, %v7434
      %v7436 = vsel %vm4428, %v7394, %v7435
      %v7437 = vsel %vm4430, %v7398, %v7436
      %v7438 = vsel %vm4418, %v7406, %v7402
      %v7439 = vsel %vm4420, %v7410, %v7438
      %v7440 = vsel %vm4422, %v7414, %v7439
      %v7441 = vsel %vm4424, %v7418, %v7440
      %v7442 = vsel %vm4426, %v7422, %v7441
      %v7443 = vsel %vm4428, %v7426, %v7442
      %v7444 = vsel %vm4430, %v7430, %v7443
      %7445 = vrot.lane.b32.xlu0 %v7437, 96
      %v7446 = vpop.permute.xlu0 %7445
      %7447 = vrot.lane.b32.xlu0 %v7444, 96
      %v7448 = vpop.permute.xlu0 %7447
      %v7451 = vlaneseq
      %v7452 = vshrl.u32 %v7451, 7
      %v7453 = vsub.s32 0, %v7452
      %v7454 = vrot.slane %v6819, %v7453
      %v7455 = vlaneseq
      %v7456 = vshrl.u32 %v7455, 7
      %v7457 = vsub.s32 0, %v7456
      %v7458 = vrot.slane %v6827, %v7457
      %v7459 = vlaneseq
      %v7460 = vshrl.u32 %v7459, 7
      %v7461 = vsub.s32 0, %v7460
      %v7462 = vrot.slane %v6826, %v7461
      %v7463 = vlaneseq
      %v7464 = vshrl.u32 %v7463, 7
      %v7465 = vsub.s32 0, %v7464
      %v7466 = vrot.slane %v6828, %v7465
      %v7467 = vlaneseq
      %v7468 = vshrl.u32 %v7467, 7
      %v7469 = vsub.s32 0, %v7468
      %v7470 = vrot.slane %v6853, %v7469
      %v7471 = vlaneseq
      %v7472 = vshrl.u32 %v7471, 7
      %v7473 = vsub.s32 0, %v7472
      %v7474 = vrot.slane %v6861, %v7473
      %v7475 = vlaneseq
      %v7476 = vshrl.u32 %v7475, 7
      %v7477 = vsub.s32 0, %v7476
      %v7478 = vrot.slane %v6860, %v7477
      %v7479 = vlaneseq
      %v7480 = vshrl.u32 %v7479, 7
      %v7481 = vsub.s32 0, %v7480
      %v7482 = vrot.slane %v6862, %v7481
      %v7483 = vlaneseq
      %v7484 = vshrl.u32 %v7483, 7
      %v7485 = vsub.s32 0, %v7484
      %v7486 = vrot.slane %v6887, %v7485
      %v7487 = vlaneseq
      %v7488 = vshrl.u32 %v7487, 7
      %v7489 = vsub.s32 0, %v7488
      %v7490 = vrot.slane %v6895, %v7489
      %v7491 = vlaneseq
      %v7492 = vshrl.u32 %v7491, 7
      %v7493 = vsub.s32 0, %v7492
      %v7494 = vrot.slane %v6894, %v7493
      %v7495 = vlaneseq
      %v7496 = vshrl.u32 %v7495, 7
      %v7497 = vsub.s32 0, %v7496
      %v7498 = vrot.slane %v6896, %v7497
      %v7499 = vlaneseq
      %v7500 = vshrl.u32 %v7499, 7
      %v7501 = vsub.s32 0, %v7500
      %v7502 = vrot.slane %v6921, %v7501
      %v7503 = vlaneseq
      %v7504 = vshrl.u32 %v7503, 7
      %v7505 = vsub.s32 0, %v7504
      %v7506 = vrot.slane %v6929, %v7505
      %v7507 = vlaneseq
      %v7508 = vshrl.u32 %v7507, 7
      %v7509 = vsub.s32 0, %v7508
      %v7510 = vrot.slane %v6928, %v7509
      %v7511 = vlaneseq
      %v7512 = vshrl.u32 %v7511, 7
      %v7513 = vsub.s32 0, %v7512
      %v7514 = vrot.slane %v6930, %v7513
      %v7515 = vsel %vm4418, %v7458, %v7454
      %v7516 = vsel %vm4420, %v7462, %v7515
      %v7517 = vsel %vm4422, %v7466, %v7516
      %v7518 = vsel %vm4424, %v7470, %v7517
      %v7519 = vsel %vm4426, %v7474, %v7518
      %v7520 = vsel %vm4428, %v7478, %v7519
      %v7521 = vsel %vm4430, %v7482, %v7520
      %v7522 = vsel %vm4418, %v7490, %v7486
      %v7523 = vsel %vm4420, %v7494, %v7522
      %v7524 = vsel %vm4422, %v7498, %v7523
      %v7525 = vsel %vm4424, %v7502, %v7524
      %v7526 = vsel %vm4426, %v7506, %v7525
      %v7527 = vsel %vm4428, %v7510, %v7526
      %v7528 = vsel %vm4430, %v7514, %v7527
      %v7531 = vlaneseq
      %v7532 = vshrl.u32 %v7531, 7
      %v7533 = vsub.s32 0, %v7532
      %v7534 = vrot.slane %v6990, %v7533
      %v7535 = vlaneseq
      %v7536 = vshrl.u32 %v7535, 7
      %v7537 = vsub.s32 0, %v7536
      %v7538 = vrot.slane %v6998, %v7537
      %v7539 = vlaneseq
      %v7540 = vshrl.u32 %v7539, 7
      %v7541 = vsub.s32 0, %v7540
      %v7542 = vrot.slane %v6997, %v7541
      %v7543 = vlaneseq
      %v7544 = vshrl.u32 %v7543, 7
      %v7545 = vsub.s32 0, %v7544
      %v7546 = vrot.slane %v6999, %v7545
      %v7547 = vlaneseq
      %v7548 = vshrl.u32 %v7547, 7
      %v7549 = vsub.s32 0, %v7548
      %v7550 = vrot.slane %v7024, %v7549
      %v7551 = vlaneseq
      %v7552 = vshrl.u32 %v7551, 7
      %v7553 = vsub.s32 0, %v7552
      %v7554 = vrot.slane %v7032, %v7553
      %v7555 = vlaneseq
      %v7556 = vshrl.u32 %v7555, 7
      %v7557 = vsub.s32 0, %v7556
      %v7558 = vrot.slane %v7031, %v7557
      %v7559 = vlaneseq
      %v7560 = vshrl.u32 %v7559, 7
      %v7561 = vsub.s32 0, %v7560
      %v7562 = vrot.slane %v7033, %v7561
      %v7563 = vlaneseq
      %v7564 = vshrl.u32 %v7563, 7
      %v7565 = vsub.s32 0, %v7564
      %v7566 = vrot.slane %v7058, %v7565
      %v7567 = vlaneseq
      %v7568 = vshrl.u32 %v7567, 7
      %v7569 = vsub.s32 0, %v7568
      %v7570 = vrot.slane %v7066, %v7569
      %v7571 = vlaneseq
      %v7572 = vshrl.u32 %v7571, 7
      %v7573 = vsub.s32 0, %v7572
      %v7574 = vrot.slane %v7065, %v7573
      %v7575 = vlaneseq
      %v7576 = vshrl.u32 %v7575, 7
      %v7577 = vsub.s32 0, %v7576
      %v7578 = vrot.slane %v7067, %v7577
      %v7579 = vlaneseq
      %v7580 = vshrl.u32 %v7579, 7
      %v7581 = vsub.s32 0, %v7580
      %v7582 = vrot.slane %v7092, %v7581
      %v7583 = vlaneseq
      %v7584 = vshrl.u32 %v7583, 7
      %v7585 = vsub.s32 0, %v7584
      %v7586 = vrot.slane %v7100, %v7585
      %v7587 = vlaneseq
      %v7588 = vshrl.u32 %v7587, 7
      %v7589 = vsub.s32 0, %v7588
      %v7590 = vrot.slane %v7099, %v7589
      %v7591 = vlaneseq
      %v7592 = vshrl.u32 %v7591, 7
      %v7593 = vsub.s32 0, %v7592
      %v7594 = vrot.slane %v7101, %v7593
      %v7595 = vsel %vm4418, %v7538, %v7534
      %v7596 = vsel %vm4420, %v7542, %v7595
      %v7597 = vsel %vm4422, %v7546, %v7596
      %v7598 = vsel %vm4424, %v7550, %v7597
      %v7599 = vsel %vm4426, %v7554, %v7598
      %v7600 = vsel %vm4428, %v7558, %v7599
      %v7601 = vsel %vm4430, %v7562, %v7600
      %v7602 = vsel %vm4418, %v7570, %v7566
      %v7603 = vsel %vm4420, %v7574, %v7602
      %v7604 = vsel %vm4422, %v7578, %v7603
      %v7605 = vsel %vm4424, %v7582, %v7604
      %v7606 = vsel %vm4426, %v7586, %v7605
      %v7607 = vsel %vm4428, %v7590, %v7606
      %v7608 = vsel %vm4430, %v7594, %v7607
      %7609 = vrot.lane.b32.xlu0 %v7601, 32
      %v7610 = vpop.permute.xlu0 %7609
      %7611 = vrot.lane.b32.xlu0 %v7608, 32
      %v7612 = vpop.permute.xlu0 %7611
      %v7615 = vlaneseq
      %v7616 = vshrl.u32 %v7615, 7
      %v7617 = vsub.s32 0, %v7616
      %v7618 = vrot.slane %v6767, %v7617
      %v7619 = vlaneseq
      %v7620 = vshrl.u32 %v7619, 7
      %v7621 = vsub.s32 0, %v7620
      %v7622 = vrot.slane %v6775, %v7621
      %v7623 = vlaneseq
      %v7624 = vshrl.u32 %v7623, 7
      %v7625 = vsub.s32 0, %v7624
      %v7626 = vrot.slane %v6774, %v7625
      %v7627 = vlaneseq
      %v7628 = vshrl.u32 %v7627, 7
      %v7629 = vsub.s32 0, %v7628
      %v7630 = vrot.slane %v6776, %v7629
      %v7631 = vsel %vm4418, %v7142, %v7138
      %v7632 = vsel %vm4420, %v7146, %v7631
      %v7633 = vsel %vm4422, %v7150, %v7632
      %v7634 = vsel %vm4424, %v7154, %v7633
      %v7635 = vsel %vm4426, %v7158, %v7634
      %v7636 = vsel %vm4428, %v7162, %v7635
      %v7637 = vsel %vm4430, %v7166, %v7636
      %v7638 = vsel %vm4418, %v7174, %v7170
      %v7639 = vsel %vm4420, %v7178, %v7638
      %v7640 = vsel %vm4422, %v7182, %v7639
      %v7641 = vsel %vm4424, %v7618, %v7640
      %v7642 = vsel %vm4426, %v7622, %v7641
      %v7643 = vsel %vm4428, %v7626, %v7642
      %v7644 = vsel %vm4430, %v7630, %v7643
      %7645 = vrot.lane.b32.xlu0 %v7637, 64
      %v7646 = vpop.permute.xlu0 %7645
      %7647 = vrot.lane.b32.xlu0 %v7644, 64
      %v7648 = vpop.permute.xlu0 %7647
      %v7651 = vlaneseq
      %v7652 = vshrl.u32 %v7651, 7
      %v7653 = vsub.s32 0, %v7652
      %v7654 = vrot.slane %v6938, %v7653
      %v7655 = vlaneseq
      %v7656 = vshrl.u32 %v7655, 7
      %v7657 = vsub.s32 0, %v7656
      %v7658 = vrot.slane %v6946, %v7657
      %v7659 = vlaneseq
      %v7660 = vshrl.u32 %v7659, 7
      %v7661 = vsub.s32 0, %v7660
      %v7662 = vrot.slane %v6945, %v7661
      %v7663 = vlaneseq
      %v7664 = vshrl.u32 %v7663, 7
      %v7665 = vsub.s32 0, %v7664
      %v7666 = vrot.slane %v6947, %v7665
      %v7667 = vsel %vm4418, %v7222, %v7218
      %v7668 = vsel %vm4420, %v7226, %v7667
      %v7669 = vsel %vm4422, %v7230, %v7668
      %v7670 = vsel %vm4424, %v7234, %v7669
      %v7671 = vsel %vm4426, %v7238, %v7670
      %v7672 = vsel %vm4428, %v7242, %v7671
      %v7673 = vsel %vm4430, %v7246, %v7672
      %v7674 = vsel %vm4418, %v7254, %v7250
      %v7675 = vsel %vm4420, %v7258, %v7674
      %v7676 = vsel %vm4422, %v7262, %v7675
      %v7677 = vsel %vm4424, %v7654, %v7676
      %v7678 = vsel %vm4426, %v7658, %v7677
      %v7679 = vsel %vm4428, %v7662, %v7678
      %v7680 = vsel %vm4430, %v7666, %v7679
      %7681 = vrot.lane.b32.xlu0 %v7673, 96
      %v7682 = vpop.permute.xlu0 %7681
      %7683 = vrot.lane.b32.xlu0 %v7680, 96
      %v7684 = vpop.permute.xlu0 %7683
      %v7687 = vlaneseq
      %v7688 = vshrl.u32 %v7687, 7
      %v7689 = vsub.s32 0, %v7688
      %v7690 = vrot.slane %v7109, %v7689
      %v7691 = vlaneseq
      %v7692 = vshrl.u32 %v7691, 7
      %v7693 = vsub.s32 0, %v7692
      %v7694 = vrot.slane %v7117, %v7693
      %v7695 = vlaneseq
      %v7696 = vshrl.u32 %v7695, 7
      %v7697 = vsub.s32 0, %v7696
      %v7698 = vrot.slane %v7116, %v7697
      %v7699 = vlaneseq
      %v7700 = vshrl.u32 %v7699, 7
      %v7701 = vsub.s32 0, %v7700
      %v7702 = vrot.slane %v7118, %v7701
      %v7703 = vsel %vm4418, %v7306, %v7302
      %v7704 = vsel %vm4420, %v7310, %v7703
      %v7705 = vsel %vm4422, %v7314, %v7704
      %v7706 = vsel %vm4424, %v7318, %v7705
      %v7707 = vsel %vm4426, %v7322, %v7706
      %v7708 = vsel %vm4428, %v7326, %v7707
      %v7709 = vsel %vm4430, %v7330, %v7708
      %v7710 = vsel %vm4418, %v7338, %v7334
      %v7711 = vsel %vm4420, %v7342, %v7710
      %v7712 = vsel %vm4422, %v7346, %v7711
      %v7713 = vsel %vm4424, %v7690, %v7712
      %v7714 = vsel %vm4426, %v7694, %v7713
      %v7715 = vsel %vm4428, %v7698, %v7714
      %v7716 = vsel %vm4430, %v7702, %v7715
      %v7719 = vsel %vm6350, %v7189, %v7278
      %v7720 = vsel %vm6350, %v7196, %v7280
      %v7721 = vsel %vm6368, %v7719, %v7362
      %v7722 = vsel %vm6368, %v7720, %v7364
      %v7723 = vsel %vm6386, %v7721, %v7446
      %v7724 = vsel %vm6386, %v7722, %v7448
      %v7725 = vsel %vm6350, %v7521, %v7610
      %v7726 = vsel %vm6350, %v7528, %v7612
      %v7727 = vsel %vm6368, %v7725, %v7646
      %v7728 = vsel %vm6368, %v7726, %v7648
      %v7729 = vsel %vm6386, %v7727, %v7682
      %v7730 = vsel %vm6386, %v7728, %v7684
      %v7731 = vpack.c.bf16 %v7724, %v7723
      %v7732 = vpack.c.bf16 %v7730, %v7729
      %v7733 = vpack.c.bf16 %v7716, %v7709
      %v7734 = vld [vmem:[%s5] sm:$0xf]
      %v7735 = vld [vmem:[%s5 + $0x4] sm:$0xf]
      %v7736 = vld [vmem:[%s5 + $0x8] sm:$0xf]
      %v7737 = vld [vmem:[%s5 + $0xc] sm:$0xf]
      %v7738 = vld [vmem:[%s5 + $0x10] sm:$0xf]
      %v7739 = vld [vmem:[%s5 + $0x14] sm:$0xf]
      %v7740 = vld [vmem:[%s5 + $0x18] sm:$0xf]
      %v7741 = vld [vmem:[%s5 + $0x1c] sm:$0xf]
      %v7742 = vld [vmem:[%s5 + $0x20] sm:$0xf]
      %v7743 = vld [vmem:[%s5 + $0x24] sm:$0xf]
      %v7744 = vld [vmem:[%s5 + $0x28] sm:$0xf]
      %v7745 = vld [vmem:[%s5 + $0x2c] sm:$0xf]
      %v7746 = vld [vmem:[%s5 + $0x30] sm:$0xf]
      %v7747 = vld [vmem:[%s5 + $0x34] sm:$0xf]
      %v7748 = vld [vmem:[%s5 + $0x38] sm:$0xf]
      %v7749 = vld [vmem:[%s5 + $0x3c] sm:$0xf]
      %v7750 = vld [vmem:[%s5 + $0x40] sm:$0xf]
      %v7751 = vld [vmem:[%s5 + $0x44] sm:$0xf]
      %v7752 = vld [vmem:[%s5 + $0x48] sm:$0xf]
      %v7753 = vld [vmem:[%s5 + $0x4c] sm:$0xf]
      %v7754 = vld [vmem:[%s5 + $0x50] sm:$0xf]
      %v7755 = vld [vmem:[%s5 + $0x54] sm:$0xf]
      %v7756 = vld [vmem:[%s5 + $0x58] sm:$0xf]
      %v7757 = vld [vmem:[%s5 + $0x5c] sm:$0xf]
      %v7758 = vld [vmem:[%s5 + $0x60] sm:$0xf]
      %v7759 = vld [vmem:[%s5 + $0x64] sm:$0xf]
      %v7760 = vld [vmem:[%s5 + $0x68] sm:$0xf]
      %v7761 = vld [vmem:[%s5 + $0x6c] sm:$0xf]
      %v7762 = vld [vmem:[%s5 + $0x70] sm:$0xf]
      %v7763 = vld [vmem:[%s5 + $0x74] sm:$0xf]
      %v7764 = vld [vmem:[%s5 + $0x78] sm:$0xf]
      %v7765 = vld [vmem:[%s5 + $0x7c] sm:$0xf]
      %v7766 = vld [vmem:[%s5 + $0x80] sm:$0xf]
      %v7767 = vld [vmem:[%s5 + $0x84] sm:$0xf]
      %v7768 = vld [vmem:[%s5 + $0x88] sm:$0xf]
      %v7769 = vld [vmem:[%s5 + $0x8c] sm:$0xf]
      %v7770 = vld [vmem:[%s6] sm:$0x1]
      %v7772 = vlaneseq
      %v7773 = vshrl.u32 %v7772, 7
      %v7774 = vsub.s32 0, %v7773
      %v7775 = vrot.slane %v7770, %v7774
      %v7813 = vunpack.c.l.b16 %v7734
      %v7814 = vunpack.c.l.b16 %v7735
      %v7815 = vunpack.c.l.b16 %v7736
      %v7816 = vunpack.c.l.b16 %v7737
      %v7817 = vunpack.c.l.b16 %v7738
      %v7818 = vunpack.c.l.b16 %v7739
      %v7819 = vunpack.c.l.b16 %v7740
      %v7820 = vunpack.c.l.b16 %v7741
      %v7821 = vunpack.c.l.b16 %v7742
      %v7822 = vunpack.c.l.b16 %v7743
      %v7823 = vunpack.c.l.b16 %v7744
      %v7824 = vunpack.c.l.b16 %v7745
      %v7825 = vunpack.c.l.b16 %v7746
      %v7826 = vunpack.c.l.b16 %v7747
      %v7827 = vunpack.c.l.b16 %v7748
      %v7828 = vunpack.c.l.b16 %v7749
      %v7829 = vunpack.c.l.b16 %v7750
      %v7830 = vunpack.c.l.b16 %v7751
      %v7831 = vunpack.c.l.b16 %v7752
      %v7832 = vunpack.c.l.b16 %v7753
      %v7833 = vunpack.c.l.b16 %v7754
      %v7834 = vunpack.c.l.b16 %v7755
      %v7835 = vunpack.c.l.b16 %v7756
      %v7836 = vunpack.c.l.b16 %v7757
      %v7837 = vunpack.c.l.b16 %v7758
      %v7838 = vunpack.c.l.b16 %v7759
      %v7839 = vunpack.c.l.b16 %v7760
      %v7840 = vunpack.c.l.b16 %v7761
      %v7841 = vunpack.c.l.b16 %v7762
      %v7842 = vunpack.c.l.b16 %v7763
      %v7843 = vunpack.c.l.b16 %v7764
      %v7844 = vunpack.c.l.b16 %v7765
      %v7845 = vunpack.c.l.b16 %v7766
      %v7846 = vunpack.c.l.b16 %v7767
      %v7847 = vunpack.c.l.b16 %v7768
      %v7848 = vunpack.c.l.b16 %v7769
      %v7849 = vpack.c.b16 %v7814, %v7813
      %v7850 = vpack.c.b16 %v7816, %v7815
      %v7851 = vpack.c.b16 %v7818, %v7817
      %v7852 = vpack.c.b16 %v7820, %v7819
      %v7853 = vpack.c.b16 %v7822, %v7821
      %v7854 = vpack.c.b16 %v7824, %v7823
      %v7855 = vpack.c.b16 %v7826, %v7825
      %v7856 = vpack.c.b16 %v7828, %v7827
      %v7857 = vpack.c.b16 %v7830, %v7829
      %v7858 = vpack.c.b16 %v7832, %v7831
      %v7859 = vpack.c.b16 %v7834, %v7833
      %v7860 = vpack.c.b16 %v7836, %v7835
      %v7861 = vpack.c.b16 %v7838, %v7837
      %v7862 = vpack.c.b16 %v7840, %v7839
      %v7863 = vpack.c.b16 %v7842, %v7841
      %v7864 = vpack.c.b16 %v7844, %v7843
      %v7865 = vpack.c.b16 %v7846, %v7845
      %v7866 = vpack.c.b16 %v7848, %v7847
      %v7886 = vsel %vm6350, %v7733, 0
      %7888 = vmatprep.subr.bf16.mxu0 0
      %7889 = vmatpush1.bf16.msra.mxu0 %v7849
      %7890 = vmatprep.subr.bf16.mxu0 0
      %7891 = vmatpush1.bf16.msra.mxu0 %v7850
      %7892 = vmatprep.subr.bf16.mxu0 0
      %7893 = vmatpush1.bf16.msra.mxu0 %v7851
      %7894 = vmatprep.subr.bf16.mxu0 0
      %7895 = vmatpush1.bf16.msra.mxu0 %v7852
      %7896 = vmatprep.subr.bf16.mxu0 0
      %7897 = vmatpush1.bf16.msra.mxu0 %v7853
      %7898 = vmatprep.subr.bf16.mxu0 0
      %7899 = vmatpush1.bf16.msra.mxu0 %v7854
      %7900 = vmatprep.subr.bf16.mxu0 0
      %7901 = vmatpush1.bf16.msra.mxu0 %v7855
      %7902 = vmatprep.subr.bf16.mxu0 0
      %7903 = vmatpush1.bf16.msra.mxu0 %v7856
      %7904 = vmatprep.subr.bf16.mxu0 0
      %7905 = vmatpush1.bf16.msra.mxu0 %v7857
      %7906 = vmatprep.subr.bf16.mxu0 0
      %7907 = vmatpush1.bf16.msra.mxu0 %v7858
      %7908 = vmatprep.subr.bf16.mxu0 0
      %7909 = vmatpush1.bf16.msra.mxu0 %v7859
      %7910 = vmatprep.subr.bf16.mxu0 0
      %7911 = vmatpush1.bf16.msra.mxu0 %v7860
      %7912 = vmatprep.subr.bf16.mxu0 0
      %7913 = vmatpush1.bf16.msra.mxu0 %v7861
      %7914 = vmatprep.subr.bf16.mxu0 0
      %7915 = vmatpush1.bf16.msra.mxu0 %v7862
      %7916 = vmatprep.subr.bf16.mxu0 0
      %7917 = vmatpush1.bf16.msra.mxu0 %v7863
      %7918 = vmatprep.subr.bf16.mxu0 0
      %7919 = vmatpush1.bf16.msra.mxu0 %v7864
      %7920 = vmatprep.mubr.bf16.mxu0 %v7732
      %7921 = vmatmul.mubr.bf16.gmra.mrb[0].mxu0 %v7731
      %v7922 = vpop.f32.mrb[0].mxu0
      %v7923 = vadd.f32 %v7775, %v7922
      %v7924 = vpop.f32.mrb[0].mxu0
      %v7925 = vpop.f32.mrb[0].mxu0
      %v7926 = vadd.f32 %v7775, %v7925
      %v7927 = vpop.f32.mrb[0].mxu0
      %7928 = vdwg.mxu0
      %7929 = vmatprep.subr.bf16.mxu0 0
      %7930 = vmatpush1.bf16.msra.mxu0 %v7865
      %7931 = vmatprep.subr.bf16.mxu0 0
      %7932 = vmatpush1.bf16.msra.mxu0 %v7866
      %7933 = vmatprep.subr.bf16.mxu0 0
      %7934 = vmatpush1.bf16.msra.mxu0 0
      %7935 = vmatprep.subr.bf16.mxu0 0
      %7936 = vmatpush1.bf16.msra.mxu0 0
      %7937 = vmatprep.subr.bf16.mxu0 0
      %7938 = vmatpush1.bf16.msra.mxu0 0
      %7939 = vmatprep.subr.bf16.mxu0 0
      %7940 = vmatpush1.bf16.msra.mxu0 0
      %7941 = vmatprep.subr.bf16.mxu0 0
      %7942 = vmatpush1.bf16.msra.mxu0 0
      %7943 = vmatprep.subr.bf16.mxu0 0
      %7944 = vmatpush1.bf16.msra.mxu0 0
      %7945 = vmatprep.subr.bf16.mxu0 0
      %7946 = vmatpush1.bf16.msra.mxu0 0
      %7947 = vmatprep.subr.bf16.mxu0 0
      %7948 = vmatpush1.bf16.msra.mxu0 0
      %7949 = vmatprep.subr.bf16.mxu0 0
      %7950 = vmatpush1.bf16.msra.mxu0 0
      %7951 = vmatprep.subr.bf16.mxu0 0
      %7952 = vmatpush1.bf16.msra.mxu0 0
      %7953 = vmatprep.subr.bf16.mxu0 0
      %7954 = vmatpush1.bf16.msra.mxu0 0
      %7955 = vmatprep.subr.bf16.mxu0 0
      %7956 = vmatpush1.bf16.msra.mxu0 0
      %7957 = vmatprep.subr.bf16.mxu0 0
      %7958 = vmatpush1.bf16.msra.mxu0 0
      %7959 = vmatprep.subr.bf16.mxu0 0
      %7960 = vmatpush1.bf16.msra.mxu0 0
      %7961 = vmatprep.mubr.bf16.mxu0 0
      %7962 = vmatmul.mubr.bf16.gmra.mrb[0].mxu0 %v7886
      %v7963 = vpop.f32.mrb[0].mxu0
      %v7964 = vadd.f32 %v7923, %v7963
      %v7965 = vpop.f32.mrb[0].mxu0
      %v7966 = vpop.f32.mrb[0].mxu0
      %v7967 = vadd.f32 %v7926, %v7966
      %v7968 = vpop.f32.mrb[0].mxu0
      %7969 = vdwg.mxu0
      %v7970 = vmax.f32 %v7964, 0.0
      %v7971 = vmax.f32 %v7967, 0.0
      %v7974 = vcombine.high %v7970, %v7970
      %v7975 = vcombine.high %v7971, %v7971
      %vm7978 = vcmask 259072
      %7979 = vst.msk [vmem:[#allocation5] sm:$0x3f] %vm7978, 0.0
      %7980 = vst.msk [vmem:[#allocation5 + $0x8] sm:$0x3f] %vm7978, 0.0
      %7981 = vst.msk [vmem:[#allocation5 + $0x10] sm:$0x3f] %vm7978, 0.0
      %7982 = vst.msk [vmem:[#allocation5 + $0x18] sm:$0x3f] %vm7978, 0.0
      %7983 = vst.msk [vmem:[#allocation5 + $0x20] sm:$0x3f] %vm7978, 0.0
      %7984 = vst.msk [vmem:[#allocation5 + $0x28] sm:$0x3f] %vm7978, 0.0
      %s7985 = scalar_lea.vmem [#allocation5], 8
      %vm7986 = vcmask 257024
      %7987 = vst.msk [vmem:[%s7985 + $0x1] sm:$0xf] %vm7986, %v7970
      %7988 = vst.msk [vmem:[%s7985 + $0x9] sm:$0xf] %vm7986, %v7974
      %7989 = vst.msk [vmem:[%s7985 + $0x11] sm:$0xf] %vm7986, %v7971
      %7990 = vst.msk [vmem:[%s7985 + $0x19] sm:$0xf] %vm7986, %v7975
      %v7991 = vld [vmem:[#allocation4] sm:$0xff]
      %v7992 = vld [vmem:[#allocation4 + $0x10] sm:$0xff]
      %v7993 = vld [vmem:[#allocation4 + $0x20] sm:$0xff]
      %v7994 = vld [vmem:[#allocation4 + $0x30] sm:$0xff]
      %v7995 = vld [vmem:[#allocation4 + $0x40] sm:$0xff]
      %v7996 = vld [vmem:[#allocation4 + $0x50] sm:$0xff]
      %v7997 = vld [vmem:[#allocation4 + $0x60] sm:$0xff]
      %v7998 = vld [vmem:[#allocation4 + $0x70] sm:$0xff]
      %v7999 = vld [vmem:[#allocation4 + $0x80] sm:$0xff]
      %v8000 = vld [vmem:[#allocation4 + $0x90] sm:$0xff]
      %v8001 = vld [vmem:[#allocation4 + $0x1] sm:$0xff]
      %v8002 = vld [vmem:[#allocation4 + $0x11] sm:$0xff]
      %v8003 = vld [vmem:[#allocation4 + $0x21] sm:$0xff]
      %v8004 = vld [vmem:[#allocation4 + $0x31] sm:$0xff]
      %v8005 = vld [vmem:[#allocation4 + $0x41] sm:$0xff]
      %v8006 = vld [vmem:[#allocation4 + $0x51] sm:$0xff]
      %v8007 = vld [vmem:[#allocation4 + $0x61] sm:$0xff]
      %v8008 = vld [vmem:[#allocation4 + $0x71] sm:$0xff]
      %v8009 = vld [vmem:[#allocation4 + $0x81] sm:$0xff]
      %v8010 = vld [vmem:[#allocation4 + $0x91] sm:$0xff]
      %v8011 = vld [vmem:[#allocation4 + $0x2] sm:$0xff]
      %v8012 = vld [vmem:[#allocation4 + $0x12] sm:$0xff]
      %v8013 = vld [vmem:[#allocation4 + $0x22] sm:$0xff]
      %v8014 = vld [vmem:[#allocation4 + $0x32] sm:$0xff]
      %v8015 = vld [vmem:[#allocation4 + $0x42] sm:$0xff]
      %v8016 = vld [vmem:[#allocation4 + $0x52] sm:$0xff]
      %v8017 = vld [vmem:[#allocation4 + $0x62] sm:$0xff]
      %v8018 = vld [vmem:[#allocation4 + $0x72] sm:$0xff]
      %v8019 = vld [vmem:[#allocation4 + $0x82] sm:$0xff]
      %v8020 = vld [vmem:[#allocation4 + $0x92] sm:$0xff]
      %8029 = vrot.lane.b32.xlu0 %v8001, 32
      %v8030 = vpop.permute.xlu0 %8029
      %8031 = vrot.lane.b32.xlu0 %v8002, 32
      %v8032 = vpop.permute.xlu0 %8031
      %8033 = vrot.lane.b32.xlu0 %v8003, 32
      %v8034 = vpop.permute.xlu0 %8033
      %8035 = vrot.lane.b32.xlu0 %v8004, 32
      %v8036 = vpop.permute.xlu0 %8035
      %8037 = vrot.lane.b32.xlu0 %v8005, 32
      %v8038 = vpop.permute.xlu0 %8037
      %8039 = vrot.lane.b32.xlu0 %v8006, 32
      %v8040 = vpop.permute.xlu0 %8039
      %8041 = vrot.lane.b32.xlu0 %v8007, 32
      %v8042 = vpop.permute.xlu0 %8041
      %8043 = vrot.lane.b32.xlu0 %v8008, 32
      %v8044 = vpop.permute.xlu0 %8043
      %8061 = vrot.lane.b32.xlu0 %v8011, 64
      %v8062 = vpop.permute.xlu0 %8061
      %8063 = vrot.lane.b32.xlu0 %v8012, 64
      %v8064 = vpop.permute.xlu0 %8063
      %8065 = vrot.lane.b32.xlu0 %v8013, 64
      %v8066 = vpop.permute.xlu0 %8065
      %8067 = vrot.lane.b32.xlu0 %v8014, 64
      %v8068 = vpop.permute.xlu0 %8067
      %8069 = vrot.lane.b32.xlu0 %v8015, 64
      %v8070 = vpop.permute.xlu0 %8069
      %8071 = vrot.lane.b32.xlu0 %v8016, 64
      %v8072 = vpop.permute.xlu0 %8071
      %8073 = vrot.lane.b32.xlu0 %v8017, 64
      %v8074 = vpop.permute.xlu0 %8073
      %8075 = vrot.lane.b32.xlu0 %v8018, 64
      %v8076 = vpop.permute.xlu0 %8075
      %8093 = vrot.lane.b32.xlu0 %v7992, 96
      %v8094 = vpop.permute.xlu0 %8093
      %8095 = vrot.lane.b32.xlu0 %v7993, 96
      %v8096 = vpop.permute.xlu0 %8095
      %8097 = vrot.lane.b32.xlu0 %v7994, 96
      %v8098 = vpop.permute.xlu0 %8097
      %8099 = vrot.lane.b32.xlu0 %v7995, 96
      %v8100 = vpop.permute.xlu0 %8099
      %8101 = vrot.lane.b32.xlu0 %v7996, 96
      %v8102 = vpop.permute.xlu0 %8101
      %8103 = vrot.lane.b32.xlu0 %v7997, 96
      %v8104 = vpop.permute.xlu0 %8103
      %8105 = vrot.lane.b32.xlu0 %v7998, 96
      %v8106 = vpop.permute.xlu0 %8105
      %8107 = vrot.lane.b32.xlu0 %v7999, 96
      %v8108 = vpop.permute.xlu0 %8107
      %8118 = vrot.lane.b32.xlu0 %v8012, 32
      %v8119 = vpop.permute.xlu0 %8118
      %8120 = vrot.lane.b32.xlu0 %v8013, 32
      %v8121 = vpop.permute.xlu0 %8120
      %8122 = vrot.lane.b32.xlu0 %v8014, 32
      %v8123 = vpop.permute.xlu0 %8122
      %8124 = vrot.lane.b32.xlu0 %v8015, 32
      %v8125 = vpop.permute.xlu0 %8124
      %8126 = vrot.lane.b32.xlu0 %v8016, 32
      %v8127 = vpop.permute.xlu0 %8126
      %8128 = vrot.lane.b32.xlu0 %v8017, 32
      %v8129 = vpop.permute.xlu0 %8128
      %8130 = vrot.lane.b32.xlu0 %v8018, 32
      %v8131 = vpop.permute.xlu0 %8130
      %8132 = vrot.lane.b32.xlu0 %v8019, 32
      %v8133 = vpop.permute.xlu0 %8132
      %8143 = vrot.lane.b32.xlu0 %v7993, 64
      %v8144 = vpop.permute.xlu0 %8143
      %8145 = vrot.lane.b32.xlu0 %v7994, 64
      %v8146 = vpop.permute.xlu0 %8145
      %8147 = vrot.lane.b32.xlu0 %v7995, 64
      %v8148 = vpop.permute.xlu0 %8147
      %8149 = vrot.lane.b32.xlu0 %v7996, 64
      %v8150 = vpop.permute.xlu0 %8149
      %8151 = vrot.lane.b32.xlu0 %v7997, 64
      %v8152 = vpop.permute.xlu0 %8151
      %8153 = vrot.lane.b32.xlu0 %v7998, 64
      %v8154 = vpop.permute.xlu0 %8153
      %8155 = vrot.lane.b32.xlu0 %v7999, 64
      %v8156 = vpop.permute.xlu0 %8155
      %8157 = vrot.lane.b32.xlu0 %v8000, 64
      %v8158 = vpop.permute.xlu0 %8157
      %8169 = vrot.lane.b32.xlu0 %v8003, 96
      %v8170 = vpop.permute.xlu0 %8169
      %8171 = vrot.lane.b32.xlu0 %v8004, 96
      %v8172 = vpop.permute.xlu0 %8171
      %8173 = vrot.lane.b32.xlu0 %v8005, 96
      %v8174 = vpop.permute.xlu0 %8173
      %8175 = vrot.lane.b32.xlu0 %v8006, 96
      %v8176 = vpop.permute.xlu0 %8175
      %8177 = vrot.lane.b32.xlu0 %v8007, 96
      %v8178 = vpop.permute.xlu0 %8177
      %8179 = vrot.lane.b32.xlu0 %v8008, 96
      %v8180 = vpop.permute.xlu0 %8179
      %8181 = vrot.lane.b32.xlu0 %v8009, 96
      %v8182 = vpop.permute.xlu0 %8181
      %8183 = vrot.lane.b32.xlu0 %v8010, 96
      %v8184 = vpop.permute.xlu0 %8183
      %v8193 = vsel %vm6350, %v7991, %v8030
      %v8194 = vsel %vm6350, %v7992, %v8032
      %v8195 = vsel %vm6350, %v7993, %v8034
      %v8196 = vsel %vm6350, %v7994, %v8036
      %v8197 = vsel %vm6350, %v7995, %v8038
      %v8198 = vsel %vm6350, %v7996, %v8040
      %v8199 = vsel %vm6350, %v7997, %v8042
      %v8200 = vsel %vm6350, %v7998, %v8044
      %v8201 = vsel %vm6368, %v8193, %v8062
      %v8202 = vsel %vm6368, %v8194, %v8064
      %v8203 = vsel %vm6368, %v8195, %v8066
      %v8204 = vsel %vm6368, %v8196, %v8068
      %v8205 = vsel %vm6368, %v8197, %v8070
      %v8206 = vsel %vm6368, %v8198, %v8072
      %v8207 = vsel %vm6368, %v8199, %v8074
      %v8208 = vsel %vm6368, %v8200, %v8076
      %v8209 = vsel %vm6386, %v8201, %v8094
      %v8210 = vsel %vm6386, %v8202, %v8096
      %v8211 = vsel %vm6386, %v8203, %v8098
      %v8212 = vsel %vm6386, %v8204, %v8100
      %v8213 = vsel %vm6386, %v8205, %v8102
      %v8214 = vsel %vm6386, %v8206, %v8104
      %v8215 = vsel %vm6386, %v8207, %v8106
      %v8216 = vsel %vm6386, %v8208, %v8108
      %v8217 = vsel %vm6350, %v8002, %v8119
      %v8218 = vsel %vm6350, %v8003, %v8121
      %v8219 = vsel %vm6350, %v8004, %v8123
      %v8220 = vsel %vm6350, %v8005, %v8125
      %v8221 = vsel %vm6350, %v8006, %v8127
      %v8222 = vsel %vm6350, %v8007, %v8129
      %v8223 = vsel %vm6350, %v8008, %v8131
      %v8224 = vsel %vm6350, %v8009, %v8133
      %v8225 = vsel %vm6368, %v8217, %v8144
      %v8226 = vsel %vm6368, %v8218, %v8146
      %v8227 = vsel %vm6368, %v8219, %v8148
      %v8228 = vsel %vm6368, %v8220, %v8150
      %v8229 = vsel %vm6368, %v8221, %v8152
      %v8230 = vsel %vm6368, %v8222, %v8154
      %v8231 = vsel %vm6368, %v8223, %v8156
      %v8232 = vsel %vm6368, %v8224, %v8158
      %v8233 = vsel %vm6386, %v8225, %v8170
      %v8234 = vsel %vm6386, %v8226, %v8172
      %v8235 = vsel %vm6386, %v8227, %v8174
      %v8236 = vsel %vm6386, %v8228, %v8176
      %v8237 = vsel %vm6386, %v8229, %v8178
      %v8238 = vsel %vm6386, %v8230, %v8180
      %v8239 = vsel %vm6386, %v8231, %v8182
      %v8240 = vsel %vm6386, %v8232, %v8184
      %v8241 = vpack.c.bf16 %v8210, %v8209
      %v8242 = vpack.c.bf16 %v8234, %v8233
      %v8243 = vpack.c.bf16 %v8014, %v8013
      %v8244 = vpack.c.bf16 %v8212, %v8211
      %v8245 = vpack.c.bf16 %v8236, %v8235
      %v8246 = vpack.c.bf16 %v8016, %v8015
      %v8247 = vpack.c.bf16 %v8214, %v8213
      %v8248 = vpack.c.bf16 %v8238, %v8237
      %v8249 = vpack.c.bf16 %v8018, %v8017
      %v8250 = vpack.c.bf16 %v8216, %v8215
      %v8251 = vpack.c.bf16 %v8240, %v8239
      %v8252 = vpack.c.bf16 %v8020, %v8019
      %v8253 = vld [vmem:[%s7] sm:$0xf]
      %v8254 = vld [vmem:[%s7 + $0x4] sm:$0xf]
      %v8255 = vld [vmem:[%s7 + $0x8] sm:$0xf]
      %v8256 = vld [vmem:[%s7 + $0xc] sm:$0xf]
      %v8257 = vld [vmem:[%s7 + $0x10] sm:$0xf]
      %v8258 = vld [vmem:[%s7 + $0x14] sm:$0xf]
      %v8259 = vld [vmem:[%s7 + $0x18] sm:$0xf]
      %v8260 = vld [vmem:[%s7 + $0x1c] sm:$0xf]
      %v8261 = vld [vmem:[%s7 + $0x20] sm:$0xf]
      %v8262 = vld [vmem:[%s7 + $0x24] sm:$0xf]
      %v8263 = vld [vmem:[%s7 + $0x28] sm:$0xf]
      %v8264 = vld [vmem:[%s7 + $0x2c] sm:$0xf]
      %v8265 = vld [vmem:[%s7 + $0x30] sm:$0xf]
      %v8266 = vld [vmem:[%s7 + $0x34] sm:$0xf]
      %v8267 = vld [vmem:[%s7 + $0x38] sm:$0xf]
      %v8268 = vld [vmem:[%s7 + $0x3c] sm:$0xf]
      %v8269 = vld [vmem:[%s7 + $0x40] sm:$0xf]
      %v8270 = vld [vmem:[%s7 + $0x44] sm:$0xf]
      %v8271 = vld [vmem:[%s7 + $0x48] sm:$0xf]
      %v8272 = vld [vmem:[%s7 + $0x4c] sm:$0xf]
      %v8273 = vld [vmem:[%s7 + $0x50] sm:$0xf]
      %v8274 = vld [vmem:[%s7 + $0x54] sm:$0xf]
      %v8275 = vld [vmem:[%s7 + $0x58] sm:$0xf]
      %v8276 = vld [vmem:[%s7 + $0x5c] sm:$0xf]
      %v8277 = vld [vmem:[%s7 + $0x60] sm:$0xf]
      %v8278 = vld [vmem:[%s7 + $0x64] sm:$0xf]
      %v8279 = vld [vmem:[%s7 + $0x68] sm:$0xf]
      %v8280 = vld [vmem:[%s7 + $0x6c] sm:$0xf]
      %v8281 = vld [vmem:[%s7 + $0x70] sm:$0xf]
      %v8282 = vld [vmem:[%s7 + $0x74] sm:$0xf]
      %v8283 = vld [vmem:[%s7 + $0x78] sm:$0xf]
      %v8284 = vld [vmem:[%s7 + $0x7c] sm:$0xf]
      %v8285 = vld [vmem:[%s7 + $0x80] sm:$0xf]
      %v8286 = vld [vmem:[%s7 + $0x84] sm:$0xf]
      %v8287 = vld [vmem:[%s7 + $0x88] sm:$0xf]
      %v8288 = vld [vmem:[%s7 + $0x8c] sm:$0xf]
      %v8289 = vld [vmem:[%s8] sm:$0x1]
      %v8291 = vlaneseq
      %v8292 = vshrl.u32 %v8291, 7
      %v8293 = vsub.s32 0, %v8292
      %v8294 = vrot.slane %v8289, %v8293
      %v8332 = vunpack.c.l.b16 %v8253
      %v8333 = vunpack.c.l.b16 %v8254
      %v8334 = vunpack.c.l.b16 %v8255
      %v8335 = vunpack.c.l.b16 %v8256
      %v8336 = vunpack.c.l.b16 %v8257
      %v8337 = vunpack.c.l.b16 %v8258
      %v8338 = vunpack.c.l.b16 %v8259
      %v8339 = vunpack.c.l.b16 %v8260
      %v8340 = vunpack.c.l.b16 %v8261
      %v8341 = vunpack.c.l.b16 %v8262
      %v8342 = vunpack.c.l.b16 %v8263
      %v8343 = vunpack.c.l.b16 %v8264
      %v8344 = vunpack.c.l.b16 %v8265
      %v8345 = vunpack.c.l.b16 %v8266
      %v8346 = vunpack.c.l.b16 %v8267
      %v8347 = vunpack.c.l.b16 %v8268
      %v8348 = vunpack.c.l.b16 %v8269
      %v8349 = vunpack.c.l.b16 %v8270
      %v8350 = vunpack.c.l.b16 %v8271
      %v8351 = vunpack.c.l.b16 %v8272
      %v8352 = vunpack.c.l.b16 %v8273
      %v8353 = vunpack.c.l.b16 %v8274
      %v8354 = vunpack.c.l.b16 %v8275
      %v8355 = vunpack.c.l.b16 %v8276
      %v8356 = vunpack.c.l.b16 %v8277
      %v8357 = vunpack.c.l.b16 %v8278
      %v8358 = vunpack.c.l.b16 %v8279
      %v8359 = vunpack.c.l.b16 %v8280
      %v8360 = vunpack.c.l.b16 %v8281
      %v8361 = vunpack.c.l.b16 %v8282
      %v8362 = vunpack.c.l.b16 %v8283
      %v8363 = vunpack.c.l.b16 %v8284
      %v8364 = vunpack.c.l.b16 %v8285
      %v8365 = vunpack.c.l.b16 %v8286
      %v8366 = vunpack.c.l.b16 %v8287
      %v8367 = vunpack.c.l.b16 %v8288
      %v8368 = vpack.c.b16 %v8333, %v8332
      %v8369 = vpack.c.b16 %v8335, %v8334
      %v8370 = vpack.c.b16 %v8337, %v8336
      %v8371 = vpack.c.b16 %v8339, %v8338
      %v8372 = vpack.c.b16 %v8341, %v8340
      %v8373 = vpack.c.b16 %v8343, %v8342
      %v8374 = vpack.c.b16 %v8345, %v8344
      %v8375 = vpack.c.b16 %v8347, %v8346
      %v8376 = vpack.c.b16 %v8349, %v8348
      %v8377 = vpack.c.b16 %v8351, %v8350
      %v8378 = vpack.c.b16 %v8353, %v8352
      %v8379 = vpack.c.b16 %v8355, %v8354
      %v8380 = vpack.c.b16 %v8357, %v8356
      %v8381 = vpack.c.b16 %v8359, %v8358
      %v8382 = vpack.c.b16 %v8361, %v8360
      %v8383 = vpack.c.b16 %v8363, %v8362
      %v8384 = vpack.c.b16 %v8365, %v8364
      %v8385 = vpack.c.b16 %v8367, %v8366
      %v8405 = vsel %vm6350, %v8243, 0
      %v8408 = vsel %vm6350, %v8246, 0
      %v8411 = vsel %vm6350, %v8249, 0
      %v8414 = vsel %vm6350, %v8252, 0
      %8416 = vmatprep.subr.bf16.mxu0 0
      %8417 = vmatpush1.bf16.msra.mxu0 %v8368
      %8418 = vmatprep.subr.bf16.mxu0 0
      %8419 = vmatpush1.bf16.msra.mxu0 %v8369
      %8420 = vmatprep.subr.bf16.mxu0 0
      %8421 = vmatpush1.bf16.msra.mxu0 %v8370
      %8422 = vmatprep.subr.bf16.mxu0 0
      %8423 = vmatpush1.bf16.msra.mxu0 %v8371
      %8424 = vmatprep.subr.bf16.mxu0 0
      %8425 = vmatpush1.bf16.msra.mxu0 %v8372
      %8426 = vmatprep.subr.bf16.mxu0 0
      %8427 = vmatpush1.bf16.msra.mxu0 %v8373
      %8428 = vmatprep.subr.bf16.mxu0 0
      %8429 = vmatpush1.bf16.msra.mxu0 %v8374
      %8430 = vmatprep.subr.bf16.mxu0 0
      %8431 = vmatpush1.bf16.msra.mxu0 %v8375
      %8432 = vmatprep.subr.bf16.mxu0 0
      %8433 = vmatpush1.bf16.msra.mxu0 %v8376
      %8434 = vmatprep.subr.bf16.mxu0 0
      %8435 = vmatpush1.bf16.msra.mxu0 %v8377
      %8436 = vmatprep.subr.bf16.mxu0 0
      %8437 = vmatpush1.bf16.msra.mxu0 %v8378
      %8438 = vmatprep.subr.bf16.mxu0 0
      %8439 = vmatpush1.bf16.msra.mxu0 %v8379
      %8440 = vmatprep.subr.bf16.mxu0 0
      %8441 = vmatpush1.bf16.msra.mxu0 %v8380
      %8442 = vmatprep.subr.bf16.mxu0 0
      %8443 = vmatpush1.bf16.msra.mxu0 %v8381
      %8444 = vmatprep.subr.bf16.mxu0 0
      %8445 = vmatpush1.bf16.msra.mxu0 %v8382
      %8446 = vmatprep.subr.bf16.mxu0 0
      %8447 = vmatpush1.bf16.msra.mxu0 %v8383
      %8448 = vmatprep.mubr.bf16.mxu0 %v8242
      %8449 = vmatmul.mubr.bf16.gmra.mrb[0].mxu0 %v8241
      %v8450 = vpop.f32.mrb[0].mxu0
      %v8451 = vadd.f32 %v8294, %v8450
      %v8452 = vpop.f32.mrb[0].mxu0
      %v8453 = vpop.f32.mrb[0].mxu0
      %v8454 = vadd.f32 %v8294, %v8453
      %v8455 = vpop.f32.mrb[0].mxu0
      %8456 = vmatprep.mubr.bf16.mxu0 %v8245
      %8457 = vmatmul.mubr.bf16.gmra.mrb[0].mxu0 %v8244
      %v8458 = vpop.f32.mrb[0].mxu0
      %v8459 = vadd.f32 %v8294, %v8458
      %v8460 = vpop.f32.mrb[0].mxu0
      %v8461 = vpop.f32.mrb[0].mxu0
      %v8462 = vadd.f32 %v8294, %v8461
      %v8463 = vpop.f32.mrb[0].mxu0
      %8464 = vmatprep.mubr.bf16.mxu0 %v8248
      %8465 = vmatmul.mubr.bf16.gmra.mrb[0].mxu0 %v8247
      %v8466 = vpop.f32.mrb[0].mxu0
      %v8467 = vadd.f32 %v8294, %v8466
      %v8468 = vpop.f32.mrb[0].mxu0
      %v8469 = vpop.f32.mrb[0].mxu0
      %v8470 = vadd.f32 %v8294, %v8469
      %v8471 = vpop.f32.mrb[0].mxu0
      %8472 = vmatprep.mubr.bf16.mxu0 %v8251
      %8473 = vmatmul.mubr.bf16.gmra.mrb[0].mxu0 %v8250
      %v8474 = vpop.f32.mrb[0].mxu0
      %v8475 = vadd.f32 %v8294, %v8474
      %v8476 = vpop.f32.mrb[0].mxu0
      %v8477 = vpop.f32.mrb[0].mxu0
      %v8478 = vadd.f32 %v8294, %v8477
      %v8479 = vpop.f32.mrb[0].mxu0
      %8480 = vdwg.mxu0
      %8481 = vmatprep.subr.bf16.mxu0 0
      %8482 = vmatpush1.bf16.msra.mxu0 %v8384
      %8483 = vmatprep.subr.bf16.mxu0 0
      %8484 = vmatpush1.bf16.msra.mxu0 %v8385
      %8485 = vmatprep.subr.bf16.mxu0 0
      %8486 = vmatpush1.bf16.msra.mxu0 0
      %8487 = vmatprep.subr.bf16.mxu0 0
      %8488 = vmatpush1.bf16.msra.mxu0 0
      %8489 = vmatprep.subr.bf16.mxu0 0
      %8490 = vmatpush1.bf16.msra.mxu0 0
      %8491 = vmatprep.subr.bf16.mxu0 0
      %8492 = vmatpush1.bf16.msra.mxu0 0
      %8493 = vmatprep.subr.bf16.mxu0 0
      %8494 = vmatpush1.bf16.msra.mxu0 0
      %8495 = vmatprep.subr.bf16.mxu0 0
      %8496 = vmatpush1.bf16.msra.mxu0 0
      %8497 = vmatprep.subr.bf16.mxu0 0
      %8498 = vmatpush1.bf16.msra.mxu0 0
      %8499 = vmatprep.subr.bf16.mxu0 0
      %8500 = vmatpush1.bf16.msra.mxu0 0
      %8501 = vmatprep.subr.bf16.mxu0 0
      %8502 = vmatpush1.bf16.msra.mxu0 0
      %8503 = vmatprep.subr.bf16.mxu0 0
      %8504 = vmatpush1.bf16.msra.mxu0 0
      %8505 = vmatprep.subr.bf16.mxu0 0
      %8506 = vmatpush1.bf16.msra.mxu0 0
      %8507 = vmatprep.subr.bf16.mxu0 0
      %8508 = vmatpush1.bf16.msra.mxu0 0
      %8509 = vmatprep.subr.bf16.mxu0 0
      %8510 = vmatpush1.bf16.msra.mxu0 0
      %8511 = vmatprep.subr.bf16.mxu0 0
      %8512 = vmatpush1.bf16.msra.mxu0 0
      %8513 = vmatprep.mubr.bf16.mxu0 0
      %8514 = vmatmul.mubr.bf16.gmra.mrb[0].mxu0 %v8405
      %v8515 = vpop.f32.mrb[0].mxu0
      %v8516 = vadd.f32 %v8451, %v8515
      %v8517 = vpop.f32.mrb[0].mxu0
      %v8518 = vpop.f32.mrb[0].mxu0
      %v8519 = vadd.f32 %v8454, %v8518
      %v8520 = vpop.f32.mrb[0].mxu0
      %8521 = vmatprep.mubr.bf16.mxu0 0
      %8522 = vmatmul.mubr.bf16.gmra.mrb[0].mxu0 %v8408
      %v8523 = vpop.f32.mrb[0].mxu0
      %v8524 = vadd.f32 %v8459, %v8523
      %v8525 = vpop.f32.mrb[0].mxu0
      %v8526 = vpop.f32.mrb[0].mxu0
      %v8527 = vadd.f32 %v8462, %v8526
      %v8528 = vpop.f32.mrb[0].mxu0
      %8529 = vmatprep.mubr.bf16.mxu0 0
      %8530 = vmatmul.mubr.bf16.gmra.mrb[0].mxu0 %v8411
      %v8531 = vpop.f32.mrb[0].mxu0
      %v8532 = vadd.f32 %v8467, %v8531
      %v8533 = vpop.f32.mrb[0].mxu0
      %v8534 = vpop.f32.mrb[0].mxu0
      %v8535 = vadd.f32 %v8470, %v8534
      %v8536 = vpop.f32.mrb[0].mxu0
      %8537 = vmatprep.mubr.bf16.mxu0 0
      %8538 = vmatmul.mubr.bf16.gmra.mrb[0].mxu0 %v8414
      %v8539 = vpop.f32.mrb[0].mxu0
      %v8540 = vadd.f32 %v8475, %v8539
      %v8541 = vpop.f32.mrb[0].mxu0
      %v8542 = vpop.f32.mrb[0].mxu0
      %v8543 = vadd.f32 %v8478, %v8542
      %v8544 = vpop.f32.mrb[0].mxu0
      %8545 = vdwg.mxu0
      %v8546 = vld [vmem:[#allocation5] sm:$0xf]
      %v8547 = vld [vmem:[#allocation5 + $0x8] sm:$0xf]
      %v8548 = vld [vmem:[#allocation5 + $0x10] sm:$0xf]
      %v8549 = vld [vmem:[#allocation5 + $0x18] sm:$0xf]
      %v8550 = vld [vmem:[#allocation5 + $0x20] sm:$0xf]
      %v8551 = vld [vmem:[#allocation5 + $0x28] sm:$0xf]
      %v8552 = vld [vmem:[#allocation5 + $0x1] sm:$0xf]
      %v8553 = vld [vmem:[#allocation5 + $0x9] sm:$0xf]
      %v8554 = vld [vmem:[#allocation5 + $0x11] sm:$0xf]
      %v8555 = vld [vmem:[#allocation5 + $0x19] sm:$0xf]
      %v8556 = vld [vmem:[#allocation5 + $0x21] sm:$0xf]
      %v8557 = vld [vmem:[#allocation5 + $0x29] sm:$0xf]
      %v8558 = vld [vmem:[#allocation5 + $0x2] sm:$0xf]
      %v8559 = vld [vmem:[#allocation5 + $0xa] sm:$0xf]
      %v8560 = vld [vmem:[#allocation5 + $0x12] sm:$0xf]
      %v8561 = vld [vmem:[#allocation5 + $0x1a] sm:$0xf]
      %v8562 = vld [vmem:[#allocation5 + $0x22] sm:$0xf]
      %v8563 = vld [vmem:[#allocation5 + $0x2a] sm:$0xf]
      %v8568 = vcombine.low %v8546, %v8547
      %v8569 = vcombine.low %v8548, %v8549
      %v8576 = vcombine.low %v8552, %v8553
      %v8577 = vcombine.low %v8554, %v8555
      %8578 = vrot.lane.b32.xlu0 %v8576, 32
      %v8579 = vpop.permute.xlu0 %8578
      %8580 = vrot.lane.b32.xlu0 %v8577, 32
      %v8581 = vpop.permute.xlu0 %8580
      %v8588 = vcombine.low %v8558, %v8559
      %v8589 = vcombine.low %v8560, %v8561
      %8590 = vrot.lane.b32.xlu0 %v8588, 64
      %v8591 = vpop.permute.xlu0 %8590
      %8592 = vrot.lane.b32.xlu0 %v8589, 64
      %v8593 = vpop.permute.xlu0 %8592
      %v8597 = vcombine.low %v8547, %v8548
      %v8598 = vcombine.low %v8549, %v8550
      %8599 = vrot.lane.b32.xlu0 %v8597, 96
      %v8600 = vpop.permute.xlu0 %8599
      %8601 = vrot.lane.b32.xlu0 %v8598, 96
      %v8602 = vpop.permute.xlu0 %8601
      %v8606 = vcombine.low %v8553, %v8554
      %v8607 = vcombine.low %v8555, %v8556
      %v8611 = vcombine.low %v8559, %v8560
      %v8612 = vcombine.low %v8561, %v8562
      %8613 = vrot.lane.b32.xlu0 %v8611, 32
      %v8614 = vpop.permute.xlu0 %8613
      %8615 = vrot.lane.b32.xlu0 %v8612, 32
      %v8616 = vpop.permute.xlu0 %8615
      %v8620 = vcombine.low %v8550, %v8551
      %8621 = vrot.lane.b32.xlu0 %v8569, 64
      %v8622 = vpop.permute.xlu0 %8621
      %8623 = vrot.lane.b32.xlu0 %v8620, 64
      %v8624 = vpop.permute.xlu0 %8623
      %v8628 = vcombine.low %v8556, %v8557
      %8629 = vrot.lane.b32.xlu0 %v8577, 96
      %v8630 = vpop.permute.xlu0 %8629
      %8631 = vrot.lane.b32.xlu0 %v8628, 96
      %v8632 = vpop.permute.xlu0 %8631
      %v8636 = vcombine.low %v8562, %v8563
      %v8639 = vsel %vm6350, %v8568, %v8579
      %v8640 = vsel %vm6350, %v8569, %v8581
      %v8641 = vsel %vm6368, %v8639, %v8591
      %v8642 = vsel %vm6368, %v8640, %v8593
      %v8643 = vsel %vm6386, %v8641, %v8600
      %v8644 = vsel %vm6386, %v8642, %v8602
      %v8645 = vsel %vm6350, %v8606, %v8614
      %v8646 = vsel %vm6350, %v8607, %v8616
      %v8647 = vsel %vm6368, %v8645, %v8622
      %v8648 = vsel %vm6368, %v8646, %v8624
      %v8649 = vsel %vm6386, %v8647, %v8630
      %v8650 = vsel %vm6386, %v8648, %v8632
      %v8651 = vpack.c.bf16 %v8644, %v8643
      %v8652 = vpack.c.bf16 %v8650, %v8649
      %v8653 = vpack.c.bf16 %v8636, %v8589
      %v8654 = vld [vmem:[%s9] sm:$0xf]
      %v8655 = vld [vmem:[%s9 + $0x4] sm:$0xf]
      %v8656 = vld [vmem:[%s9 + $0x8] sm:$0xf]
      %v8657 = vld [vmem:[%s9 + $0xc] sm:$0xf]
      %v8658 = vld [vmem:[%s9 + $0x10] sm:$0xf]
      %v8659 = vld [vmem:[%s9 + $0x14] sm:$0xf]
      %v8660 = vld [vmem:[%s9 + $0x18] sm:$0xf]
      %v8661 = vld [vmem:[%s9 + $0x1c] sm:$0xf]
      %v8662 = vld [vmem:[%s9 + $0x20] sm:$0xf]
      %v8663 = vld [vmem:[%s9 + $0x24] sm:$0xf]
      %v8664 = vld [vmem:[%s9 + $0x28] sm:$0xf]
      %v8665 = vld [vmem:[%s9 + $0x2c] sm:$0xf]
      %v8666 = vld [vmem:[%s9 + $0x30] sm:$0xf]
      %v8667 = vld [vmem:[%s9 + $0x34] sm:$0xf]
      %v8668 = vld [vmem:[%s9 + $0x38] sm:$0xf]
      %v8669 = vld [vmem:[%s9 + $0x3c] sm:$0xf]
      %v8670 = vld [vmem:[%s9 + $0x40] sm:$0xf]
      %v8671 = vld [vmem:[%s9 + $0x44] sm:$0xf]
      %v8672 = vld [vmem:[%s9 + $0x48] sm:$0xf]
      %v8673 = vld [vmem:[%s9 + $0x4c] sm:$0xf]
      %v8674 = vld [vmem:[%s9 + $0x50] sm:$0xf]
      %v8675 = vld [vmem:[%s9 + $0x54] sm:$0xf]
      %v8676 = vld [vmem:[%s9 + $0x58] sm:$0xf]
      %v8677 = vld [vmem:[%s9 + $0x5c] sm:$0xf]
      %v8678 = vld [vmem:[%s9 + $0x60] sm:$0xf]
      %v8679 = vld [vmem:[%s9 + $0x64] sm:$0xf]
      %v8680 = vld [vmem:[%s9 + $0x68] sm:$0xf]
      %v8681 = vld [vmem:[%s9 + $0x6c] sm:$0xf]
      %v8682 = vld [vmem:[%s9 + $0x70] sm:$0xf]
      %v8683 = vld [vmem:[%s9 + $0x74] sm:$0xf]
      %v8684 = vld [vmem:[%s9 + $0x78] sm:$0xf]
      %v8685 = vld [vmem:[%s9 + $0x7c] sm:$0xf]
      %v8686 = vld [vmem:[%s9 + $0x80] sm:$0xf]
      %v8687 = vld [vmem:[%s9 + $0x84] sm:$0xf]
      %v8688 = vld [vmem:[%s9 + $0x88] sm:$0xf]
      %v8689 = vld [vmem:[%s9 + $0x8c] sm:$0xf]
      %v8690 = vld [vmem:[%s10] sm:$0x1]
      %v8692 = vlaneseq
      %v8693 = vshrl.u32 %v8692, 7
      %v8694 = vsub.s32 0, %v8693
      %v8695 = vrot.slane %v8690, %v8694
      %v8733 = vunpack.c.l.b16 %v8654
      %v8734 = vunpack.c.l.b16 %v8655
      %v8735 = vunpack.c.l.b16 %v8656
      %v8736 = vunpack.c.l.b16 %v8657
      %v8737 = vunpack.c.l.b16 %v8658
      %v8738 = vunpack.c.l.b16 %v8659
      %v8739 = vunpack.c.l.b16 %v8660
      %v8740 = vunpack.c.l.b16 %v8661
      %v8741 = vunpack.c.l.b16 %v8662
      %v8742 = vunpack.c.l.b16 %v8663
      %v8743 = vunpack.c.l.b16 %v8664
      %v8744 = vunpack.c.l.b16 %v8665
      %v8745 = vunpack.c.l.b16 %v8666
      %v8746 = vunpack.c.l.b16 %v8667
      %v8747 = vunpack.c.l.b16 %v8668
      %v8748 = vunpack.c.l.b16 %v8669
      %v8749 = vunpack.c.l.b16 %v8670
      %v8750 = vunpack.c.l.b16 %v8671
      %v8751 = vunpack.c.l.b16 %v8672
      %v8752 = vunpack.c.l.b16 %v8673
      %v8753 = vunpack.c.l.b16 %v8674
      %v8754 = vunpack.c.l.b16 %v8675
      %v8755 = vunpack.c.l.b16 %v8676
      %v8756 = vunpack.c.l.b16 %v8677
      %v8757 = vunpack.c.l.b16 %v8678
      %v8758 = vunpack.c.l.b16 %v8679
      %v8759 = vunpack.c.l.b16 %v8680
      %v8760 = vunpack.c.l.b16 %v8681
      %v8761 = vunpack.c.l.b16 %v8682
      %v8762 = vunpack.c.l.b16 %v8683
      %v8763 = vunpack.c.l.b16 %v8684
      %v8764 = vunpack.c.l.b16 %v8685
      %v8765 = vunpack.c.l.b16 %v8686
      %v8766 = vunpack.c.l.b16 %v8687
      %v8767 = vunpack.c.l.b16 %v8688
      %v8768 = vunpack.c.l.b16 %v8689
      %v8769 = vpack.c.b16 %v8734, %v8733
      %v8770 = vpack.c.b16 %v8736, %v8735
      %v8771 = vpack.c.b16 %v8738, %v8737
      %v8772 = vpack.c.b16 %v8740, %v8739
      %v8773 = vpack.c.b16 %v8742, %v8741
      %v8774 = vpack.c.b16 %v8744, %v8743
      %v8775 = vpack.c.b16 %v8746, %v8745
      %v8776 = vpack.c.b16 %v8748, %v8747
      %v8777 = vpack.c.b16 %v8750, %v8749
      %v8778 = vpack.c.b16 %v8752, %v8751
      %v8779 = vpack.c.b16 %v8754, %v8753
      %v8780 = vpack.c.b16 %v8756, %v8755
      %v8781 = vpack.c.b16 %v8758, %v8757
      %v8782 = vpack.c.b16 %v8760, %v8759
      %v8783 = vpack.c.b16 %v8762, %v8761
      %v8784 = vpack.c.b16 %v8764, %v8763
      %v8785 = vpack.c.b16 %v8766, %v8765
      %v8786 = vpack.c.b16 %v8768, %v8767
      %v8806 = vsel %vm6350, %v8653, 0
      %8808 = vmatprep.subr.bf16.mxu0 0
      %8809 = vmatpush1.bf16.msra.mxu0 %v8769
      %8810 = vmatprep.subr.bf16.mxu0 0
      %8811 = vmatpush1.bf16.msra.mxu0 %v8770
      %8812 = vmatprep.subr.bf16.mxu0 0
      %8813 = vmatpush1.bf16.msra.mxu0 %v8771
      %8814 = vmatprep.subr.bf16.mxu0 0
      %8815 = vmatpush1.bf16.msra.mxu0 %v8772
      %8816 = vmatprep.subr.bf16.mxu0 0
      %8817 = vmatpush1.bf16.msra.mxu0 %v8773
      %8818 = vmatprep.subr.bf16.mxu0 0
      %8819 = vmatpush1.bf16.msra.mxu0 %v8774
      %8820 = vmatprep.subr.bf16.mxu0 0
      %8821 = vmatpush1.bf16.msra.mxu0 %v8775
      %8822 = vmatprep.subr.bf16.mxu0 0
      %8823 = vmatpush1.bf16.msra.mxu0 %v8776
      %8824 = vmatprep.subr.bf16.mxu0 0
      %8825 = vmatpush1.bf16.msra.mxu0 %v8777
      %8826 = vmatprep.subr.bf16.mxu0 0
      %8827 = vmatpush1.bf16.msra.mxu0 %v8778
      %8828 = vmatprep.subr.bf16.mxu0 0
      %8829 = vmatpush1.bf16.msra.mxu0 %v8779
      %8830 = vmatprep.subr.bf16.mxu0 0
      %8831 = vmatpush1.bf16.msra.mxu0 %v8780
      %8832 = vmatprep.subr.bf16.mxu0 0
      %8833 = vmatpush1.bf16.msra.mxu0 %v8781
      %8834 = vmatprep.subr.bf16.mxu0 0
      %8835 = vmatpush1.bf16.msra.mxu0 %v8782
      %8836 = vmatprep.subr.bf16.mxu0 0
      %8837 = vmatpush1.bf16.msra.mxu0 %v8783
      %8838 = vmatprep.subr.bf16.mxu0 0
      %8839 = vmatpush1.bf16.msra.mxu0 %v8784
      %8840 = vmatprep.mubr.bf16.mxu0 %v8652
      %8841 = vmatmul.mubr.bf16.gmra.mrb[0].mxu0 %v8651
      %v8842 = vpop.f32.mrb[0].mxu0
      %v8843 = vadd.f32 %v8695, %v8842
      %v8844 = vpop.f32.mrb[0].mxu0
      %v8845 = vpop.f32.mrb[0].mxu0
      %v8846 = vadd.f32 %v8695, %v8845
      %v8847 = vpop.f32.mrb[0].mxu0
      %8848 = vdwg.mxu0
      %8849 = vmatprep.subr.bf16.mxu0 0
      %8850 = vmatpush1.bf16.msra.mxu0 %v8785
      %8851 = vmatprep.subr.bf16.mxu0 0
      %8852 = vmatpush1.bf16.msra.mxu0 %v8786
      %8853 = vmatprep.subr.bf16.mxu0 0
      %8854 = vmatpush1.bf16.msra.mxu0 0
      %8855 = vmatprep.subr.bf16.mxu0 0
      %8856 = vmatpush1.bf16.msra.mxu0 0
      %8857 = vmatprep.subr.bf16.mxu0 0
      %8858 = vmatpush1.bf16.msra.mxu0 0
      %8859 = vmatprep.subr.bf16.mxu0 0
      %8860 = vmatpush1.bf16.msra.mxu0 0
      %8861 = vmatprep.subr.bf16.mxu0 0
      %8862 = vmatpush1.bf16.msra.mxu0 0
      %8863 = vmatprep.subr.bf16.mxu0 0
      %8864 = vmatpush1.bf16.msra.mxu0 0
      %8865 = vmatprep.subr.bf16.mxu0 0
      %8866 = vmatpush1.bf16.msra.mxu0 0
      %8867 = vmatprep.subr.bf16.mxu0 0
      %8868 = vmatpush1.bf16.msra.mxu0 0
      %8869 = vmatprep.subr.bf16.mxu0 0
      %8870 = vmatpush1.bf16.msra.mxu0 0
      %8871 = vmatprep.subr.bf16.mxu0 0
      %8872 = vmatpush1.bf16.msra.mxu0 0
      %8873 = vmatprep.subr.bf16.mxu0 0
      %8874 = vmatpush1.bf16.msra.mxu0 0
      %8875 = vmatprep.subr.bf16.mxu0 0
      %8876 = vmatpush1.bf16.msra.mxu0 0
      %8877 = vmatprep.subr.bf16.mxu0 0
      %8878 = vmatpush1.bf16.msra.mxu0 0
      %8879 = vmatprep.subr.bf16.mxu0 0
      %8880 = vmatpush1.bf16.msra.mxu0 0
      %8881 = vmatprep.mubr.bf16.mxu0 0
      %8882 = vmatmul.mubr.bf16.gmra.mrb[0].mxu0 %v8806
      %v8883 = vpop.f32.mrb[0].mxu0
      %v8884 = vadd.f32 %v8843, %v8883
      %v8885 = vpop.f32.mrb[0].mxu0
      %v8886 = vpop.f32.mrb[0].mxu0
      %v8887 = vadd.f32 %v8846, %v8886
      %v8888 = vpop.f32.mrb[0].mxu0
      %8889 = vdwg.mxu0
      %vm8890 = vcmask 39936
      %v8891 = vsel %vm8890, %v8516, -inf
      %8892 = vmax.xlane.f32.xlu0 %v8891
      %v8893 = vpop.xlane.xlu0 %8892
      %v8894 = vsel %vm8890, %v8519, -inf
      %8895 = vmax.xlane.f32.xlu0 %v8894
      %v8896 = vpop.xlane.xlu0 %8895
      %v8897 = vsel %vm8890, %v8524, -inf
      %8898 = vmax.xlane.f32.xlu0 %v8897
      %v8899 = vpop.xlane.xlu0 %8898
      %v8900 = vsel %vm8890, %v8527, -inf
      %8901 = vmax.xlane.f32.xlu0 %v8900
      %v8902 = vpop.xlane.xlu0 %8901
      %v8903 = vsel %vm8890, %v8532, -inf
      %8904 = vmax.xlane.f32.xlu0 %v8903
      %v8905 = vpop.xlane.xlu0 %8904
      %v8906 = vsel %vm8890, %v8535, -inf
      %8907 = vmax.xlane.f32.xlu0 %v8906
      %v8908 = vpop.xlane.xlu0 %8907
      %v8909 = vsel %vm8890, %v8540, -inf
      %8910 = vmax.xlane.f32.xlu0 %v8909
      %v8911 = vpop.xlane.xlu0 %8910
      %v8912 = vsel %vm8890, %v8543, -inf
      %8913 = vmax.xlane.f32.xlu0 %v8912
      %v8914 = vpop.xlane.xlu0 %8913
      %v8915 = vsub.f32 %v8516, %v8893
      %v8916 = vsub.f32 %v8519, %v8896
      %v8917 = vsub.f32 %v8524, %v8899
      %v8918 = vsub.f32 %v8527, %v8902
      %v8919 = vsub.f32 %v8532, %v8905
      %v8920 = vsub.f32 %v8535, %v8908
      %v8921 = vsub.f32 %v8540, %v8911
      %v8922 = vsub.f32 %v8543, %v8914
      %v8923 = vmul.f32 %v8915, 1.442695
      %v8924 = vpow.pop %v8923
      %v8925 = vmul.f32 %v8916, 1.442695
      %v8926 = vpow.pop %v8925
      %v8927 = vmul.f32 %v8917, 1.442695
      %v8928 = vpow.pop %v8927
      %v8929 = vmul.f32 %v8918, 1.442695
      %v8930 = vpow.pop %v8929
      %v8931 = vmul.f32 %v8919, 1.442695
      %v8932 = vpow.pop %v8931
      %v8933 = vmul.f32 %v8920, 1.442695
      %v8934 = vpow.pop %v8933
      %v8935 = vmul.f32 %v8921, 1.442695
      %v8936 = vpow.pop %v8935
      %v8937 = vmul.f32 %v8922, 1.442695
      %v8938 = vpow.pop %v8937
      %v8939 = vsel %vm8890, %v8924, 0.0
      %8940 = vadd.xlane.f32.xlu0 %v8939
      %v8941 = vpop.xlane.xlu0 %8940
      %v8942 = vsel %vm8890, %v8926, 0.0
      %8943 = vadd.xlane.f32.xlu0 %v8942
      %v8944 = vpop.xlane.xlu0 %8943
      %v8945 = vsel %vm8890, %v8928, 0.0
      %8946 = vadd.xlane.f32.xlu0 %v8945
      %v8947 = vpop.xlane.xlu0 %8946
      %v8948 = vsel %vm8890, %v8930, 0.0
      %8949 = vadd.xlane.f32.xlu0 %v8948
      %v8950 = vpop.xlane.xlu0 %8949
      %v8951 = vsel %vm8890, %v8932, 0.0
      %8952 = vadd.xlane.f32.xlu0 %v8951
      %v8953 = vpop.xlane.xlu0 %8952
      %v8954 = vsel %vm8890, %v8934, 0.0
      %8955 = vadd.xlane.f32.xlu0 %v8954
      %v8956 = vpop.xlane.xlu0 %8955
      %v8957 = vsel %vm8890, %v8936, 0.0
      %8958 = vadd.xlane.f32.xlu0 %v8957
      %v8959 = vpop.xlane.xlu0 %8958
      %v8960 = vsel %vm8890, %v8938, 0.0
      %8961 = vadd.xlane.f32.xlu0 %v8960
      %v8962 = vpop.xlane.xlu0 %8961
      %v8963 = vrcp.pop %v8941
      %v8964 = vmul.f32 %v8924, %v8963
      %v8965 = vrcp.pop %v8944
      %v8966 = vmul.f32 %v8926, %v8965
      %v8967 = vrcp.pop %v8947
      %v8968 = vmul.f32 %v8928, %v8967
      %v8969 = vrcp.pop %v8950
      %v8970 = vmul.f32 %v8930, %v8969
      %v8971 = vrcp.pop %v8953
      %v8972 = vmul.f32 %v8932, %v8971
      %v8973 = vrcp.pop %v8956
      %v8974 = vmul.f32 %v8934, %v8973
      %v8975 = vrcp.pop %v8959
      %v8976 = vmul.f32 %v8936, %v8975
      %v8977 = vrcp.pop %v8962
      %v8978 = vmul.f32 %v8938, %v8977
      %v8979 = vld [vmem:[%s11] sm:$0xff]
      %v8980 = vld [vmem:[%s11 + $0x8] sm:$0xff]
      %v8981 = vld [vmem:[%s11 + $0x10] sm:$0xff]
      %v8982 = vld [vmem:[%s11 + $0x18] sm:$0xff]
      %v8983 = vld [vmem:[%s11 + $0x20] sm:$0xff]
      %v8984 = vld [vmem:[%s11 + $0x28] sm:$0xff]
      %v8985 = vld [vmem:[%s11 + $0x30] sm:$0xff]
      %v8986 = vld [vmem:[%s11 + $0x38] sm:$0xff]
      %v8987 = vmul.f32 %v8516, 0.1
      %v8988 = vmul.f32 %v8519, 0.1
      %v8989 = vmul.f32 %v8524, 0.1
      %v8990 = vmul.f32 %v8527, 0.1
      %v8991 = vmul.f32 %v8532, 0.1
      %v8992 = vmul.f32 %v8535, 0.1
      %v8993 = vmul.f32 %v8540, 0.1
      %v8994 = vmul.f32 %v8543, 0.1
      %9003 = vrot.lane.b32.xlu0 %v8979, 18
      %v9004 = vpop.permute.xlu0 %9003
      %9005 = vrot.lane.b32.xlu0 %v8980, 18
      %v9006 = vpop.permute.xlu0 %9005
      %9007 = vrot.lane.b32.xlu0 %v8981, 18
      %v9008 = vpop.permute.xlu0 %9007
      %9009 = vrot.lane.b32.xlu0 %v8982, 18
      %v9010 = vpop.permute.xlu0 %9009
      %9011 = vrot.lane.b32.xlu0 %v8983, 18
      %v9012 = vpop.permute.xlu0 %9011
      %9013 = vrot.lane.b32.xlu0 %v8984, 18
      %v9014 = vpop.permute.xlu0 %9013
      %9015 = vrot.lane.b32.xlu0 %v8985, 18
      %v9016 = vpop.permute.xlu0 %9015
      %9017 = vrot.lane.b32.xlu0 %v8986, 18
      %v9018 = vpop.permute.xlu0 %9017
      %v9027 = vmul.f32 %v8987, %v9004
      %v9028 = vmul.f32 %v8988, %v9006
      %v9029 = vmul.f32 %v8989, %v9008
      %v9030 = vmul.f32 %v8990, %v9010
      %v9031 = vmul.f32 %v8991, %v9012
      %v9032 = vmul.f32 %v8992, %v9014
      %v9033 = vmul.f32 %v8993, %v9016
      %v9034 = vmul.f32 %v8994, %v9018
      %9035 = vrot.lane.b32.xlu0 %v8979, 20
      %v9036 = vpop.permute.xlu0 %9035
      %9037 = vrot.lane.b32.xlu0 %v8980, 20
      %v9038 = vpop.permute.xlu0 %9037
      %9039 = vrot.lane.b32.xlu0 %v8981, 20
      %v9040 = vpop.permute.xlu0 %9039
      %9041 = vrot.lane.b32.xlu0 %v8982, 20
      %v9042 = vpop.permute.xlu0 %9041
      %9043 = vrot.lane.b32.xlu0 %v8983, 20
      %v9044 = vpop.permute.xlu0 %9043
      %9045 = vrot.lane.b32.xlu0 %v8984, 20
      %v9046 = vpop.permute.xlu0 %9045
      %9047 = vrot.lane.b32.xlu0 %v8985, 20
      %v9048 = vpop.permute.xlu0 %9047
      %9049 = vrot.lane.b32.xlu0 %v8986, 20
      %v9050 = vpop.permute.xlu0 %9049
      %v9059 = vadd.f32 %v9027, %v9036
      %v9060 = vadd.f32 %v9028, %v9038
      %v9061 = vadd.f32 %v9029, %v9040
      %v9062 = vadd.f32 %v9030, %v9042
      %v9063 = vadd.f32 %v9031, %v9044
      %v9064 = vadd.f32 %v9032, %v9046
      %v9065 = vadd.f32 %v9033, %v9048
      %v9066 = vadd.f32 %v9034, %v9050
      %v9067 = vmul.f32 %v8516, 0.2
      %v9068 = vmul.f32 %v8519, 0.2
      %v9069 = vmul.f32 %v8524, 0.2
      %v9070 = vmul.f32 %v8527, 0.2
      %v9071 = vmul.f32 %v8532, 0.2
      %v9072 = vmul.f32 %v8535, 0.2
      %v9073 = vmul.f32 %v8540, 0.2
      %v9074 = vmul.f32 %v8543, 0.2
      %v9075 = vmul.f32 %v9067, 1.442695
      %v9076 = vpow.pop %v9075
      %v9077 = vmul.f32 %v9068, 1.442695
      %v9078 = vpow.pop %v9077
      %v9079 = vmul.f32 %v9069, 1.442695
      %v9080 = vpow.pop %v9079
      %v9081 = vmul.f32 %v9070, 1.442695
      %v9082 = vpow.pop %v9081
      %v9083 = vmul.f32 %v9071, 1.442695
      %v9084 = vpow.pop %v9083
      %v9085 = vmul.f32 %v9072, 1.442695
      %v9086 = vpow.pop %v9085
      %v9087 = vmul.f32 %v9073, 1.442695
      %v9088 = vpow.pop %v9087
      %v9089 = vmul.f32 %v9074, 1.442695
      %v9090 = vpow.pop %v9089
      %v9091 = vmul.f32 %v9076, %v9036
      %v9092 = vmul.f32 %v9078, %v9038
      %v9093 = vmul.f32 %v9080, %v9040
      %v9094 = vmul.f32 %v9082, %v9042
      %v9095 = vmul.f32 %v9084, %v9044
      %v9096 = vmul.f32 %v9086, %v9046
      %v9097 = vmul.f32 %v9088, %v9048
      %v9098 = vmul.f32 %v9090, %v9050
      %v9099 = vmul.f32 %v9091, 0.5
      %v9100 = vmul.f32 %v9092, 0.5
      %v9101 = vmul.f32 %v9093, 0.5
      %v9102 = vmul.f32 %v9094, 0.5
      %v9103 = vmul.f32 %v9095, 0.5
      %v9104 = vmul.f32 %v9096, 0.5
      %v9105 = vmul.f32 %v9097, 0.5
      %v9106 = vmul.f32 %v9098, 0.5
      %9115 = vrot.lane.b32.xlu0 %v9099, 126
      %v9116 = vpop.permute.xlu0 %9115
      %9117 = vrot.lane.b32.xlu0 %v9100, 126
      %v9118 = vpop.permute.xlu0 %9117
      %9119 = vrot.lane.b32.xlu0 %v9101, 126
      %v9120 = vpop.permute.xlu0 %9119
      %9121 = vrot.lane.b32.xlu0 %v9102, 126
      %v9122 = vpop.permute.xlu0 %9121
      %9123 = vrot.lane.b32.xlu0 %v9103, 126
      %v9124 = vpop.permute.xlu0 %9123
      %9125 = vrot.lane.b32.xlu0 %v9104, 126
      %v9126 = vpop.permute.xlu0 %9125
      %9127 = vrot.lane.b32.xlu0 %v9105, 126
      %v9128 = vpop.permute.xlu0 %9127
      %9129 = vrot.lane.b32.xlu0 %v9106, 126
      %v9130 = vpop.permute.xlu0 %9129
      %v9139 = vsub.f32 %v9059, %v9116
      %v9140 = vsub.f32 %v9060, %v9118
      %v9141 = vsub.f32 %v9061, %v9120
      %v9142 = vsub.f32 %v9062, %v9122
      %v9143 = vsub.f32 %v9063, %v9124
      %v9144 = vsub.f32 %v9064, %v9126
      %v9145 = vsub.f32 %v9065, %v9128
      %v9146 = vsub.f32 %v9066, %v9130
      %v9147 = vadd.f32 %v9059, %v9116
      %v9148 = vadd.f32 %v9060, %v9118
      %v9149 = vadd.f32 %v9061, %v9120
      %v9150 = vadd.f32 %v9062, %v9122
      %v9151 = vadd.f32 %v9063, %v9124
      %v9152 = vadd.f32 %v9064, %v9126
      %v9153 = vadd.f32 %v9065, %v9128
      %v9154 = vadd.f32 %v9066, %v9130
      %9163 = vrot.lane.b32.xlu0 %v9139, 108
      %v9164 = vpop.permute.xlu0 %9163
      %9165 = vrot.lane.b32.xlu0 %v9140, 108
      %v9166 = vpop.permute.xlu0 %9165
      %9167 = vrot.lane.b32.xlu0 %v9141, 108
      %v9168 = vpop.permute.xlu0 %9167
      %9169 = vrot.lane.b32.xlu0 %v9142, 108
      %v9170 = vpop.permute.xlu0 %9169
      %9171 = vrot.lane.b32.xlu0 %v9143, 108
      %v9172 = vpop.permute.xlu0 %9171
      %9173 = vrot.lane.b32.xlu0 %v9144, 108
      %v9174 = vpop.permute.xlu0 %9173
      %9175 = vrot.lane.b32.xlu0 %v9145, 108
      %v9176 = vpop.permute.xlu0 %9175
      %9177 = vrot.lane.b32.xlu0 %v9146, 108
      %v9178 = vpop.permute.xlu0 %9177
      %9195 = vrot.lane.b32.xlu0 %v9147, 110
      %v9196 = vpop.permute.xlu0 %9195
      %9197 = vrot.lane.b32.xlu0 %v9148, 110
      %v9198 = vpop.permute.xlu0 %9197
      %9199 = vrot.lane.b32.xlu0 %v9149, 110
      %v9200 = vpop.permute.xlu0 %9199
      %9201 = vrot.lane.b32.xlu0 %v9150, 110
      %v9202 = vpop.permute.xlu0 %9201
      %9203 = vrot.lane.b32.xlu0 %v9151, 110
      %v9204 = vpop.permute.xlu0 %9203
      %9205 = vrot.lane.b32.xlu0 %v9152, 110
      %v9206 = vpop.permute.xlu0 %9205
      %9207 = vrot.lane.b32.xlu0 %v9153, 110
      %v9208 = vpop.permute.xlu0 %9207
      %9209 = vrot.lane.b32.xlu0 %v9154, 110
      %v9210 = vpop.permute.xlu0 %9209
      %vm9219 = vcmask 15360
      %v9220 = vsel %vm9219, %v9164, %v9196
      %v9221 = vsel %vm9219, %v9166, %v9198
      %v9222 = vsel %vm9219, %v9168, %v9200
      %v9223 = vsel %vm9219, %v9170, %v9202
      %v9224 = vsel %vm9219, %v9172, %v9204
      %v9225 = vsel %vm9219, %v9174, %v9206
      %v9226 = vsel %vm9219, %v9176, %v9208
      %v9227 = vsel %vm9219, %v9178, %v9210
      %vm9228 = vcmask 80936
      %v9229 = vsel %vm9228, %v8516, -inf
      %9230 = vmax.xlane.f32.xlu0 %v9229
      %v9231 = vpop.xlane.xlu0 %9230
      %v9232 = vsel %vm9228, %v8519, -inf
      %9233 = vmax.xlane.f32.xlu0 %v9232
      %v9234 = vpop.xlane.xlu0 %9233
      %v9235 = vsel %vm9228, %v8524, -inf
      %9236 = vmax.xlane.f32.xlu0 %v9235
      %v9237 = vpop.xlane.xlu0 %9236
      %v9238 = vsel %vm9228, %v8527, -inf
      %9239 = vmax.xlane.f32.xlu0 %v9238
      %v9240 = vpop.xlane.xlu0 %9239
      %v9241 = vsel %vm9228, %v8532, -inf
      %9242 = vmax.xlane.f32.xlu0 %v9241
      %v9243 = vpop.xlane.xlu0 %9242
      %v9244 = vsel %vm9228, %v8535, -inf
      %9245 = vmax.xlane.f32.xlu0 %v9244
      %v9246 = vpop.xlane.xlu0 %9245
      %v9247 = vsel %vm9228, %v8540, -inf
      %9248 = vmax.xlane.f32.xlu0 %v9247
      %v9249 = vpop.xlane.xlu0 %9248
      %v9250 = vsel %vm9228, %v8543, -inf
      %9251 = vmax.xlane.f32.xlu0 %v9250
      %v9252 = vpop.xlane.xlu0 %9251
      %v9253 = vsub.f32 %v8516, %v9231
      %v9254 = vsub.f32 %v8519, %v9234
      %v9255 = vsub.f32 %v8524, %v9237
      %v9256 = vsub.f32 %v8527, %v9240
      %v9257 = vsub.f32 %v8532, %v9243
      %v9258 = vsub.f32 %v8535, %v9246
      %v9259 = vsub.f32 %v8540, %v9249
      %v9260 = vsub.f32 %v8543, %v9252
      %v9261 = vmul.f32 %v9253, 1.442695
      %v9262 = vpow.pop %v9261
      %v9263 = vmul.f32 %v9254, 1.442695
      %v9264 = vpow.pop %v9263
      %v9265 = vmul.f32 %v9255, 1.442695
      %v9266 = vpow.pop %v9265
      %v9267 = vmul.f32 %v9256, 1.442695
      %v9268 = vpow.pop %v9267
      %v9269 = vmul.f32 %v9257, 1.442695
      %v9270 = vpow.pop %v9269
      %v9271 = vmul.f32 %v9258, 1.442695
      %v9272 = vpow.pop %v9271
      %v9273 = vmul.f32 %v9259, 1.442695
      %v9274 = vpow.pop %v9273
      %v9275 = vmul.f32 %v9260, 1.442695
      %v9276 = vpow.pop %v9275
      %9285 = vrot.lane.b32.xlu0 %v9262, 123
      %v9286 = vpop.permute.xlu0 %9285
      %9287 = vrot.lane.b32.xlu0 %v9264, 123
      %v9288 = vpop.permute.xlu0 %9287
      %9289 = vrot.lane.b32.xlu0 %v9266, 123
      %v9290 = vpop.permute.xlu0 %9289
      %9291 = vrot.lane.b32.xlu0 %v9268, 123
      %v9292 = vpop.permute.xlu0 %9291
      %9293 = vrot.lane.b32.xlu0 %v9270, 123
      %v9294 = vpop.permute.xlu0 %9293
      %9295 = vrot.lane.b32.xlu0 %v9272, 123
      %v9296 = vpop.permute.xlu0 %9295
      %9297 = vrot.lane.b32.xlu0 %v9274, 123
      %v9298 = vpop.permute.xlu0 %9297
      %9299 = vrot.lane.b32.xlu0 %v9276, 123
      %v9300 = vpop.permute.xlu0 %9299
      %v9309 = vsel %vm8890, %v9286, 0.0
      %9310 = vadd.xlane.f32.xlu0 %v9309
      %v9311 = vpop.xlane.xlu0 %9310
      %v9312 = vsel %vm8890, %v9288, 0.0
      %9313 = vadd.xlane.f32.xlu0 %v9312
      %v9314 = vpop.xlane.xlu0 %9313
      %v9315 = vsel %vm8890, %v9290, 0.0
      %9316 = vadd.xlane.f32.xlu0 %v9315
      %v9317 = vpop.xlane.xlu0 %9316
      %v9318 = vsel %vm8890, %v9292, 0.0
      %9319 = vadd.xlane.f32.xlu0 %v9318
      %v9320 = vpop.xlane.xlu0 %9319
      %v9321 = vsel %vm8890, %v9294, 0.0
      %9322 = vadd.xlane.f32.xlu0 %v9321
      %v9323 = vpop.xlane.xlu0 %9322
      %v9324 = vsel %vm8890, %v9296, 0.0
      %9325 = vadd.xlane.f32.xlu0 %v9324
      %v9326 = vpop.xlane.xlu0 %9325
      %v9327 = vsel %vm8890, %v9298, 0.0
      %9328 = vadd.xlane.f32.xlu0 %v9327
      %v9329 = vpop.xlane.xlu0 %9328
      %v9330 = vsel %vm8890, %v9300, 0.0
      %9331 = vadd.xlane.f32.xlu0 %v9330
      %v9332 = vpop.xlane.xlu0 %9331
      %v9333 = vrcp.pop %v9311
      %v9334 = vmul.f32 %v9262, %v9333
      %v9335 = vrcp.pop %v9314
      %v9336 = vmul.f32 %v9264, %v9335
      %v9337 = vrcp.pop %v9317
      %v9338 = vmul.f32 %v9266, %v9337
      %v9339 = vrcp.pop %v9320
      %v9340 = vmul.f32 %v9268, %v9339
      %v9341 = vrcp.pop %v9323
      %v9342 = vmul.f32 %v9270, %v9341
      %v9343 = vrcp.pop %v9326
      %v9344 = vmul.f32 %v9272, %v9343
      %v9345 = vrcp.pop %v9329
      %v9346 = vmul.f32 %v9274, %v9345
      %v9347 = vrcp.pop %v9332
      %v9348 = vmul.f32 %v9276, %v9347
      %s9349 = scalar_lea.vmem %s11, 64
      %v9350 = vld [vmem:[%s9349] sm:$0xff]
      %v9351 = vld [vmem:[%s9349 + $0x8] sm:$0xff]
      %v9352 = vld [vmem:[%s9349 + $0x10] sm:$0xff]
      %v9353 = vld [vmem:[%s9349 + $0x18] sm:$0xff]
      %v9354 = vld [vmem:[%s9349 + $0x20] sm:$0xff]
      %v9355 = vld [vmem:[%s9349 + $0x28] sm:$0xff]
      %v9356 = vld [vmem:[%s9349 + $0x30] sm:$0xff]
      %v9357 = vld [vmem:[%s9349 + $0x38] sm:$0xff]
      %9366 = vrot.lane.b32.xlu0 %v9350, 22
      %v9367 = vpop.permute.xlu0 %9366
      %9368 = vrot.lane.b32.xlu0 %v9351, 22
      %v9369 = vpop.permute.xlu0 %9368
      %9370 = vrot.lane.b32.xlu0 %v9352, 22
      %v9371 = vpop.permute.xlu0 %9370
      %9372 = vrot.lane.b32.xlu0 %v9353, 22
      %v9373 = vpop.permute.xlu0 %9372
      %9374 = vrot.lane.b32.xlu0 %v9354, 22
      %v9375 = vpop.permute.xlu0 %9374
      %9376 = vrot.lane.b32.xlu0 %v9355, 22
      %v9377 = vpop.permute.xlu0 %9376
      %9378 = vrot.lane.b32.xlu0 %v9356, 22
      %v9379 = vpop.permute.xlu0 %9378
      %9380 = vrot.lane.b32.xlu0 %v9357, 22
      %v9381 = vpop.permute.xlu0 %9380
      %v9390 = vmul.f32 %v8987, %v9367
      %v9391 = vmul.f32 %v8988, %v9369
      %v9392 = vmul.f32 %v8989, %v9371
      %v9393 = vmul.f32 %v8990, %v9373
      %v9394 = vmul.f32 %v8991, %v9375
      %v9395 = vmul.f32 %v8992, %v9377
      %v9396 = vmul.f32 %v8993, %v9379
      %v9397 = vmul.f32 %v8994, %v9381
      %9398 = vrot.lane.b32.xlu0 %v9350, 24
      %v9399 = vpop.permute.xlu0 %9398
      %9400 = vrot.lane.b32.xlu0 %v9351, 24
      %v9401 = vpop.permute.xlu0 %9400
      %9402 = vrot.lane.b32.xlu0 %v9352, 24
      %v9403 = vpop.permute.xlu0 %9402
      %9404 = vrot.lane.b32.xlu0 %v9353, 24
      %v9405 = vpop.permute.xlu0 %9404
      %9406 = vrot.lane.b32.xlu0 %v9354, 24
      %v9407 = vpop.permute.xlu0 %9406
      %9408 = vrot.lane.b32.xlu0 %v9355, 24
      %v9409 = vpop.permute.xlu0 %9408
      %9410 = vrot.lane.b32.xlu0 %v9356, 24
      %v9411 = vpop.permute.xlu0 %9410
      %9412 = vrot.lane.b32.xlu0 %v9357, 24
      %v9413 = vpop.permute.xlu0 %9412
      %v9422 = vadd.f32 %v9390, %v9399
      %v9423 = vadd.f32 %v9391, %v9401
      %v9424 = vadd.f32 %v9392, %v9403
      %v9425 = vadd.f32 %v9393, %v9405
      %v9426 = vadd.f32 %v9394, %v9407
      %v9427 = vadd.f32 %v9395, %v9409
      %v9428 = vadd.f32 %v9396, %v9411
      %v9429 = vadd.f32 %v9397, %v9413
      %v9430 = vmul.f32 %v9076, %v9399
      %v9431 = vmul.f32 %v9078, %v9401
      %v9432 = vmul.f32 %v9080, %v9403
      %v9433 = vmul.f32 %v9082, %v9405
      %v9434 = vmul.f32 %v9084, %v9407
      %v9435 = vmul.f32 %v9086, %v9409
      %v9436 = vmul.f32 %v9088, %v9411
      %v9437 = vmul.f32 %v9090, %v9413
      %v9438 = vmul.f32 %v9430, 0.5
      %v9439 = vmul.f32 %v9431, 0.5
      %v9440 = vmul.f32 %v9432, 0.5
      %v9441 = vmul.f32 %v9433, 0.5
      %v9442 = vmul.f32 %v9434, 0.5
      %v9443 = vmul.f32 %v9435, 0.5
      %v9444 = vmul.f32 %v9436, 0.5
      %v9445 = vmul.f32 %v9437, 0.5
      %9454 = vrot.lane.b32.xlu0 %v9438, 126
      %v9455 = vpop.permute.xlu0 %9454
      %9456 = vrot.lane.b32.xlu0 %v9439, 126
      %v9457 = vpop.permute.xlu0 %9456
      %9458 = vrot.lane.b32.xlu0 %v9440, 126
      %v9459 = vpop.permute.xlu0 %9458
      %9460 = vrot.lane.b32.xlu0 %v9441, 126
      %v9461 = vpop.permute.xlu0 %9460
      %9462 = vrot.lane.b32.xlu0 %v9442, 126
      %v9463 = vpop.permute.xlu0 %9462
      %9464 = vrot.lane.b32.xlu0 %v9443, 126
      %v9465 = vpop.permute.xlu0 %9464
      %9466 = vrot.lane.b32.xlu0 %v9444, 126
      %v9467 = vpop.permute.xlu0 %9466
      %9468 = vrot.lane.b32.xlu0 %v9445, 126
      %v9469 = vpop.permute.xlu0 %9468
      %v9478 = vsub.f32 %v9422, %v9455
      %v9479 = vsub.f32 %v9423, %v9457
      %v9480 = vsub.f32 %v9424, %v9459
      %v9481 = vsub.f32 %v9425, %v9461
      %v9482 = vsub.f32 %v9426, %v9463
      %v9483 = vsub.f32 %v9427, %v9465
      %v9484 = vsub.f32 %v9428, %v9467
      %v9485 = vsub.f32 %v9429, %v9469
      %v9486 = vadd.f32 %v9422, %v9455
      %v9487 = vadd.f32 %v9423, %v9457
      %v9488 = vadd.f32 %v9424, %v9459
      %v9489 = vadd.f32 %v9425, %v9461
      %v9490 = vadd.f32 %v9426, %v9463
      %v9491 = vadd.f32 %v9427, %v9465
      %v9492 = vadd.f32 %v9428, %v9467
      %v9493 = vadd.f32 %v9429, %v9469
      %9502 = vrot.lane.b32.xlu0 %v9478, 104
      %v9503 = vpop.permute.xlu0 %9502
      %9504 = vrot.lane.b32.xlu0 %v9479, 104
      %v9505 = vpop.permute.xlu0 %9504
      %9506 = vrot.lane.b32.xlu0 %v9480, 104
      %v9507 = vpop.permute.xlu0 %9506
      %9508 = vrot.lane.b32.xlu0 %v9481, 104
      %v9509 = vpop.permute.xlu0 %9508
      %9510 = vrot.lane.b32.xlu0 %v9482, 104
      %v9511 = vpop.permute.xlu0 %9510
      %9512 = vrot.lane.b32.xlu0 %v9483, 104
      %v9513 = vpop.permute.xlu0 %9512
      %9514 = vrot.lane.b32.xlu0 %v9484, 104
      %v9515 = vpop.permute.xlu0 %9514
      %9516 = vrot.lane.b32.xlu0 %v9485, 104
      %v9517 = vpop.permute.xlu0 %9516
      %9534 = vrot.lane.b32.xlu0 %v9486, 106
      %v9535 = vpop.permute.xlu0 %9534
      %9536 = vrot.lane.b32.xlu0 %v9487, 106
      %v9537 = vpop.permute.xlu0 %9536
      %9538 = vrot.lane.b32.xlu0 %v9488, 106
      %v9539 = vpop.permute.xlu0 %9538
      %9540 = vrot.lane.b32.xlu0 %v9489, 106
      %v9541 = vpop.permute.xlu0 %9540
      %9542 = vrot.lane.b32.xlu0 %v9490, 106
      %v9543 = vpop.permute.xlu0 %9542
      %9544 = vrot.lane.b32.xlu0 %v9491, 106
      %v9545 = vpop.permute.xlu0 %9544
      %9546 = vrot.lane.b32.xlu0 %v9492, 106
      %v9547 = vpop.permute.xlu0 %9546
      %9548 = vrot.lane.b32.xlu0 %v9493, 106
      %v9549 = vpop.permute.xlu0 %9548
      %v9558 = vsel %vm9219, %v9503, %v9535
      %v9559 = vsel %vm9219, %v9505, %v9537
      %v9560 = vsel %vm9219, %v9507, %v9539
      %v9561 = vsel %vm9219, %v9509, %v9541
      %v9562 = vsel %vm9219, %v9511, %v9543
      %v9563 = vsel %vm9219, %v9513, %v9545
      %v9564 = vsel %vm9219, %v9515, %v9547
      %v9565 = vsel %vm9219, %v9517, %v9549
      %vm9566 = vcmask 121936
      %v9567 = vsel %vm9566, %v8516, -inf
      %9568 = vmax.xlane.f32.xlu0 %v9567
      %v9569 = vpop.xlane.xlu0 %9568
      %v9570 = vsel %vm9566, %v8519, -inf
      %9571 = vmax.xlane.f32.xlu0 %v9570
      %v9572 = vpop.xlane.xlu0 %9571
      %v9573 = vsel %vm9566, %v8524, -inf
      %9574 = vmax.xlane.f32.xlu0 %v9573
      %v9575 = vpop.xlane.xlu0 %9574
      %v9576 = vsel %vm9566, %v8527, -inf
      %9577 = vmax.xlane.f32.xlu0 %v9576
      %v9578 = vpop.xlane.xlu0 %9577
      %v9579 = vsel %vm9566, %v8532, -inf
      %9580 = vmax.xlane.f32.xlu0 %v9579
      %v9581 = vpop.xlane.xlu0 %9580
      %v9582 = vsel %vm9566, %v8535, -inf
      %9583 = vmax.xlane.f32.xlu0 %v9582
      %v9584 = vpop.xlane.xlu0 %9583
      %v9585 = vsel %vm9566, %v8540, -inf
      %9586 = vmax.xlane.f32.xlu0 %v9585
      %v9587 = vpop.xlane.xlu0 %9586
      %v9588 = vsel %vm9566, %v8543, -inf
      %9589 = vmax.xlane.f32.xlu0 %v9588
      %v9590 = vpop.xlane.xlu0 %9589
      %v9591 = vsub.f32 %v8516, %v9569
      %v9592 = vsub.f32 %v8519, %v9572
      %v9593 = vsub.f32 %v8524, %v9575
      %v9594 = vsub.f32 %v8527, %v9578
      %v9595 = vsub.f32 %v8532, %v9581
      %v9596 = vsub.f32 %v8535, %v9584
      %v9597 = vsub.f32 %v8540, %v9587
      %v9598 = vsub.f32 %v8543, %v9590
      %v9599 = vmul.f32 %v9591, 1.442695
      %v9600 = vpow.pop %v9599
      %v9601 = vmul.f32 %v9592, 1.442695
      %v9602 = vpow.pop %v9601
      %v9603 = vmul.f32 %v9593, 1.442695
      %v9604 = vpow.pop %v9603
      %v9605 = vmul.f32 %v9594, 1.442695
      %v9606 = vpow.pop %v9605
      %v9607 = vmul.f32 %v9595, 1.442695
      %v9608 = vpow.pop %v9607
      %v9609 = vmul.f32 %v9596, 1.442695
      %v9610 = vpow.pop %v9609
      %v9611 = vmul.f32 %v9597, 1.442695
      %v9612 = vpow.pop %v9611
      %v9613 = vmul.f32 %v9598, 1.442695
      %v9614 = vpow.pop %v9613
      %9623 = vrot.lane.b32.xlu0 %v9600, 118
      %v9624 = vpop.permute.xlu0 %9623
      %9625 = vrot.lane.b32.xlu0 %v9602, 118
      %v9626 = vpop.permute.xlu0 %9625
      %9627 = vrot.lane.b32.xlu0 %v9604, 118
      %v9628 = vpop.permute.xlu0 %9627
      %9629 = vrot.lane.b32.xlu0 %v9606, 118
      %v9630 = vpop.permute.xlu0 %9629
      %9631 = vrot.lane.b32.xlu0 %v9608, 118
      %v9632 = vpop.permute.xlu0 %9631
      %9633 = vrot.lane.b32.xlu0 %v9610, 118
      %v9634 = vpop.permute.xlu0 %9633
      %9635 = vrot.lane.b32.xlu0 %v9612, 118
      %v9636 = vpop.permute.xlu0 %9635
      %9637 = vrot.lane.b32.xlu0 %v9614, 118
      %v9638 = vpop.permute.xlu0 %9637
      %v9647 = vsel %vm8890, %v9624, 0.0
      %9648 = vadd.xlane.f32.xlu0 %v9647
      %v9649 = vpop.xlane.xlu0 %9648
      %v9650 = vsel %vm8890, %v9626, 0.0
      %9651 = vadd.xlane.f32.xlu0 %v9650
      %v9652 = vpop.xlane.xlu0 %9651
      %v9653 = vsel %vm8890, %v9628, 0.0
      %9654 = vadd.xlane.f32.xlu0 %v9653
      %v9655 = vpop.xlane.xlu0 %9654
      %v9656 = vsel %vm8890, %v9630, 0.0
      %9657 = vadd.xlane.f32.xlu0 %v9656
      %v9658 = vpop.xlane.xlu0 %9657
      %v9659 = vsel %vm8890, %v9632, 0.0
      %9660 = vadd.xlane.f32.xlu0 %v9659
      %v9661 = vpop.xlane.xlu0 %9660
      %v9662 = vsel %vm8890, %v9634, 0.0
      %9663 = vadd.xlane.f32.xlu0 %v9662
      %v9664 = vpop.xlane.xlu0 %9663
      %v9665 = vsel %vm8890, %v9636, 0.0
      %9666 = vadd.xlane.f32.xlu0 %v9665
      %v9667 = vpop.xlane.xlu0 %9666
      %v9668 = vsel %vm8890, %v9638, 0.0
      %9669 = vadd.xlane.f32.xlu0 %v9668
      %v9670 = vpop.xlane.xlu0 %9669
      %v9671 = vrcp.pop %v9649
      %v9672 = vmul.f32 %v9600, %v9671
      %v9673 = vrcp.pop %v9652
      %v9674 = vmul.f32 %v9602, %v9673
      %v9675 = vrcp.pop %v9655
      %v9676 = vmul.f32 %v9604, %v9675
      %v9677 = vrcp.pop %v9658
      %v9678 = vmul.f32 %v9606, %v9677
      %v9679 = vrcp.pop %v9661
      %v9680 = vmul.f32 %v9608, %v9679
      %v9681 = vrcp.pop %v9664
      %v9682 = vmul.f32 %v9610, %v9681
      %v9683 = vrcp.pop %v9667
      %v9684 = vmul.f32 %v9612, %v9683
      %v9685 = vrcp.pop %v9670
      %v9686 = vmul.f32 %v9614, %v9685
      %s9687 = scalar_lea.vmem %s11, 128
      %v9688 = vld [vmem:[%s9687] sm:$0xff]
      %v9689 = vld [vmem:[%s9687 + $0x8] sm:$0xff]
      %v9690 = vld [vmem:[%s9687 + $0x10] sm:$0xff]
      %v9691 = vld [vmem:[%s9687 + $0x18] sm:$0xff]
      %v9692 = vld [vmem:[%s9687 + $0x20] sm:$0xff]
      %v9693 = vld [vmem:[%s9687 + $0x28] sm:$0xff]
      %v9694 = vld [vmem:[%s9687 + $0x30] sm:$0xff]
      %v9695 = vld [vmem:[%s9687 + $0x38] sm:$0xff]
      %9704 = vrot.lane.b32.xlu0 %v9688, 26
      %v9705 = vpop.permute.xlu0 %9704
      %9706 = vrot.lane.b32.xlu0 %v9689, 26
      %v9707 = vpop.permute.xlu0 %9706
      %9708 = vrot.lane.b32.xlu0 %v9690, 26
      %v9709 = vpop.permute.xlu0 %9708
      %9710 = vrot.lane.b32.xlu0 %v9691, 26
      %v9711 = vpop.permute.xlu0 %9710
      %9712 = vrot.lane.b32.xlu0 %v9692, 26
      %v9713 = vpop.permute.xlu0 %9712
      %9714 = vrot.lane.b32.xlu0 %v9693, 26
      %v9715 = vpop.permute.xlu0 %9714
      %9716 = vrot.lane.b32.xlu0 %v9694, 26
      %v9717 = vpop.permute.xlu0 %9716
      %9718 = vrot.lane.b32.xlu0 %v9695, 26
      %v9719 = vpop.permute.xlu0 %9718
      %v9728 = vmul.f32 %v8987, %v9705
      %v9729 = vmul.f32 %v8988, %v9707
      %v9730 = vmul.f32 %v8989, %v9709
      %v9731 = vmul.f32 %v8990, %v9711
      %v9732 = vmul.f32 %v8991, %v9713
      %v9733 = vmul.f32 %v8992, %v9715
      %v9734 = vmul.f32 %v8993, %v9717
      %v9735 = vmul.f32 %v8994, %v9719
      %9736 = vrot.lane.b32.xlu0 %v9688, 28
      %v9737 = vpop.permute.xlu0 %9736
      %9738 = vrot.lane.b32.xlu0 %v9689, 28
      %v9739 = vpop.permute.xlu0 %9738
      %9740 = vrot.lane.b32.xlu0 %v9690, 28
      %v9741 = vpop.permute.xlu0 %9740
      %9742 = vrot.lane.b32.xlu0 %v9691, 28
      %v9743 = vpop.permute.xlu0 %9742
      %9744 = vrot.lane.b32.xlu0 %v9692, 28
      %v9745 = vpop.permute.xlu0 %9744
      %9746 = vrot.lane.b32.xlu0 %v9693, 28
      %v9747 = vpop.permute.xlu0 %9746
      %9748 = vrot.lane.b32.xlu0 %v9694, 28
      %v9749 = vpop.permute.xlu0 %9748
      %9750 = vrot.lane.b32.xlu0 %v9695, 28
      %v9751 = vpop.permute.xlu0 %9750
      %v9760 = vadd.f32 %v9728, %v9737
      %v9761 = vadd.f32 %v9729, %v9739
      %v9762 = vadd.f32 %v9730, %v9741
      %v9763 = vadd.f32 %v9731, %v9743
      %v9764 = vadd.f32 %v9732, %v9745
      %v9765 = vadd.f32 %v9733, %v9747
      %v9766 = vadd.f32 %v9734, %v9749
      %v9767 = vadd.f32 %v9735, %v9751
      %v9768 = vmul.f32 %v9076, %v9737
      %v9769 = vmul.f32 %v9078, %v9739
      %v9770 = vmul.f32 %v9080, %v9741
      %v9771 = vmul.f32 %v9082, %v9743
      %v9772 = vmul.f32 %v9084, %v9745
      %v9773 = vmul.f32 %v9086, %v9747
      %v9774 = vmul.f32 %v9088, %v9749
      %v9775 = vmul.f32 %v9090, %v9751
      %v9776 = vmul.f32 %v9768, 0.5
      %v9777 = vmul.f32 %v9769, 0.5
      %v9778 = vmul.f32 %v9770, 0.5
      %v9779 = vmul.f32 %v9771, 0.5
      %v9780 = vmul.f32 %v9772, 0.5
      %v9781 = vmul.f32 %v9773, 0.5
      %v9782 = vmul.f32 %v9774, 0.5
      %v9783 = vmul.f32 %v9775, 0.5
      %9792 = vrot.lane.b32.xlu0 %v9776, 126
      %v9793 = vpop.permute.xlu0 %9792
      %9794 = vrot.lane.b32.xlu0 %v9777, 126
      %v9795 = vpop.permute.xlu0 %9794
      %9796 = vrot.lane.b32.xlu0 %v9778, 126
      %v9797 = vpop.permute.xlu0 %9796
      %9798 = vrot.lane.b32.xlu0 %v9779, 126
      %v9799 = vpop.permute.xlu0 %9798
      %9800 = vrot.lane.b32.xlu0 %v9780, 126
      %v9801 = vpop.permute.xlu0 %9800
      %9802 = vrot.lane.b32.xlu0 %v9781, 126
      %v9803 = vpop.permute.xlu0 %9802
      %9804 = vrot.lane.b32.xlu0 %v9782, 126
      %v9805 = vpop.permute.xlu0 %9804
      %9806 = vrot.lane.b32.xlu0 %v9783, 126
      %v9807 = vpop.permute.xlu0 %9806
      %v9816 = vsub.f32 %v9760, %v9793
      %v9817 = vsub.f32 %v9761, %v9795
      %v9818 = vsub.f32 %v9762, %v9797
      %v9819 = vsub.f32 %v9763, %v9799
      %v9820 = vsub.f32 %v9764, %v9801
      %v9821 = vsub.f32 %v9765, %v9803
      %v9822 = vsub.f32 %v9766, %v9805
      %v9823 = vsub.f32 %v9767, %v9807
      %v9824 = vadd.f32 %v9760, %v9793
      %v9825 = vadd.f32 %v9761, %v9795
      %v9826 = vadd.f32 %v9762, %v9797
      %v9827 = vadd.f32 %v9763, %v9799
      %v9828 = vadd.f32 %v9764, %v9801
      %v9829 = vadd.f32 %v9765, %v9803
      %v9830 = vadd.f32 %v9766, %v9805
      %v9831 = vadd.f32 %v9767, %v9807
      %9840 = vrot.lane.b32.xlu0 %v9816, 100
      %v9841 = vpop.permute.xlu0 %9840
      %9842 = vrot.lane.b32.xlu0 %v9817, 100
      %v9843 = vpop.permute.xlu0 %9842
      %9844 = vrot.lane.b32.xlu0 %v9818, 100
      %v9845 = vpop.permute.xlu0 %9844
      %9846 = vrot.lane.b32.xlu0 %v9819, 100
      %v9847 = vpop.permute.xlu0 %9846
      %9848 = vrot.lane.b32.xlu0 %v9820, 100
      %v9849 = vpop.permute.xlu0 %9848
      %9850 = vrot.lane.b32.xlu0 %v9821, 100
      %v9851 = vpop.permute.xlu0 %9850
      %9852 = vrot.lane.b32.xlu0 %v9822, 100
      %v9853 = vpop.permute.xlu0 %9852
      %9854 = vrot.lane.b32.xlu0 %v9823, 100
      %v9855 = vpop.permute.xlu0 %9854
      %9872 = vrot.lane.b32.xlu0 %v9824, 102
      %v9873 = vpop.permute.xlu0 %9872
      %9874 = vrot.lane.b32.xlu0 %v9825, 102
      %v9875 = vpop.permute.xlu0 %9874
      %9876 = vrot.lane.b32.xlu0 %v9826, 102
      %v9877 = vpop.permute.xlu0 %9876
      %9878 = vrot.lane.b32.xlu0 %v9827, 102
      %v9879 = vpop.permute.xlu0 %9878
      %9880 = vrot.lane.b32.xlu0 %v9828, 102
      %v9881 = vpop.permute.xlu0 %9880
      %9882 = vrot.lane.b32.xlu0 %v9829, 102
      %v9883 = vpop.permute.xlu0 %9882
      %9884 = vrot.lane.b32.xlu0 %v9830, 102
      %v9885 = vpop.permute.xlu0 %9884
      %9886 = vrot.lane.b32.xlu0 %v9831, 102
      %v9887 = vpop.permute.xlu0 %9886
      %v9896 = vsel %vm9219, %v9841, %v9873
      %v9897 = vsel %vm9219, %v9843, %v9875
      %v9898 = vsel %vm9219, %v9845, %v9877
      %v9899 = vsel %vm9219, %v9847, %v9879
      %v9900 = vsel %vm9219, %v9849, %v9881
      %v9901 = vsel %vm9219, %v9851, %v9883
      %v9902 = vsel %vm9219, %v9853, %v9885
      %v9903 = vsel %vm9219, %v9855, %v9887
      %vm9904 = vcmask 162936
      %v9905 = vsel %vm9904, %v8516, -inf
      %9906 = vmax.xlane.f32.xlu0 %v9905
      %v9907 = vpop.xlane.xlu0 %9906
      %v9908 = vsel %vm9904, %v8519, -inf
      %9909 = vmax.xlane.f32.xlu0 %v9908
      %v9910 = vpop.xlane.xlu0 %9909
      %v9911 = vsel %vm9904, %v8524, -inf
      %9912 = vmax.xlane.f32.xlu0 %v9911
      %v9913 = vpop.xlane.xlu0 %9912
      %v9914 = vsel %vm9904, %v8527, -inf
      %9915 = vmax.xlane.f32.xlu0 %v9914
      %v9916 = vpop.xlane.xlu0 %9915
      %v9917 = vsel %vm9904, %v8532, -inf
      %9918 = vmax.xlane.f32.xlu0 %v9917
      %v9919 = vpop.xlane.xlu0 %9918
      %v9920 = vsel %vm9904, %v8535, -inf
      %9921 = vmax.xlane.f32.xlu0 %v9920
      %v9922 = vpop.xlane.xlu0 %9921
      %v9923 = vsel %vm9904, %v8540, -inf
      %9924 = vmax.xlane.f32.xlu0 %v9923
      %v9925 = vpop.xlane.xlu0 %9924
      %v9926 = vsel %vm9904, %v8543, -inf
      %9927 = vmax.xlane.f32.xlu0 %v9926
      %v9928 = vpop.xlane.xlu0 %9927
      %v9929 = vsub.f32 %v8516, %v9907
      %v9930 = vsub.f32 %v8519, %v9910
      %v9931 = vsub.f32 %v8524, %v9913
      %v9932 = vsub.f32 %v8527, %v9916
      %v9933 = vsub.f32 %v8532, %v9919
      %v9934 = vsub.f32 %v8535, %v9922
      %v9935 = vsub.f32 %v8540, %v9925
      %v9936 = vsub.f32 %v8543, %v9928
      %v9937 = vmul.f32 %v9929, 1.442695
      %v9938 = vpow.pop %v9937
      %v9939 = vmul.f32 %v9930, 1.442695
      %v9940 = vpow.pop %v9939
      %v9941 = vmul.f32 %v9931, 1.442695
      %v9942 = vpow.pop %v9941
      %v9943 = vmul.f32 %v9932, 1.442695
      %v9944 = vpow.pop %v9943
      %v9945 = vmul.f32 %v9933, 1.442695
      %v9946 = vpow.pop %v9945
      %v9947 = vmul.f32 %v9934, 1.442695
      %v9948 = vpow.pop %v9947
      %v9949 = vmul.f32 %v9935, 1.442695
      %v9950 = vpow.pop %v9949
      %v9951 = vmul.f32 %v9936, 1.442695
      %v9952 = vpow.pop %v9951
      %9961 = vrot.lane.b32.xlu0 %v9938, 113
      %v9962 = vpop.permute.xlu0 %9961
      %9963 = vrot.lane.b32.xlu0 %v9940, 113
      %v9964 = vpop.permute.xlu0 %9963
      %9965 = vrot.lane.b32.xlu0 %v9942, 113
      %v9966 = vpop.permute.xlu0 %9965
      %9967 = vrot.lane.b32.xlu0 %v9944, 113
      %v9968 = vpop.permute.xlu0 %9967
      %9969 = vrot.lane.b32.xlu0 %v9946, 113
      %v9970 = vpop.permute.xlu0 %9969
      %9971 = vrot.lane.b32.xlu0 %v9948, 113
      %v9972 = vpop.permute.xlu0 %9971
      %9973 = vrot.lane.b32.xlu0 %v9950, 113
      %v9974 = vpop.permute.xlu0 %9973
      %9975 = vrot.lane.b32.xlu0 %v9952, 113
      %v9976 = vpop.permute.xlu0 %9975
      %v9985 = vsel %vm8890, %v9962, 0.0
      %9986 = vadd.xlane.f32.xlu0 %v9985
      %v9987 = vpop.xlane.xlu0 %9986
      %v9988 = vsel %vm8890, %v9964, 0.0
      %9989 = vadd.xlane.f32.xlu0 %v9988
      %v9990 = vpop.xlane.xlu0 %9989
      %v9991 = vsel %vm8890, %v9966, 0.0
      %9992 = vadd.xlane.f32.xlu0 %v9991
      %v9993 = vpop.xlane.xlu0 %9992
      %v9994 = vsel %vm8890, %v9968, 0.0
      %9995 = vadd.xlane.f32.xlu0 %v9994
      %v9996 = vpop.xlane.xlu0 %9995
      %v9997 = vsel %vm8890, %v9970, 0.0
      %9998 = vadd.xlane.f32.xlu0 %v9997
      %v9999 = vpop.xlane.xlu0 %9998
      %v10000 = vsel %vm8890, %v9972, 0.0
      %10001 = vadd.xlane.f32.xlu0 %v10000
      %v10002 = vpop.xlane.xlu0 %10001
      %v10003 = vsel %vm8890, %v9974, 0.0
      %10004 = vadd.xlane.f32.xlu0 %v10003
      %v10005 = vpop.xlane.xlu0 %10004
      %v10006 = vsel %vm8890, %v9976, 0.0
      %10007 = vadd.xlane.f32.xlu0 %v10006
      %v10008 = vpop.xlane.xlu0 %10007
      %v10009 = vrcp.pop %v9987
      %v10010 = vmul.f32 %v9938, %v10009
      %v10011 = vrcp.pop %v9990
      %v10012 = vmul.f32 %v9940, %v10011
      %v10013 = vrcp.pop %v9993
      %v10014 = vmul.f32 %v9942, %v10013
      %v10015 = vrcp.pop %v9996
      %v10016 = vmul.f32 %v9944, %v10015
      %v10017 = vrcp.pop %v9999
      %v10018 = vmul.f32 %v9946, %v10017
      %v10019 = vrcp.pop %v10002
      %v10020 = vmul.f32 %v9948, %v10019
      %v10021 = vrcp.pop %v10005
      %v10022 = vmul.f32 %v9950, %v10021
      %v10023 = vrcp.pop %v10008
      %v10024 = vmul.f32 %v9952, %v10023
      %s10025 = scalar_lea.vmem %s11, 192
      %v10026 = vld [vmem:[%s10025] sm:$0xff]
      %v10027 = vld [vmem:[%s10025 + $0x8] sm:$0xff]
      %v10028 = vld [vmem:[%s10025 + $0x10] sm:$0xff]
      %v10029 = vld [vmem:[%s10025 + $0x18] sm:$0xff]
      %v10030 = vld [vmem:[%s10025 + $0x20] sm:$0xff]
      %v10031 = vld [vmem:[%s10025 + $0x28] sm:$0xff]
      %v10032 = vld [vmem:[%s10025 + $0x30] sm:$0xff]
      %v10033 = vld [vmem:[%s10025 + $0x38] sm:$0xff]
      %10042 = vrot.lane.b32.xlu0 %v10026, 30
      %v10043 = vpop.permute.xlu0 %10042
      %10044 = vrot.lane.b32.xlu0 %v10027, 30
      %v10045 = vpop.permute.xlu0 %10044
      %10046 = vrot.lane.b32.xlu0 %v10028, 30
      %v10047 = vpop.permute.xlu0 %10046
      %10048 = vrot.lane.b32.xlu0 %v10029, 30
      %v10049 = vpop.permute.xlu0 %10048
      %10050 = vrot.lane.b32.xlu0 %v10030, 30
      %v10051 = vpop.permute.xlu0 %10050
      %10052 = vrot.lane.b32.xlu0 %v10031, 30
      %v10053 = vpop.permute.xlu0 %10052
      %10054 = vrot.lane.b32.xlu0 %v10032, 30
      %v10055 = vpop.permute.xlu0 %10054
      %10056 = vrot.lane.b32.xlu0 %v10033, 30
      %v10057 = vpop.permute.xlu0 %10056
      %v10066 = vmul.f32 %v8987, %v10043
      %v10067 = vmul.f32 %v8988, %v10045
      %v10068 = vmul.f32 %v8989, %v10047
      %v10069 = vmul.f32 %v8990, %v10049
      %v10070 = vmul.f32 %v8991, %v10051
      %v10071 = vmul.f32 %v8992, %v10053
      %v10072 = vmul.f32 %v8993, %v10055
      %v10073 = vmul.f32 %v8994, %v10057
      %10074 = vrot.lane.b32.xlu0 %v10026, 32
      %v10075 = vpop.permute.xlu0 %10074
      %10076 = vrot.lane.b32.xlu0 %v10027, 32
      %v10077 = vpop.permute.xlu0 %10076
      %10078 = vrot.lane.b32.xlu0 %v10028, 32
      %v10079 = vpop.permute.xlu0 %10078
      %10080 = vrot.lane.b32.xlu0 %v10029, 32
      %v10081 = vpop.permute.xlu0 %10080
      %10082 = vrot.lane.b32.xlu0 %v10030, 32
      %v10083 = vpop.permute.xlu0 %10082
      %10084 = vrot.lane.b32.xlu0 %v10031, 32
      %v10085 = vpop.permute.xlu0 %10084
      %10086 = vrot.lane.b32.xlu0 %v10032, 32
      %v10087 = vpop.permute.xlu0 %10086
      %10088 = vrot.lane.b32.xlu0 %v10033, 32
      %v10089 = vpop.permute.xlu0 %10088
      %v10098 = vadd.f32 %v10066, %v10075
      %v10099 = vadd.f32 %v10067, %v10077
      %v10100 = vadd.f32 %v10068, %v10079
      %v10101 = vadd.f32 %v10069, %v10081
      %v10102 = vadd.f32 %v10070, %v10083
      %v10103 = vadd.f32 %v10071, %v10085
      %v10104 = vadd.f32 %v10072, %v10087
      %v10105 = vadd.f32 %v10073, %v10089
      %v10106 = vmul.f32 %v9076, %v10075
      %v10107 = vmul.f32 %v9078, %v10077
      %v10108 = vmul.f32 %v9080, %v10079
      %v10109 = vmul.f32 %v9082, %v10081
      %v10110 = vmul.f32 %v9084, %v10083
      %v10111 = vmul.f32 %v9086, %v10085
      %v10112 = vmul.f32 %v9088, %v10087
      %v10113 = vmul.f32 %v9090, %v10089
      %v10114 = vmul.f32 %v10106, 0.5
      %v10115 = vmul.f32 %v10107, 0.5
      %v10116 = vmul.f32 %v10108, 0.5
      %v10117 = vmul.f32 %v10109, 0.5
      %v10118 = vmul.f32 %v10110, 0.5
      %v10119 = vmul.f32 %v10111, 0.5
      %v10120 = vmul.f32 %v10112, 0.5
      %v10121 = vmul.f32 %v10113, 0.5
      %10130 = vrot.lane.b32.xlu0 %v10114, 126
      %v10131 = vpop.permute.xlu0 %10130
      %10132 = vrot.lane.b32.xlu0 %v10115, 126
      %v10133 = vpop.permute.xlu0 %10132
      %10134 = vrot.lane.b32.xlu0 %v10116, 126
      %v10135 = vpop.permute.xlu0 %10134
      %10136 = vrot.lane.b32.xlu0 %v10117, 126
      %v10137 = vpop.permute.xlu0 %10136
      %10138 = vrot.lane.b32.xlu0 %v10118, 126
      %v10139 = vpop.permute.xlu0 %10138
      %10140 = vrot.lane.b32.xlu0 %v10119, 126
      %v10141 = vpop.permute.xlu0 %10140
      %10142 = vrot.lane.b32.xlu0 %v10120, 126
      %v10143 = vpop.permute.xlu0 %10142
      %10144 = vrot.lane.b32.xlu0 %v10121, 126
      %v10145 = vpop.permute.xlu0 %10144
      %v10154 = vsub.f32 %v10098, %v10131
      %v10155 = vsub.f32 %v10099, %v10133
      %v10156 = vsub.f32 %v10100, %v10135
      %v10157 = vsub.f32 %v10101, %v10137
      %v10158 = vsub.f32 %v10102, %v10139
      %v10159 = vsub.f32 %v10103, %v10141
      %v10160 = vsub.f32 %v10104, %v10143
      %v10161 = vsub.f32 %v10105, %v10145
      %v10162 = vadd.f32 %v10098, %v10131
      %v10163 = vadd.f32 %v10099, %v10133
      %v10164 = vadd.f32 %v10100, %v10135
      %v10165 = vadd.f32 %v10101, %v10137
      %v10166 = vadd.f32 %v10102, %v10139
      %v10167 = vadd.f32 %v10103, %v10141
      %v10168 = vadd.f32 %v10104, %v10143
      %v10169 = vadd.f32 %v10105, %v10145
      %10178 = vrot.lane.b32.xlu0 %v10154, 96
      %v10179 = vpop.permute.xlu0 %10178
      %10180 = vrot.lane.b32.xlu0 %v10155, 96
      %v10181 = vpop.permute.xlu0 %10180
      %10182 = vrot.lane.b32.xlu0 %v10156, 96
      %v10183 = vpop.permute.xlu0 %10182
      %10184 = vrot.lane.b32.xlu0 %v10157, 96
      %v10185 = vpop.permute.xlu0 %10184
      %10186 = vrot.lane.b32.xlu0 %v10158, 96
      %v10187 = vpop.permute.xlu0 %10186
      %10188 = vrot.lane.b32.xlu0 %v10159, 96
      %v10189 = vpop.permute.xlu0 %10188
      %10190 = vrot.lane.b32.xlu0 %v10160, 96
      %v10191 = vpop.permute.xlu0 %10190
      %10192 = vrot.lane.b32.xlu0 %v10161, 96
      %v10193 = vpop.permute.xlu0 %10192
      %10210 = vrot.lane.b32.xlu0 %v10162, 98
      %v10211 = vpop.permute.xlu0 %10210
      %10212 = vrot.lane.b32.xlu0 %v10163, 98
      %v10213 = vpop.permute.xlu0 %10212
      %10214 = vrot.lane.b32.xlu0 %v10164, 98
      %v10215 = vpop.permute.xlu0 %10214
      %10216 = vrot.lane.b32.xlu0 %v10165, 98
      %v10217 = vpop.permute.xlu0 %10216
      %10218 = vrot.lane.b32.xlu0 %v10166, 98
      %v10219 = vpop.permute.xlu0 %10218
      %10220 = vrot.lane.b32.xlu0 %v10167, 98
      %v10221 = vpop.permute.xlu0 %10220
      %10222 = vrot.lane.b32.xlu0 %v10168, 98
      %v10223 = vpop.permute.xlu0 %10222
      %10224 = vrot.lane.b32.xlu0 %v10169, 98
      %v10225 = vpop.permute.xlu0 %10224
      %v10234 = vsel %vm9219, %v10179, %v10211
      %v10235 = vsel %vm9219, %v10181, %v10213
      %v10236 = vsel %vm9219, %v10183, %v10215
      %v10237 = vsel %vm9219, %v10185, %v10217
      %v10238 = vsel %vm9219, %v10187, %v10219
      %v10239 = vsel %vm9219, %v10189, %v10221
      %v10240 = vsel %vm9219, %v10191, %v10223
      %v10241 = vsel %vm9219, %v10193, %v10225
      %v10242 = vsel %vm8890, %v8964, %v9334
      %v10243 = vsel %vm8890, %v8966, %v9336
      %v10244 = vsel %vm8890, %v8968, %v9338
      %v10245 = vsel %vm8890, %v8970, %v9340
      %v10246 = vsel %vm8890, %v8972, %v9342
      %v10247 = vsel %vm8890, %v8974, %v9344
      %v10248 = vsel %vm8890, %v8976, %v9346
      %v10249 = vsel %vm8890, %v8978, %v9348
      %vm10250 = vcmask 80896
      %v10251 = vsel %vm10250, %v10242, %v9672
      %v10252 = vsel %vm10250, %v10243, %v9674
      %v10253 = vsel %vm10250, %v10244, %v9676
      %v10254 = vsel %vm10250, %v10245, %v9678
      %v10255 = vsel %vm10250, %v10246, %v9680
      %v10256 = vsel %vm10250, %v10247, %v9682
      %v10257 = vsel %vm10250, %v10248, %v9684
      %v10258 = vsel %vm10250, %v10249, %v9686
      %v10259 = vsel %vm1716, %v10251, %v10010
      %v10260 = vsel %vm1716, %v10252, %v10012
      %v10261 = vsel %vm1716, %v10253, %v10014
      %v10262 = vsel %vm1716, %v10254, %v10016
      %v10263 = vsel %vm1716, %v10255, %v10018
      %v10264 = vsel %vm1716, %v10256, %v10020
      %v10265 = vsel %vm1716, %v10257, %v10022
      %v10266 = vsel %vm1716, %v10258, %v10024
      %10275 = vrot.lane.b32.xlu0 %v9558, 4
      %v10276 = vpop.permute.xlu0 %10275
      %10277 = vrot.lane.b32.xlu0 %v9559, 4
      %v10278 = vpop.permute.xlu0 %10277
      %10279 = vrot.lane.b32.xlu0 %v9560, 4
      %v10280 = vpop.permute.xlu0 %10279
      %10281 = vrot.lane.b32.xlu0 %v9561, 4
      %v10282 = vpop.permute.xlu0 %10281
      %10283 = vrot.lane.b32.xlu0 %v9562, 4
      %v10284 = vpop.permute.xlu0 %10283
      %10285 = vrot.lane.b32.xlu0 %v9563, 4
      %v10286 = vpop.permute.xlu0 %10285
      %10287 = vrot.lane.b32.xlu0 %v9564, 4
      %v10288 = vpop.permute.xlu0 %10287
      %10289 = vrot.lane.b32.xlu0 %v9565, 4
      %v10290 = vpop.permute.xlu0 %10289
      %10307 = vrot.lane.b32.xlu0 %v9896, 8
      %v10308 = vpop.permute.xlu0 %10307
      %10309 = vrot.lane.b32.xlu0 %v9897, 8
      %v10310 = vpop.permute.xlu0 %10309
      %10311 = vrot.lane.b32.xlu0 %v9898, 8
      %v10312 = vpop.permute.xlu0 %10311
      %10313 = vrot.lane.b32.xlu0 %v9899, 8
      %v10314 = vpop.permute.xlu0 %10313
      %10315 = vrot.lane.b32.xlu0 %v9900, 8
      %v10316 = vpop.permute.xlu0 %10315
      %10317 = vrot.lane.b32.xlu0 %v9901, 8
      %v10318 = vpop.permute.xlu0 %10317
      %10319 = vrot.lane.b32.xlu0 %v9902, 8
      %v10320 = vpop.permute.xlu0 %10319
      %10321 = vrot.lane.b32.xlu0 %v9903, 8
      %v10322 = vpop.permute.xlu0 %10321
      %10339 = vrot.lane.b32.xlu0 %v10234, 12
      %v10340 = vpop.permute.xlu0 %10339
      %10341 = vrot.lane.b32.xlu0 %v10235, 12
      %v10342 = vpop.permute.xlu0 %10341
      %10343 = vrot.lane.b32.xlu0 %v10236, 12
      %v10344 = vpop.permute.xlu0 %10343
      %10345 = vrot.lane.b32.xlu0 %v10237, 12
      %v10346 = vpop.permute.xlu0 %10345
      %10347 = vrot.lane.b32.xlu0 %v10238, 12
      %v10348 = vpop.permute.xlu0 %10347
      %10349 = vrot.lane.b32.xlu0 %v10239, 12
      %v10350 = vpop.permute.xlu0 %10349
      %10351 = vrot.lane.b32.xlu0 %v10240, 12
      %v10352 = vpop.permute.xlu0 %10351
      %10353 = vrot.lane.b32.xlu0 %v10241, 12
      %v10354 = vpop.permute.xlu0 %10353
      %vm10363 = vcmask 31744
      %v10364 = vsel %vm10363, %v9220, %v10276
      %v10365 = vsel %vm10363, %v9221, %v10278
      %v10366 = vsel %vm10363, %v9222, %v10280
      %v10367 = vsel %vm10363, %v9223, %v10282
      %v10368 = vsel %vm10363, %v9224, %v10284
      %v10369 = vsel %vm10363, %v9225, %v10286
      %v10370 = vsel %vm10363, %v9226, %v10288
      %v10371 = vsel %vm10363, %v9227, %v10290
      %vm10372 = vcmask 64512
      %v10373 = vsel %vm10372, %v10364, %v10308
      %v10374 = vsel %vm10372, %v10365, %v10310
      %v10375 = vsel %vm10372, %v10366, %v10312
      %v10376 = vsel %vm10372, %v10367, %v10314
      %v10377 = vsel %vm10372, %v10368, %v10316
      %v10378 = vsel %vm10372, %v10369, %v10318
      %v10379 = vsel %vm10372, %v10370, %v10320
      %v10380 = vsel %vm10372, %v10371, %v10322
      %v10381 = vsel %vm1683, %v10373, %v10340
      %v10382 = vsel %vm1683, %v10374, %v10342
      %v10383 = vsel %vm1683, %v10375, %v10344
      %v10384 = vsel %vm1683, %v10376, %v10346
      %v10385 = vsel %vm1683, %v10377, %v10348
      %v10386 = vsel %vm1683, %v10378, %v10350
      %v10387 = vsel %vm1683, %v10379, %v10352
      %v10388 = vsel %vm1683, %v10380, %v10354
      %v10389 = vsel %vm8890, %v8884, -inf
      %10390 = vmax.xlane.f32.xlu0 %v10389
      %v10391 = vpop.xlane.xlu0 %10390
      %v10392 = vsel %vm8890, %v8887, -inf
      %10393 = vmax.xlane.f32.xlu0 %v10392
      %v10394 = vpop.xlane.xlu0 %10393
      %v10395 = vsub.f32 %v8884, %v10391
      %v10396 = vsub.f32 %v8887, %v10394
      %v10397 = vmul.f32 %v10395, 1.442695
      %v10398 = vpow.pop %v10397
      %v10399 = vmul.f32 %v10396, 1.442695
      %v10400 = vpow.pop %v10399
      %v10401 = vsel %vm8890, %v10398, 0.0
      %10402 = vadd.xlane.f32.xlu0 %v10401
      %v10403 = vpop.xlane.xlu0 %10402
      %v10404 = vsel %vm8890, %v10400, 0.0
      %10405 = vadd.xlane.f32.xlu0 %v10404
      %v10406 = vpop.xlane.xlu0 %10405
      %v10407 = vrcp.pop %v10403
      %v10408 = vmul.f32 %v10398, %v10407
      %v10409 = vrcp.pop %v10406
      %v10410 = vmul.f32 %v10400, %v10409
      %v10411 = vld [vmem:[%s12] sm:$0xff]
      %v10412 = vld [vmem:[%s12 + $0x8] sm:$0xff]
      %v10413 = vmul.f32 %v8884, 0.1
      %v10414 = vmul.f32 %v8887, 0.1
      %10417 = vrot.lane.b32.xlu0 %v10411, 18
      %v10418 = vpop.permute.xlu0 %10417
      %10419 = vrot.lane.b32.xlu0 %v10412, 18
      %v10420 = vpop.permute.xlu0 %10419
      %v10423 = vmul.f32 %v10413, %v10418
      %v10424 = vmul.f32 %v10414, %v10420
      %10425 = vrot.lane.b32.xlu0 %v10411, 20
      %v10426 = vpop.permute.xlu0 %10425
      %10427 = vrot.lane.b32.xlu0 %v10412, 20
      %v10428 = vpop.permute.xlu0 %10427
      %v10431 = vadd.f32 %v10423, %v10426
      %v10432 = vadd.f32 %v10424, %v10428
      %v10433 = vmul.f32 %v8884, 0.2
      %v10434 = vmul.f32 %v8887, 0.2
      %v10435 = vmul.f32 %v10433, 1.442695
      %v10436 = vpow.pop %v10435
      %v10437 = vmul.f32 %v10434, 1.442695
      %v10438 = vpow.pop %v10437
      %v10439 = vmul.f32 %v10436, %v10426
      %v10440 = vmul.f32 %v10438, %v10428
      %v10441 = vmul.f32 %v10439, 0.5
      %v10442 = vmul.f32 %v10440, 0.5
      %10445 = vrot.lane.b32.xlu0 %v10441, 126
      %v10446 = vpop.permute.xlu0 %10445
      %10447 = vrot.lane.b32.xlu0 %v10442, 126
      %v10448 = vpop.permute.xlu0 %10447
      %v10451 = vsub.f32 %v10431, %v10446
      %v10452 = vsub.f32 %v10432, %v10448
      %v10453 = vadd.f32 %v10431, %v10446
      %v10454 = vadd.f32 %v10432, %v10448
      %10457 = vrot.lane.b32.xlu0 %v10451, 108
      %v10458 = vpop.permute.xlu0 %10457
      %10459 = vrot.lane.b32.xlu0 %v10452, 108
      %v10460 = vpop.permute.xlu0 %10459
      %10465 = vrot.lane.b32.xlu0 %v10453, 110
      %v10466 = vpop.permute.xlu0 %10465
      %10467 = vrot.lane.b32.xlu0 %v10454, 110
      %v10468 = vpop.permute.xlu0 %10467
      %v10471 = vsel %vm9219, %v10458, %v10466
      %v10472 = vsel %vm9219, %v10460, %v10468
      %v10473 = vsel %vm9228, %v8884, -inf
      %10474 = vmax.xlane.f32.xlu0 %v10473
      %v10475 = vpop.xlane.xlu0 %10474
      %v10476 = vsel %vm9228, %v8887, -inf
      %10477 = vmax.xlane.f32.xlu0 %v10476
      %v10478 = vpop.xlane.xlu0 %10477
      %v10479 = vsub.f32 %v8884, %v10475
      %v10480 = vsub.f32 %v8887, %v10478
      %v10481 = vmul.f32 %v10479, 1.442695
      %v10482 = vpow.pop %v10481
      %v10483 = vmul.f32 %v10480, 1.442695
      %v10484 = vpow.pop %v10483
      %10487 = vrot.lane.b32.xlu0 %v10482, 123
      %v10488 = vpop.permute.xlu0 %10487
      %10489 = vrot.lane.b32.xlu0 %v10484, 123
      %v10490 = vpop.permute.xlu0 %10489
      %v10493 = vsel %vm8890, %v10488, 0.0
      %10494 = vadd.xlane.f32.xlu0 %v10493
      %v10495 = vpop.xlane.xlu0 %10494
      %v10496 = vsel %vm8890, %v10490, 0.0
      %10497 = vadd.xlane.f32.xlu0 %v10496
      %v10498 = vpop.xlane.xlu0 %10497
      %v10499 = vrcp.pop %v10495
      %v10500 = vmul.f32 %v10482, %v10499
      %v10501 = vrcp.pop %v10498
      %v10502 = vmul.f32 %v10484, %v10501
      %s10503 = scalar_lea.vmem %s12, 16
      %v10504 = vld [vmem:[%s10503] sm:$0xff]
      %v10505 = vld [vmem:[%s10503 + $0x8] sm:$0xff]
      %10508 = vrot.lane.b32.xlu0 %v10504, 22
      %v10509 = vpop.permute.xlu0 %10508
      %10510 = vrot.lane.b32.xlu0 %v10505, 22
      %v10511 = vpop.permute.xlu0 %10510
      %v10514 = vmul.f32 %v10413, %v10509
      %v10515 = vmul.f32 %v10414, %v10511
      %10516 = vrot.lane.b32.xlu0 %v10504, 24
      %v10517 = vpop.permute.xlu0 %10516
      %10518 = vrot.lane.b32.xlu0 %v10505, 24
      %v10519 = vpop.permute.xlu0 %10518
      %v10522 = vadd.f32 %v10514, %v10517
      %v10523 = vadd.f32 %v10515, %v10519
      %v10524 = vmul.f32 %v10436, %v10517
      %v10525 = vmul.f32 %v10438, %v10519
      %v10526 = vmul.f32 %v10524, 0.5
      %v10527 = vmul.f32 %v10525, 0.5
      %10530 = vrot.lane.b32.xlu0 %v10526, 126
      %v10531 = vpop.permute.xlu0 %10530
      %10532 = vrot.lane.b32.xlu0 %v10527, 126
      %v10533 = vpop.permute.xlu0 %10532
      %v10536 = vsub.f32 %v10522, %v10531
      %v10537 = vsub.f32 %v10523, %v10533
      %v10538 = vadd.f32 %v10522, %v10531
      %v10539 = vadd.f32 %v10523, %v10533
      %10542 = vrot.lane.b32.xlu0 %v10536, 104
      %v10543 = vpop.permute.xlu0 %10542
      %10544 = vrot.lane.b32.xlu0 %v10537, 104
      %v10545 = vpop.permute.xlu0 %10544
      %10550 = vrot.lane.b32.xlu0 %v10538, 106
      %v10551 = vpop.permute.xlu0 %10550
      %10552 = vrot.lane.b32.xlu0 %v10539, 106
      %v10553 = vpop.permute.xlu0 %10552
      %v10556 = vsel %vm9219, %v10543, %v10551
      %v10557 = vsel %vm9219, %v10545, %v10553
      %v10558 = vsel %vm9566, %v8884, -inf
      %10559 = vmax.xlane.f32.xlu0 %v10558
      %v10560 = vpop.xlane.xlu0 %10559
      %v10561 = vsel %vm9566, %v8887, -inf
      %10562 = vmax.xlane.f32.xlu0 %v10561
      %v10563 = vpop.xlane.xlu0 %10562
      %v10564 = vsub.f32 %v8884, %v10560
      %v10565 = vsub.f32 %v8887, %v10563
      %v10566 = vmul.f32 %v10564, 1.442695
      %v10567 = vpow.pop %v10566
      %v10568 = vmul.f32 %v10565, 1.442695
      %v10569 = vpow.pop %v10568
      %10572 = vrot.lane.b32.xlu0 %v10567, 118
      %v10573 = vpop.permute.xlu0 %10572
      %10574 = vrot.lane.b32.xlu0 %v10569, 118
      %v10575 = vpop.permute.xlu0 %10574
      %v10578 = vsel %vm8890, %v10573, 0.0
      %10579 = vadd.xlane.f32.xlu0 %v10578
      %v10580 = vpop.xlane.xlu0 %10579
      %v10581 = vsel %vm8890, %v10575, 0.0
      %10582 = vadd.xlane.f32.xlu0 %v10581
      %v10583 = vpop.xlane.xlu0 %10582
      %v10584 = vrcp.pop %v10580
      %v10585 = vmul.f32 %v10567, %v10584
      %v10586 = vrcp.pop %v10583
      %v10587 = vmul.f32 %v10569, %v10586
      %s10588 = scalar_lea.vmem %s12, 32
      %v10589 = vld [vmem:[%s10588] sm:$0xff]
      %v10590 = vld [vmem:[%s10588 + $0x8] sm:$0xff]
      %10593 = vrot.lane.b32.xlu0 %v10589, 26
      %v10594 = vpop.permute.xlu0 %10593
      %10595 = vrot.lane.b32.xlu0 %v10590, 26
      %v10596 = vpop.permute.xlu0 %10595
      %v10599 = vmul.f32 %v10413, %v10594
      %v10600 = vmul.f32 %v10414, %v10596
      %10601 = vrot.lane.b32.xlu0 %v10589, 28
      %v10602 = vpop.permute.xlu0 %10601
      %10603 = vrot.lane.b32.xlu0 %v10590, 28
      %v10604 = vpop.permute.xlu0 %10603
      %v10607 = vadd.f32 %v10599, %v10602
      %v10608 = vadd.f32 %v10600, %v10604
      %v10609 = vmul.f32 %v10436, %v10602
      %v10610 = vmul.f32 %v10438, %v10604
      %v10611 = vmul.f32 %v10609, 0.5
      %v10612 = vmul.f32 %v10610, 0.5
      %10615 = vrot.lane.b32.xlu0 %v10611, 126
      %v10616 = vpop.permute.xlu0 %10615
      %10617 = vrot.lane.b32.xlu0 %v10612, 126
      %v10618 = vpop.permute.xlu0 %10617
      %v10621 = vsub.f32 %v10607, %v10616
      %v10622 = vsub.f32 %v10608, %v10618
      %v10623 = vadd.f32 %v10607, %v10616
      %v10624 = vadd.f32 %v10608, %v10618
      %10627 = vrot.lane.b32.xlu0 %v10621, 100
      %v10628 = vpop.permute.xlu0 %10627
      %10629 = vrot.lane.b32.xlu0 %v10622, 100
      %v10630 = vpop.permute.xlu0 %10629
      %10635 = vrot.lane.b32.xlu0 %v10623, 102
      %v10636 = vpop.permute.xlu0 %10635
      %10637 = vrot.lane.b32.xlu0 %v10624, 102
      %v10638 = vpop.permute.xlu0 %10637
      %v10641 = vsel %vm9219, %v10628, %v10636
      %v10642 = vsel %vm9219, %v10630, %v10638
      %v10643 = vsel %vm9904, %v8884, -inf
      %10644 = vmax.xlane.f32.xlu0 %v10643
      %v10645 = vpop.xlane.xlu0 %10644
      %v10646 = vsel %vm9904, %v8887, -inf
      %10647 = vmax.xlane.f32.xlu0 %v10646
      %v10648 = vpop.xlane.xlu0 %10647
      %v10649 = vsub.f32 %v8884, %v10645
      %v10650 = vsub.f32 %v8887, %v10648
      %v10651 = vmul.f32 %v10649, 1.442695
      %v10652 = vpow.pop %v10651
      %v10653 = vmul.f32 %v10650, 1.442695
      %v10654 = vpow.pop %v10653
      %10657 = vrot.lane.b32.xlu0 %v10652, 113
      %v10658 = vpop.permute.xlu0 %10657
      %10659 = vrot.lane.b32.xlu0 %v10654, 113
      %v10660 = vpop.permute.xlu0 %10659
      %v10663 = vsel %vm8890, %v10658, 0.0
      %10664 = vadd.xlane.f32.xlu0 %v10663
      %v10665 = vpop.xlane.xlu0 %10664
      %v10666 = vsel %vm8890, %v10660, 0.0
      %10667 = vadd.xlane.f32.xlu0 %v10666
      %v10668 = vpop.xlane.xlu0 %10667
      %v10669 = vrcp.pop %v10665
      %v10670 = vmul.f32 %v10652, %v10669
      %v10671 = vrcp.pop %v10668
      %v10672 = vmul.f32 %v10654, %v10671
      %s10673 = scalar_lea.vmem %s12, 48
      %v10674 = vld [vmem:[%s10673] sm:$0xff]
      %v10675 = vld [vmem:[%s10673 + $0x8] sm:$0xff]
      %10678 = vrot.lane.b32.xlu0 %v10674, 30
      %v10679 = vpop.permute.xlu0 %10678
      %10680 = vrot.lane.b32.xlu0 %v10675, 30
      %v10681 = vpop.permute.xlu0 %10680
      %v10684 = vmul.f32 %v10413, %v10679
      %v10685 = vmul.f32 %v10414, %v10681
      %10686 = vrot.lane.b32.xlu0 %v10674, 32
      %v10687 = vpop.permute.xlu0 %10686
      %10688 = vrot.lane.b32.xlu0 %v10675, 32
      %v10689 = vpop.permute.xlu0 %10688
      %v10692 = vadd.f32 %v10684, %v10687
      %v10693 = vadd.f32 %v10685, %v10689
      %v10694 = vmul.f32 %v10436, %v10687
      %v10695 = vmul.f32 %v10438, %v10689
      %v10696 = vmul.f32 %v10694, 0.5
      %v10697 = vmul.f32 %v10695, 0.5
      %10700 = vrot.lane.b32.xlu0 %v10696, 126
      %v10701 = vpop.permute.xlu0 %10700
      %10702 = vrot.lane.b32.xlu0 %v10697, 126
      %v10703 = vpop.permute.xlu0 %10702
      %v10706 = vsub.f32 %v10692, %v10701
      %v10707 = vsub.f32 %v10693, %v10703
      %v10708 = vadd.f32 %v10692, %v10701
      %v10709 = vadd.f32 %v10693, %v10703
      %10712 = vrot.lane.b32.xlu0 %v10706, 96
      %v10713 = vpop.permute.xlu0 %10712
      %10714 = vrot.lane.b32.xlu0 %v10707, 96
      %v10715 = vpop.permute.xlu0 %10714
      %10720 = vrot.lane.b32.xlu0 %v10708, 98
      %v10721 = vpop.permute.xlu0 %10720
      %10722 = vrot.lane.b32.xlu0 %v10709, 98
      %v10723 = vpop.permute.xlu0 %10722
      %v10726 = vsel %vm9219, %v10713, %v10721
      %v10727 = vsel %vm9219, %v10715, %v10723
      %v10728 = vsel %vm8890, %v10408, %v10500
      %v10729 = vsel %vm8890, %v10410, %v10502
      %v10730 = vsel %vm10250, %v10728, %v10585
      %v10731 = vsel %vm10250, %v10729, %v10587
      %v10732 = vsel %vm1716, %v10730, %v10670
      %v10733 = vsel %vm1716, %v10731, %v10672
      %10736 = vrot.lane.b32.xlu0 %v10556, 4
      %v10737 = vpop.permute.xlu0 %10736
      %10738 = vrot.lane.b32.xlu0 %v10557, 4
      %v10739 = vpop.permute.xlu0 %10738
      %10744 = vrot.lane.b32.xlu0 %v10641, 8
      %v10745 = vpop.permute.xlu0 %10744
      %10746 = vrot.lane.b32.xlu0 %v10642, 8
      %v10747 = vpop.permute.xlu0 %10746
      %10752 = vrot.lane.b32.xlu0 %v10726, 12
      %v10753 = vpop.permute.xlu0 %10752
      %10754 = vrot.lane.b32.xlu0 %v10727, 12
      %v10755 = vpop.permute.xlu0 %10754
      %v10758 = vsel %vm10363, %v10471, %v10737
      %v10759 = vsel %vm10363, %v10472, %v10739
      %v10760 = vsel %vm10372, %v10758, %v10745
      %v10761 = vsel %vm10372, %v10759, %v10747
      %v10762 = vsel %vm1683, %v10760, %v10753
      %v10763 = vsel %vm1683, %v10761, %v10755
      %vm10764 = vcmask 162816
      %10765 = vst.msk [vmem:[%s475] sm:$0xff] %vm10764, %v10259
      %10766 = vst.msk [vmem:[%s475 + $0x8] sm:$0xff] %vm10764, %v10260
      %10767 = vst.msk [vmem:[%s475 + $0x10] sm:$0xff] %vm10764, %v10261
      %10768 = vst.msk [vmem:[%s475 + $0x18] sm:$0xff] %vm10764, %v10262
      %10769 = vst.msk [vmem:[%s475 + $0x20] sm:$0xff] %vm10764, %v10263
      %10770 = vst.msk [vmem:[%s475 + $0x28] sm:$0xff] %vm10764, %v10264
      %10771 = vst.msk [vmem:[%s475 + $0x30] sm:$0xff] %vm10764, %v10265
      %10772 = vst.msk [vmem:[%s475 + $0x38] sm:$0xff] %vm10764, %v10266
      %10773 = vst.msk [vmem:[%s475 + $0x40] sm:$0xff] %vm10764, %v10732
      %10774 = vst.msk [vmem:[%s475 + $0x48] sm:$0xff] %vm10764, %v10733
      %10775 = vst.msk [vmem:[%s480] sm:$0xff] %vm2135, %v10381
      %10776 = vst.msk [vmem:[%s480 + $0x8] sm:$0xff] %vm2135, %v10382
      %10777 = vst.msk [vmem:[%s480 + $0x10] sm:$0xff] %vm2135, %v10383
      %10778 = vst.msk [vmem:[%s480 + $0x18] sm:$0xff] %vm2135, %v10384
      %10779 = vst.msk [vmem:[%s480 + $0x20] sm:$0xff] %vm2135, %v10385
      %10780 = vst.msk [vmem:[%s480 + $0x28] sm:$0xff] %vm2135, %v10386
      %10781 = vst.msk [vmem:[%s480 + $0x30] sm:$0xff] %vm2135, %v10387
      %10782 = vst.msk [vmem:[%s480 + $0x38] sm:$0xff] %vm2135, %v10388
      %10783 = vst.msk [vmem:[%s480 + $0x40] sm:$0xff] %vm2135, %v10762
      %10784 = vst.msk [vmem:[%s480 + $0x48] sm:$0xff] %vm2135, %v10763
      %p10785 = scmp.lt.s32.totalorder %s26, 1
      %s10786 = scalar_select %p10785, %s26, 1
      %s10787 = smul.addr %s10786, 10
      %s10788 = smul.addr %s10787, 8
      %s10789 = scalar_lea.vmem %s13, %s10788
      %p10790 = scmp.lt.s32.totalorder %s26, 1
      %s10791 = scalar_select %p10790, %s26, 1
      %s10792 = smul.addr %s10791, 10
      %s10793 = smul.addr %s10792, 8
      %s10794 = scalar_lea.vmem %s14, %s10793
      // Predicated region
      $region73: #{tpu_custom_call.1} parent=71 // pred_check
        %p10795 = pneg %p322
      $region74: #{tpu_custom_call.1} parent=71 // pred_check_branch
        %10797 = sbr.rel (%p10795) target = $region76
      $region75: #{tpu_custom_call.1} parent=71 // pred_region
        _
      $region76: #{tpu_custom_call.1} parent=71 // pred_fallthru
        _
      // Predicated region
      $region77: #{tpu_custom_call.1} parent=71 // pred_check
        %p10798 = pneg %p348
      $region78: #{tpu_custom_call.1} parent=71 // pred_check_branch
        %10800 = sbr.rel (%p10798) target = $region80
      $region79: #{tpu_custom_call.1} parent=71 // pred_region
        _
      $region80: #{tpu_custom_call.1} parent=71 // pred_fallthru
        _
    $region72: #{tpu_custom_call.1} parent=5 // pred_fallthru
      _
    %p10801 = scmp.le.s32.totalorder 2, %s21
    // Predicated region
    $region81: #{tpu_custom_call.1} parent=5 // pred_check
      %p10802 = pneg %p10801
    $region82: #{tpu_custom_call.1} parent=5 // pred_check_branch
      %10804 = sbr.rel (%p10802) target = $region84
    $region83: #{tpu_custom_call.1} parent=5 // pred_region
      %s10805 = ssub.s32 %s21, 2
      // Predicated region
      $region85: #{tpu_custom_call.1} parent=83 // pred_check
        %p10806 = pneg %p328
      $region86: #{tpu_custom_call.1} parent=83 // pred_check_branch
        %10808 = sbr.rel (%p10806) target = $region88
      $region87: #{tpu_custom_call.1} parent=83 // pred_region
        %p10809 = scmp.lt.s32.totalorder %s27, 1
        %s10810 = scalar_select %p10809, %s27, 1
        %s10811 = smul.addr %s10810, 10
        %s10812 = smul.addr %s10811, 8
        %s10813 = scalar_lea.vmem %s13, %s10812
      $region88: #{tpu_custom_call.1} parent=83 // pred_fallthru
        _
      // Predicated region
      $region89: #{tpu_custom_call.1} parent=83 // pred_check
        %p10814 = pneg %p354
      $region90: #{tpu_custom_call.1} parent=83 // pred_check_branch
        %10816 = sbr.rel (%p10814) target = $region92
      $region91: #{tpu_custom_call.1} parent=83 // pred_region
        %p10817 = scmp.lt.s32.totalorder %s27, 1
        %s10818 = scalar_select %p10817, %s27, 1
        %s10819 = smul.addr %s10818, 10
        %s10820 = smul.addr %s10819, 8
        %s10821 = scalar_lea.vmem %s14, %s10820
      $region92: #{tpu_custom_call.1} parent=83 // pred_fallthru
        _
    $region84: #{tpu_custom_call.1} parent=5 // pred_fallthru
      _
  $region6: #{tpu_custom_call.1} parent=0 // loop_footer
    %s25 = sadd.s32 1, %s21
  $region7: #{tpu_custom_call.1} parent=0 // loop_footer_branch
    %20 = sbr.rel target = $region3
  $region8: #{tpu_custom_call.1} parent=0 // loop_exit
    _

</llo_original>
